<compile_context>
chip_gen: v5e
topology: v5e:2x2
jax: 0.10.0
libtpu: 0.0.40
codegen_flags: <defaults>
</compile_context>

<pallas_src>
import functools
import math

import jax
import jax.numpy as jnp
import numpy as np
from jax.experimental import pallas as pl
from jax.experimental.pallas import tpu as pltpu


# ----------------------------- Pallas kernel ------------------------------- #

def _bilstm_chunk_kernel(gxf_ref, gxb_ref, wblk_ref, outf_ref, outb_ref, state_scr,
                         *, t_chunk, batch, hidden):
    """Fused forward+backward LSTM recurrence over one time chunk.

    Grid axis 0 = time chunk (sequential / "arbitrary").
    gxf_ref  : (TC*B, 4H) bf16  precomputed x@W_ih_f + b_f, gate order [i,f,o,g]
    gxb_ref  : (TC*B, 4H) bf16  same for the backward direction (block nchunks-1-c)
    wblk_ref : (2H, 8H)   bf16  blockdiag(W_hh_f, W_hh_b), columns [fwd 4H | bwd 4H]
    outf_ref : (TC*B, H)        forward hidden states (natural time order)
    outb_ref : (TC*B, H)        backward hidden states (block nchunks-1-c)
    state_scr: (2, B, 2H) f32   [h_cat, c_cat] = [h_f|h_b, c_f|c_b], persists across chunks
    """
    H = hidden
    B = batch

    @pl.when(pl.program_id(0) == 0)
    def _():
        state_scr[...] = jnp.zeros_like(state_scr)

    # Hoist the (already fused) weight load out of the time loop.
    wblk = wblk_ref[...]                                    # (2H, 8H) bf16

    h_cat = state_scr[0]                                    # (B, 2H) f32
    c_cat = state_scr[1]                                    # (B, 2H) f32
    c_f = c_cat[:, :H]
    c_b = c_cat[:, H:]

    def gate_update(gates, c_prev):
        # gates: (B, 4H) f32, column order [i | f | o | g] (permuted at prep time)
        # sigmoid only on the contiguous first 3H lanes, tanh only on the last H.
        sg = jax.nn.sigmoid(gates[:, :3 * H])
        gg = jnp.tanh(gates[:, 3 * H:])
        i_g = sg[:, :H]
        f_g = sg[:, H:2 * H]
        o_g = sg[:, 2 * H:3 * H]
        c_new = f_g * c_prev + i_g * gg
        h_new = o_g * jnp.tanh(c_new)
        return h_new, c_new

    # Fully static Python loop: slice starts are compile-time constants (static
    # sublane offsets), body fully unrolled for the scheduler.
    # TODO(synk): switch to a partially-unrolled lax.fori_loop (unroll=4..8) once
    #             B*H grows enough that the fully-unrolled body spills vregs.
    for j in range(t_chunk):
        row = j * B
        row_r = (t_chunk - 1 - j) * B          # backward direction walks the chunk in reverse

        # ONE fused recurrent matmul for both directions (bf16 operands, f32 acc).
        rec = jnp.dot(h_cat.astype(jnp.bfloat16), wblk,
                      preferred_element_type=jnp.float32)   # (B, 8H)

        g_f = gxf_ref[row:row + B, :] + rec[:, :4 * H]      # bf16 + f32 -> f32
        g_b = gxb_ref[row_r:row_r + B, :] + rec[:, 4 * H:]

        h_f, c_f = gate_update(g_f, c_f)
        h_b, c_b = gate_update(g_b, c_b)

        outf_ref[row:row + B, :] = h_f.astype(outf_ref.dtype)
        outb_ref[row_r:row_r + B, :] = h_b.astype(outb_ref.dtype)

        h_cat = jnp.concatenate([h_f, h_b], axis=-1)        # LHS of next step's fused dot

    state_scr[0] = h_cat
    state_scr[1] = jnp.concatenate([c_f, c_b], axis=-1)


def _bilstm_layer(gxf, gxb, w_blk_bf16, *, t_chunk, out_dtype):
    """Run one fused bidirectional LSTM layer over the full (time-major) sequence.

    gxf, gxb : (T, B, 4H) bf16 gates_x per direction (gate order [i,f,o,g], bias folded in)
    w_blk    : (2H, 8H)   bf16 block-diagonal recurrent weight
    returns  : out_f, out_b each (T, B, H) in `out_dtype`, natural time order
    """
    T, B, G4 = gxf.shape
    H = G4 // 4

    nchunks = -(-T // t_chunk)
    T_pad = nchunks * t_chunk
    if T_pad != T:
        # Zero gates keep the backward-direction state exactly zero through the pad,
        # so padding at the end is exact for both directions (padded rows discarded).
        pad = ((0, T_pad - T), (0, 0), (0, 0))
        gxf = jnp.pad(gxf, pad)
        gxb = jnp.pad(gxb, pad)

    rows = t_chunk * B
    gxf2 = gxf.reshape(T_pad * B, G4)          # sublane-dense presentation (free reshape)
    gxb2 = gxb.reshape(T_pad * B, G4)

    kernel = functools.partial(_bilstm_chunk_kernel,
                               t_chunk=t_chunk, batch=B, hidden=H)

    out_isz = int(np.dtype(out_dtype).itemsize)
    # Double-buffered streamed blocks + weights + state scratch (bytes), with headroom.
    vmem_bytes = (2 * 2 * rows * G4 * 2                  # gx blocks (2 dirs, bf16)
                  + 2 * 2 * rows * H * out_isz           # output blocks (2 dirs)
                  + 2 * (2 * H) * (8 * H) * 2            # fused weight
                  + 2 * B * 2 * H * 4)                   # state scratch (f32)
    vmem_limit = int(min(max(4 * vmem_bytes, 32 * 1024 * 1024), 64 * 1024 * 1024))

    out_f, out_b = pl.pallas_call(
        kernel,
        out_shape=(jax.ShapeDtypeStruct((T_pad * B, H), out_dtype),
                   jax.ShapeDtypeStruct((T_pad * B, H), out_dtype)),
        grid=(nchunks,),
        in_specs=[
            pl.BlockSpec((rows, G4), lambda c: (c, 0)),
            pl.BlockSpec((rows, G4), lambda c: (nchunks - 1 - c, 0)),
            pl.BlockSpec((2 * H, 8 * H), lambda c: (0, 0)),
        ],
        out_specs=(
            pl.BlockSpec((rows, H), lambda c: (c, 0)),
            pl.BlockSpec((rows, H), lambda c: (nchunks - 1 - c, 0)),
        ),
        scratch_shapes=[pltpu.VMEM((2, B, 2 * H), jnp.float32)],
        compiler_params=pltpu.CompilerParams(
            dimension_semantics=("arbitrary",),
            vmem_limit_bytes=vmem_limit),
    )(gxf2, gxb2, w_blk_bf16)

    out_f = out_f.reshape(T_pad, B, H)[:T]
    out_b = out_b.reshape(T_pad, B, H)[:T]
    return out_f, out_b


# ----------------------------- model wrapper ------------------------------- #

def _gate_perm(H):
    """Column permutation PyTorch [i, f, g, o] -> kernel order [i, f, o, g]."""
    return np.concatenate([np.arange(0, 2 * H),
                           np.arange(3 * H, 4 * H),
                           np.arange(2 * H, 3 * H)])


def _prep_layer(layer):
    """Permute gate columns and build the block-diagonal recurrent weight."""
    H = layer["w_hh_f"].shape[0]
    perm = _gate_perm(H)
    w_ih_f = layer["w_ih_f"][:, perm]
    w_ih_b = layer["w_ih_b"][:, perm]
    b_f = layer["b_f"][perm]
    b_b = layer["b_b"][perm]
    w_blk = jnp.zeros((2 * H, 8 * H), jnp.float32)
    w_blk = w_blk.at[:H, :4 * H].set(layer["w_hh_f"][:, perm])
    w_blk = w_blk.at[H:, 4 * H:].set(layer["w_hh_b"][:, perm])
    return w_ih_f, b_f, w_ih_b, b_b, w_blk.astype(jnp.bfloat16)


def _project(inputs, w_ih_t, b):
    """Hoisted input projection for ALL timesteps (bf16 matmul, f32 accumulation).

    inputs : list of time-major (T, B, d_i) arrays whose feature-concat is the layer input
             (avoids materializing the fwd/bwd concat between layers)
    w_ih_t : (sum d_i, 4H) f32
    b      : (4H,) f32  (= b_ih + b_hh)
    returns (T, B, 4H) bf16  (halved HBM traffic; re-promoted to f32 inside the kernel)
    """
    off = 0
    acc = None
    for inp in inputs:
        d = inp.shape[-1]
        w = w_ih_t[off:off + d].astype(jnp.bfloat16)
        part = jnp.einsum("tbd,dg->tbg", inp.astype(jnp.bfloat16), w,
                          preferred_element_type=jnp.float32)
        acc = part if acc is None else acc + part
        off += d
    return (acc + b[None, None, :]).astype(jnp.bfloat16)


def _pick_t_chunk(T, B, max_chunk=32):
    """Chunk length: large enough to amortize per-grid-step overhead, with
    t_chunk*B a multiple of 8 so streamed blocks are sublane-dense."""
    m = 8 // math.gcd(B, 8)
    c = max(1, min(max_chunk, T))
    c = -(-c // m) * m
    return c


def init_bilstm_params(key, input_size, hidden_size, num_layers):
    """Parameters matching nn.LSTM(input_size, hidden_size//2, num_layers, bidirectional).

    Stored pre-transposed in PyTorch gate order [i, f, g, o]:
      w_ih_{f,b}: (d_in, 4H), w_hh_{f,b}: (H, 4H), b_{f,b}: (4H,) = b_ih + b_hh.
    """
    assert hidden_size % 2 == 0
    H = hidden_size // 2
    bound = 1.0 / np.sqrt(H)
    params = []
    for layer in range(num_layers):
        d_in = input_size if layer == 0 else 2 * H
        layer_p = {}
        for tag in ("f", "b"):   # forward / backward direction
            key, k1, k2, k3, k4 = jax.random.split(key, 5)
            w_ih = jax.random.uniform(k1, (4 * H, d_in), jnp.float32, -bound, bound)
            w_hh = jax.random.uniform(k2, (4 * H, H), jnp.float32, -bound, bound)
            b_ih = jax.random.uniform(k3, (4 * H,), jnp.float32, -bound, bound)
            b_hh = jax.random.uniform(k4, (4 * H,), jnp.float32, -bound, bound)
            layer_p[f"w_ih_{tag}"] = w_ih.T
            layer_p[f"w_hh_{tag}"] = w_hh.T
            layer_p[f"b_{tag}"] = b_ih + b_hh
        params.append(layer_p)
    return params


def nn_lstm_all_forward(x, params):
    """Equivalent of nnLSTMall.forward: (B, T, input_size) -> (B, T, hidden_size)."""
    B, T, _ = x.shape
    n_layers = len(params)
    t_chunk = _pick_t_chunk(T, B)
    inputs = [jnp.swapaxes(x, 0, 1)]           # time-major (T, B, D); no per-layer HBM flips
    for li, layer in enumerate(params):
        w_ih_f, b_f, w_ih_b, b_b, w_blk = _prep_layer(layer)
        gxf = _project(inputs, w_ih_f, b_f)
        gxb = _project(inputs, w_ih_b, b_b)
        out_dtype = jnp.float32 if li == n_layers - 1 else jnp.bfloat16
        out_f, out_b = _bilstm_layer(gxf, gxb, w_blk,
                                     t_chunk=t_chunk, out_dtype=out_dtype)
        inputs = [out_f, out_b]
    out_tm = jnp.concatenate([o.astype(jnp.float32) for o in inputs], axis=-1)
    return jnp.swapaxes(out_tm, 0, 1)          # (B, T, hidden_size)


# ------------------------- pure-JAX reference ------------------------------ #

def _lstm_dir_ref(gx, w_hh_t):
    """gx: (T, B, 4H) bf16 in processing order (PyTorch gate order, bias included)."""
    _, B, G4 = gx.shape
    H = G4 // 4
    w = w_hh_t.astype(jnp.bfloat16)

    def step(carry, g_x):
        h, c = carry
        gates = g_x.astype(jnp.float32) + jnp.dot(h.astype(jnp.bfloat16), w,
                                                  preferred_element_type=jnp.float32)
        i = jax.nn.sigmoid(gates[:, 0 * H:1 * H])
        f = jax.nn.sigmoid(gates[:, 1 * H:2 * H])
        g = jnp.tanh(gates[:, 2 * H:3 * H])
        o = jax.nn.sigmoid(gates[:, 3 * H:4 * H])
        c = f * c + i * g
        h = o * jnp.tanh(c)
        return (h, c), h

    init = (jnp.zeros((B, H), jnp.float32), jnp.zeros((B, H), jnp.float32))
    _, hs = jax.lax.scan(step, init, gx)
    return hs


def nn_lstm_all_ref(x, params):
    inputs = [jnp.swapaxes(x, 0, 1)]
    for layer in params:
        gxf = _project(inputs, layer["w_ih_f"], layer["b_f"])
        gxb = _project(inputs, layer["w_ih_b"], layer["b_b"])
        out_f = _lstm_dir_ref(gxf, layer["w_hh_f"])
        out_b = _lstm_dir_ref(gxb[::-1], layer["w_hh_b"])[::-1]
        inputs = [out_f, out_b]
    return jnp.swapaxes(jnp.concatenate(inputs, axis=-1), 0, 1)


# --------------------------------- main ------------------------------------ #

if __name__ == "__main__":
    # Module hyper-parameters (param.input_size / param.hidden_size / param.num_layers)
    B, T = 2, 16
    input_size = 32
    hidden_size = 64      # per-direction H = 32; module output feature dim = hidden_size
    num_layers = 2

    key = jax.random.PRNGKey(0)
    key, xkey = jax.random.split(key)
    x = jax.random.normal(xkey, (B, T, input_size), jnp.float32)
    params = init_bilstm_params(key, input_size, hidden_size, num_layers)

    out = jax.jit(nn_lstm_all_forward)(x, params)
    out = jax.block_until_ready(out)
    assert out.shape == (B, T, hidden_size), out.shape

    ref = nn_lstm_all_ref(x, params)
    np.testing.assert_allclose(np.asarray(out), np.asarray(ref), rtol=2e-3, atol=2e-3)

    print("KERNEL_OK")
</pallas_src>

<mosaic_0001>
module attributes {stable_mosaic.version = 11 : i64} {
  func.func @_bilstm_chunk_kernel(%arg0: i32, %arg1: memref<32x128xbf16, #tpu.memory_space<vmem>>, %arg2: memref<32x128xbf16, #tpu.memory_space<vmem>>, %arg3: memref<64x256xbf16, #tpu.memory_space<vmem>>, %arg4: memref<32x32xbf16, #tpu.memory_space<vmem>>, %arg5: memref<32x32xbf16, #tpu.memory_space<vmem>>, %arg6: memref<2x2x64xf32, #tpu.memory_space<vmem>>) attributes {dimension_semantics = [#tpu.dimension_semantics<arbitrary>], iteration_bounds = array<i64: 1>, scalar_prefetch = 0 : i64, scratch_operands = 1 : i64, tpu.core_type = #tpu.core_type<tc>, window_params = [{transform_indices = @transform_0, window_bounds = array<i64: 32, 128>}, {transform_indices = @transform_1, window_bounds = array<i64: 32, 128>}, {pipeline_mode = #tpu.pipeline_mode<synchronous>, transform_indices = @transform_2, window_bounds = array<i64: 64, 256>}, {transform_indices = @transform_3, window_bounds = array<i64: 32, 32>}, {transform_indices = @transform_4, window_bounds = array<i64: 32, 32>}]} {
    %c0_i32 = arith.constant 0 : i32
    %0 = arith.cmpi eq, %arg0, %c0_i32 : i32
    %1 = arith.extui %0 : i1 to i32
    %c0_i32_0 = arith.constant 0 : i32
    %2 = arith.cmpi ne, %1, %c0_i32_0 : i32
    scf.if %2 {
      %cst_173 = arith.constant 0.000000e+00 : f32
      %769 = vector.broadcast %cst_173 : f32 to vector<2x2x64xf32>
      %c0_174 = arith.constant 0 : index
      %c0_175 = arith.constant 0 : index
      %c0_176 = arith.constant 0 : index
      %770 = vector.load %arg6[%c0_174, %c0_175, %c0_176] : memref<2x2x64xf32, #tpu.memory_space<vmem>>, vector<2x2x64xf32>
      tpu.vector_store %arg6[%c0_174, %c0_175, %c0_176], %769 {strides = array<i32>} : memref<2x2x64xf32, #tpu.memory_space<vmem>>, vector<2x2x64xf32>,
    } else {
    }
    %c0 = arith.constant 0 : index
    %c0_1 = arith.constant 0 : index
    %3 = vector.load %arg3[%c0, %c0_1] : memref<64x256xbf16, #tpu.memory_space<vmem>>, vector<64x256xbf16>
    %c0_2 = arith.constant 0 : index
    %c0_3 = arith.constant 0 : index
    %c0_4 = arith.constant 0 : index
    %4 = vector.load %arg6[%c0_2, %c0_3, %c0_4] : memref<2x2x64xf32, #tpu.memory_space<vmem>>, vector<1x2x64xf32>
    %5 = vector.shape_cast %4 : vector<1x2x64xf32> to vector<2x64xf32>
    %c1 = arith.constant 1 : index
    %c0_5 = arith.constant 0 : index
    %c0_6 = arith.constant 0 : index
    %6 = vector.load %arg6[%c1, %c0_5, %c0_6] : memref<2x2x64xf32, #tpu.memory_space<vmem>>, vector<1x2x64xf32>
    %7 = vector.shape_cast %6 : vector<1x2x64xf32> to vector<2x64xf32>
    %8 = vector.extract_strided_slice %7 {offsets = [0, 0], sizes = [2, 32], strides = [1, 1]} : vector<2x64xf32> to vector<2x32xf32>
    %9 = vector.extract_strided_slice %7 {offsets = [0, 32], sizes = [2, 32], strides = [1, 1]} : vector<2x64xf32> to vector<2x32xf32>
    %10 = arith.truncf %5 : vector<2x64xf32> to vector<2x64xbf16>
    %cst = arith.constant dense<0.000000e+00> : vector<2x256xf32>
    %11 = tpu.matmul %10, %3, %cst {dimension_numbers = #tpu.dot_dimension_numbers<[1], [0], [0], [1], [0, 0, 1, 1], [], []>} : vector<2x64xbf16>, vector<64x256xbf16>, vector<2x256xf32> -> vector<2x256xf32>
    %c0_7 = arith.constant 0 : index
    %c0_8 = arith.constant 0 : index
    %12 = vector.load %arg1[%c0_7, %c0_8] : memref<32x128xbf16, #tpu.memory_space<vmem>>, vector<2x128xbf16>
    %13 = vector.extract_strided_slice %11 {offsets = [0, 0], sizes = [2, 128], strides = [1, 1]} : vector<2x256xf32> to vector<2x128xf32>
    %14 = arith.extf %12 : vector<2x128xbf16> to vector<2x128xf32>
    %15 = arith.addf %14, %13 : vector<2x128xf32>
    %c30 = arith.constant 30 : index
    %c0_9 = arith.constant 0 : index
    %16 = vector.load %arg2[%c30, %c0_9] : memref<32x128xbf16, #tpu.memory_space<vmem>>, vector<2x128xbf16>
    %17 = vector.extract_strided_slice %11 {offsets = [0, 128], sizes = [2, 128], strides = [1, 1]} : vector<2x256xf32> to vector<2x128xf32>
    %18 = arith.extf %16 : vector<2x128xbf16> to vector<2x128xf32>
    %19 = arith.addf %18, %17 : vector<2x128xf32>
    %20 = vector.extract_strided_slice %15 {offsets = [0, 0], sizes = [2, 96], strides = [1, 1]} : vector<2x128xf32> to vector<2x96xf32>
    %21 = arith.negf %20 : vector<2x96xf32>
    %22 = math.exp %21 : vector<2x96xf32>
    %cst_10 = arith.constant 1.000000e+00 : f32
    %23 = vector.broadcast %cst_10 : f32 to vector<2x96xf32>
    %24 = arith.addf %23, %22 : vector<2x96xf32>
    %25 = arith.divf %23, %24 : vector<2x96xf32>
    %26 = vector.extract_strided_slice %15 {offsets = [0, 96], sizes = [2, 32], strides = [1, 1]} : vector<2x128xf32> to vector<2x32xf32>
    %27 = math.tanh %26 : vector<2x32xf32>
    %28 = vector.extract_strided_slice %25 {offsets = [0, 0], sizes = [2, 32], strides = [1, 1]} : vector<2x96xf32> to vector<2x32xf32>
    %29 = vector.extract_strided_slice %25 {offsets = [0, 32], sizes = [2, 32], strides = [1, 1]} : vector<2x96xf32> to vector<2x32xf32>
    %30 = vector.extract_strided_slice %25 {offsets = [0, 64], sizes = [2, 32], strides = [1, 1]} : vector<2x96xf32> to vector<2x32xf32>
    %31 = arith.mulf %29, %8 : vector<2x32xf32>
    %32 = arith.mulf %28, %27 : vector<2x32xf32>
    %33 = arith.addf %31, %32 : vector<2x32xf32>
    %34 = math.tanh %33 : vector<2x32xf32>
    %35 = arith.mulf %30, %34 : vector<2x32xf32>
    %36 = vector.extract_strided_slice %19 {offsets = [0, 0], sizes = [2, 96], strides = [1, 1]} : vector<2x128xf32> to vector<2x96xf32>
    %37 = arith.negf %36 : vector<2x96xf32>
    %38 = math.exp %37 : vector<2x96xf32>
    %cst_11 = arith.constant 1.000000e+00 : f32
    %39 = vector.broadcast %cst_11 : f32 to vector<2x96xf32>
    %40 = arith.addf %39, %38 : vector<2x96xf32>
    %41 = arith.divf %39, %40 : vector<2x96xf32>
    %42 = vector.extract_strided_slice %19 {offsets = [0, 96], sizes = [2, 32], strides = [1, 1]} : vector<2x128xf32> to vector<2x32xf32>
    %43 = math.tanh %42 : vector<2x32xf32>
    %44 = vector.extract_strided_slice %41 {offsets = [0, 0], sizes = [2, 32], strides = [1, 1]} : vector<2x96xf32> to vector<2x32xf32>
    %45 = vector.extract_strided_slice %41 {offsets = [0, 32], sizes = [2, 32], strides = [1, 1]} : vector<2x96xf32> to vector<2x32xf32>
    %46 = vector.extract_strided_slice %41 {offsets = [0, 64], sizes = [2, 32], strides = [1, 1]} : vector<2x96xf32> to vector<2x32xf32>
    %47 = arith.mulf %45, %9 : vector<2x32xf32>
    %48 = arith.mulf %44, %43 : vector<2x32xf32>
    %49 = arith.addf %47, %48 : vector<2x32xf32>
    %50 = math.tanh %49 : vector<2x32xf32>
    %51 = arith.mulf %46, %50 : vector<2x32xf32>
    %52 = arith.truncf %35 : vector<2x32xf32> to vector<2x32xbf16>
    %c0_12 = arith.constant 0 : index
    %c0_13 = arith.constant 0 : index
    %53 = vector.load %arg4[%c0_12, %c0_13] : memref<32x32xbf16, #tpu.memory_space<vmem>>, vector<2x32xbf16>
    tpu.vector_store %arg4[%c0_12, %c0_13], %52 {strides = array<i32>} : memref<32x32xbf16, #tpu.memory_space<vmem>>, vector<2x32xbf16>,
    %54 = arith.truncf %51 : vector<2x32xf32> to vector<2x32xbf16>
    %c30_14 = arith.constant 30 : index
    %c0_15 = arith.constant 0 : index
    %55 = vector.load %arg5[%c30_14, %c0_15] : memref<32x32xbf16, #tpu.memory_space<vmem>>, vector<2x32xbf16>
    tpu.vector_store %arg5[%c30_14, %c0_15], %54 {strides = array<i32>} : memref<32x32xbf16, #tpu.memory_space<vmem>>, vector<2x32xbf16>,
    %56 = tpu.concatenate %35, %51 in 1 : vector<2x32xf32>, vector<2x32xf32> -> vector<2x64xf32>
    %57 = arith.truncf %56 : vector<2x64xf32> to vector<2x64xbf16>
    %cst_16 = arith.constant dense<0.000000e+00> : vector<2x256xf32>
    %58 = tpu.matmul %57, %3, %cst_16 {dimension_numbers = #tpu.dot_dimension_numbers<[1], [0], [0], [1], [0, 0, 1, 1], [], []>} : vector<2x64xbf16>, vector<64x256xbf16>, vector<2x256xf32> -> vector<2x256xf32>
    %c2 = arith.constant 2 : index
    %c0_17 = arith.constant 0 : index
    %59 = vector.load %arg1[%c2, %c0_17] : memref<32x128xbf16, #tpu.memory_space<vmem>>, vector<2x128xbf16>
    %60 = vector.extract_strided_slice %58 {offsets = [0, 0], sizes = [2, 128], strides = [1, 1]} : vector<2x256xf32> to vector<2x128xf32>
    %61 = arith.extf %59 : vector<2x128xbf16> to vector<2x128xf32>
    %62 = arith.addf %61, %60 : vector<2x128xf32>
    %c28 = arith.constant 28 : index
    %c0_18 = arith.constant 0 : index
    %63 = vector.load %arg2[%c28, %c0_18] : memref<32x128xbf16, #tpu.memory_space<vmem>>, vector<2x128xbf16>
    %64 = vector.extract_strided_slice %58 {offsets = [0, 128], sizes = [2, 128], strides = [1, 1]} : vector<2x256xf32> to vector<2x128xf32>
    %65 = arith.extf %63 : vector<2x128xbf16> to vector<2x128xf32>
    %66 = arith.addf %65, %64 : vector<2x128xf32>
    %67 = vector.extract_strided_slice %62 {offsets = [0, 0], sizes = [2, 96], strides = [1, 1]} : vector<2x128xf32> to vector<2x96xf32>
    %68 = arith.negf %67 : vector<2x96xf32>
    %69 = math.exp %68 : vector<2x96xf32>
    %cst_19 = arith.constant 1.000000e+00 : f32
    %70 = vector.broadcast %cst_19 : f32 to vector<2x96xf32>
    %71 = arith.addf %70, %69 : vector<2x96xf32>
    %72 = arith.divf %70, %71 : vector<2x96xf32>
    %73 = vector.extract_strided_slice %62 {offsets = [0, 96], sizes = [2, 32], strides = [1, 1]} : vector<2x128xf32> to vector<2x32xf32>
    %74 = math.tanh %73 : vector<2x32xf32>
    %75 = vector.extract_strided_slice %72 {offsets = [0, 0], sizes = [2, 32], strides = [1, 1]} : vector<2x96xf32> to vector<2x32xf32>
    %76 = vector.extract_strided_slice %72 {offsets = [0, 32], sizes = [2, 32], strides = [1, 1]} : vector<2x96xf32> to vector<2x32xf32>
    %77 = vector.extract_strided_slice %72 {offsets = [0, 64], sizes = [2, 32], strides = [1, 1]} : vector<2x96xf32> to vector<2x32xf32>
    %78 = arith.mulf %76, %33 : vector<2x32xf32>
    %79 = arith.mulf %75, %74 : vector<2x32xf32>
    %80 = arith.addf %78, %79 : vector<2x32xf32>
    %81 = math.tanh %80 : vector<2x32xf32>
    %82 = arith.mulf %77, %81 : vector<2x32xf32>
    %83 = vector.extract_strided_slice %66 {offsets = [0, 0], sizes = [2, 96], strides = [1, 1]} : vector<2x128xf32> to vector<2x96xf32>
    %84 = arith.negf %83 : vector<2x96xf32>
    %85 = math.exp %84 : vector<2x96xf32>
    %cst_20 = arith.constant 1.000000e+00 : f32
    %86 = vector.broadcast %cst_20 : f32 to vector<2x96xf32>
    %87 = arith.addf %86, %85 : vector<2x96xf32>
    %88 = arith.divf %86, %87 : vector<2x96xf32>
    %89 = vector.extract_strided_slice %66 {offsets = [0, 96], sizes = [2, 32], strides = [1, 1]} : vector<2x128xf32> to vector<2x32xf32>
    %90 = math.tanh %89 : vector<2x32xf32>
    %91 = vector.extract_strided_slice %88 {offsets = [0, 0], sizes = [2, 32], strides = [1, 1]} : vector<2x96xf32> to vector<2x32xf32>
    %92 = vector.extract_strided_slice %88 {offsets = [0, 32], sizes = [2, 32], strides = [1, 1]} : vector<2x96xf32> to vector<2x32xf32>
    %93 = vector.extract_strided_slice %88 {offsets = [0, 64], sizes = [2, 32], strides = [1, 1]} : vector<2x96xf32> to vector<2x32xf32>
    %94 = arith.mulf %92, %49 : vector<2x32xf32>
    %95 = arith.mulf %91, %90 : vector<2x32xf32>
    %96 = arith.addf %94, %95 : vector<2x32xf32>
    %97 = math.tanh %96 : vector<2x32xf32>
    %98 = arith.mulf %93, %97 : vector<2x32xf32>
    %99 = arith.truncf %82 : vector<2x32xf32> to vector<2x32xbf16>
    %c2_21 = arith.constant 2 : index
    %c0_22 = arith.constant 0 : index
    %100 = vector.load %arg4[%c2_21, %c0_22] : memref<32x32xbf16, #tpu.memory_space<vmem>>, vector<2x32xbf16>
    tpu.vector_store %arg4[%c2_21, %c0_22], %99 {strides = array<i32>} : memref<32x32xbf16, #tpu.memory_space<vmem>>, vector<2x32xbf16>,
    %101 = arith.truncf %98 : vector<2x32xf32> to vector<2x32xbf16>
    %c28_23 = arith.constant 28 : index
    %c0_24 = arith.constant 0 : index
    %102 = vector.load %arg5[%c28_23, %c0_24] : memref<32x32xbf16, #tpu.memory_space<vmem>>, vector<2x32xbf16>
    tpu.vector_store %arg5[%c28_23, %c0_24], %101 {strides = array<i32>} : memref<32x32xbf16, #tpu.memory_space<vmem>>, vector<2x32xbf16>,
    %103 = tpu.concatenate %82, %98 in 1 : vector<2x32xf32>, vector<2x32xf32> -> vector<2x64xf32>
    %104 = arith.truncf %103 : vector<2x64xf32> to vector<2x64xbf16>
    %cst_25 = arith.constant dense<0.000000e+00> : vector<2x256xf32>
    %105 = tpu.matmul %104, %3, %cst_25 {dimension_numbers = #tpu.dot_dimension_numbers<[1], [0], [0], [1], [0, 0, 1, 1], [], []>} : vector<2x64xbf16>, vector<64x256xbf16>, vector<2x256xf32> -> vector<2x256xf32>
    %c4 = arith.constant 4 : index
    %c0_26 = arith.constant 0 : index
    %106 = vector.load %arg1[%c4, %c0_26] : memref<32x128xbf16, #tpu.memory_space<vmem>>, vector<2x128xbf16>
    %107 = vector.extract_strided_slice %105 {offsets = [0, 0], sizes = [2, 128], strides = [1, 1]} : vector<2x256xf32> to vector<2x128xf32>
    %108 = arith.extf %106 : vector<2x128xbf16> to vector<2x128xf32>
    %109 = arith.addf %108, %107 : vector<2x128xf32>
    %c26 = arith.constant 26 : index
    %c0_27 = arith.constant 0 : index
    %110 = vector.load %arg2[%c26, %c0_27] : memref<32x128xbf16, #tpu.memory_space<vmem>>, vector<2x128xbf16>
    %111 = vector.extract_strided_slice %105 {offsets = [0, 128], sizes = [2, 128], strides = [1, 1]} : vector<2x256xf32> to vector<2x128xf32>
    %112 = arith.extf %110 : vector<2x128xbf16> to vector<2x128xf32>
    %113 = arith.addf %112, %111 : vector<2x128xf32>
    %114 = vector.extract_strided_slice %109 {offsets = [0, 0], sizes = [2, 96], strides = [1, 1]} : vector<2x128xf32> to vector<2x96xf32>
    %115 = arith.negf %114 : vector<2x96xf32>
    %116 = math.exp %115 : vector<2x96xf32>
    %cst_28 = arith.constant 1.000000e+00 : f32
    %117 = vector.broadcast %cst_28 : f32 to vector<2x96xf32>
    %118 = arith.addf %117, %116 : vector<2x96xf32>
    %119 = arith.divf %117, %118 : vector<2x96xf32>
    %120 = vector.extract_strided_slice %109 {offsets = [0, 96], sizes = [2, 32], strides = [1, 1]} : vector<2x128xf32> to vector<2x32xf32>
    %121 = math.tanh %120 : vector<2x32xf32>
    %122 = vector.extract_strided_slice %119 {offsets = [0, 0], sizes = [2, 32], strides = [1, 1]} : vector<2x96xf32> to vector<2x32xf32>
    %123 = vector.extract_strided_slice %119 {offsets = [0, 32], sizes = [2, 32], strides = [1, 1]} : vector<2x96xf32> to vector<2x32xf32>
    %124 = vector.extract_strided_slice %119 {offsets = [0, 64], sizes = [2, 32], strides = [1, 1]} : vector<2x96xf32> to vector<2x32xf32>
    %125 = arith.mulf %123, %80 : vector<2x32xf32>
    %126 = arith.mulf %122, %121 : vector<2x32xf32>
    %127 = arith.addf %125, %126 : vector<2x32xf32>
    %128 = math.tanh %127 : vector<2x32xf32>
    %129 = arith.mulf %124, %128 : vector<2x32xf32>
    %130 = vector.extract_strided_slice %113 {offsets = [0, 0], sizes = [2, 96], strides = [1, 1]} : vector<2x128xf32> to vector<2x96xf32>
    %131 = arith.negf %130 : vector<2x96xf32>
    %132 = math.exp %131 : vector<2x96xf32>
    %cst_29 = arith.constant 1.000000e+00 : f32
    %133 = vector.broadcast %cst_29 : f32 to vector<2x96xf32>
    %134 = arith.addf %133, %132 : vector<2x96xf32>
    %135 = arith.divf %133, %134 : vector<2x96xf32>
    %136 = vector.extract_strided_slice %113 {offsets = [0, 96], sizes = [2, 32], strides = [1, 1]} : vector<2x128xf32> to vector<2x32xf32>
    %137 = math.tanh %136 : vector<2x32xf32>
    %138 = vector.extract_strided_slice %135 {offsets = [0, 0], sizes = [2, 32], strides = [1, 1]} : vector<2x96xf32> to vector<2x32xf32>
    %139 = vector.extract_strided_slice %135 {offsets = [0, 32], sizes = [2, 32], strides = [1, 1]} : vector<2x96xf32> to vector<2x32xf32>
    %140 = vector.extract_strided_slice %135 {offsets = [0, 64], sizes = [2, 32], strides = [1, 1]} : vector<2x96xf32> to vector<2x32xf32>
    %141 = arith.mulf %139, %96 : vector<2x32xf32>
    %142 = arith.mulf %138, %137 : vector<2x32xf32>
    %143 = arith.addf %141, %142 : vector<2x32xf32>
    %144 = math.tanh %143 : vector<2x32xf32>
    %145 = arith.mulf %140, %144 : vector<2x32xf32>
    %146 = arith.truncf %129 : vector<2x32xf32> to vector<2x32xbf16>
    %c4_30 = arith.constant 4 : index
    %c0_31 = arith.constant 0 : index
    %147 = vector.load %arg4[%c4_30, %c0_31] : memref<32x32xbf16, #tpu.memory_space<vmem>>, vector<2x32xbf16>
    tpu.vector_store %arg4[%c4_30, %c0_31], %146 {strides = array<i32>} : memref<32x32xbf16, #tpu.memory_space<vmem>>, vector<2x32xbf16>,
    %148 = arith.truncf %145 : vector<2x32xf32> to vector<2x32xbf16>
    %c26_32 = arith.constant 26 : index
    %c0_33 = arith.constant 0 : index
    %149 = vector.load %arg5[%c26_32, %c0_33] : memref<32x32xbf16, #tpu.memory_space<vmem>>, vector<2x32xbf16>
    tpu.vector_store %arg5[%c26_32, %c0_33], %148 {strides = array<i32>} : memref<32x32xbf16, #tpu.memory_space<vmem>>, vector<2x32xbf16>,
    %150 = tpu.concatenate %129, %145 in 1 : vector<2x32xf32>, vector<2x32xf32> -> vector<2x64xf32>
    %151 = arith.truncf %150 : vector<2x64xf32> to vector<2x64xbf16>
    %cst_34 = arith.constant dense<0.000000e+00> : vector<2x256xf32>
    %152 = tpu.matmul %151, %3, %cst_34 {dimension_numbers = #tpu.dot_dimension_numbers<[1], [0], [0], [1], [0, 0, 1, 1], [], []>} : vector<2x64xbf16>, vector<64x256xbf16>, vector<2x256xf32> -> vector<2x256xf32>
    %c6 = arith.constant 6 : index
    %c0_35 = arith.constant 0 : index
    %153 = vector.load %arg1[%c6, %c0_35] : memref<32x128xbf16, #tpu.memory_space<vmem>>, vector<2x128xbf16>
    %154 = vector.extract_strided_slice %152 {offsets = [0, 0], sizes = [2, 128], strides = [1, 1]} : vector<2x256xf32> to vector<2x128xf32>
    %155 = arith.extf %153 : vector<2x128xbf16> to vector<2x128xf32>
    %156 = arith.addf %155, %154 : vector<2x128xf32>
    %c24 = arith.constant 24 : index
    %c0_36 = arith.constant 0 : index
    %157 = vector.load %arg2[%c24, %c0_36] : memref<32x128xbf16, #tpu.memory_space<vmem>>, vector<2x128xbf16>
    %158 = vector.extract_strided_slice %152 {offsets = [0, 128], sizes = [2, 128], strides = [1, 1]} : vector<2x256xf32> to vector<2x128xf32>
    %159 = arith.extf %157 : vector<2x128xbf16> to vector<2x128xf32>
    %160 = arith.addf %159, %158 : vector<2x128xf32>
    %161 = vector.extract_strided_slice %156 {offsets = [0, 0], sizes = [2, 96], strides = [1, 1]} : vector<2x128xf32> to vector<2x96xf32>
    %162 = arith.negf %161 : vector<2x96xf32>
    %163 = math.exp %162 : vector<2x96xf32>
    %cst_37 = arith.constant 1.000000e+00 : f32
    %164 = vector.broadcast %cst_37 : f32 to vector<2x96xf32>
    %165 = arith.addf %164, %163 : vector<2x96xf32>
    %166 = arith.divf %164, %165 : vector<2x96xf32>
    %167 = vector.extract_strided_slice %156 {offsets = [0, 96], sizes = [2, 32], strides = [1, 1]} : vector<2x128xf32> to vector<2x32xf32>
    %168 = math.tanh %167 : vector<2x32xf32>
    %169 = vector.extract_strided_slice %166 {offsets = [0, 0], sizes = [2, 32], strides = [1, 1]} : vector<2x96xf32> to vector<2x32xf32>
    %170 = vector.extract_strided_slice %166 {offsets = [0, 32], sizes = [2, 32], strides = [1, 1]} : vector<2x96xf32> to vector<2x32xf32>
    %171 = vector.extract_strided_slice %166 {offsets = [0, 64], sizes = [2, 32], strides = [1, 1]} : vector<2x96xf32> to vector<2x32xf32>
    %172 = arith.mulf %170, %127 : vector<2x32xf32>
    %173 = arith.mulf %169, %168 : vector<2x32xf32>
    %174 = arith.addf %172, %173 : vector<2x32xf32>
    %175 = math.tanh %174 : vector<2x32xf32>
    %176 = arith.mulf %171, %175 : vector<2x32xf32>
    %177 = vector.extract_strided_slice %160 {offsets = [0, 0], sizes = [2, 96], strides = [1, 1]} : vector<2x128xf32> to vector<2x96xf32>
    %178 = arith.negf %177 : vector<2x96xf32>
    %179 = math.exp %178 : vector<2x96xf32>
    %cst_38 = arith.constant 1.000000e+00 : f32
    %180 = vector.broadcast %cst_38 : f32 to vector<2x96xf32>
    %181 = arith.addf %180, %179 : vector<2x96xf32>
    %182 = arith.divf %180, %181 : vector<2x96xf32>
    %183 = vector.extract_strided_slice %160 {offsets = [0, 96], sizes = [2, 32], strides = [1, 1]} : vector<2x128xf32> to vector<2x32xf32>
    %184 = math.tanh %183 : vector<2x32xf32>
    %185 = vector.extract_strided_slice %182 {offsets = [0, 0], sizes = [2, 32], strides = [1, 1]} : vector<2x96xf32> to vector<2x32xf32>
    %186 = vector.extract_strided_slice %182 {offsets = [0, 32], sizes = [2, 32], strides = [1, 1]} : vector<2x96xf32> to vector<2x32xf32>
    %187 = vector.extract_strided_slice %182 {offsets = [0, 64], sizes = [2, 32], strides = [1, 1]} : vector<2x96xf32> to vector<2x32xf32>
    %188 = arith.mulf %186, %143 : vector<2x32xf32>
    %189 = arith.mulf %185, %184 : vector<2x32xf32>
    %190 = arith.addf %188, %189 : vector<2x32xf32>
    %191 = math.tanh %190 : vector<2x32xf32>
    %192 = arith.mulf %187, %191 : vector<2x32xf32>
    %193 = arith.truncf %176 : vector<2x32xf32> to vector<2x32xbf16>
    %c6_39 = arith.constant 6 : index
    %c0_40 = arith.constant 0 : index
    %194 = vector.load %arg4[%c6_39, %c0_40] : memref<32x32xbf16, #tpu.memory_space<vmem>>, vector<2x32xbf16>
    tpu.vector_store %arg4[%c6_39, %c0_40], %193 {strides = array<i32>} : memref<32x32xbf16, #tpu.memory_space<vmem>>, vector<2x32xbf16>,
    %195 = arith.truncf %192 : vector<2x32xf32> to vector<2x32xbf16>
    %c24_41 = arith.constant 24 : index
    %c0_42 = arith.constant 0 : index
    %196 = vector.load %arg5[%c24_41, %c0_42] : memref<32x32xbf16, #tpu.memory_space<vmem>>, vector<2x32xbf16>
    tpu.vector_store %arg5[%c24_41, %c0_42], %195 {strides = array<i32>} : memref<32x32xbf16, #tpu.memory_space<vmem>>, vector<2x32xbf16>,
    %197 = tpu.concatenate %176, %192 in 1 : vector<2x32xf32>, vector<2x32xf32> -> vector<2x64xf32>
    %198 = arith.truncf %197 : vector<2x64xf32> to vector<2x64xbf16>
    %cst_43 = arith.constant dense<0.000000e+00> : vector<2x256xf32>
    %199 = tpu.matmul %198, %3, %cst_43 {dimension_numbers = #tpu.dot_dimension_numbers<[1], [0], [0], [1], [0, 0, 1, 1], [], []>} : vector<2x64xbf16>, vector<64x256xbf16>, vector<2x256xf32> -> vector<2x256xf32>
    %c8 = arith.constant 8 : index
    %c0_44 = arith.constant 0 : index
    %200 = vector.load %arg1[%c8, %c0_44] : memref<32x128xbf16, #tpu.memory_space<vmem>>, vector<2x128xbf16>
    %201 = vector.extract_strided_slice %199 {offsets = [0, 0], sizes = [2, 128], strides = [1, 1]} : vector<2x256xf32> to vector<2x128xf32>
    %202 = arith.extf %200 : vector<2x128xbf16> to vector<2x128xf32>
    %203 = arith.addf %202, %201 : vector<2x128xf32>
    %c22 = arith.constant 22 : index
    %c0_45 = arith.constant 0 : index
    %204 = vector.load %arg2[%c22, %c0_45] : memref<32x128xbf16, #tpu.memory_space<vmem>>, vector<2x128xbf16>
    %205 = vector.extract_strided_slice %199 {offsets = [0, 128], sizes = [2, 128], strides = [1, 1]} : vector<2x256xf32> to vector<2x128xf32>
    %206 = arith.extf %204 : vector<2x128xbf16> to vector<2x128xf32>
    %207 = arith.addf %206, %205 : vector<2x128xf32>
    %208 = vector.extract_strided_slice %203 {offsets = [0, 0], sizes = [2, 96], strides = [1, 1]} : vector<2x128xf32> to vector<2x96xf32>
    %209 = arith.negf %208 : vector<2x96xf32>
    %210 = math.exp %209 : vector<2x96xf32>
    %cst_46 = arith.constant 1.000000e+00 : f32
    %211 = vector.broadcast %cst_46 : f32 to vector<2x96xf32>
    %212 = arith.addf %211, %210 : vector<2x96xf32>
    %213 = arith.divf %211, %212 : vector<2x96xf32>
    %214 = vector.extract_strided_slice %203 {offsets = [0, 96], sizes = [2, 32], strides = [1, 1]} : vector<2x128xf32> to vector<2x32xf32>
    %215 = math.tanh %214 : vector<2x32xf32>
    %216 = vector.extract_strided_slice %213 {offsets = [0, 0], sizes = [2, 32], strides = [1, 1]} : vector<2x96xf32> to vector<2x32xf32>
    %217 = vector.extract_strided_slice %213 {offsets = [0, 32], sizes = [2, 32], strides = [1, 1]} : vector<2x96xf32> to vector<2x32xf32>
    %218 = vector.extract_strided_slice %213 {offsets = [0, 64], sizes = [2, 32], strides = [1, 1]} : vector<2x96xf32> to vector<2x32xf32>
    %219 = arith.mulf %217, %174 : vector<2x32xf32>
    %220 = arith.mulf %216, %215 : vector<2x32xf32>
    %221 = arith.addf %219, %220 : vector<2x32xf32>
    %222 = math.tanh %221 : vector<2x32xf32>
    %223 = arith.mulf %218, %222 : vector<2x32xf32>
    %224 = vector.extract_strided_slice %207 {offsets = [0, 0], sizes = [2, 96], strides = [1, 1]} : vector<2x128xf32> to vector<2x96xf32>
    %225 = arith.negf %224 : vector<2x96xf32>
    %226 = math.exp %225 : vector<2x96xf32>
    %cst_47 = arith.constant 1.000000e+00 : f32
    %227 = vector.broadcast %cst_47 : f32 to vector<2x96xf32>
    %228 = arith.addf %227, %226 : vector<2x96xf32>
    %229 = arith.divf %227, %228 : vector<2x96xf32>
    %230 = vector.extract_strided_slice %207 {offsets = [0, 96], sizes = [2, 32], strides = [1, 1]} : vector<2x128xf32> to vector<2x32xf32>
    %231 = math.tanh %230 : vector<2x32xf32>
    %232 = vector.extract_strided_slice %229 {offsets = [0, 0], sizes = [2, 32], strides = [1, 1]} : vector<2x96xf32> to vector<2x32xf32>
    %233 = vector.extract_strided_slice %229 {offsets = [0, 32], sizes = [2, 32], strides = [1, 1]} : vector<2x96xf32> to vector<2x32xf32>
    %234 = vector.extract_strided_slice %229 {offsets = [0, 64], sizes = [2, 32], strides = [1, 1]} : vector<2x96xf32> to vector<2x32xf32>
    %235 = arith.mulf %233, %190 : vector<2x32xf32>
    %236 = arith.mulf %232, %231 : vector<2x32xf32>
    %237 = arith.addf %235, %236 : vector<2x32xf32>
    %238 = math.tanh %237 : vector<2x32xf32>
    %239 = arith.mulf %234, %238 : vector<2x32xf32>
    %240 = arith.truncf %223 : vector<2x32xf32> to vector<2x32xbf16>
    %c8_48 = arith.constant 8 : index
    %c0_49 = arith.constant 0 : index
    %241 = vector.load %arg4[%c8_48, %c0_49] : memref<32x32xbf16, #tpu.memory_space<vmem>>, vector<2x32xbf16>
    tpu.vector_store %arg4[%c8_48, %c0_49], %240 {strides = array<i32>} : memref<32x32xbf16, #tpu.memory_space<vmem>>, vector<2x32xbf16>,
    %242 = arith.truncf %239 : vector<2x32xf32> to vector<2x32xbf16>
    %c22_50 = arith.constant 22 : index
    %c0_51 = arith.constant 0 : index
    %243 = vector.load %arg5[%c22_50, %c0_51] : memref<32x32xbf16, #tpu.memory_space<vmem>>, vector<2x32xbf16>
    tpu.vector_store %arg5[%c22_50, %c0_51], %242 {strides = array<i32>} : memref<32x32xbf16, #tpu.memory_space<vmem>>, vector<2x32xbf16>,
    %244 = tpu.concatenate %223, %239 in 1 : vector<2x32xf32>, vector<2x32xf32> -> vector<2x64xf32>
    %245 = arith.truncf %244 : vector<2x64xf32> to vector<2x64xbf16>
    %cst_52 = arith.constant dense<0.000000e+00> : vector<2x256xf32>
    %246 = tpu.matmul %245, %3, %cst_52 {dimension_numbers = #tpu.dot_dimension_numbers<[1], [0], [0], [1], [0, 0, 1, 1], [], []>} : vector<2x64xbf16>, vector<64x256xbf16>, vector<2x256xf32> -> vector<2x256xf32>
    %c10 = arith.constant 10 : index
    %c0_53 = arith.constant 0 : index
    %247 = vector.load %arg1[%c10, %c0_53] : memref<32x128xbf16, #tpu.memory_space<vmem>>, vector<2x128xbf16>
    %248 = vector.extract_strided_slice %246 {offsets = [0, 0], sizes = [2, 128], strides = [1, 1]} : vector<2x256xf32> to vector<2x128xf32>
    %249 = arith.extf %247 : vector<2x128xbf16> to vector<2x128xf32>
    %250 = arith.addf %249, %248 : vector<2x128xf32>
    %c20 = arith.constant 20 : index
    %c0_54 = arith.constant 0 : index
    %251 = vector.load %arg2[%c20, %c0_54] : memref<32x128xbf16, #tpu.memory_space<vmem>>, vector<2x128xbf16>
    %252 = vector.extract_strided_slice %246 {offsets = [0, 128], sizes = [2, 128], strides = [1, 1]} : vector<2x256xf32> to vector<2x128xf32>
    %253 = arith.extf %251 : vector<2x128xbf16> to vector<2x128xf32>
    %254 = arith.addf %253, %252 : vector<2x128xf32>
    %255 = vector.extract_strided_slice %250 {offsets = [0, 0], sizes = [2, 96], strides = [1, 1]} : vector<2x128xf32> to vector<2x96xf32>
    %256 = arith.negf %255 : vector<2x96xf32>
    %257 = math.exp %256 : vector<2x96xf32>
    %cst_55 = arith.constant 1.000000e+00 : f32
    %258 = vector.broadcast %cst_55 : f32 to vector<2x96xf32>
    %259 = arith.addf %258, %257 : vector<2x96xf32>
    %260 = arith.divf %258, %259 : vector<2x96xf32>
    %261 = vector.extract_strided_slice %250 {offsets = [0, 96], sizes = [2, 32], strides = [1, 1]} : vector<2x128xf32> to vector<2x32xf32>
    %262 = math.tanh %261 : vector<2x32xf32>
    %263 = vector.extract_strided_slice %260 {offsets = [0, 0], sizes = [2, 32], strides = [1, 1]} : vector<2x96xf32> to vector<2x32xf32>
    %264 = vector.extract_strided_slice %260 {offsets = [0, 32], sizes = [2, 32], strides = [1, 1]} : vector<2x96xf32> to vector<2x32xf32>
    %265 = vector.extract_strided_slice %260 {offsets = [0, 64], sizes = [2, 32], strides = [1, 1]} : vector<2x96xf32> to vector<2x32xf32>
    %266 = arith.mulf %264, %221 : vector<2x32xf32>
    %267 = arith.mulf %263, %262 : vector<2x32xf32>
    %268 = arith.addf %266, %267 : vector<2x32xf32>
    %269 = math.tanh %268 : vector<2x32xf32>
    %270 = arith.mulf %265, %269 : vector<2x32xf32>
    %271 = vector.extract_strided_slice %254 {offsets = [0, 0], sizes = [2, 96], strides = [1, 1]} : vector<2x128xf32> to vector<2x96xf32>
    %272 = arith.negf %271 : vector<2x96xf32>
    %273 = math.exp %272 : vector<2x96xf32>
    %cst_56 = arith.constant 1.000000e+00 : f32
    %274 = vector.broadcast %cst_56 : f32 to vector<2x96xf32>
    %275 = arith.addf %274, %273 : vector<2x96xf32>
    %276 = arith.divf %274, %275 : vector<2x96xf32>
    %277 = vector.extract_strided_slice %254 {offsets = [0, 96], sizes = [2, 32], strides = [1, 1]} : vector<2x128xf32> to vector<2x32xf32>
    %278 = math.tanh %277 : vector<2x32xf32>
    %279 = vector.extract_strided_slice %276 {offsets = [0, 0], sizes = [2, 32], strides = [1, 1]} : vector<2x96xf32> to vector<2x32xf32>
    %280 = vector.extract_strided_slice %276 {offsets = [0, 32], sizes = [2, 32], strides = [1, 1]} : vector<2x96xf32> to vector<2x32xf32>
    %281 = vector.extract_strided_slice %276 {offsets = [0, 64], sizes = [2, 32], strides = [1, 1]} : vector<2x96xf32> to vector<2x32xf32>
    %282 = arith.mulf %280, %237 : vector<2x32xf32>
    %283 = arith.mulf %279, %278 : vector<2x32xf32>
    %284 = arith.addf %282, %283 : vector<2x32xf32>
    %285 = math.tanh %284 : vector<2x32xf32>
    %286 = arith.mulf %281, %285 : vector<2x32xf32>
    %287 = arith.truncf %270 : vector<2x32xf32> to vector<2x32xbf16>
    %c10_57 = arith.constant 10 : index
    %c0_58 = arith.constant 0 : index
    %288 = vector.load %arg4[%c10_57, %c0_58] : memref<32x32xbf16, #tpu.memory_space<vmem>>, vector<2x32xbf16>
    tpu.vector_store %arg4[%c10_57, %c0_58], %287 {strides = array<i32>} : memref<32x32xbf16, #tpu.memory_space<vmem>>, vector<2x32xbf16>,
    %289 = arith.truncf %286 : vector<2x32xf32> to vector<2x32xbf16>
    %c20_59 = arith.constant 20 : index
    %c0_60 = arith.constant 0 : index
    %290 = vector.load %arg5[%c20_59, %c0_60] : memref<32x32xbf16, #tpu.memory_space<vmem>>, vector<2x32xbf16>
    tpu.vector_store %arg5[%c20_59, %c0_60], %289 {strides = array<i32>} : memref<32x32xbf16, #tpu.memory_space<vmem>>, vector<2x32xbf16>,
    %291 = tpu.concatenate %270, %286 in 1 : vector<2x32xf32>, vector<2x32xf32> -> vector<2x64xf32>
    %292 = arith.truncf %291 : vector<2x64xf32> to vector<2x64xbf16>
    %cst_61 = arith.constant dense<0.000000e+00> : vector<2x256xf32>
    %293 = tpu.matmul %292, %3, %cst_61 {dimension_numbers = #tpu.dot_dimension_numbers<[1], [0], [0], [1], [0, 0, 1, 1], [], []>} : vector<2x64xbf16>, vector<64x256xbf16>, vector<2x256xf32> -> vector<2x256xf32>
    %c12 = arith.constant 12 : index
    %c0_62 = arith.constant 0 : index
    %294 = vector.load %arg1[%c12, %c0_62] : memref<32x128xbf16, #tpu.memory_space<vmem>>, vector<2x128xbf16>
    %295 = vector.extract_strided_slice %293 {offsets = [0, 0], sizes = [2, 128], strides = [1, 1]} : vector<2x256xf32> to vector<2x128xf32>
    %296 = arith.extf %294 : vector<2x128xbf16> to vector<2x128xf32>
    %297 = arith.addf %296, %295 : vector<2x128xf32>
    %c18 = arith.constant 18 : index
    %c0_63 = arith.constant 0 : index
    %298 = vector.load %arg2[%c18, %c0_63] : memref<32x128xbf16, #tpu.memory_space<vmem>>, vector<2x128xbf16>
    %299 = vector.extract_strided_slice %293 {offsets = [0, 128], sizes = [2, 128], strides = [1, 1]} : vector<2x256xf32> to vector<2x128xf32>
    %300 = arith.extf %298 : vector<2x128xbf16> to vector<2x128xf32>
    %301 = arith.addf %300, %299 : vector<2x128xf32>
    %302 = vector.extract_strided_slice %297 {offsets = [0, 0], sizes = [2, 96], strides = [1, 1]} : vector<2x128xf32> to vector<2x96xf32>
    %303 = arith.negf %302 : vector<2x96xf32>
    %304 = math.exp %303 : vector<2x96xf32>
    %cst_64 = arith.constant 1.000000e+00 : f32
    %305 = vector.broadcast %cst_64 : f32 to vector<2x96xf32>
    %306 = arith.addf %305, %304 : vector<2x96xf32>
    %307 = arith.divf %305, %306 : vector<2x96xf32>
    %308 = vector.extract_strided_slice %297 {offsets = [0, 96], sizes = [2, 32], strides = [1, 1]} : vector<2x128xf32> to vector<2x32xf32>
    %309 = math.tanh %308 : vector<2x32xf32>
    %310 = vector.extract_strided_slice %307 {offsets = [0, 0], sizes = [2, 32], strides = [1, 1]} : vector<2x96xf32> to vector<2x32xf32>
    %311 = vector.extract_strided_slice %307 {offsets = [0, 32], sizes = [2, 32], strides = [1, 1]} : vector<2x96xf32> to vector<2x32xf32>
    %312 = vector.extract_strided_slice %307 {offsets = [0, 64], sizes = [2, 32], strides = [1, 1]} : vector<2x96xf32> to vector<2x32xf32>
    %313 = arith.mulf %311, %268 : vector<2x32xf32>
    %314 = arith.mulf %310, %309 : vector<2x32xf32>
    %315 = arith.addf %313, %314 : vector<2x32xf32>
    %316 = math.tanh %315 : vector<2x32xf32>
    %317 = arith.mulf %312, %316 : vector<2x32xf32>
    %318 = vector.extract_strided_slice %301 {offsets = [0, 0], sizes = [2, 96], strides = [1, 1]} : vector<2x128xf32> to vector<2x96xf32>
    %319 = arith.negf %318 : vector<2x96xf32>
    %320 = math.exp %319 : vector<2x96xf32>
    %cst_65 = arith.constant 1.000000e+00 : f32
    %321 = vector.broadcast %cst_65 : f32 to vector<2x96xf32>
    %322 = arith.addf %321, %320 : vector<2x96xf32>
    %323 = arith.divf %321, %322 : vector<2x96xf32>
    %324 = vector.extract_strided_slice %301 {offsets = [0, 96], sizes = [2, 32], strides = [1, 1]} : vector<2x128xf32> to vector<2x32xf32>
    %325 = math.tanh %324 : vector<2x32xf32>
    %326 = vector.extract_strided_slice %323 {offsets = [0, 0], sizes = [2, 32], strides = [1, 1]} : vector<2x96xf32> to vector<2x32xf32>
    %327 = vector.extract_strided_slice %323 {offsets = [0, 32], sizes = [2, 32], strides = [1, 1]} : vector<2x96xf32> to vector<2x32xf32>
    %328 = vector.extract_strided_slice %323 {offsets = [0, 64], sizes = [2, 32], strides = [1, 1]} : vector<2x96xf32> to vector<2x32xf32>
    %329 = arith.mulf %327, %284 : vector<2x32xf32>
    %330 = arith.mulf %326, %325 : vector<2x32xf32>
    %331 = arith.addf %329, %330 : vector<2x32xf32>
    %332 = math.tanh %331 : vector<2x32xf32>
    %333 = arith.mulf %328, %332 : vector<2x32xf32>
    %334 = arith.truncf %317 : vector<2x32xf32> to vector<2x32xbf16>
    %c12_66 = arith.constant 12 : index
    %c0_67 = arith.constant 0 : index
    %335 = vector.load %arg4[%c12_66, %c0_67] : memref<32x32xbf16, #tpu.memory_space<vmem>>, vector<2x32xbf16>
    tpu.vector_store %arg4[%c12_66, %c0_67], %334 {strides = array<i32>} : memref<32x32xbf16, #tpu.memory_space<vmem>>, vector<2x32xbf16>,
    %336 = arith.truncf %333 : vector<2x32xf32> to vector<2x32xbf16>
    %c18_68 = arith.constant 18 : index
    %c0_69 = arith.constant 0 : index
    %337 = vector.load %arg5[%c18_68, %c0_69] : memref<32x32xbf16, #tpu.memory_space<vmem>>, vector<2x32xbf16>
    tpu.vector_store %arg5[%c18_68, %c0_69], %336 {strides = array<i32>} : memref<32x32xbf16, #tpu.memory_space<vmem>>, vector<2x32xbf16>,
    %338 = tpu.concatenate %317, %333 in 1 : vector<2x32xf32>, vector<2x32xf32> -> vector<2x64xf32>
    %339 = arith.truncf %338 : vector<2x64xf32> to vector<2x64xbf16>
    %cst_70 = arith.constant dense<0.000000e+00> : vector<2x256xf32>
    %340 = tpu.matmul %339, %3, %cst_70 {dimension_numbers = #tpu.dot_dimension_numbers<[1], [0], [0], [1], [0, 0, 1, 1], [], []>} : vector<2x64xbf16>, vector<64x256xbf16>, vector<2x256xf32> -> vector<2x256xf32>
    %c14 = arith.constant 14 : index
    %c0_71 = arith.constant 0 : index
    %341 = vector.load %arg1[%c14, %c0_71] : memref<32x128xbf16, #tpu.memory_space<vmem>>, vector<2x128xbf16>
    %342 = vector.extract_strided_slice %340 {offsets = [0, 0], sizes = [2, 128], strides = [1, 1]} : vector<2x256xf32> to vector<2x128xf32>
    %343 = arith.extf %341 : vector<2x128xbf16> to vector<2x128xf32>
    %344 = arith.addf %343, %342 : vector<2x128xf32>
    %c16 = arith.constant 16 : index
    %c0_72 = arith.constant 0 : index
    %345 = vector.load %arg2[%c16, %c0_72] : memref<32x128xbf16, #tpu.memory_space<vmem>>, vector<2x128xbf16>
    %346 = vector.extract_strided_slice %340 {offsets = [0, 128], sizes = [2, 128], strides = [1, 1]} : vector<2x256xf32> to vector<2x128xf32>
    %347 = arith.extf %345 : vector<2x128xbf16> to vector<2x128xf32>
    %348 = arith.addf %347, %346 : vector<2x128xf32>
    %349 = vector.extract_strided_slice %344 {offsets = [0, 0], sizes = [2, 96], strides = [1, 1]} : vector<2x128xf32> to vector<2x96xf32>
    %350 = arith.negf %349 : vector<2x96xf32>
    %351 = math.exp %350 : vector<2x96xf32>
    %cst_73 = arith.constant 1.000000e+00 : f32
    %352 = vector.broadcast %cst_73 : f32 to vector<2x96xf32>
    %353 = arith.addf %352, %351 : vector<2x96xf32>
    %354 = arith.divf %352, %353 : vector<2x96xf32>
    %355 = vector.extract_strided_slice %344 {offsets = [0, 96], sizes = [2, 32], strides = [1, 1]} : vector<2x128xf32> to vector<2x32xf32>
    %356 = math.tanh %355 : vector<2x32xf32>
    %357 = vector.extract_strided_slice %354 {offsets = [0, 0], sizes = [2, 32], strides = [1, 1]} : vector<2x96xf32> to vector<2x32xf32>
    %358 = vector.extract_strided_slice %354 {offsets = [0, 32], sizes = [2, 32], strides = [1, 1]} : vector<2x96xf32> to vector<2x32xf32>
    %359 = vector.extract_strided_slice %354 {offsets = [0, 64], sizes = [2, 32], strides = [1, 1]} : vector<2x96xf32> to vector<2x32xf32>
    %360 = arith.mulf %358, %315 : vector<2x32xf32>
    %361 = arith.mulf %357, %356 : vector<2x32xf32>
    %362 = arith.addf %360, %361 : vector<2x32xf32>
    %363 = math.tanh %362 : vector<2x32xf32>
    %364 = arith.mulf %359, %363 : vector<2x32xf32>
    %365 = vector.extract_strided_slice %348 {offsets = [0, 0], sizes = [2, 96], strides = [1, 1]} : vector<2x128xf32> to vector<2x96xf32>
    %366 = arith.negf %365 : vector<2x96xf32>
    %367 = math.exp %366 : vector<2x96xf32>
    %cst_74 = arith.constant 1.000000e+00 : f32
    %368 = vector.broadcast %cst_74 : f32 to vector<2x96xf32>
    %369 = arith.addf %368, %367 : vector<2x96xf32>
    %370 = arith.divf %368, %369 : vector<2x96xf32>
    %371 = vector.extract_strided_slice %348 {offsets = [0, 96], sizes = [2, 32], strides = [1, 1]} : vector<2x128xf32> to vector<2x32xf32>
    %372 = math.tanh %371 : vector<2x32xf32>
    %373 = vector.extract_strided_slice %370 {offsets = [0, 0], sizes = [2, 32], strides = [1, 1]} : vector<2x96xf32> to vector<2x32xf32>
    %374 = vector.extract_strided_slice %370 {offsets = [0, 32], sizes = [2, 32], strides = [1, 1]} : vector<2x96xf32> to vector<2x32xf32>
    %375 = vector.extract_strided_slice %370 {offsets = [0, 64], sizes = [2, 32], strides = [1, 1]} : vector<2x96xf32> to vector<2x32xf32>
    %376 = arith.mulf %374, %331 : vector<2x32xf32>
    %377 = arith.mulf %373, %372 : vector<2x32xf32>
    %378 = arith.addf %376, %377 : vector<2x32xf32>
    %379 = math.tanh %378 : vector<2x32xf32>
    %380 = arith.mulf %375, %379 : vector<2x32xf32>
    %381 = arith.truncf %364 : vector<2x32xf32> to vector<2x32xbf16>
    %c14_75 = arith.constant 14 : index
    %c0_76 = arith.constant 0 : index
    %382 = vector.load %arg4[%c14_75, %c0_76] : memref<32x32xbf16, #tpu.memory_space<vmem>>, vector<2x32xbf16>
    tpu.vector_store %arg4[%c14_75, %c0_76], %381 {strides = array<i32>} : memref<32x32xbf16, #tpu.memory_space<vmem>>, vector<2x32xbf16>,
    %383 = arith.truncf %380 : vector<2x32xf32> to vector<2x32xbf16>
    %c16_77 = arith.constant 16 : index
    %c0_78 = arith.constant 0 : index
    %384 = vector.load %arg5[%c16_77, %c0_78] : memref<32x32xbf16, #tpu.memory_space<vmem>>, vector<2x32xbf16>
    tpu.vector_store %arg5[%c16_77, %c0_78], %383 {strides = array<i32>} : memref<32x32xbf16, #tpu.memory_space<vmem>>, vector<2x32xbf16>,
    %385 = tpu.concatenate %364, %380 in 1 : vector<2x32xf32>, vector<2x32xf32> -> vector<2x64xf32>
    %386 = arith.truncf %385 : vector<2x64xf32> to vector<2x64xbf16>
    %cst_79 = arith.constant dense<0.000000e+00> : vector<2x256xf32>
    %387 = tpu.matmul %386, %3, %cst_79 {dimension_numbers = #tpu.dot_dimension_numbers<[1], [0], [0], [1], [0, 0, 1, 1], [], []>} : vector<2x64xbf16>, vector<64x256xbf16>, vector<2x256xf32> -> vector<2x256xf32>
    %c16_80 = arith.constant 16 : index
    %c0_81 = arith.constant 0 : index
    %388 = vector.load %arg1[%c16_80, %c0_81] : memref<32x128xbf16, #tpu.memory_space<vmem>>, vector<2x128xbf16>
    %389 = vector.extract_strided_slice %387 {offsets = [0, 0], sizes = [2, 128], strides = [1, 1]} : vector<2x256xf32> to vector<2x128xf32>
    %390 = arith.extf %388 : vector<2x128xbf16> to vector<2x128xf32>
    %391 = arith.addf %390, %389 : vector<2x128xf32>
    %c14_82 = arith.constant 14 : index
    %c0_83 = arith.constant 0 : index
    %392 = vector.load %arg2[%c14_82, %c0_83] : memref<32x128xbf16, #tpu.memory_space<vmem>>, vector<2x128xbf16>
    %393 = vector.extract_strided_slice %387 {offsets = [0, 128], sizes = [2, 128], strides = [1, 1]} : vector<2x256xf32> to vector<2x128xf32>
    %394 = arith.extf %392 : vector<2x128xbf16> to vector<2x128xf32>
    %395 = arith.addf %394, %393 : vector<2x128xf32>
    %396 = vector.extract_strided_slice %391 {offsets = [0, 0], sizes = [2, 96], strides = [1, 1]} : vector<2x128xf32> to vector<2x96xf32>
    %397 = arith.negf %396 : vector<2x96xf32>
    %398 = math.exp %397 : vector<2x96xf32>
    %cst_84 = arith.constant 1.000000e+00 : f32
    %399 = vector.broadcast %cst_84 : f32 to vector<2x96xf32>
    %400 = arith.addf %399, %398 : vector<2x96xf32>
    %401 = arith.divf %399, %400 : vector<2x96xf32>
    %402 = vector.extract_strided_slice %391 {offsets = [0, 96], sizes = [2, 32], strides = [1, 1]} : vector<2x128xf32> to vector<2x32xf32>
    %403 = math.tanh %402 : vector<2x32xf32>
    %404 = vector.extract_strided_slice %401 {offsets = [0, 0], sizes = [2, 32], strides = [1, 1]} : vector<2x96xf32> to vector<2x32xf32>
    %405 = vector.extract_strided_slice %401 {offsets = [0, 32], sizes = [2, 32], strides = [1, 1]} : vector<2x96xf32> to vector<2x32xf32>
    %406 = vector.extract_strided_slice %401 {offsets = [0, 64], sizes = [2, 32], strides = [1, 1]} : vector<2x96xf32> to vector<2x32xf32>
    %407 = arith.mulf %405, %362 : vector<2x32xf32>
    %408 = arith.mulf %404, %403 : vector<2x32xf32>
    %409 = arith.addf %407, %408 : vector<2x32xf32>
    %410 = math.tanh %409 : vector<2x32xf32>
    %411 = arith.mulf %406, %410 : vector<2x32xf32>
    %412 = vector.extract_strided_slice %395 {offsets = [0, 0], sizes = [2, 96], strides = [1, 1]} : vector<2x128xf32> to vector<2x96xf32>
    %413 = arith.negf %412 : vector<2x96xf32>
    %414 = math.exp %413 : vector<2x96xf32>
    %cst_85 = arith.constant 1.000000e+00 : f32
    %415 = vector.broadcast %cst_85 : f32 to vector<2x96xf32>
    %416 = arith.addf %415, %414 : vector<2x96xf32>
    %417 = arith.divf %415, %416 : vector<2x96xf32>
    %418 = vector.extract_strided_slice %395 {offsets = [0, 96], sizes = [2, 32], strides = [1, 1]} : vector<2x128xf32> to vector<2x32xf32>
    %419 = math.tanh %418 : vector<2x32xf32>
    %420 = vector.extract_strided_slice %417 {offsets = [0, 0], sizes = [2, 32], strides = [1, 1]} : vector<2x96xf32> to vector<2x32xf32>
    %421 = vector.extract_strided_slice %417 {offsets = [0, 32], sizes = [2, 32], strides = [1, 1]} : vector<2x96xf32> to vector<2x32xf32>
    %422 = vector.extract_strided_slice %417 {offsets = [0, 64], sizes = [2, 32], strides = [1, 1]} : vector<2x96xf32> to vector<2x32xf32>
    %423 = arith.mulf %421, %378 : vector<2x32xf32>
    %424 = arith.mulf %420, %419 : vector<2x32xf32>
    %425 = arith.addf %423, %424 : vector<2x32xf32>
    %426 = math.tanh %425 : vector<2x32xf32>
    %427 = arith.mulf %422, %426 : vector<2x32xf32>
    %428 = arith.truncf %411 : vector<2x32xf32> to vector<2x32xbf16>
    %c16_86 = arith.constant 16 : index
    %c0_87 = arith.constant 0 : index
    %429 = vector.load %arg4[%c16_86, %c0_87] : memref<32x32xbf16, #tpu.memory_space<vmem>>, vector<2x32xbf16>
    tpu.vector_store %arg4[%c16_86, %c0_87], %428 {strides = array<i32>} : memref<32x32xbf16, #tpu.memory_space<vmem>>, vector<2x32xbf16>,
    %430 = arith.truncf %427 : vector<2x32xf32> to vector<2x32xbf16>
    %c14_88 = arith.constant 14 : index
    %c0_89 = arith.constant 0 : index
    %431 = vector.load %arg5[%c14_88, %c0_89] : memref<32x32xbf16, #tpu.memory_space<vmem>>, vector<2x32xbf16>
    tpu.vector_store %arg5[%c14_88, %c0_89], %430 {strides = array<i32>} : memref<32x32xbf16, #tpu.memory_space<vmem>>, vector<2x32xbf16>,
    %432 = tpu.concatenate %411, %427 in 1 : vector<2x32xf32>, vector<2x32xf32> -> vector<2x64xf32>
    %433 = arith.truncf %432 : vector<2x64xf32> to vector<2x64xbf16>
    %cst_90 = arith.constant dense<0.000000e+00> : vector<2x256xf32>
    %434 = tpu.matmul %433, %3, %cst_90 {dimension_numbers = #tpu.dot_dimension_numbers<[1], [0], [0], [1], [0, 0, 1, 1], [], []>} : vector<2x64xbf16>, vector<64x256xbf16>, vector<2x256xf32> -> vector<2x256xf32>
    %c18_91 = arith.constant 18 : index
    %c0_92 = arith.constant 0 : index
    %435 = vector.load %arg1[%c18_91, %c0_92] : memref<32x128xbf16, #tpu.memory_space<vmem>>, vector<2x128xbf16>
    %436 = vector.extract_strided_slice %434 {offsets = [0, 0], sizes = [2, 128], strides = [1, 1]} : vector<2x256xf32> to vector<2x128xf32>
    %437 = arith.extf %435 : vector<2x128xbf16> to vector<2x128xf32>
    %438 = arith.addf %437, %436 : vector<2x128xf32>
    %c12_93 = arith.constant 12 : index
    %c0_94 = arith.constant 0 : index
    %439 = vector.load %arg2[%c12_93, %c0_94] : memref<32x128xbf16, #tpu.memory_space<vmem>>, vector<2x128xbf16>
    %440 = vector.extract_strided_slice %434 {offsets = [0, 128], sizes = [2, 128], strides = [1, 1]} : vector<2x256xf32> to vector<2x128xf32>
    %441 = arith.extf %439 : vector<2x128xbf16> to vector<2x128xf32>
    %442 = arith.addf %441, %440 : vector<2x128xf32>
    %443 = vector.extract_strided_slice %438 {offsets = [0, 0], sizes = [2, 96], strides = [1, 1]} : vector<2x128xf32> to vector<2x96xf32>
    %444 = arith.negf %443 : vector<2x96xf32>
    %445 = math.exp %444 : vector<2x96xf32>
    %cst_95 = arith.constant 1.000000e+00 : f32
    %446 = vector.broadcast %cst_95 : f32 to vector<2x96xf32>
    %447 = arith.addf %446, %445 : vector<2x96xf32>
    %448 = arith.divf %446, %447 : vector<2x96xf32>
    %449 = vector.extract_strided_slice %438 {offsets = [0, 96], sizes = [2, 32], strides = [1, 1]} : vector<2x128xf32> to vector<2x32xf32>
    %450 = math.tanh %449 : vector<2x32xf32>
    %451 = vector.extract_strided_slice %448 {offsets = [0, 0], sizes = [2, 32], strides = [1, 1]} : vector<2x96xf32> to vector<2x32xf32>
    %452 = vector.extract_strided_slice %448 {offsets = [0, 32], sizes = [2, 32], strides = [1, 1]} : vector<2x96xf32> to vector<2x32xf32>
    %453 = vector.extract_strided_slice %448 {offsets = [0, 64], sizes = [2, 32], strides = [1, 1]} : vector<2x96xf32> to vector<2x32xf32>
    %454 = arith.mulf %452, %409 : vector<2x32xf32>
    %455 = arith.mulf %451, %450 : vector<2x32xf32>
    %456 = arith.addf %454, %455 : vector<2x32xf32>
    %457 = math.tanh %456 : vector<2x32xf32>
    %458 = arith.mulf %453, %457 : vector<2x32xf32>
    %459 = vector.extract_strided_slice %442 {offsets = [0, 0], sizes = [2, 96], strides = [1, 1]} : vector<2x128xf32> to vector<2x96xf32>
    %460 = arith.negf %459 : vector<2x96xf32>
    %461 = math.exp %460 : vector<2x96xf32>
    %cst_96 = arith.constant 1.000000e+00 : f32
    %462 = vector.broadcast %cst_96 : f32 to vector<2x96xf32>
    %463 = arith.addf %462, %461 : vector<2x96xf32>
    %464 = arith.divf %462, %463 : vector<2x96xf32>
    %465 = vector.extract_strided_slice %442 {offsets = [0, 96], sizes = [2, 32], strides = [1, 1]} : vector<2x128xf32> to vector<2x32xf32>
    %466 = math.tanh %465 : vector<2x32xf32>
    %467 = vector.extract_strided_slice %464 {offsets = [0, 0], sizes = [2, 32], strides = [1, 1]} : vector<2x96xf32> to vector<2x32xf32>
    %468 = vector.extract_strided_slice %464 {offsets = [0, 32], sizes = [2, 32], strides = [1, 1]} : vector<2x96xf32> to vector<2x32xf32>
    %469 = vector.extract_strided_slice %464 {offsets = [0, 64], sizes = [2, 32], strides = [1, 1]} : vector<2x96xf32> to vector<2x32xf32>
    %470 = arith.mulf %468, %425 : vector<2x32xf32>
    %471 = arith.mulf %467, %466 : vector<2x32xf32>
    %472 = arith.addf %470, %471 : vector<2x32xf32>
    %473 = math.tanh %472 : vector<2x32xf32>
    %474 = arith.mulf %469, %473 : vector<2x32xf32>
    %475 = arith.truncf %458 : vector<2x32xf32> to vector<2x32xbf16>
    %c18_97 = arith.constant 18 : index
    %c0_98 = arith.constant 0 : index
    %476 = vector.load %arg4[%c18_97, %c0_98] : memref<32x32xbf16, #tpu.memory_space<vmem>>, vector<2x32xbf16>
    tpu.vector_store %arg4[%c18_97, %c0_98], %475 {strides = array<i32>} : memref<32x32xbf16, #tpu.memory_space<vmem>>, vector<2x32xbf16>,
    %477 = arith.truncf %474 : vector<2x32xf32> to vector<2x32xbf16>
    %c12_99 = arith.constant 12 : index
    %c0_100 = arith.constant 0 : index
    %478 = vector.load %arg5[%c12_99, %c0_100] : memref<32x32xbf16, #tpu.memory_space<vmem>>, vector<2x32xbf16>
    tpu.vector_store %arg5[%c12_99, %c0_100], %477 {strides = array<i32>} : memref<32x32xbf16, #tpu.memory_space<vmem>>, vector<2x32xbf16>,
    %479 = tpu.concatenate %458, %474 in 1 : vector<2x32xf32>, vector<2x32xf32> -> vector<2x64xf32>
    %480 = arith.truncf %479 : vector<2x64xf32> to vector<2x64xbf16>
    %cst_101 = arith.constant dense<0.000000e+00> : vector<2x256xf32>
    %481 = tpu.matmul %480, %3, %cst_101 {dimension_numbers = #tpu.dot_dimension_numbers<[1], [0], [0], [1], [0, 0, 1, 1], [], []>} : vector<2x64xbf16>, vector<64x256xbf16>, vector<2x256xf32> -> vector<2x256xf32>
    %c20_102 = arith.constant 20 : index
    %c0_103 = arith.constant 0 : index
    %482 = vector.load %arg1[%c20_102, %c0_103] : memref<32x128xbf16, #tpu.memory_space<vmem>>, vector<2x128xbf16>
    %483 = vector.extract_strided_slice %481 {offsets = [0, 0], sizes = [2, 128], strides = [1, 1]} : vector<2x256xf32> to vector<2x128xf32>
    %484 = arith.extf %482 : vector<2x128xbf16> to vector<2x128xf32>
    %485 = arith.addf %484, %483 : vector<2x128xf32>
    %c10_104 = arith.constant 10 : index
    %c0_105 = arith.constant 0 : index
    %486 = vector.load %arg2[%c10_104, %c0_105] : memref<32x128xbf16, #tpu.memory_space<vmem>>, vector<2x128xbf16>
    %487 = vector.extract_strided_slice %481 {offsets = [0, 128], sizes = [2, 128], strides = [1, 1]} : vector<2x256xf32> to vector<2x128xf32>
    %488 = arith.extf %486 : vector<2x128xbf16> to vector<2x128xf32>
    %489 = arith.addf %488, %487 : vector<2x128xf32>
    %490 = vector.extract_strided_slice %485 {offsets = [0, 0], sizes = [2, 96], strides = [1, 1]} : vector<2x128xf32> to vector<2x96xf32>
    %491 = arith.negf %490 : vector<2x96xf32>
    %492 = math.exp %491 : vector<2x96xf32>
    %cst_106 = arith.constant 1.000000e+00 : f32
    %493 = vector.broadcast %cst_106 : f32 to vector<2x96xf32>
    %494 = arith.addf %493, %492 : vector<2x96xf32>
    %495 = arith.divf %493, %494 : vector<2x96xf32>
    %496 = vector.extract_strided_slice %485 {offsets = [0, 96], sizes = [2, 32], strides = [1, 1]} : vector<2x128xf32> to vector<2x32xf32>
    %497 = math.tanh %496 : vector<2x32xf32>
    %498 = vector.extract_strided_slice %495 {offsets = [0, 0], sizes = [2, 32], strides = [1, 1]} : vector<2x96xf32> to vector<2x32xf32>
    %499 = vector.extract_strided_slice %495 {offsets = [0, 32], sizes = [2, 32], strides = [1, 1]} : vector<2x96xf32> to vector<2x32xf32>
    %500 = vector.extract_strided_slice %495 {offsets = [0, 64], sizes = [2, 32], strides = [1, 1]} : vector<2x96xf32> to vector<2x32xf32>
    %501 = arith.mulf %499, %456 : vector<2x32xf32>
    %502 = arith.mulf %498, %497 : vector<2x32xf32>
    %503 = arith.addf %501, %502 : vector<2x32xf32>
    %504 = math.tanh %503 : vector<2x32xf32>
    %505 = arith.mulf %500, %504 : vector<2x32xf32>
    %506 = vector.extract_strided_slice %489 {offsets = [0, 0], sizes = [2, 96], strides = [1, 1]} : vector<2x128xf32> to vector<2x96xf32>
    %507 = arith.negf %506 : vector<2x96xf32>
    %508 = math.exp %507 : vector<2x96xf32>
    %cst_107 = arith.constant 1.000000e+00 : f32
    %509 = vector.broadcast %cst_107 : f32 to vector<2x96xf32>
    %510 = arith.addf %509, %508 : vector<2x96xf32>
    %511 = arith.divf %509, %510 : vector<2x96xf32>
    %512 = vector.extract_strided_slice %489 {offsets = [0, 96], sizes = [2, 32], strides = [1, 1]} : vector<2x128xf32> to vector<2x32xf32>
    %513 = math.tanh %512 : vector<2x32xf32>
    %514 = vector.extract_strided_slice %511 {offsets = [0, 0], sizes = [2, 32], strides = [1, 1]} : vector<2x96xf32> to vector<2x32xf32>
    %515 = vector.extract_strided_slice %511 {offsets = [0, 32], sizes = [2, 32], strides = [1, 1]} : vector<2x96xf32> to vector<2x32xf32>
    %516 = vector.extract_strided_slice %511 {offsets = [0, 64], sizes = [2, 32], strides = [1, 1]} : vector<2x96xf32> to vector<2x32xf32>
    %517 = arith.mulf %515, %472 : vector<2x32xf32>
    %518 = arith.mulf %514, %513 : vector<2x32xf32>
    %519 = arith.addf %517, %518 : vector<2x32xf32>
    %520 = math.tanh %519 : vector<2x32xf32>
    %521 = arith.mulf %516, %520 : vector<2x32xf32>
    %522 = arith.truncf %505 : vector<2x32xf32> to vector<2x32xbf16>
    %c20_108 = arith.constant 20 : index
    %c0_109 = arith.constant 0 : index
    %523 = vector.load %arg4[%c20_108, %c0_109] : memref<32x32xbf16, #tpu.memory_space<vmem>>, vector<2x32xbf16>
    tpu.vector_store %arg4[%c20_108, %c0_109], %522 {strides = array<i32>} : memref<32x32xbf16, #tpu.memory_space<vmem>>, vector<2x32xbf16>,
    %524 = arith.truncf %521 : vector<2x32xf32> to vector<2x32xbf16>
    %c10_110 = arith.constant 10 : index
    %c0_111 = arith.constant 0 : index
    %525 = vector.load %arg5[%c10_110, %c0_111] : memref<32x32xbf16, #tpu.memory_space<vmem>>, vector<2x32xbf16>
    tpu.vector_store %arg5[%c10_110, %c0_111], %524 {strides = array<i32>} : memref<32x32xbf16, #tpu.memory_space<vmem>>, vector<2x32xbf16>,
    %526 = tpu.concatenate %505, %521 in 1 : vector<2x32xf32>, vector<2x32xf32> -> vector<2x64xf32>
    %527 = arith.truncf %526 : vector<2x64xf32> to vector<2x64xbf16>
    %cst_112 = arith.constant dense<0.000000e+00> : vector<2x256xf32>
    %528 = tpu.matmul %527, %3, %cst_112 {dimension_numbers = #tpu.dot_dimension_numbers<[1], [0], [0], [1], [0, 0, 1, 1], [], []>} : vector<2x64xbf16>, vector<64x256xbf16>, vector<2x256xf32> -> vector<2x256xf32>
    %c22_113 = arith.constant 22 : index
    %c0_114 = arith.constant 0 : index
    %529 = vector.load %arg1[%c22_113, %c0_114] : memref<32x128xbf16, #tpu.memory_space<vmem>>, vector<2x128xbf16>
    %530 = vector.extract_strided_slice %528 {offsets = [0, 0], sizes = [2, 128], strides = [1, 1]} : vector<2x256xf32> to vector<2x128xf32>
    %531 = arith.extf %529 : vector<2x128xbf16> to vector<2x128xf32>
    %532 = arith.addf %531, %530 : vector<2x128xf32>
    %c8_115 = arith.constant 8 : index
    %c0_116 = arith.constant 0 : index
    %533 = vector.load %arg2[%c8_115, %c0_116] : memref<32x128xbf16, #tpu.memory_space<vmem>>, vector<2x128xbf16>
    %534 = vector.extract_strided_slice %528 {offsets = [0, 128], sizes = [2, 128], strides = [1, 1]} : vector<2x256xf32> to vector<2x128xf32>
    %535 = arith.extf %533 : vector<2x128xbf16> to vector<2x128xf32>
    %536 = arith.addf %535, %534 : vector<2x128xf32>
    %537 = vector.extract_strided_slice %532 {offsets = [0, 0], sizes = [2, 96], strides = [1, 1]} : vector<2x128xf32> to vector<2x96xf32>
    %538 = arith.negf %537 : vector<2x96xf32>
    %539 = math.exp %538 : vector<2x96xf32>
    %cst_117 = arith.constant 1.000000e+00 : f32
    %540 = vector.broadcast %cst_117 : f32 to vector<2x96xf32>
    %541 = arith.addf %540, %539 : vector<2x96xf32>
    %542 = arith.divf %540, %541 : vector<2x96xf32>
    %543 = vector.extract_strided_slice %532 {offsets = [0, 96], sizes = [2, 32], strides = [1, 1]} : vector<2x128xf32> to vector<2x32xf32>
    %544 = math.tanh %543 : vector<2x32xf32>
    %545 = vector.extract_strided_slice %542 {offsets = [0, 0], sizes = [2, 32], strides = [1, 1]} : vector<2x96xf32> to vector<2x32xf32>
    %546 = vector.extract_strided_slice %542 {offsets = [0, 32], sizes = [2, 32], strides = [1, 1]} : vector<2x96xf32> to vector<2x32xf32>
    %547 = vector.extract_strided_slice %542 {offsets = [0, 64], sizes = [2, 32], strides = [1, 1]} : vector<2x96xf32> to vector<2x32xf32>
    %548 = arith.mulf %546, %503 : vector<2x32xf32>
    %549 = arith.mulf %545, %544 : vector<2x32xf32>
    %550 = arith.addf %548, %549 : vector<2x32xf32>
    %551 = math.tanh %550 : vector<2x32xf32>
    %552 = arith.mulf %547, %551 : vector<2x32xf32>
    %553 = vector.extract_strided_slice %536 {offsets = [0, 0], sizes = [2, 96], strides = [1, 1]} : vector<2x128xf32> to vector<2x96xf32>
    %554 = arith.negf %553 : vector<2x96xf32>
    %555 = math.exp %554 : vector<2x96xf32>
    %cst_118 = arith.constant 1.000000e+00 : f32
    %556 = vector.broadcast %cst_118 : f32 to vector<2x96xf32>
    %557 = arith.addf %556, %555 : vector<2x96xf32>
    %558 = arith.divf %556, %557 : vector<2x96xf32>
    %559 = vector.extract_strided_slice %536 {offsets = [0, 96], sizes = [2, 32], strides = [1, 1]} : vector<2x128xf32> to vector<2x32xf32>
    %560 = math.tanh %559 : vector<2x32xf32>
    %561 = vector.extract_strided_slice %558 {offsets = [0, 0], sizes = [2, 32], strides = [1, 1]} : vector<2x96xf32> to vector<2x32xf32>
    %562 = vector.extract_strided_slice %558 {offsets = [0, 32], sizes = [2, 32], strides = [1, 1]} : vector<2x96xf32> to vector<2x32xf32>
    %563 = vector.extract_strided_slice %558 {offsets = [0, 64], sizes = [2, 32], strides = [1, 1]} : vector<2x96xf32> to vector<2x32xf32>
    %564 = arith.mulf %562, %519 : vector<2x32xf32>
    %565 = arith.mulf %561, %560 : vector<2x32xf32>
    %566 = arith.addf %564, %565 : vector<2x32xf32>
    %567 = math.tanh %566 : vector<2x32xf32>
    %568 = arith.mulf %563, %567 : vector<2x32xf32>
    %569 = arith.truncf %552 : vector<2x32xf32> to vector<2x32xbf16>
    %c22_119 = arith.constant 22 : index
    %c0_120 = arith.constant 0 : index
    %570 = vector.load %arg4[%c22_119, %c0_120] : memref<32x32xbf16, #tpu.memory_space<vmem>>, vector<2x32xbf16>
    tpu.vector_store %arg4[%c22_119, %c0_120], %569 {strides = array<i32>} : memref<32x32xbf16, #tpu.memory_space<vmem>>, vector<2x32xbf16>,
    %571 = arith.truncf %568 : vector<2x32xf32> to vector<2x32xbf16>
    %c8_121 = arith.constant 8 : index
    %c0_122 = arith.constant 0 : index
    %572 = vector.load %arg5[%c8_121, %c0_122] : memref<32x32xbf16, #tpu.memory_space<vmem>>, vector<2x32xbf16>
    tpu.vector_store %arg5[%c8_121, %c0_122], %571 {strides = array<i32>} : memref<32x32xbf16, #tpu.memory_space<vmem>>, vector<2x32xbf16>,
    %573 = tpu.concatenate %552, %568 in 1 : vector<2x32xf32>, vector<2x32xf32> -> vector<2x64xf32>
    %574 = arith.truncf %573 : vector<2x64xf32> to vector<2x64xbf16>
    %cst_123 = arith.constant dense<0.000000e+00> : vector<2x256xf32>
    %575 = tpu.matmul %574, %3, %cst_123 {dimension_numbers = #tpu.dot_dimension_numbers<[1], [0], [0], [1], [0, 0, 1, 1], [], []>} : vector<2x64xbf16>, vector<64x256xbf16>, vector<2x256xf32> -> vector<2x256xf32>
    %c24_124 = arith.constant 24 : index
    %c0_125 = arith.constant 0 : index
    %576 = vector.load %arg1[%c24_124, %c0_125] : memref<32x128xbf16, #tpu.memory_space<vmem>>, vector<2x128xbf16>
    %577 = vector.extract_strided_slice %575 {offsets = [0, 0], sizes = [2, 128], strides = [1, 1]} : vector<2x256xf32> to vector<2x128xf32>
    %578 = arith.extf %576 : vector<2x128xbf16> to vector<2x128xf32>
    %579 = arith.addf %578, %577 : vector<2x128xf32>
    %c6_126 = arith.constant 6 : index
    %c0_127 = arith.constant 0 : index
    %580 = vector.load %arg2[%c6_126, %c0_127] : memref<32x128xbf16, #tpu.memory_space<vmem>>, vector<2x128xbf16>
    %581 = vector.extract_strided_slice %575 {offsets = [0, 128], sizes = [2, 128], strides = [1, 1]} : vector<2x256xf32> to vector<2x128xf32>
    %582 = arith.extf %580 : vector<2x128xbf16> to vector<2x128xf32>
    %583 = arith.addf %582, %581 : vector<2x128xf32>
    %584 = vector.extract_strided_slice %579 {offsets = [0, 0], sizes = [2, 96], strides = [1, 1]} : vector<2x128xf32> to vector<2x96xf32>
    %585 = arith.negf %584 : vector<2x96xf32>
    %586 = math.exp %585 : vector<2x96xf32>
    %cst_128 = arith.constant 1.000000e+00 : f32
    %587 = vector.broadcast %cst_128 : f32 to vector<2x96xf32>
    %588 = arith.addf %587, %586 : vector<2x96xf32>
    %589 = arith.divf %587, %588 : vector<2x96xf32>
    %590 = vector.extract_strided_slice %579 {offsets = [0, 96], sizes = [2, 32], strides = [1, 1]} : vector<2x128xf32> to vector<2x32xf32>
    %591 = math.tanh %590 : vector<2x32xf32>
    %592 = vector.extract_strided_slice %589 {offsets = [0, 0], sizes = [2, 32], strides = [1, 1]} : vector<2x96xf32> to vector<2x32xf32>
    %593 = vector.extract_strided_slice %589 {offsets = [0, 32], sizes = [2, 32], strides = [1, 1]} : vector<2x96xf32> to vector<2x32xf32>
    %594 = vector.extract_strided_slice %589 {offsets = [0, 64], sizes = [2, 32], strides = [1, 1]} : vector<2x96xf32> to vector<2x32xf32>
    %595 = arith.mulf %593, %550 : vector<2x32xf32>
    %596 = arith.mulf %592, %591 : vector<2x32xf32>
    %597 = arith.addf %595, %596 : vector<2x32xf32>
    %598 = math.tanh %597 : vector<2x32xf32>
    %599 = arith.mulf %594, %598 : vector<2x32xf32>
    %600 = vector.extract_strided_slice %583 {offsets = [0, 0], sizes = [2, 96], strides = [1, 1]} : vector<2x128xf32> to vector<2x96xf32>
    %601 = arith.negf %600 : vector<2x96xf32>
    %602 = math.exp %601 : vector<2x96xf32>
    %cst_129 = arith.constant 1.000000e+00 : f32
    %603 = vector.broadcast %cst_129 : f32 to vector<2x96xf32>
    %604 = arith.addf %603, %602 : vector<2x96xf32>
    %605 = arith.divf %603, %604 : vector<2x96xf32>
    %606 = vector.extract_strided_slice %583 {offsets = [0, 96], sizes = [2, 32], strides = [1, 1]} : vector<2x128xf32> to vector<2x32xf32>
    %607 = math.tanh %606 : vector<2x32xf32>
    %608 = vector.extract_strided_slice %605 {offsets = [0, 0], sizes = [2, 32], strides = [1, 1]} : vector<2x96xf32> to vector<2x32xf32>
    %609 = vector.extract_strided_slice %605 {offsets = [0, 32], sizes = [2, 32], strides = [1, 1]} : vector<2x96xf32> to vector<2x32xf32>
    %610 = vector.extract_strided_slice %605 {offsets = [0, 64], sizes = [2, 32], strides = [1, 1]} : vector<2x96xf32> to vector<2x32xf32>
    %611 = arith.mulf %609, %566 : vector<2x32xf32>
    %612 = arith.mulf %608, %607 : vector<2x32xf32>
    %613 = arith.addf %611, %612 : vector<2x32xf32>
    %614 = math.tanh %613 : vector<2x32xf32>
    %615 = arith.mulf %610, %614 : vector<2x32xf32>
    %616 = arith.truncf %599 : vector<2x32xf32> to vector<2x32xbf16>
    %c24_130 = arith.constant 24 : index
    %c0_131 = arith.constant 0 : index
    %617 = vector.load %arg4[%c24_130, %c0_131] : memref<32x32xbf16, #tpu.memory_space<vmem>>, vector<2x32xbf16>
    tpu.vector_store %arg4[%c24_130, %c0_131], %616 {strides = array<i32>} : memref<32x32xbf16, #tpu.memory_space<vmem>>, vector<2x32xbf16>,
    %618 = arith.truncf %615 : vector<2x32xf32> to vector<2x32xbf16>
    %c6_132 = arith.constant 6 : index
    %c0_133 = arith.constant 0 : index
    %619 = vector.load %arg5[%c6_132, %c0_133] : memref<32x32xbf16, #tpu.memory_space<vmem>>, vector<2x32xbf16>
    tpu.vector_store %arg5[%c6_132, %c0_133], %618 {strides = array<i32>} : memref<32x32xbf16, #tpu.memory_space<vmem>>, vector<2x32xbf16>,
    %620 = tpu.concatenate %599, %615 in 1 : vector<2x32xf32>, vector<2x32xf32> -> vector<2x64xf32>
    %621 = arith.truncf %620 : vector<2x64xf32> to vector<2x64xbf16>
    %cst_134 = arith.constant dense<0.000000e+00> : vector<2x256xf32>
    %622 = tpu.matmul %621, %3, %cst_134 {dimension_numbers = #tpu.dot_dimension_numbers<[1], [0], [0], [1], [0, 0, 1, 1], [], []>} : vector<2x64xbf16>, vector<64x256xbf16>, vector<2x256xf32> -> vector<2x256xf32>
    %c26_135 = arith.constant 26 : index
    %c0_136 = arith.constant 0 : index
    %623 = vector.load %arg1[%c26_135, %c0_136] : memref<32x128xbf16, #tpu.memory_space<vmem>>, vector<2x128xbf16>
    %624 = vector.extract_strided_slice %622 {offsets = [0, 0], sizes = [2, 128], strides = [1, 1]} : vector<2x256xf32> to vector<2x128xf32>
    %625 = arith.extf %623 : vector<2x128xbf16> to vector<2x128xf32>
    %626 = arith.addf %625, %624 : vector<2x128xf32>
    %c4_137 = arith.constant 4 : index
    %c0_138 = arith.constant 0 : index
    %627 = vector.load %arg2[%c4_137, %c0_138] : memref<32x128xbf16, #tpu.memory_space<vmem>>, vector<2x128xbf16>
    %628 = vector.extract_strided_slice %622 {offsets = [0, 128], sizes = [2, 128], strides = [1, 1]} : vector<2x256xf32> to vector<2x128xf32>
    %629 = arith.extf %627 : vector<2x128xbf16> to vector<2x128xf32>
    %630 = arith.addf %629, %628 : vector<2x128xf32>
    %631 = vector.extract_strided_slice %626 {offsets = [0, 0], sizes = [2, 96], strides = [1, 1]} : vector<2x128xf32> to vector<2x96xf32>
    %632 = arith.negf %631 : vector<2x96xf32>
    %633 = math.exp %632 : vector<2x96xf32>
    %cst_139 = arith.constant 1.000000e+00 : f32
    %634 = vector.broadcast %cst_139 : f32 to vector<2x96xf32>
    %635 = arith.addf %634, %633 : vector<2x96xf32>
    %636 = arith.divf %634, %635 : vector<2x96xf32>
    %637 = vector.extract_strided_slice %626 {offsets = [0, 96], sizes = [2, 32], strides = [1, 1]} : vector<2x128xf32> to vector<2x32xf32>
    %638 = math.tanh %637 : vector<2x32xf32>
    %639 = vector.extract_strided_slice %636 {offsets = [0, 0], sizes = [2, 32], strides = [1, 1]} : vector<2x96xf32> to vector<2x32xf32>
    %640 = vector.extract_strided_slice %636 {offsets = [0, 32], sizes = [2, 32], strides = [1, 1]} : vector<2x96xf32> to vector<2x32xf32>
    %641 = vector.extract_strided_slice %636 {offsets = [0, 64], sizes = [2, 32], strides = [1, 1]} : vector<2x96xf32> to vector<2x32xf32>
    %642 = arith.mulf %640, %597 : vector<2x32xf32>
    %643 = arith.mulf %639, %638 : vector<2x32xf32>
    %644 = arith.addf %642, %643 : vector<2x32xf32>
    %645 = math.tanh %644 : vector<2x32xf32>
    %646 = arith.mulf %641, %645 : vector<2x32xf32>
    %647 = vector.extract_strided_slice %630 {offsets = [0, 0], sizes = [2, 96], strides = [1, 1]} : vector<2x128xf32> to vector<2x96xf32>
    %648 = arith.negf %647 : vector<2x96xf32>
    %649 = math.exp %648 : vector<2x96xf32>
    %cst_140 = arith.constant 1.000000e+00 : f32
    %650 = vector.broadcast %cst_140 : f32 to vector<2x96xf32>
    %651 = arith.addf %650, %649 : vector<2x96xf32>
    %652 = arith.divf %650, %651 : vector<2x96xf32>
    %653 = vector.extract_strided_slice %630 {offsets = [0, 96], sizes = [2, 32], strides = [1, 1]} : vector<2x128xf32> to vector<2x32xf32>
    %654 = math.tanh %653 : vector<2x32xf32>
    %655 = vector.extract_strided_slice %652 {offsets = [0, 0], sizes = [2, 32], strides = [1, 1]} : vector<2x96xf32> to vector<2x32xf32>
    %656 = vector.extract_strided_slice %652 {offsets = [0, 32], sizes = [2, 32], strides = [1, 1]} : vector<2x96xf32> to vector<2x32xf32>
    %657 = vector.extract_strided_slice %652 {offsets = [0, 64], sizes = [2, 32], strides = [1, 1]} : vector<2x96xf32> to vector<2x32xf32>
    %658 = arith.mulf %656, %613 : vector<2x32xf32>
    %659 = arith.mulf %655, %654 : vector<2x32xf32>
    %660 = arith.addf %658, %659 : vector<2x32xf32>
    %661 = math.tanh %660 : vector<2x32xf32>
    %662 = arith.mulf %657, %661 : vector<2x32xf32>
    %663 = arith.truncf %646 : vector<2x32xf32> to vector<2x32xbf16>
    %c26_141 = arith.constant 26 : index
    %c0_142 = arith.constant 0 : index
    %664 = vector.load %arg4[%c26_141, %c0_142] : memref<32x32xbf16, #tpu.memory_space<vmem>>, vector<2x32xbf16>
    tpu.vector_store %arg4[%c26_141, %c0_142], %663 {strides = array<i32>} : memref<32x32xbf16, #tpu.memory_space<vmem>>, vector<2x32xbf16>,
    %665 = arith.truncf %662 : vector<2x32xf32> to vector<2x32xbf16>
    %c4_143 = arith.constant 4 : index
    %c0_144 = arith.constant 0 : index
    %666 = vector.load %arg5[%c4_143, %c0_144] : memref<32x32xbf16, #tpu.memory_space<vmem>>, vector<2x32xbf16>
    tpu.vector_store %arg5[%c4_143, %c0_144], %665 {strides = array<i32>} : memref<32x32xbf16, #tpu.memory_space<vmem>>, vector<2x32xbf16>,
    %667 = tpu.concatenate %646, %662 in 1 : vector<2x32xf32>, vector<2x32xf32> -> vector<2x64xf32>
    %668 = arith.truncf %667 : vector<2x64xf32> to vector<2x64xbf16>
    %cst_145 = arith.constant dense<0.000000e+00> : vector<2x256xf32>
    %669 = tpu.matmul %668, %3, %cst_145 {dimension_numbers = #tpu.dot_dimension_numbers<[1], [0], [0], [1], [0, 0, 1, 1], [], []>} : vector<2x64xbf16>, vector<64x256xbf16>, vector<2x256xf32> -> vector<2x256xf32>
    %c28_146 = arith.constant 28 : index
    %c0_147 = arith.constant 0 : index
    %670 = vector.load %arg1[%c28_146, %c0_147] : memref<32x128xbf16, #tpu.memory_space<vmem>>, vector<2x128xbf16>
    %671 = vector.extract_strided_slice %669 {offsets = [0, 0], sizes = [2, 128], strides = [1, 1]} : vector<2x256xf32> to vector<2x128xf32>
    %672 = arith.extf %670 : vector<2x128xbf16> to vector<2x128xf32>
    %673 = arith.addf %672, %671 : vector<2x128xf32>
    %c2_148 = arith.constant 2 : index
    %c0_149 = arith.constant 0 : index
    %674 = vector.load %arg2[%c2_148, %c0_149] : memref<32x128xbf16, #tpu.memory_space<vmem>>, vector<2x128xbf16>
    %675 = vector.extract_strided_slice %669 {offsets = [0, 128], sizes = [2, 128], strides = [1, 1]} : vector<2x256xf32> to vector<2x128xf32>
    %676 = arith.extf %674 : vector<2x128xbf16> to vector<2x128xf32>
    %677 = arith.addf %676, %675 : vector<2x128xf32>
    %678 = vector.extract_strided_slice %673 {offsets = [0, 0], sizes = [2, 96], strides = [1, 1]} : vector<2x128xf32> to vector<2x96xf32>
    %679 = arith.negf %678 : vector<2x96xf32>
    %680 = math.exp %679 : vector<2x96xf32>
    %cst_150 = arith.constant 1.000000e+00 : f32
    %681 = vector.broadcast %cst_150 : f32 to vector<2x96xf32>
    %682 = arith.addf %681, %680 : vector<2x96xf32>
    %683 = arith.divf %681, %682 : vector<2x96xf32>
    %684 = vector.extract_strided_slice %673 {offsets = [0, 96], sizes = [2, 32], strides = [1, 1]} : vector<2x128xf32> to vector<2x32xf32>
    %685 = math.tanh %684 : vector<2x32xf32>
    %686 = vector.extract_strided_slice %683 {offsets = [0, 0], sizes = [2, 32], strides = [1, 1]} : vector<2x96xf32> to vector<2x32xf32>
    %687 = vector.extract_strided_slice %683 {offsets = [0, 32], sizes = [2, 32], strides = [1, 1]} : vector<2x96xf32> to vector<2x32xf32>
    %688 = vector.extract_strided_slice %683 {offsets = [0, 64], sizes = [2, 32], strides = [1, 1]} : vector<2x96xf32> to vector<2x32xf32>
    %689 = arith.mulf %687, %644 : vector<2x32xf32>
    %690 = arith.mulf %686, %685 : vector<2x32xf32>
    %691 = arith.addf %689, %690 : vector<2x32xf32>
    %692 = math.tanh %691 : vector<2x32xf32>
    %693 = arith.mulf %688, %692 : vector<2x32xf32>
    %694 = vector.extract_strided_slice %677 {offsets = [0, 0], sizes = [2, 96], strides = [1, 1]} : vector<2x128xf32> to vector<2x96xf32>
    %695 = arith.negf %694 : vector<2x96xf32>
    %696 = math.exp %695 : vector<2x96xf32>
    %cst_151 = arith.constant 1.000000e+00 : f32
    %697 = vector.broadcast %cst_151 : f32 to vector<2x96xf32>
    %698 = arith.addf %697, %696 : vector<2x96xf32>
    %699 = arith.divf %697, %698 : vector<2x96xf32>
    %700 = vector.extract_strided_slice %677 {offsets = [0, 96], sizes = [2, 32], strides = [1, 1]} : vector<2x128xf32> to vector<2x32xf32>
    %701 = math.tanh %700 : vector<2x32xf32>
    %702 = vector.extract_strided_slice %699 {offsets = [0, 0], sizes = [2, 32], strides = [1, 1]} : vector<2x96xf32> to vector<2x32xf32>
    %703 = vector.extract_strided_slice %699 {offsets = [0, 32], sizes = [2, 32], strides = [1, 1]} : vector<2x96xf32> to vector<2x32xf32>
    %704 = vector.extract_strided_slice %699 {offsets = [0, 64], sizes = [2, 32], strides = [1, 1]} : vector<2x96xf32> to vector<2x32xf32>
    %705 = arith.mulf %703, %660 : vector<2x32xf32>
    %706 = arith.mulf %702, %701 : vector<2x32xf32>
    %707 = arith.addf %705, %706 : vector<2x32xf32>
    %708 = math.tanh %707 : vector<2x32xf32>
    %709 = arith.mulf %704, %708 : vector<2x32xf32>
    %710 = arith.truncf %693 : vector<2x32xf32> to vector<2x32xbf16>
    %c28_152 = arith.constant 28 : index
    %c0_153 = arith.constant 0 : index
    %711 = vector.load %arg4[%c28_152, %c0_153] : memref<32x32xbf16, #tpu.memory_space<vmem>>, vector<2x32xbf16>
    tpu.vector_store %arg4[%c28_152, %c0_153], %710 {strides = array<i32>} : memref<32x32xbf16, #tpu.memory_space<vmem>>, vector<2x32xbf16>,
    %712 = arith.truncf %709 : vector<2x32xf32> to vector<2x32xbf16>
    %c2_154 = arith.constant 2 : index
    %c0_155 = arith.constant 0 : index
    %713 = vector.load %arg5[%c2_154, %c0_155] : memref<32x32xbf16, #tpu.memory_space<vmem>>, vector<2x32xbf16>
    tpu.vector_store %arg5[%c2_154, %c0_155], %712 {strides = array<i32>} : memref<32x32xbf16, #tpu.memory_space<vmem>>, vector<2x32xbf16>,
    %714 = tpu.concatenate %693, %709 in 1 : vector<2x32xf32>, vector<2x32xf32> -> vector<2x64xf32>
    %715 = arith.truncf %714 : vector<2x64xf32> to vector<2x64xbf16>
    %cst_156 = arith.constant dense<0.000000e+00> : vector<2x256xf32>
    %716 = tpu.matmul %715, %3, %cst_156 {dimension_numbers = #tpu.dot_dimension_numbers<[1], [0], [0], [1], [0, 0, 1, 1], [], []>} : vector<2x64xbf16>, vector<64x256xbf16>, vector<2x256xf32> -> vector<2x256xf32>
    %c30_157 = arith.constant 30 : index
    %c0_158 = arith.constant 0 : index
    %717 = vector.load %arg1[%c30_157, %c0_158] : memref<32x128xbf16, #tpu.memory_space<vmem>>, vector<2x128xbf16>
    %718 = vector.extract_strided_slice %716 {offsets = [0, 0], sizes = [2, 128], strides = [1, 1]} : vector<2x256xf32> to vector<2x128xf32>
    %719 = arith.extf %717 : vector<2x128xbf16> to vector<2x128xf32>
    %720 = arith.addf %719, %718 : vector<2x128xf32>
    %c0_159 = arith.constant 0 : index
    %c0_160 = arith.constant 0 : index
    %721 = vector.load %arg2[%c0_159, %c0_160] : memref<32x128xbf16, #tpu.memory_space<vmem>>, vector<2x128xbf16>
    %722 = vector.extract_strided_slice %716 {offsets = [0, 128], sizes = [2, 128], strides = [1, 1]} : vector<2x256xf32> to vector<2x128xf32>
    %723 = arith.extf %721 : vector<2x128xbf16> to vector<2x128xf32>
    %724 = arith.addf %723, %722 : vector<2x128xf32>
    %725 = vector.extract_strided_slice %720 {offsets = [0, 0], sizes = [2, 96], strides = [1, 1]} : vector<2x128xf32> to vector<2x96xf32>
    %726 = arith.negf %725 : vector<2x96xf32>
    %727 = math.exp %726 : vector<2x96xf32>
    %cst_161 = arith.constant 1.000000e+00 : f32
    %728 = vector.broadcast %cst_161 : f32 to vector<2x96xf32>
    %729 = arith.addf %728, %727 : vector<2x96xf32>
    %730 = arith.divf %728, %729 : vector<2x96xf32>
    %731 = vector.extract_strided_slice %720 {offsets = [0, 96], sizes = [2, 32], strides = [1, 1]} : vector<2x128xf32> to vector<2x32xf32>
    %732 = math.tanh %731 : vector<2x32xf32>
    %733 = vector.extract_strided_slice %730 {offsets = [0, 0], sizes = [2, 32], strides = [1, 1]} : vector<2x96xf32> to vector<2x32xf32>
    %734 = vector.extract_strided_slice %730 {offsets = [0, 32], sizes = [2, 32], strides = [1, 1]} : vector<2x96xf32> to vector<2x32xf32>
    %735 = vector.extract_strided_slice %730 {offsets = [0, 64], sizes = [2, 32], strides = [1, 1]} : vector<2x96xf32> to vector<2x32xf32>
    %736 = arith.mulf %734, %691 : vector<2x32xf32>
    %737 = arith.mulf %733, %732 : vector<2x32xf32>
    %738 = arith.addf %736, %737 : vector<2x32xf32>
    %739 = math.tanh %738 : vector<2x32xf32>
    %740 = arith.mulf %735, %739 : vector<2x32xf32>
    %741 = vector.extract_strided_slice %724 {offsets = [0, 0], sizes = [2, 96], strides = [1, 1]} : vector<2x128xf32> to vector<2x96xf32>
    %742 = arith.negf %741 : vector<2x96xf32>
    %743 = math.exp %742 : vector<2x96xf32>
    %cst_162 = arith.constant 1.000000e+00 : f32
    %744 = vector.broadcast %cst_162 : f32 to vector<2x96xf32>
    %745 = arith.addf %744, %743 : vector<2x96xf32>
    %746 = arith.divf %744, %745 : vector<2x96xf32>
    %747 = vector.extract_strided_slice %724 {offsets = [0, 96], sizes = [2, 32], strides = [1, 1]} : vector<2x128xf32> to vector<2x32xf32>
    %748 = math.tanh %747 : vector<2x32xf32>
    %749 = vector.extract_strided_slice %746 {offsets = [0, 0], sizes = [2, 32], strides = [1, 1]} : vector<2x96xf32> to vector<2x32xf32>
    %750 = vector.extract_strided_slice %746 {offsets = [0, 32], sizes = [2, 32], strides = [1, 1]} : vector<2x96xf32> to vector<2x32xf32>
    %751 = vector.extract_strided_slice %746 {offsets = [0, 64], sizes = [2, 32], strides = [1, 1]} : vector<2x96xf32> to vector<2x32xf32>
    %752 = arith.mulf %750, %707 : vector<2x32xf32>
    %753 = arith.mulf %749, %748 : vector<2x32xf32>
    %754 = arith.addf %752, %753 : vector<2x32xf32>
    %755 = math.tanh %754 : vector<2x32xf32>
    %756 = arith.mulf %751, %755 : vector<2x32xf32>
    %757 = arith.truncf %740 : vector<2x32xf32> to vector<2x32xbf16>
    %c30_163 = arith.constant 30 : index
    %c0_164 = arith.constant 0 : index
    %758 = vector.load %arg4[%c30_163, %c0_164] : memref<32x32xbf16, #tpu.memory_space<vmem>>, vector<2x32xbf16>
    tpu.vector_store %arg4[%c30_163, %c0_164], %757 {strides = array<i32>} : memref<32x32xbf16, #tpu.memory_space<vmem>>, vector<2x32xbf16>,
    %759 = arith.truncf %756 : vector<2x32xf32> to vector<2x32xbf16>
    %c0_165 = arith.constant 0 : index
    %c0_166 = arith.constant 0 : index
    %760 = vector.load %arg5[%c0_165, %c0_166] : memref<32x32xbf16, #tpu.memory_space<vmem>>, vector<2x32xbf16>
    tpu.vector_store %arg5[%c0_165, %c0_166], %759 {strides = array<i32>} : memref<32x32xbf16, #tpu.memory_space<vmem>>, vector<2x32xbf16>,
    %761 = tpu.concatenate %740, %756 in 1 : vector<2x32xf32>, vector<2x32xf32> -> vector<2x64xf32>
    %c0_167 = arith.constant 0 : index
    %c0_168 = arith.constant 0 : index
    %c0_169 = arith.constant 0 : index
    %762 = vector.load %arg6[%c0_167, %c0_168, %c0_169] : memref<2x2x64xf32, #tpu.memory_space<vmem>>, vector<1x2x64xf32>
    %763 = vector.shape_cast %762 : vector<1x2x64xf32> to vector<2x64xf32>
    %764 = vector.shape_cast %761 : vector<2x64xf32> to vector<1x2x64xf32>
    tpu.vector_store %arg6[%c0_167, %c0_168, %c0_169], %764 {strides = array<i32>} : memref<2x2x64xf32, #tpu.memory_space<vmem>>, vector<1x2x64xf32>,
    %765 = tpu.concatenate %738, %754 in 1 : vector<2x32xf32>, vector<2x32xf32> -> vector<2x64xf32>
    %c1_170 = arith.constant 1 : index
    %c0_171 = arith.constant 0 : index
    %c0_172 = arith.constant 0 : index
    %766 = vector.load %arg6[%c1_170, %c0_171, %c0_172] : memref<2x2x64xf32, #tpu.memory_space<vmem>>, vector<1x2x64xf32>
    %767 = vector.shape_cast %766 : vector<1x2x64xf32> to vector<2x64xf32>
    %768 = vector.shape_cast %765 : vector<2x64xf32> to vector<1x2x64xf32>
    tpu.vector_store %arg6[%c1_170, %c0_171, %c0_172], %768 {strides = array<i32>} : memref<2x2x64xf32, #tpu.memory_space<vmem>>, vector<1x2x64xf32>,
    return
  }
  func.func @transform_0(%arg0: i32) -> (i32, i32) {
    %c0_i32 = arith.constant 0 : i32
    %c0_i32_0 = arith.constant 0 : i32
    return %arg0, %c0_i32 : i32, i32
  }
  func.func @transform_1(%arg0: i32) -> (i32, i32) {
    %c0_i32 = arith.constant 0 : i32
    %0 = arith.subi %c0_i32, %arg0 : i32
    %c0_i32_0 = arith.constant 0 : i32
    %c0_i32_1 = arith.constant 0 : i32
    return %0, %c0_i32_0 : i32, i32
  }
  func.func @transform_2(%arg0: i32) -> (i32, i32) {
    %c0_i32 = arith.constant 0 : i32
    %c0_i32_0 = arith.constant 0 : i32
    %c0_i32_1 = arith.constant 0 : i32
    return %c0_i32, %c0_i32_0 : i32, i32
  }
  func.func @transform_3(%arg0: i32) -> (i32, i32) {
    %c0_i32 = arith.constant 0 : i32
    %c0_i32_0 = arith.constant 0 : i32
    return %arg0, %c0_i32 : i32, i32
  }
  func.func @transform_4(%arg0: i32) -> (i32, i32) {
    %c0_i32 = arith.constant 0 : i32
    %0 = arith.subi %c0_i32, %arg0 : i32
    %c0_i32_0 = arith.constant 0 : i32
    %c0_i32_1 = arith.constant 0 : i32
    return %0, %c0_i32_0 : i32, i32
  }
}

module attributes {stable_mosaic.version = 11 : i64} {
  func.func @_bilstm_chunk_kernel(%arg0: i32, %arg1: memref<32x128xbf16, #tpu.memory_space<vmem>>, %arg2: memref<32x128xbf16, #tpu.memory_space<vmem>>, %arg3: memref<64x256xbf16, #tpu.memory_space<vmem>>, %arg4: memref<32x32xf32, #tpu.memory_space<vmem>>, %arg5: memref<32x32xf32, #tpu.memory_space<vmem>>, %arg6: memref<2x2x64xf32, #tpu.memory_space<vmem>>) attributes {dimension_semantics = [#tpu.dimension_semantics<arbitrary>], iteration_bounds = array<i64: 1>, scalar_prefetch = 0 : i64, scratch_operands = 1 : i64, tpu.core_type = #tpu.core_type<tc>, window_params = [{transform_indices = @transform_0, window_bounds = array<i64: 32, 128>}, {transform_indices = @transform_1, window_bounds = array<i64: 32, 128>}, {pipeline_mode = #tpu.pipeline_mode<synchronous>, transform_indices = @transform_2, window_bounds = array<i64: 64, 256>}, {transform_indices = @transform_3, window_bounds = array<i64: 32, 32>}, {transform_indices = @transform_4, window_bounds = array<i64: 32, 32>}]} {
    %c0_i32 = arith.constant 0 : i32
    %0 = arith.cmpi eq, %arg0, %c0_i32 : i32
    %1 = arith.extui %0 : i1 to i32
    %c0_i32_0 = arith.constant 0 : i32
    %2 = arith.cmpi ne, %1, %c0_i32_0 : i32
    scf.if %2 {
      %cst_173 = arith.constant 0.000000e+00 : f32
      %737 = vector.broadcast %cst_173 : f32 to vector<2x2x64xf32>
      %c0_174 = arith.constant 0 : index
      %c0_175 = arith.constant 0 : index
      %c0_176 = arith.constant 0 : index
      %738 = vector.load %arg6[%c0_174, %c0_175, %c0_176] : memref<2x2x64xf32, #tpu.memory_space<vmem>>, vector<2x2x64xf32>
      tpu.vector_store %arg6[%c0_174, %c0_175, %c0_176], %737 {strides = array<i32>} : memref<2x2x64xf32, #tpu.memory_space<vmem>>, vector<2x2x64xf32>,
    } else {
    }
    %c0 = arith.constant 0 : index
    %c0_1 = arith.constant 0 : index
    %3 = vector.load %arg3[%c0, %c0_1] : memref<64x256xbf16, #tpu.memory_space<vmem>>, vector<64x256xbf16>
    %c0_2 = arith.constant 0 : index
    %c0_3 = arith.constant 0 : index
    %c0_4 = arith.constant 0 : index
    %4 = vector.load %arg6[%c0_2, %c0_3, %c0_4] : memref<2x2x64xf32, #tpu.memory_space<vmem>>, vector<1x2x64xf32>
    %5 = vector.shape_cast %4 : vector<1x2x64xf32> to vector<2x64xf32>
    %c1 = arith.constant 1 : index
    %c0_5 = arith.constant 0 : index
    %c0_6 = arith.constant 0 : index
    %6 = vector.load %arg6[%c1, %c0_5, %c0_6] : memref<2x2x64xf32, #tpu.memory_space<vmem>>, vector<1x2x64xf32>
    %7 = vector.shape_cast %6 : vector<1x2x64xf32> to vector<2x64xf32>
    %8 = vector.extract_strided_slice %7 {offsets = [0, 0], sizes = [2, 32], strides = [1, 1]} : vector<2x64xf32> to vector<2x32xf32>
    %9 = vector.extract_strided_slice %7 {offsets = [0, 32], sizes = [2, 32], strides = [1, 1]} : vector<2x64xf32> to vector<2x32xf32>
    %10 = arith.truncf %5 : vector<2x64xf32> to vector<2x64xbf16>
    %cst = arith.constant dense<0.000000e+00> : vector<2x256xf32>
    %11 = tpu.matmul %10, %3, %cst {dimension_numbers = #tpu.dot_dimension_numbers<[1], [0], [0], [1], [0, 0, 1, 1], [], []>} : vector<2x64xbf16>, vector<64x256xbf16>, vector<2x256xf32> -> vector<2x256xf32>
    %c0_7 = arith.constant 0 : index
    %c0_8 = arith.constant 0 : index
    %12 = vector.load %arg1[%c0_7, %c0_8] : memref<32x128xbf16, #tpu.memory_space<vmem>>, vector<2x128xbf16>
    %13 = vector.extract_strided_slice %11 {offsets = [0, 0], sizes = [2, 128], strides = [1, 1]} : vector<2x256xf32> to vector<2x128xf32>
    %14 = arith.extf %12 : vector<2x128xbf16> to vector<2x128xf32>
    %15 = arith.addf %14, %13 : vector<2x128xf32>
    %c30 = arith.constant 30 : index
    %c0_9 = arith.constant 0 : index
    %16 = vector.load %arg2[%c30, %c0_9] : memref<32x128xbf16, #tpu.memory_space<vmem>>, vector<2x128xbf16>
    %17 = vector.extract_strided_slice %11 {offsets = [0, 128], sizes = [2, 128], strides = [1, 1]} : vector<2x256xf32> to vector<2x128xf32>
    %18 = arith.extf %16 : vector<2x128xbf16> to vector<2x128xf32>
    %19 = arith.addf %18, %17 : vector<2x128xf32>
    %20 = vector.extract_strided_slice %15 {offsets = [0, 0], sizes = [2, 96], strides = [1, 1]} : vector<2x128xf32> to vector<2x96xf32>
    %21 = arith.negf %20 : vector<2x96xf32>
    %22 = math.exp %21 : vector<2x96xf32>
    %cst_10 = arith.constant 1.000000e+00 : f32
    %23 = vector.broadcast %cst_10 : f32 to vector<2x96xf32>
    %24 = arith.addf %23, %22 : vector<2x96xf32>
    %25 = arith.divf %23, %24 : vector<2x96xf32>
    %26 = vector.extract_strided_slice %15 {offsets = [0, 96], sizes = [2, 32], strides = [1, 1]} : vector<2x128xf32> to vector<2x32xf32>
    %27 = math.tanh %26 : vector<2x32xf32>
    %28 = vector.extract_strided_slice %25 {offsets = [0, 0], sizes = [2, 32], strides = [1, 1]} : vector<2x96xf32> to vector<2x32xf32>
    %29 = vector.extract_strided_slice %25 {offsets = [0, 32], sizes = [2, 32], strides = [1, 1]} : vector<2x96xf32> to vector<2x32xf32>
    %30 = vector.extract_strided_slice %25 {offsets = [0, 64], sizes = [2, 32], strides = [1, 1]} : vector<2x96xf32> to vector<2x32xf32>
    %31 = arith.mulf %29, %8 : vector<2x32xf32>
    %32 = arith.mulf %28, %27 : vector<2x32xf32>
    %33 = arith.addf %31, %32 : vector<2x32xf32>
    %34 = math.tanh %33 : vector<2x32xf32>
    %35 = arith.mulf %30, %34 : vector<2x32xf32>
    %36 = vector.extract_strided_slice %19 {offsets = [0, 0], sizes = [2, 96], strides = [1, 1]} : vector<2x128xf32> to vector<2x96xf32>
    %37 = arith.negf %36 : vector<2x96xf32>
    %38 = math.exp %37 : vector<2x96xf32>
    %cst_11 = arith.constant 1.000000e+00 : f32
    %39 = vector.broadcast %cst_11 : f32 to vector<2x96xf32>
    %40 = arith.addf %39, %38 : vector<2x96xf32>
    %41 = arith.divf %39, %40 : vector<2x96xf32>
    %42 = vector.extract_strided_slice %19 {offsets = [0, 96], sizes = [2, 32], strides = [1, 1]} : vector<2x128xf32> to vector<2x32xf32>
    %43 = math.tanh %42 : vector<2x32xf32>
    %44 = vector.extract_strided_slice %41 {offsets = [0, 0], sizes = [2, 32], strides = [1, 1]} : vector<2x96xf32> to vector<2x32xf32>
    %45 = vector.extract_strided_slice %41 {offsets = [0, 32], sizes = [2, 32], strides = [1, 1]} : vector<2x96xf32> to vector<2x32xf32>
    %46 = vector.extract_strided_slice %41 {offsets = [0, 64], sizes = [2, 32], strides = [1, 1]} : vector<2x96xf32> to vector<2x32xf32>
    %47 = arith.mulf %45, %9 : vector<2x32xf32>
    %48 = arith.mulf %44, %43 : vector<2x32xf32>
    %49 = arith.addf %47, %48 : vector<2x32xf32>
    %50 = math.tanh %49 : vector<2x32xf32>
    %51 = arith.mulf %46, %50 : vector<2x32xf32>
    %c0_12 = arith.constant 0 : index
    %c0_13 = arith.constant 0 : index
    %52 = vector.load %arg4[%c0_12, %c0_13] : memref<32x32xf32, #tpu.memory_space<vmem>>, vector<2x32xf32>
    tpu.vector_store %arg4[%c0_12, %c0_13], %35 {strides = array<i32>} : memref<32x32xf32, #tpu.memory_space<vmem>>, vector<2x32xf32>,
    %c30_14 = arith.constant 30 : index
    %c0_15 = arith.constant 0 : index
    %53 = vector.load %arg5[%c30_14, %c0_15] : memref<32x32xf32, #tpu.memory_space<vmem>>, vector<2x32xf32>
    tpu.vector_store %arg5[%c30_14, %c0_15], %51 {strides = array<i32>} : memref<32x32xf32, #tpu.memory_space<vmem>>, vector<2x32xf32>,
    %54 = tpu.concatenate %35, %51 in 1 : vector<2x32xf32>, vector<2x32xf32> -> vector<2x64xf32>
    %55 = arith.truncf %54 : vector<2x64xf32> to vector<2x64xbf16>
    %cst_16 = arith.constant dense<0.000000e+00> : vector<2x256xf32>
    %56 = tpu.matmul %55, %3, %cst_16 {dimension_numbers = #tpu.dot_dimension_numbers<[1], [0], [0], [1], [0, 0, 1, 1], [], []>} : vector<2x64xbf16>, vector<64x256xbf16>, vector<2x256xf32> -> vector<2x256xf32>
    %c2 = arith.constant 2 : index
    %c0_17 = arith.constant 0 : index
    %57 = vector.load %arg1[%c2, %c0_17] : memref<32x128xbf16, #tpu.memory_space<vmem>>, vector<2x128xbf16>
    %58 = vector.extract_strided_slice %56 {offsets = [0, 0], sizes = [2, 128], strides = [1, 1]} : vector<2x256xf32> to vector<2x128xf32>
    %59 = arith.extf %57 : vector<2x128xbf16> to vector<2x128xf32>
    %60 = arith.addf %59, %58 : vector<2x128xf32>
    %c28 = arith.constant 28 : index
    %c0_18 = arith.constant 0 : index
    %61 = vector.load %arg2[%c28, %c0_18] : memref<32x128xbf16, #tpu.memory_space<vmem>>, vector<2x128xbf16>
    %62 = vector.extract_strided_slice %56 {offsets = [0, 128], sizes = [2, 128], strides = [1, 1]} : vector<2x256xf32> to vector<2x128xf32>
    %63 = arith.extf %61 : vector<2x128xbf16> to vector<2x128xf32>
    %64 = arith.addf %63, %62 : vector<2x128xf32>
    %65 = vector.extract_strided_slice %60 {offsets = [0, 0], sizes = [2, 96], strides = [1, 1]} : vector<2x128xf32> to vector<2x96xf32>
    %66 = arith.negf %65 : vector<2x96xf32>
    %67 = math.exp %66 : vector<2x96xf32>
    %cst_19 = arith.constant 1.000000e+00 : f32
    %68 = vector.broadcast %cst_19 : f32 to vector<2x96xf32>
    %69 = arith.addf %68, %67 : vector<2x96xf32>
    %70 = arith.divf %68, %69 : vector<2x96xf32>
    %71 = vector.extract_strided_slice %60 {offsets = [0, 96], sizes = [2, 32], strides = [1, 1]} : vector<2x128xf32> to vector<2x32xf32>
    %72 = math.tanh %71 : vector<2x32xf32>
    %73 = vector.extract_strided_slice %70 {offsets = [0, 0], sizes = [2, 32], strides = [1, 1]} : vector<2x96xf32> to vector<2x32xf32>
    %74 = vector.extract_strided_slice %70 {offsets = [0, 32], sizes = [2, 32], strides = [1, 1]} : vector<2x96xf32> to vector<2x32xf32>
    %75 = vector.extract_strided_slice %70 {offsets = [0, 64], sizes = [2, 32], strides = [1, 1]} : vector<2x96xf32> to vector<2x32xf32>
    %76 = arith.mulf %74, %33 : vector<2x32xf32>
    %77 = arith.mulf %73, %72 : vector<2x32xf32>
    %78 = arith.addf %76, %77 : vector<2x32xf32>
    %79 = math.tanh %78 : vector<2x32xf32>
    %80 = arith.mulf %75, %79 : vector<2x32xf32>
    %81 = vector.extract_strided_slice %64 {offsets = [0, 0], sizes = [2, 96], strides = [1, 1]} : vector<2x128xf32> to vector<2x96xf32>
    %82 = arith.negf %81 : vector<2x96xf32>
    %83 = math.exp %82 : vector<2x96xf32>
    %cst_20 = arith.constant 1.000000e+00 : f32
    %84 = vector.broadcast %cst_20 : f32 to vector<2x96xf32>
    %85 = arith.addf %84, %83 : vector<2x96xf32>
    %86 = arith.divf %84, %85 : vector<2x96xf32>
    %87 = vector.extract_strided_slice %64 {offsets = [0, 96], sizes = [2, 32], strides = [1, 1]} : vector<2x128xf32> to vector<2x32xf32>
    %88 = math.tanh %87 : vector<2x32xf32>
    %89 = vector.extract_strided_slice %86 {offsets = [0, 0], sizes = [2, 32], strides = [1, 1]} : vector<2x96xf32> to vector<2x32xf32>
    %90 = vector.extract_strided_slice %86 {offsets = [0, 32], sizes = [2, 32], strides = [1, 1]} : vector<2x96xf32> to vector<2x32xf32>
    %91 = vector.extract_strided_slice %86 {offsets = [0, 64], sizes = [2, 32], strides = [1, 1]} : vector<2x96xf32> to vector<2x32xf32>
    %92 = arith.mulf %90, %49 : vector<2x32xf32>
    %93 = arith.mulf %89, %88 : vector<2x32xf32>
    %94 = arith.addf %92, %93 : vector<2x32xf32>
    %95 = math.tanh %94 : vector<2x32xf32>
    %96 = arith.mulf %91, %95 : vector<2x32xf32>
    %c2_21 = arith.constant 2 : index
    %c0_22 = arith.constant 0 : index
    %97 = vector.load %arg4[%c2_21, %c0_22] : memref<32x32xf32, #tpu.memory_space<vmem>>, vector<2x32xf32>
    tpu.vector_store %arg4[%c2_21, %c0_22], %80 {strides = array<i32>} : memref<32x32xf32, #tpu.memory_space<vmem>>, vector<2x32xf32>,
    %c28_23 = arith.constant 28 : index
    %c0_24 = arith.constant 0 : index
    %98 = vector.load %arg5[%c28_23, %c0_24] : memref<32x32xf32, #tpu.memory_space<vmem>>, vector<2x32xf32>
    tpu.vector_store %arg5[%c28_23, %c0_24], %96 {strides = array<i32>} : memref<32x32xf32, #tpu.memory_space<vmem>>, vector<2x32xf32>,
    %99 = tpu.concatenate %80, %96 in 1 : vector<2x32xf32>, vector<2x32xf32> -> vector<2x64xf32>
    %100 = arith.truncf %99 : vector<2x64xf32> to vector<2x64xbf16>
    %cst_25 = arith.constant dense<0.000000e+00> : vector<2x256xf32>
    %101 = tpu.matmul %100, %3, %cst_25 {dimension_numbers = #tpu.dot_dimension_numbers<[1], [0], [0], [1], [0, 0, 1, 1], [], []>} : vector<2x64xbf16>, vector<64x256xbf16>, vector<2x256xf32> -> vector<2x256xf32>
    %c4 = arith.constant 4 : index
    %c0_26 = arith.constant 0 : index
    %102 = vector.load %arg1[%c4, %c0_26] : memref<32x128xbf16, #tpu.memory_space<vmem>>, vector<2x128xbf16>
    %103 = vector.extract_strided_slice %101 {offsets = [0, 0], sizes = [2, 128], strides = [1, 1]} : vector<2x256xf32> to vector<2x128xf32>
    %104 = arith.extf %102 : vector<2x128xbf16> to vector<2x128xf32>
    %105 = arith.addf %104, %103 : vector<2x128xf32>
    %c26 = arith.constant 26 : index
    %c0_27 = arith.constant 0 : index
    %106 = vector.load %arg2[%c26, %c0_27] : memref<32x128xbf16, #tpu.memory_space<vmem>>, vector<2x128xbf16>
    %107 = vector.extract_strided_slice %101 {offsets = [0, 128], sizes = [2, 128], strides = [1, 1]} : vector<2x256xf32> to vector<2x128xf32>
    %108 = arith.extf %106 : vector<2x128xbf16> to vector<2x128xf32>
    %109 = arith.addf %108, %107 : vector<2x128xf32>
    %110 = vector.extract_strided_slice %105 {offsets = [0, 0], sizes = [2, 96], strides = [1, 1]} : vector<2x128xf32> to vector<2x96xf32>
    %111 = arith.negf %110 : vector<2x96xf32>
    %112 = math.exp %111 : vector<2x96xf32>
    %cst_28 = arith.constant 1.000000e+00 : f32
    %113 = vector.broadcast %cst_28 : f32 to vector<2x96xf32>
    %114 = arith.addf %113, %112 : vector<2x96xf32>
    %115 = arith.divf %113, %114 : vector<2x96xf32>
    %116 = vector.extract_strided_slice %105 {offsets = [0, 96], sizes = [2, 32], strides = [1, 1]} : vector<2x128xf32> to vector<2x32xf32>
    %117 = math.tanh %116 : vector<2x32xf32>
    %118 = vector.extract_strided_slice %115 {offsets = [0, 0], sizes = [2, 32], strides = [1, 1]} : vector<2x96xf32> to vector<2x32xf32>
    %119 = vector.extract_strided_slice %115 {offsets = [0, 32], sizes = [2, 32], strides = [1, 1]} : vector<2x96xf32> to vector<2x32xf32>
    %120 = vector.extract_strided_slice %115 {offsets = [0, 64], sizes = [2, 32], strides = [1, 1]} : vector<2x96xf32> to vector<2x32xf32>
    %121 = arith.mulf %119, %78 : vector<2x32xf32>
    %122 = arith.mulf %118, %117 : vector<2x32xf32>
    %123 = arith.addf %121, %122 : vector<2x32xf32>
    %124 = math.tanh %123 : vector<2x32xf32>
    %125 = arith.mulf %120, %124 : vector<2x32xf32>
    %126 = vector.extract_strided_slice %109 {offsets = [0, 0], sizes = [2, 96], strides = [1, 1]} : vector<2x128xf32> to vector<2x96xf32>
    %127 = arith.negf %126 : vector<2x96xf32>
    %128 = math.exp %127 : vector<2x96xf32>
    %cst_29 = arith.constant 1.000000e+00 : f32
    %129 = vector.broadcast %cst_29 : f32 to vector<2x96xf32>
    %130 = arith.addf %129, %128 : vector<2x96xf32>
    %131 = arith.divf %129, %130 : vector<2x96xf32>
    %132 = vector.extract_strided_slice %109 {offsets = [0, 96], sizes = [2, 32], strides = [1, 1]} : vector<2x128xf32> to vector<2x32xf32>
    %133 = math.tanh %132 : vector<2x32xf32>
    %134 = vector.extract_strided_slice %131 {offsets = [0, 0], sizes = [2, 32], strides = [1, 1]} : vector<2x96xf32> to vector<2x32xf32>
    %135 = vector.extract_strided_slice %131 {offsets = [0, 32], sizes = [2, 32], strides = [1, 1]} : vector<2x96xf32> to vector<2x32xf32>
    %136 = vector.extract_strided_slice %131 {offsets = [0, 64], sizes = [2, 32], strides = [1, 1]} : vector<2x96xf32> to vector<2x32xf32>
    %137 = arith.mulf %135, %94 : vector<2x32xf32>
    %138 = arith.mulf %134, %133 : vector<2x32xf32>
    %139 = arith.addf %137, %138 : vector<2x32xf32>
    %140 = math.tanh %139 : vector<2x32xf32>
    %141 = arith.mulf %136, %140 : vector<2x32xf32>
    %c4_30 = arith.constant 4 : index
    %c0_31 = arith.constant 0 : index
    %142 = vector.load %arg4[%c4_30, %c0_31] : memref<32x32xf32, #tpu.memory_space<vmem>>, vector<2x32xf32>
    tpu.vector_store %arg4[%c4_30, %c0_31], %125 {strides = array<i32>} : memref<32x32xf32, #tpu.memory_space<vmem>>, vector<2x32xf32>,
    %c26_32 = arith.constant 26 : index
    %c0_33 = arith.constant 0 : index
    %143 = vector.load %arg5[%c26_32, %c0_33] : memref<32x32xf32, #tpu.memory_space<vmem>>, vector<2x32xf32>
    tpu.vector_store %arg5[%c26_32, %c0_33], %141 {strides = array<i32>} : memref<32x32xf32, #tpu.memory_space<vmem>>, vector<2x32xf32>,
    %144 = tpu.concatenate %125, %141 in 1 : vector<2x32xf32>, vector<2x32xf32> -> vector<2x64xf32>
    %145 = arith.truncf %144 : vector<2x64xf32> to vector<2x64xbf16>
    %cst_34 = arith.constant dense<0.000000e+00> : vector<2x256xf32>
    %146 = tpu.matmul %145, %3, %cst_34 {dimension_numbers = #tpu.dot_dimension_numbers<[1], [0], [0], [1], [0, 0, 1, 1], [], []>} : vector<2x64xbf16>, vector<64x256xbf16>, vector<2x256xf32> -> vector<2x256xf32>
    %c6 = arith.constant 6 : index
    %c0_35 = arith.constant 0 : index
    %147 = vector.load %arg1[%c6, %c0_35] : memref<32x128xbf16, #tpu.memory_space<vmem>>, vector<2x128xbf16>
    %148 = vector.extract_strided_slice %146 {offsets = [0, 0], sizes = [2, 128], strides = [1, 1]} : vector<2x256xf32> to vector<2x128xf32>
    %149 = arith.extf %147 : vector<2x128xbf16> to vector<2x128xf32>
    %150 = arith.addf %149, %148 : vector<2x128xf32>
    %c24 = arith.constant 24 : index
    %c0_36 = arith.constant 0 : index
    %151 = vector.load %arg2[%c24, %c0_36] : memref<32x128xbf16, #tpu.memory_space<vmem>>, vector<2x128xbf16>
    %152 = vector.extract_strided_slice %146 {offsets = [0, 128], sizes = [2, 128], strides = [1, 1]} : vector<2x256xf32> to vector<2x128xf32>
    %153 = arith.extf %151 : vector<2x128xbf16> to vector<2x128xf32>
    %154 = arith.addf %153, %152 : vector<2x128xf32>
    %155 = vector.extract_strided_slice %150 {offsets = [0, 0], sizes = [2, 96], strides = [1, 1]} : vector<2x128xf32> to vector<2x96xf32>
    %156 = arith.negf %155 : vector<2x96xf32>
    %157 = math.exp %156 : vector<2x96xf32>
    %cst_37 = arith.constant 1.000000e+00 : f32
    %158 = vector.broadcast %cst_37 : f32 to vector<2x96xf32>
    %159 = arith.addf %158, %157 : vector<2x96xf32>
    %160 = arith.divf %158, %159 : vector<2x96xf32>
    %161 = vector.extract_strided_slice %150 {offsets = [0, 96], sizes = [2, 32], strides = [1, 1]} : vector<2x128xf32> to vector<2x32xf32>
    %162 = math.tanh %161 : vector<2x32xf32>
    %163 = vector.extract_strided_slice %160 {offsets = [0, 0], sizes = [2, 32], strides = [1, 1]} : vector<2x96xf32> to vector<2x32xf32>
    %164 = vector.extract_strided_slice %160 {offsets = [0, 32], sizes = [2, 32], strides = [1, 1]} : vector<2x96xf32> to vector<2x32xf32>
    %165 = vector.extract_strided_slice %160 {offsets = [0, 64], sizes = [2, 32], strides = [1, 1]} : vector<2x96xf32> to vector<2x32xf32>
    %166 = arith.mulf %164, %123 : vector<2x32xf32>
    %167 = arith.mulf %163, %162 : vector<2x32xf32>
    %168 = arith.addf %166, %167 : vector<2x32xf32>
    %169 = math.tanh %168 : vector<2x32xf32>
    %170 = arith.mulf %165, %169 : vector<2x32xf32>
    %171 = vector.extract_strided_slice %154 {offsets = [0, 0], sizes = [2, 96], strides = [1, 1]} : vector<2x128xf32> to vector<2x96xf32>
    %172 = arith.negf %171 : vector<2x96xf32>
    %173 = math.exp %172 : vector<2x96xf32>
    %cst_38 = arith.constant 1.000000e+00 : f32
    %174 = vector.broadcast %cst_38 : f32 to vector<2x96xf32>
    %175 = arith.addf %174, %173 : vector<2x96xf32>
    %176 = arith.divf %174, %175 : vector<2x96xf32>
    %177 = vector.extract_strided_slice %154 {offsets = [0, 96], sizes = [2, 32], strides = [1, 1]} : vector<2x128xf32> to vector<2x32xf32>
    %178 = math.tanh %177 : vector<2x32xf32>
    %179 = vector.extract_strided_slice %176 {offsets = [0, 0], sizes = [2, 32], strides = [1, 1]} : vector<2x96xf32> to vector<2x32xf32>
    %180 = vector.extract_strided_slice %176 {offsets = [0, 32], sizes = [2, 32], strides = [1, 1]} : vector<2x96xf32> to vector<2x32xf32>
    %181 = vector.extract_strided_slice %176 {offsets = [0, 64], sizes = [2, 32], strides = [1, 1]} : vector<2x96xf32> to vector<2x32xf32>
    %182 = arith.mulf %180, %139 : vector<2x32xf32>
    %183 = arith.mulf %179, %178 : vector<2x32xf32>
    %184 = arith.addf %182, %183 : vector<2x32xf32>
    %185 = math.tanh %184 : vector<2x32xf32>
    %186 = arith.mulf %181, %185 : vector<2x32xf32>
    %c6_39 = arith.constant 6 : index
    %c0_40 = arith.constant 0 : index
    %187 = vector.load %arg4[%c6_39, %c0_40] : memref<32x32xf32, #tpu.memory_space<vmem>>, vector<2x32xf32>
    tpu.vector_store %arg4[%c6_39, %c0_40], %170 {strides = array<i32>} : memref<32x32xf32, #tpu.memory_space<vmem>>, vector<2x32xf32>,
    %c24_41 = arith.constant 24 : index
    %c0_42 = arith.constant 0 : index
    %188 = vector.load %arg5[%c24_41, %c0_42] : memref<32x32xf32, #tpu.memory_space<vmem>>, vector<2x32xf32>
    tpu.vector_store %arg5[%c24_41, %c0_42], %186 {strides = array<i32>} : memref<32x32xf32, #tpu.memory_space<vmem>>, vector<2x32xf32>,
    %189 = tpu.concatenate %170, %186 in 1 : vector<2x32xf32>, vector<2x32xf32> -> vector<2x64xf32>
    %190 = arith.truncf %189 : vector<2x64xf32> to vector<2x64xbf16>
    %cst_43 = arith.constant dense<0.000000e+00> : vector<2x256xf32>
    %191 = tpu.matmul %190, %3, %cst_43 {dimension_numbers = #tpu.dot_dimension_numbers<[1], [0], [0], [1], [0, 0, 1, 1], [], []>} : vector<2x64xbf16>, vector<64x256xbf16>, vector<2x256xf32> -> vector<2x256xf32>
    %c8 = arith.constant 8 : index
    %c0_44 = arith.constant 0 : index
    %192 = vector.load %arg1[%c8, %c0_44] : memref<32x128xbf16, #tpu.memory_space<vmem>>, vector<2x128xbf16>
    %193 = vector.extract_strided_slice %191 {offsets = [0, 0], sizes = [2, 128], strides = [1, 1]} : vector<2x256xf32> to vector<2x128xf32>
    %194 = arith.extf %192 : vector<2x128xbf16> to vector<2x128xf32>
    %195 = arith.addf %194, %193 : vector<2x128xf32>
    %c22 = arith.constant 22 : index
    %c0_45 = arith.constant 0 : index
    %196 = vector.load %arg2[%c22, %c0_45] : memref<32x128xbf16, #tpu.memory_space<vmem>>, vector<2x128xbf16>
    %197 = vector.extract_strided_slice %191 {offsets = [0, 128], sizes = [2, 128], strides = [1, 1]} : vector<2x256xf32> to vector<2x128xf32>
    %198 = arith.extf %196 : vector<2x128xbf16> to vector<2x128xf32>
    %199 = arith.addf %198, %197 : vector<2x128xf32>
    %200 = vector.extract_strided_slice %195 {offsets = [0, 0], sizes = [2, 96], strides = [1, 1]} : vector<2x128xf32> to vector<2x96xf32>
    %201 = arith.negf %200 : vector<2x96xf32>
    %202 = math.exp %201 : vector<2x96xf32>
    %cst_46 = arith.constant 1.000000e+00 : f32
    %203 = vector.broadcast %cst_46 : f32 to vector<2x96xf32>
    %204 = arith.addf %203, %202 : vector<2x96xf32>
    %205 = arith.divf %203, %204 : vector<2x96xf32>
    %206 = vector.extract_strided_slice %195 {offsets = [0, 96], sizes = [2, 32], strides = [1, 1]} : vector<2x128xf32> to vector<2x32xf32>
    %207 = math.tanh %206 : vector<2x32xf32>
    %208 = vector.extract_strided_slice %205 {offsets = [0, 0], sizes = [2, 32], strides = [1, 1]} : vector<2x96xf32> to vector<2x32xf32>
    %209 = vector.extract_strided_slice %205 {offsets = [0, 32], sizes = [2, 32], strides = [1, 1]} : vector<2x96xf32> to vector<2x32xf32>
    %210 = vector.extract_strided_slice %205 {offsets = [0, 64], sizes = [2, 32], strides = [1, 1]} : vector<2x96xf32> to vector<2x32xf32>
    %211 = arith.mulf %209, %168 : vector<2x32xf32>
    %212 = arith.mulf %208, %207 : vector<2x32xf32>
    %213 = arith.addf %211, %212 : vector<2x32xf32>
    %214 = math.tanh %213 : vector<2x32xf32>
    %215 = arith.mulf %210, %214 : vector<2x32xf32>
    %216 = vector.extract_strided_slice %199 {offsets = [0, 0], sizes = [2, 96], strides = [1, 1]} : vector<2x128xf32> to vector<2x96xf32>
    %217 = arith.negf %216 : vector<2x96xf32>
    %218 = math.exp %217 : vector<2x96xf32>
    %cst_47 = arith.constant 1.000000e+00 : f32
    %219 = vector.broadcast %cst_47 : f32 to vector<2x96xf32>
    %220 = arith.addf %219, %218 : vector<2x96xf32>
    %221 = arith.divf %219, %220 : vector<2x96xf32>
    %222 = vector.extract_strided_slice %199 {offsets = [0, 96], sizes = [2, 32], strides = [1, 1]} : vector<2x128xf32> to vector<2x32xf32>
    %223 = math.tanh %222 : vector<2x32xf32>
    %224 = vector.extract_strided_slice %221 {offsets = [0, 0], sizes = [2, 32], strides = [1, 1]} : vector<2x96xf32> to vector<2x32xf32>
    %225 = vector.extract_strided_slice %221 {offsets = [0, 32], sizes = [2, 32], strides = [1, 1]} : vector<2x96xf32> to vector<2x32xf32>
    %226 = vector.extract_strided_slice %221 {offsets = [0, 64], sizes = [2, 32], strides = [1, 1]} : vector<2x96xf32> to vector<2x32xf32>
    %227 = arith.mulf %225, %184 : vector<2x32xf32>
    %228 = arith.mulf %224, %223 : vector<2x32xf32>
    %229 = arith.addf %227, %228 : vector<2x32xf32>
    %230 = math.tanh %229 : vector<2x32xf32>
    %231 = arith.mulf %226, %230 : vector<2x32xf32>
    %c8_48 = arith.constant 8 : index
    %c0_49 = arith.constant 0 : index
    %232 = vector.load %arg4[%c8_48, %c0_49] : memref<32x32xf32, #tpu.memory_space<vmem>>, vector<2x32xf32>
    tpu.vector_store %arg4[%c8_48, %c0_49], %215 {strides = array<i32>} : memref<32x32xf32, #tpu.memory_space<vmem>>, vector<2x32xf32>,
    %c22_50 = arith.constant 22 : index
    %c0_51 = arith.constant 0 : index
    %233 = vector.load %arg5[%c22_50, %c0_51] : memref<32x32xf32, #tpu.memory_space<vmem>>, vector<2x32xf32>
    tpu.vector_store %arg5[%c22_50, %c0_51], %231 {strides = array<i32>} : memref<32x32xf32, #tpu.memory_space<vmem>>, vector<2x32xf32>,
    %234 = tpu.concatenate %215, %231 in 1 : vector<2x32xf32>, vector<2x32xf32> -> vector<2x64xf32>
    %235 = arith.truncf %234 : vector<2x64xf32> to vector<2x64xbf16>
    %cst_52 = arith.constant dense<0.000000e+00> : vector<2x256xf32>
    %236 = tpu.matmul %235, %3, %cst_52 {dimension_numbers = #tpu.dot_dimension_numbers<[1], [0], [0], [1], [0, 0, 1, 1], [], []>} : vector<2x64xbf16>, vector<64x256xbf16>, vector<2x256xf32> -> vector<2x256xf32>
    %c10 = arith.constant 10 : index
    %c0_53 = arith.constant 0 : index
    %237 = vector.load %arg1[%c10, %c0_53] : memref<32x128xbf16, #tpu.memory_space<vmem>>, vector<2x128xbf16>
    %238 = vector.extract_strided_slice %236 {offsets = [0, 0], sizes = [2, 128], strides = [1, 1]} : vector<2x256xf32> to vector<2x128xf32>
    %239 = arith.extf %237 : vector<2x128xbf16> to vector<2x128xf32>
    %240 = arith.addf %239, %238 : vector<2x128xf32>
    %c20 = arith.constant 20 : index
    %c0_54 = arith.constant 0 : index
    %241 = vector.load %arg2[%c20, %c0_54] : memref<32x128xbf16, #tpu.memory_space<vmem>>, vector<2x128xbf16>
    %242 = vector.extract_strided_slice %236 {offsets = [0, 128], sizes = [2, 128], strides = [1, 1]} : vector<2x256xf32> to vector<2x128xf32>
    %243 = arith.extf %241 : vector<2x128xbf16> to vector<2x128xf32>
    %244 = arith.addf %243, %242 : vector<2x128xf32>
    %245 = vector.extract_strided_slice %240 {offsets = [0, 0], sizes = [2, 96], strides = [1, 1]} : vector<2x128xf32> to vector<2x96xf32>
    %246 = arith.negf %245 : vector<2x96xf32>
    %247 = math.exp %246 : vector<2x96xf32>
    %cst_55 = arith.constant 1.000000e+00 : f32
    %248 = vector.broadcast %cst_55 : f32 to vector<2x96xf32>
    %249 = arith.addf %248, %247 : vector<2x96xf32>
    %250 = arith.divf %248, %249 : vector<2x96xf32>
    %251 = vector.extract_strided_slice %240 {offsets = [0, 96], sizes = [2, 32], strides = [1, 1]} : vector<2x128xf32> to vector<2x32xf32>
    %252 = math.tanh %251 : vector<2x32xf32>
    %253 = vector.extract_strided_slice %250 {offsets = [0, 0], sizes = [2, 32], strides = [1, 1]} : vector<2x96xf32> to vector<2x32xf32>
    %254 = vector.extract_strided_slice %250 {offsets = [0, 32], sizes = [2, 32], strides = [1, 1]} : vector<2x96xf32> to vector<2x32xf32>
    %255 = vector.extract_strided_slice %250 {offsets = [0, 64], sizes = [2, 32], strides = [1, 1]} : vector<2x96xf32> to vector<2x32xf32>
    %256 = arith.mulf %254, %213 : vector<2x32xf32>
    %257 = arith.mulf %253, %252 : vector<2x32xf32>
    %258 = arith.addf %256, %257 : vector<2x32xf32>
    %259 = math.tanh %258 : vector<2x32xf32>
    %260 = arith.mulf %255, %259 : vector<2x32xf32>
    %261 = vector.extract_strided_slice %244 {offsets = [0, 0], sizes = [2, 96], strides = [1, 1]} : vector<2x128xf32> to vector<2x96xf32>
    %262 = arith.negf %261 : vector<2x96xf32>
    %263 = math.exp %262 : vector<2x96xf32>
    %cst_56 = arith.constant 1.000000e+00 : f32
    %264 = vector.broadcast %cst_56 : f32 to vector<2x96xf32>
    %265 = arith.addf %264, %263 : vector<2x96xf32>
    %266 = arith.divf %264, %265 : vector<2x96xf32>
    %267 = vector.extract_strided_slice %244 {offsets = [0, 96], sizes = [2, 32], strides = [1, 1]} : vector<2x128xf32> to vector<2x32xf32>
    %268 = math.tanh %267 : vector<2x32xf32>
    %269 = vector.extract_strided_slice %266 {offsets = [0, 0], sizes = [2, 32], strides = [1, 1]} : vector<2x96xf32> to vector<2x32xf32>
    %270 = vector.extract_strided_slice %266 {offsets = [0, 32], sizes = [2, 32], strides = [1, 1]} : vector<2x96xf32> to vector<2x32xf32>
    %271 = vector.extract_strided_slice %266 {offsets = [0, 64], sizes = [2, 32], strides = [1, 1]} : vector<2x96xf32> to vector<2x32xf32>
    %272 = arith.mulf %270, %229 : vector<2x32xf32>
    %273 = arith.mulf %269, %268 : vector<2x32xf32>
    %274 = arith.addf %272, %273 : vector<2x32xf32>
    %275 = math.tanh %274 : vector<2x32xf32>
    %276 = arith.mulf %271, %275 : vector<2x32xf32>
    %c10_57 = arith.constant 10 : index
    %c0_58 = arith.constant 0 : index
    %277 = vector.load %arg4[%c10_57, %c0_58] : memref<32x32xf32, #tpu.memory_space<vmem>>, vector<2x32xf32>
    tpu.vector_store %arg4[%c10_57, %c0_58], %260 {strides = array<i32>} : memref<32x32xf32, #tpu.memory_space<vmem>>, vector<2x32xf32>,
    %c20_59 = arith.constant 20 : index
    %c0_60 = arith.constant 0 : index
    %278 = vector.load %arg5[%c20_59, %c0_60] : memref<32x32xf32, #tpu.memory_space<vmem>>, vector<2x32xf32>
    tpu.vector_store %arg5[%c20_59, %c0_60], %276 {strides = array<i32>} : memref<32x32xf32, #tpu.memory_space<vmem>>, vector<2x32xf32>,
    %279 = tpu.concatenate %260, %276 in 1 : vector<2x32xf32>, vector<2x32xf32> -> vector<2x64xf32>
    %280 = arith.truncf %279 : vector<2x64xf32> to vector<2x64xbf16>
    %cst_61 = arith.constant dense<0.000000e+00> : vector<2x256xf32>
    %281 = tpu.matmul %280, %3, %cst_61 {dimension_numbers = #tpu.dot_dimension_numbers<[1], [0], [0], [1], [0, 0, 1, 1], [], []>} : vector<2x64xbf16>, vector<64x256xbf16>, vector<2x256xf32> -> vector<2x256xf32>
    %c12 = arith.constant 12 : index
    %c0_62 = arith.constant 0 : index
    %282 = vector.load %arg1[%c12, %c0_62] : memref<32x128xbf16, #tpu.memory_space<vmem>>, vector<2x128xbf16>
    %283 = vector.extract_strided_slice %281 {offsets = [0, 0], sizes = [2, 128], strides = [1, 1]} : vector<2x256xf32> to vector<2x128xf32>
    %284 = arith.extf %282 : vector<2x128xbf16> to vector<2x128xf32>
    %285 = arith.addf %284, %283 : vector<2x128xf32>
    %c18 = arith.constant 18 : index
    %c0_63 = arith.constant 0 : index
    %286 = vector.load %arg2[%c18, %c0_63] : memref<32x128xbf16, #tpu.memory_space<vmem>>, vector<2x128xbf16>
    %287 = vector.extract_strided_slice %281 {offsets = [0, 128], sizes = [2, 128], strides = [1, 1]} : vector<2x256xf32> to vector<2x128xf32>
    %288 = arith.extf %286 : vector<2x128xbf16> to vector<2x128xf32>
    %289 = arith.addf %288, %287 : vector<2x128xf32>
    %290 = vector.extract_strided_slice %285 {offsets = [0, 0], sizes = [2, 96], strides = [1, 1]} : vector<2x128xf32> to vector<2x96xf32>
    %291 = arith.negf %290 : vector<2x96xf32>
    %292 = math.exp %291 : vector<2x96xf32>
    %cst_64 = arith.constant 1.000000e+00 : f32
    %293 = vector.broadcast %cst_64 : f32 to vector<2x96xf32>
    %294 = arith.addf %293, %292 : vector<2x96xf32>
    %295 = arith.divf %293, %294 : vector<2x96xf32>
    %296 = vector.extract_strided_slice %285 {offsets = [0, 96], sizes = [2, 32], strides = [1, 1]} : vector<2x128xf32> to vector<2x32xf32>
    %297 = math.tanh %296 : vector<2x32xf32>
    %298 = vector.extract_strided_slice %295 {offsets = [0, 0], sizes = [2, 32], strides = [1, 1]} : vector<2x96xf32> to vector<2x32xf32>
    %299 = vector.extract_strided_slice %295 {offsets = [0, 32], sizes = [2, 32], strides = [1, 1]} : vector<2x96xf32> to vector<2x32xf32>
    %300 = vector.extract_strided_slice %295 {offsets = [0, 64], sizes = [2, 32], strides = [1, 1]} : vector<2x96xf32> to vector<2x32xf32>
    %301 = arith.mulf %299, %258 : vector<2x32xf32>
    %302 = arith.mulf %298, %297 : vector<2x32xf32>
    %303 = arith.addf %301, %302 : vector<2x32xf32>
    %304 = math.tanh %303 : vector<2x32xf32>
    %305 = arith.mulf %300, %304 : vector<2x32xf32>
    %306 = vector.extract_strided_slice %289 {offsets = [0, 0], sizes = [2, 96], strides = [1, 1]} : vector<2x128xf32> to vector<2x96xf32>
    %307 = arith.negf %306 : vector<2x96xf32>
    %308 = math.exp %307 : vector<2x96xf32>
    %cst_65 = arith.constant 1.000000e+00 : f32
    %309 = vector.broadcast %cst_65 : f32 to vector<2x96xf32>
    %310 = arith.addf %309, %308 : vector<2x96xf32>
    %311 = arith.divf %309, %310 : vector<2x96xf32>
    %312 = vector.extract_strided_slice %289 {offsets = [0, 96], sizes = [2, 32], strides = [1, 1]} : vector<2x128xf32> to vector<2x32xf32>
    %313 = math.tanh %312 : vector<2x32xf32>
    %314 = vector.extract_strided_slice %311 {offsets = [0, 0], sizes = [2, 32], strides = [1, 1]} : vector<2x96xf32> to vector<2x32xf32>
    %315 = vector.extract_strided_slice %311 {offsets = [0, 32], sizes = [2, 32], strides = [1, 1]} : vector<2x96xf32> to vector<2x32xf32>
    %316 = vector.extract_strided_slice %311 {offsets = [0, 64], sizes = [2, 32], strides = [1, 1]} : vector<2x96xf32> to vector<2x32xf32>
    %317 = arith.mulf %315, %274 : vector<2x32xf32>
    %318 = arith.mulf %314, %313 : vector<2x32xf32>
    %319 = arith.addf %317, %318 : vector<2x32xf32>
    %320 = math.tanh %319 : vector<2x32xf32>
    %321 = arith.mulf %316, %320 : vector<2x32xf32>
    %c12_66 = arith.constant 12 : index
    %c0_67 = arith.constant 0 : index
    %322 = vector.load %arg4[%c12_66, %c0_67] : memref<32x32xf32, #tpu.memory_space<vmem>>, vector<2x32xf32>
    tpu.vector_store %arg4[%c12_66, %c0_67], %305 {strides = array<i32>} : memref<32x32xf32, #tpu.memory_space<vmem>>, vector<2x32xf32>,
    %c18_68 = arith.constant 18 : index
    %c0_69 = arith.constant 0 : index
    %323 = vector.load %arg5[%c18_68, %c0_69] : memref<32x32xf32, #tpu.memory_space<vmem>>, vector<2x32xf32>
    tpu.vector_store %arg5[%c18_68, %c0_69], %321 {strides = array<i32>} : memref<32x32xf32, #tpu.memory_space<vmem>>, vector<2x32xf32>,
    %324 = tpu.concatenate %305, %321 in 1 : vector<2x32xf32>, vector<2x32xf32> -> vector<2x64xf32>
    %325 = arith.truncf %324 : vector<2x64xf32> to vector<2x64xbf16>
    %cst_70 = arith.constant dense<0.000000e+00> : vector<2x256xf32>
    %326 = tpu.matmul %325, %3, %cst_70 {dimension_numbers = #tpu.dot_dimension_numbers<[1], [0], [0], [1], [0, 0, 1, 1], [], []>} : vector<2x64xbf16>, vector<64x256xbf16>, vector<2x256xf32> -> vector<2x256xf32>
    %c14 = arith.constant 14 : index
    %c0_71 = arith.constant 0 : index
    %327 = vector.load %arg1[%c14, %c0_71] : memref<32x128xbf16, #tpu.memory_space<vmem>>, vector<2x128xbf16>
    %328 = vector.extract_strided_slice %326 {offsets = [0, 0], sizes = [2, 128], strides = [1, 1]} : vector<2x256xf32> to vector<2x128xf32>
    %329 = arith.extf %327 : vector<2x128xbf16> to vector<2x128xf32>
    %330 = arith.addf %329, %328 : vector<2x128xf32>
    %c16 = arith.constant 16 : index
    %c0_72 = arith.constant 0 : index
    %331 = vector.load %arg2[%c16, %c0_72] : memref<32x128xbf16, #tpu.memory_space<vmem>>, vector<2x128xbf16>
    %332 = vector.extract_strided_slice %326 {offsets = [0, 128], sizes = [2, 128], strides = [1, 1]} : vector<2x256xf32> to vector<2x128xf32>
    %333 = arith.extf %331 : vector<2x128xbf16> to vector<2x128xf32>
    %334 = arith.addf %333, %332 : vector<2x128xf32>
    %335 = vector.extract_strided_slice %330 {offsets = [0, 0], sizes = [2, 96], strides = [1, 1]} : vector<2x128xf32> to vector<2x96xf32>
    %336 = arith.negf %335 : vector<2x96xf32>
    %337 = math.exp %336 : vector<2x96xf32>
    %cst_73 = arith.constant 1.000000e+00 : f32
    %338 = vector.broadcast %cst_73 : f32 to vector<2x96xf32>
    %339 = arith.addf %338, %337 : vector<2x96xf32>
    %340 = arith.divf %338, %339 : vector<2x96xf32>
    %341 = vector.extract_strided_slice %330 {offsets = [0, 96], sizes = [2, 32], strides = [1, 1]} : vector<2x128xf32> to vector<2x32xf32>
    %342 = math.tanh %341 : vector<2x32xf32>
    %343 = vector.extract_strided_slice %340 {offsets = [0, 0], sizes = [2, 32], strides = [1, 1]} : vector<2x96xf32> to vector<2x32xf32>
    %344 = vector.extract_strided_slice %340 {offsets = [0, 32], sizes = [2, 32], strides = [1, 1]} : vector<2x96xf32> to vector<2x32xf32>
    %345 = vector.extract_strided_slice %340 {offsets = [0, 64], sizes = [2, 32], strides = [1, 1]} : vector<2x96xf32> to vector<2x32xf32>
    %346 = arith.mulf %344, %303 : vector<2x32xf32>
    %347 = arith.mulf %343, %342 : vector<2x32xf32>
    %348 = arith.addf %346, %347 : vector<2x32xf32>
    %349 = math.tanh %348 : vector<2x32xf32>
    %350 = arith.mulf %345, %349 : vector<2x32xf32>
    %351 = vector.extract_strided_slice %334 {offsets = [0, 0], sizes = [2, 96], strides = [1, 1]} : vector<2x128xf32> to vector<2x96xf32>
    %352 = arith.negf %351 : vector<2x96xf32>
    %353 = math.exp %352 : vector<2x96xf32>
    %cst_74 = arith.constant 1.000000e+00 : f32
    %354 = vector.broadcast %cst_74 : f32 to vector<2x96xf32>
    %355 = arith.addf %354, %353 : vector<2x96xf32>
    %356 = arith.divf %354, %355 : vector<2x96xf32>
    %357 = vector.extract_strided_slice %334 {offsets = [0, 96], sizes = [2, 32], strides = [1, 1]} : vector<2x128xf32> to vector<2x32xf32>
    %358 = math.tanh %357 : vector<2x32xf32>
    %359 = vector.extract_strided_slice %356 {offsets = [0, 0], sizes = [2, 32], strides = [1, 1]} : vector<2x96xf32> to vector<2x32xf32>
    %360 = vector.extract_strided_slice %356 {offsets = [0, 32], sizes = [2, 32], strides = [1, 1]} : vector<2x96xf32> to vector<2x32xf32>
    %361 = vector.extract_strided_slice %356 {offsets = [0, 64], sizes = [2, 32], strides = [1, 1]} : vector<2x96xf32> to vector<2x32xf32>
    %362 = arith.mulf %360, %319 : vector<2x32xf32>
    %363 = arith.mulf %359, %358 : vector<2x32xf32>
    %364 = arith.addf %362, %363 : vector<2x32xf32>
    %365 = math.tanh %364 : vector<2x32xf32>
    %366 = arith.mulf %361, %365 : vector<2x32xf32>
    %c14_75 = arith.constant 14 : index
    %c0_76 = arith.constant 0 : index
    %367 = vector.load %arg4[%c14_75, %c0_76] : memref<32x32xf32, #tpu.memory_space<vmem>>, vector<2x32xf32>
    tpu.vector_store %arg4[%c14_75, %c0_76], %350 {strides = array<i32>} : memref<32x32xf32, #tpu.memory_space<vmem>>, vector<2x32xf32>,
    %c16_77 = arith.constant 16 : index
    %c0_78 = arith.constant 0 : index
    %368 = vector.load %arg5[%c16_77, %c0_78] : memref<32x32xf32, #tpu.memory_space<vmem>>, vector<2x32xf32>
    tpu.vector_store %arg5[%c16_77, %c0_78], %366 {strides = array<i32>} : memref<32x32xf32, #tpu.memory_space<vmem>>, vector<2x32xf32>,
    %369 = tpu.concatenate %350, %366 in 1 : vector<2x32xf32>, vector<2x32xf32> -> vector<2x64xf32>
    %370 = arith.truncf %369 : vector<2x64xf32> to vector<2x64xbf16>
    %cst_79 = arith.constant dense<0.000000e+00> : vector<2x256xf32>
    %371 = tpu.matmul %370, %3, %cst_79 {dimension_numbers = #tpu.dot_dimension_numbers<[1], [0], [0], [1], [0, 0, 1, 1], [], []>} : vector<2x64xbf16>, vector<64x256xbf16>, vector<2x256xf32> -> vector<2x256xf32>
    %c16_80 = arith.constant 16 : index
    %c0_81 = arith.constant 0 : index
    %372 = vector.load %arg1[%c16_80, %c0_81] : memref<32x128xbf16, #tpu.memory_space<vmem>>, vector<2x128xbf16>
    %373 = vector.extract_strided_slice %371 {offsets = [0, 0], sizes = [2, 128], strides = [1, 1]} : vector<2x256xf32> to vector<2x128xf32>
    %374 = arith.extf %372 : vector<2x128xbf16> to vector<2x128xf32>
    %375 = arith.addf %374, %373 : vector<2x128xf32>
    %c14_82 = arith.constant 14 : index
    %c0_83 = arith.constant 0 : index
    %376 = vector.load %arg2[%c14_82, %c0_83] : memref<32x128xbf16, #tpu.memory_space<vmem>>, vector<2x128xbf16>
    %377 = vector.extract_strided_slice %371 {offsets = [0, 128], sizes = [2, 128], strides = [1, 1]} : vector<2x256xf32> to vector<2x128xf32>
    %378 = arith.extf %376 : vector<2x128xbf16> to vector<2x128xf32>
    %379 = arith.addf %378, %377 : vector<2x128xf32>
    %380 = vector.extract_strided_slice %375 {offsets = [0, 0], sizes = [2, 96], strides = [1, 1]} : vector<2x128xf32> to vector<2x96xf32>
    %381 = arith.negf %380 : vector<2x96xf32>
    %382 = math.exp %381 : vector<2x96xf32>
    %cst_84 = arith.constant 1.000000e+00 : f32
    %383 = vector.broadcast %cst_84 : f32 to vector<2x96xf32>
    %384 = arith.addf %383, %382 : vector<2x96xf32>
    %385 = arith.divf %383, %384 : vector<2x96xf32>
    %386 = vector.extract_strided_slice %375 {offsets = [0, 96], sizes = [2, 32], strides = [1, 1]} : vector<2x128xf32> to vector<2x32xf32>
    %387 = math.tanh %386 : vector<2x32xf32>
    %388 = vector.extract_strided_slice %385 {offsets = [0, 0], sizes = [2, 32], strides = [1, 1]} : vector<2x96xf32> to vector<2x32xf32>
    %389 = vector.extract_strided_slice %385 {offsets = [0, 32], sizes = [2, 32], strides = [1, 1]} : vector<2x96xf32> to vector<2x32xf32>
    %390 = vector.extract_strided_slice %385 {offsets = [0, 64], sizes = [2, 32], strides = [1, 1]} : vector<2x96xf32> to vector<2x32xf32>
    %391 = arith.mulf %389, %348 : vector<2x32xf32>
    %392 = arith.mulf %388, %387 : vector<2x32xf32>
    %393 = arith.addf %391, %392 : vector<2x32xf32>
    %394 = math.tanh %393 : vector<2x32xf32>
    %395 = arith.mulf %390, %394 : vector<2x32xf32>
    %396 = vector.extract_strided_slice %379 {offsets = [0, 0], sizes = [2, 96], strides = [1, 1]} : vector<2x128xf32> to vector<2x96xf32>
    %397 = arith.negf %396 : vector<2x96xf32>
    %398 = math.exp %397 : vector<2x96xf32>
    %cst_85 = arith.constant 1.000000e+00 : f32
    %399 = vector.broadcast %cst_85 : f32 to vector<2x96xf32>
    %400 = arith.addf %399, %398 : vector<2x96xf32>
    %401 = arith.divf %399, %400 : vector<2x96xf32>
    %402 = vector.extract_strided_slice %379 {offsets = [0, 96], sizes = [2, 32], strides = [1, 1]} : vector<2x128xf32> to vector<2x32xf32>
    %403 = math.tanh %402 : vector<2x32xf32>
    %404 = vector.extract_strided_slice %401 {offsets = [0, 0], sizes = [2, 32], strides = [1, 1]} : vector<2x96xf32> to vector<2x32xf32>
    %405 = vector.extract_strided_slice %401 {offsets = [0, 32], sizes = [2, 32], strides = [1, 1]} : vector<2x96xf32> to vector<2x32xf32>
    %406 = vector.extract_strided_slice %401 {offsets = [0, 64], sizes = [2, 32], strides = [1, 1]} : vector<2x96xf32> to vector<2x32xf32>
    %407 = arith.mulf %405, %364 : vector<2x32xf32>
    %408 = arith.mulf %404, %403 : vector<2x32xf32>
    %409 = arith.addf %407, %408 : vector<2x32xf32>
    %410 = math.tanh %409 : vector<2x32xf32>
    %411 = arith.mulf %406, %410 : vector<2x32xf32>
    %c16_86 = arith.constant 16 : index
    %c0_87 = arith.constant 0 : index
    %412 = vector.load %arg4[%c16_86, %c0_87] : memref<32x32xf32, #tpu.memory_space<vmem>>, vector<2x32xf32>
    tpu.vector_store %arg4[%c16_86, %c0_87], %395 {strides = array<i32>} : memref<32x32xf32, #tpu.memory_space<vmem>>, vector<2x32xf32>,
    %c14_88 = arith.constant 14 : index
    %c0_89 = arith.constant 0 : index
    %413 = vector.load %arg5[%c14_88, %c0_89] : memref<32x32xf32, #tpu.memory_space<vmem>>, vector<2x32xf32>
    tpu.vector_store %arg5[%c14_88, %c0_89], %411 {strides = array<i32>} : memref<32x32xf32, #tpu.memory_space<vmem>>, vector<2x32xf32>,
    %414 = tpu.concatenate %395, %411 in 1 : vector<2x32xf32>, vector<2x32xf32> -> vector<2x64xf32>
    %415 = arith.truncf %414 : vector<2x64xf32> to vector<2x64xbf16>
    %cst_90 = arith.constant dense<0.000000e+00> : vector<2x256xf32>
    %416 = tpu.matmul %415, %3, %cst_90 {dimension_numbers = #tpu.dot_dimension_numbers<[1], [0], [0], [1], [0, 0, 1, 1], [], []>} : vector<2x64xbf16>, vector<64x256xbf16>, vector<2x256xf32> -> vector<2x256xf32>
    %c18_91 = arith.constant 18 : index
    %c0_92 = arith.constant 0 : index
    %417 = vector.load %arg1[%c18_91, %c0_92] : memref<32x128xbf16, #tpu.memory_space<vmem>>, vector<2x128xbf16>
    %418 = vector.extract_strided_slice %416 {offsets = [0, 0], sizes = [2, 128], strides = [1, 1]} : vector<2x256xf32> to vector<2x128xf32>
    %419 = arith.extf %417 : vector<2x128xbf16> to vector<2x128xf32>
    %420 = arith.addf %419, %418 : vector<2x128xf32>
    %c12_93 = arith.constant 12 : index
    %c0_94 = arith.constant 0 : index
    %421 = vector.load %arg2[%c12_93, %c0_94] : memref<32x128xbf16, #tpu.memory_space<vmem>>, vector<2x128xbf16>
    %422 = vector.extract_strided_slice %416 {offsets = [0, 128], sizes = [2, 128], strides = [1, 1]} : vector<2x256xf32> to vector<2x128xf32>
    %423 = arith.extf %421 : vector<2x128xbf16> to vector<2x128xf32>
    %424 = arith.addf %423, %422 : vector<2x128xf32>
    %425 = vector.extract_strided_slice %420 {offsets = [0, 0], sizes = [2, 96], strides = [1, 1]} : vector<2x128xf32> to vector<2x96xf32>
    %426 = arith.negf %425 : vector<2x96xf32>
    %427 = math.exp %426 : vector<2x96xf32>
    %cst_95 = arith.constant 1.000000e+00 : f32
    %428 = vector.broadcast %cst_95 : f32 to vector<2x96xf32>
    %429 = arith.addf %428, %427 : vector<2x96xf32>
    %430 = arith.divf %428, %429 : vector<2x96xf32>
    %431 = vector.extract_strided_slice %420 {offsets = [0, 96], sizes = [2, 32], strides = [1, 1]} : vector<2x128xf32> to vector<2x32xf32>
    %432 = math.tanh %431 : vector<2x32xf32>
    %433 = vector.extract_strided_slice %430 {offsets = [0, 0], sizes = [2, 32], strides = [1, 1]} : vector<2x96xf32> to vector<2x32xf32>
    %434 = vector.extract_strided_slice %430 {offsets = [0, 32], sizes = [2, 32], strides = [1, 1]} : vector<2x96xf32> to vector<2x32xf32>
    %435 = vector.extract_strided_slice %430 {offsets = [0, 64], sizes = [2, 32], strides = [1, 1]} : vector<2x96xf32> to vector<2x32xf32>
    %436 = arith.mulf %434, %393 : vector<2x32xf32>
    %437 = arith.mulf %433, %432 : vector<2x32xf32>
    %438 = arith.addf %436, %437 : vector<2x32xf32>
    %439 = math.tanh %438 : vector<2x32xf32>
    %440 = arith.mulf %435, %439 : vector<2x32xf32>
    %441 = vector.extract_strided_slice %424 {offsets = [0, 0], sizes = [2, 96], strides = [1, 1]} : vector<2x128xf32> to vector<2x96xf32>
    %442 = arith.negf %441 : vector<2x96xf32>
    %443 = math.exp %442 : vector<2x96xf32>
    %cst_96 = arith.constant 1.000000e+00 : f32
    %444 = vector.broadcast %cst_96 : f32 to vector<2x96xf32>
    %445 = arith.addf %444, %443 : vector<2x96xf32>
    %446 = arith.divf %444, %445 : vector<2x96xf32>
    %447 = vector.extract_strided_slice %424 {offsets = [0, 96], sizes = [2, 32], strides = [1, 1]} : vector<2x128xf32> to vector<2x32xf32>
    %448 = math.tanh %447 : vector<2x32xf32>
    %449 = vector.extract_strided_slice %446 {offsets = [0, 0], sizes = [2, 32], strides = [1, 1]} : vector<2x96xf32> to vector<2x32xf32>
    %450 = vector.extract_strided_slice %446 {offsets = [0, 32], sizes = [2, 32], strides = [1, 1]} : vector<2x96xf32> to vector<2x32xf32>
    %451 = vector.extract_strided_slice %446 {offsets = [0, 64], sizes = [2, 32], strides = [1, 1]} : vector<2x96xf32> to vector<2x32xf32>
    %452 = arith.mulf %450, %409 : vector<2x32xf32>
    %453 = arith.mulf %449, %448 : vector<2x32xf32>
    %454 = arith.addf %452, %453 : vector<2x32xf32>
    %455 = math.tanh %454 : vector<2x32xf32>
    %456 = arith.mulf %451, %455 : vector<2x32xf32>
    %c18_97 = arith.constant 18 : index
    %c0_98 = arith.constant 0 : index
    %457 = vector.load %arg4[%c18_97, %c0_98] : memref<32x32xf32, #tpu.memory_space<vmem>>, vector<2x32xf32>
    tpu.vector_store %arg4[%c18_97, %c0_98], %440 {strides = array<i32>} : memref<32x32xf32, #tpu.memory_space<vmem>>, vector<2x32xf32>,
    %c12_99 = arith.constant 12 : index
    %c0_100 = arith.constant 0 : index
    %458 = vector.load %arg5[%c12_99, %c0_100] : memref<32x32xf32, #tpu.memory_space<vmem>>, vector<2x32xf32>
    tpu.vector_store %arg5[%c12_99, %c0_100], %456 {strides = array<i32>} : memref<32x32xf32, #tpu.memory_space<vmem>>, vector<2x32xf32>,
    %459 = tpu.concatenate %440, %456 in 1 : vector<2x32xf32>, vector<2x32xf32> -> vector<2x64xf32>
    %460 = arith.truncf %459 : vector<2x64xf32> to vector<2x64xbf16>
    %cst_101 = arith.constant dense<0.000000e+00> : vector<2x256xf32>
    %461 = tpu.matmul %460, %3, %cst_101 {dimension_numbers = #tpu.dot_dimension_numbers<[1], [0], [0], [1], [0, 0, 1, 1], [], []>} : vector<2x64xbf16>, vector<64x256xbf16>, vector<2x256xf32> -> vector<2x256xf32>
    %c20_102 = arith.constant 20 : index
    %c0_103 = arith.constant 0 : index
    %462 = vector.load %arg1[%c20_102, %c0_103] : memref<32x128xbf16, #tpu.memory_space<vmem>>, vector<2x128xbf16>
    %463 = vector.extract_strided_slice %461 {offsets = [0, 0], sizes = [2, 128], strides = [1, 1]} : vector<2x256xf32> to vector<2x128xf32>
    %464 = arith.extf %462 : vector<2x128xbf16> to vector<2x128xf32>
    %465 = arith.addf %464, %463 : vector<2x128xf32>
    %c10_104 = arith.constant 10 : index
    %c0_105 = arith.constant 0 : index
    %466 = vector.load %arg2[%c10_104, %c0_105] : memref<32x128xbf16, #tpu.memory_space<vmem>>, vector<2x128xbf16>
    %467 = vector.extract_strided_slice %461 {offsets = [0, 128], sizes = [2, 128], strides = [1, 1]} : vector<2x256xf32> to vector<2x128xf32>
    %468 = arith.extf %466 : vector<2x128xbf16> to vector<2x128xf32>
    %469 = arith.addf %468, %467 : vector<2x128xf32>
    %470 = vector.extract_strided_slice %465 {offsets = [0, 0], sizes = [2, 96], strides = [1, 1]} : vector<2x128xf32> to vector<2x96xf32>
    %471 = arith.negf %470 : vector<2x96xf32>
    %472 = math.exp %471 : vector<2x96xf32>
    %cst_106 = arith.constant 1.000000e+00 : f32
    %473 = vector.broadcast %cst_106 : f32 to vector<2x96xf32>
    %474 = arith.addf %473, %472 : vector<2x96xf32>
    %475 = arith.divf %473, %474 : vector<2x96xf32>
    %476 = vector.extract_strided_slice %465 {offsets = [0, 96], sizes = [2, 32], strides = [1, 1]} : vector<2x128xf32> to vector<2x32xf32>
    %477 = math.tanh %476 : vector<2x32xf32>
    %478 = vector.extract_strided_slice %475 {offsets = [0, 0], sizes = [2, 32], strides = [1, 1]} : vector<2x96xf32> to vector<2x32xf32>
    %479 = vector.extract_strided_slice %475 {offsets = [0, 32], sizes = [2, 32], strides = [1, 1]} : vector<2x96xf32> to vector<2x32xf32>
    %480 = vector.extract_strided_slice %475 {offsets = [0, 64], sizes = [2, 32], strides = [1, 1]} : vector<2x96xf32> to vector<2x32xf32>
    %481 = arith.mulf %479, %438 : vector<2x32xf32>
    %482 = arith.mulf %478, %477 : vector<2x32xf32>
    %483 = arith.addf %481, %482 : vector<2x32xf32>
    %484 = math.tanh %483 : vector<2x32xf32>
    %485 = arith.mulf %480, %484 : vector<2x32xf32>
    %486 = vector.extract_strided_slice %469 {offsets = [0, 0], sizes = [2, 96], strides = [1, 1]} : vector<2x128xf32> to vector<2x96xf32>
    %487 = arith.negf %486 : vector<2x96xf32>
    %488 = math.exp %487 : vector<2x96xf32>
    %cst_107 = arith.constant 1.000000e+00 : f32
    %489 = vector.broadcast %cst_107 : f32 to vector<2x96xf32>
    %490 = arith.addf %489, %488 : vector<2x96xf32>
    %491 = arith.divf %489, %490 : vector<2x96xf32>
    %492 = vector.extract_strided_slice %469 {offsets = [0, 96], sizes = [2, 32], strides = [1, 1]} : vector<2x128xf32> to vector<2x32xf32>
    %493 = math.tanh %492 : vector<2x32xf32>
    %494 = vector.extract_strided_slice %491 {offsets = [0, 0], sizes = [2, 32], strides = [1, 1]} : vector<2x96xf32> to vector<2x32xf32>
    %495 = vector.extract_strided_slice %491 {offsets = [0, 32], sizes = [2, 32], strides = [1, 1]} : vector<2x96xf32> to vector<2x32xf32>
    %496 = vector.extract_strided_slice %491 {offsets = [0, 64], sizes = [2, 32], strides = [1, 1]} : vector<2x96xf32> to vector<2x32xf32>
    %497 = arith.mulf %495, %454 : vector<2x32xf32>
    %498 = arith.mulf %494, %493 : vector<2x32xf32>
    %499 = arith.addf %497, %498 : vector<2x32xf32>
    %500 = math.tanh %499 : vector<2x32xf32>
    %501 = arith.mulf %496, %500 : vector<2x32xf32>
    %c20_108 = arith.constant 20 : index
    %c0_109 = arith.constant 0 : index
    %502 = vector.load %arg4[%c20_108, %c0_109] : memref<32x32xf32, #tpu.memory_space<vmem>>, vector<2x32xf32>
    tpu.vector_store %arg4[%c20_108, %c0_109], %485 {strides = array<i32>} : memref<32x32xf32, #tpu.memory_space<vmem>>, vector<2x32xf32>,
    %c10_110 = arith.constant 10 : index
    %c0_111 = arith.constant 0 : index
    %503 = vector.load %arg5[%c10_110, %c0_111] : memref<32x32xf32, #tpu.memory_space<vmem>>, vector<2x32xf32>
    tpu.vector_store %arg5[%c10_110, %c0_111], %501 {strides = array<i32>} : memref<32x32xf32, #tpu.memory_space<vmem>>, vector<2x32xf32>,
    %504 = tpu.concatenate %485, %501 in 1 : vector<2x32xf32>, vector<2x32xf32> -> vector<2x64xf32>
    %505 = arith.truncf %504 : vector<2x64xf32> to vector<2x64xbf16>
    %cst_112 = arith.constant dense<0.000000e+00> : vector<2x256xf32>
    %506 = tpu.matmul %505, %3, %cst_112 {dimension_numbers = #tpu.dot_dimension_numbers<[1], [0], [0], [1], [0, 0, 1, 1], [], []>} : vector<2x64xbf16>, vector<64x256xbf16>, vector<2x256xf32> -> vector<2x256xf32>
    %c22_113 = arith.constant 22 : index
    %c0_114 = arith.constant 0 : index
    %507 = vector.load %arg1[%c22_113, %c0_114] : memref<32x128xbf16, #tpu.memory_space<vmem>>, vector<2x128xbf16>
    %508 = vector.extract_strided_slice %506 {offsets = [0, 0], sizes = [2, 128], strides = [1, 1]} : vector<2x256xf32> to vector<2x128xf32>
    %509 = arith.extf %507 : vector<2x128xbf16> to vector<2x128xf32>
    %510 = arith.addf %509, %508 : vector<2x128xf32>
    %c8_115 = arith.constant 8 : index
    %c0_116 = arith.constant 0 : index
    %511 = vector.load %arg2[%c8_115, %c0_116] : memref<32x128xbf16, #tpu.memory_space<vmem>>, vector<2x128xbf16>
    %512 = vector.extract_strided_slice %506 {offsets = [0, 128], sizes = [2, 128], strides = [1, 1]} : vector<2x256xf32> to vector<2x128xf32>
    %513 = arith.extf %511 : vector<2x128xbf16> to vector<2x128xf32>
    %514 = arith.addf %513, %512 : vector<2x128xf32>
    %515 = vector.extract_strided_slice %510 {offsets = [0, 0], sizes = [2, 96], strides = [1, 1]} : vector<2x128xf32> to vector<2x96xf32>
    %516 = arith.negf %515 : vector<2x96xf32>
    %517 = math.exp %516 : vector<2x96xf32>
    %cst_117 = arith.constant 1.000000e+00 : f32
    %518 = vector.broadcast %cst_117 : f32 to vector<2x96xf32>
    %519 = arith.addf %518, %517 : vector<2x96xf32>
    %520 = arith.divf %518, %519 : vector<2x96xf32>
    %521 = vector.extract_strided_slice %510 {offsets = [0, 96], sizes = [2, 32], strides = [1, 1]} : vector<2x128xf32> to vector<2x32xf32>
    %522 = math.tanh %521 : vector<2x32xf32>
    %523 = vector.extract_strided_slice %520 {offsets = [0, 0], sizes = [2, 32], strides = [1, 1]} : vector<2x96xf32> to vector<2x32xf32>
    %524 = vector.extract_strided_slice %520 {offsets = [0, 32], sizes = [2, 32], strides = [1, 1]} : vector<2x96xf32> to vector<2x32xf32>
    %525 = vector.extract_strided_slice %520 {offsets = [0, 64], sizes = [2, 32], strides = [1, 1]} : vector<2x96xf32> to vector<2x32xf32>
    %526 = arith.mulf %524, %483 : vector<2x32xf32>
    %527 = arith.mulf %523, %522 : vector<2x32xf32>
    %528 = arith.addf %526, %527 : vector<2x32xf32>
    %529 = math.tanh %528 : vector<2x32xf32>
    %530 = arith.mulf %525, %529 : vector<2x32xf32>
    %531 = vector.extract_strided_slice %514 {offsets = [0, 0], sizes = [2, 96], strides = [1, 1]} : vector<2x128xf32> to vector<2x96xf32>
    %532 = arith.negf %531 : vector<2x96xf32>
    %533 = math.exp %532 : vector<2x96xf32>
    %cst_118 = arith.constant 1.000000e+00 : f32
    %534 = vector.broadcast %cst_118 : f32 to vector<2x96xf32>
    %535 = arith.addf %534, %533 : vector<2x96xf32>
    %536 = arith.divf %534, %535 : vector<2x96xf32>
    %537 = vector.extract_strided_slice %514 {offsets = [0, 96], sizes = [2, 32], strides = [1, 1]} : vector<2x128xf32> to vector<2x32xf32>
    %538 = math.tanh %537 : vector<2x32xf32>
    %539 = vector.extract_strided_slice %536 {offsets = [0, 0], sizes = [2, 32], strides = [1, 1]} : vector<2x96xf32> to vector<2x32xf32>
    %540 = vector.extract_strided_slice %536 {offsets = [0, 32], sizes = [2, 32], strides = [1, 1]} : vector<2x96xf32> to vector<2x32xf32>
    %541 = vector.extract_strided_slice %536 {offsets = [0, 64], sizes = [2, 32], strides = [1, 1]} : vector<2x96xf32> to vector<2x32xf32>
    %542 = arith.mulf %540, %499 : vector<2x32xf32>
    %543 = arith.mulf %539, %538 : vector<2x32xf32>
    %544 = arith.addf %542, %543 : vector<2x32xf32>
    %545 = math.tanh %544 : vector<2x32xf32>
    %546 = arith.mulf %541, %545 : vector<2x32xf32>
    %c22_119 = arith.constant 22 : index
    %c0_120 = arith.constant 0 : index
    %547 = vector.load %arg4[%c22_119, %c0_120] : memref<32x32xf32, #tpu.memory_space<vmem>>, vector<2x32xf32>
    tpu.vector_store %arg4[%c22_119, %c0_120], %530 {strides = array<i32>} : memref<32x32xf32, #tpu.memory_space<vmem>>, vector<2x32xf32>,
    %c8_121 = arith.constant 8 : index
    %c0_122 = arith.constant 0 : index
    %548 = vector.load %arg5[%c8_121, %c0_122] : memref<32x32xf32, #tpu.memory_space<vmem>>, vector<2x32xf32>
    tpu.vector_store %arg5[%c8_121, %c0_122], %546 {strides = array<i32>} : memref<32x32xf32, #tpu.memory_space<vmem>>, vector<2x32xf32>,
    %549 = tpu.concatenate %530, %546 in 1 : vector<2x32xf32>, vector<2x32xf32> -> vector<2x64xf32>
    %550 = arith.truncf %549 : vector<2x64xf32> to vector<2x64xbf16>
    %cst_123 = arith.constant dense<0.000000e+00> : vector<2x256xf32>
    %551 = tpu.matmul %550, %3, %cst_123 {dimension_numbers = #tpu.dot_dimension_numbers<[1], [0], [0], [1], [0, 0, 1, 1], [], []>} : vector<2x64xbf16>, vector<64x256xbf16>, vector<2x256xf32> -> vector<2x256xf32>
    %c24_124 = arith.constant 24 : index
    %c0_125 = arith.constant 0 : index
    %552 = vector.load %arg1[%c24_124, %c0_125] : memref<32x128xbf16, #tpu.memory_space<vmem>>, vector<2x128xbf16>
    %553 = vector.extract_strided_slice %551 {offsets = [0, 0], sizes = [2, 128], strides = [1, 1]} : vector<2x256xf32> to vector<2x128xf32>
    %554 = arith.extf %552 : vector<2x128xbf16> to vector<2x128xf32>
    %555 = arith.addf %554, %553 : vector<2x128xf32>
    %c6_126 = arith.constant 6 : index
    %c0_127 = arith.constant 0 : index
    %556 = vector.load %arg2[%c6_126, %c0_127] : memref<32x128xbf16, #tpu.memory_space<vmem>>, vector<2x128xbf16>
    %557 = vector.extract_strided_slice %551 {offsets = [0, 128], sizes = [2, 128], strides = [1, 1]} : vector<2x256xf32> to vector<2x128xf32>
    %558 = arith.extf %556 : vector<2x128xbf16> to vector<2x128xf32>
    %559 = arith.addf %558, %557 : vector<2x128xf32>
    %560 = vector.extract_strided_slice %555 {offsets = [0, 0], sizes = [2, 96], strides = [1, 1]} : vector<2x128xf32> to vector<2x96xf32>
    %561 = arith.negf %560 : vector<2x96xf32>
    %562 = math.exp %561 : vector<2x96xf32>
    %cst_128 = arith.constant 1.000000e+00 : f32
    %563 = vector.broadcast %cst_128 : f32 to vector<2x96xf32>
    %564 = arith.addf %563, %562 : vector<2x96xf32>
    %565 = arith.divf %563, %564 : vector<2x96xf32>
    %566 = vector.extract_strided_slice %555 {offsets = [0, 96], sizes = [2, 32], strides = [1, 1]} : vector<2x128xf32> to vector<2x32xf32>
    %567 = math.tanh %566 : vector<2x32xf32>
    %568 = vector.extract_strided_slice %565 {offsets = [0, 0], sizes = [2, 32], strides = [1, 1]} : vector<2x96xf32> to vector<2x32xf32>
    %569 = vector.extract_strided_slice %565 {offsets = [0, 32], sizes = [2, 32], strides = [1, 1]} : vector<2x96xf32> to vector<2x32xf32>
    %570 = vector.extract_strided_slice %565 {offsets = [0, 64], sizes = [2, 32], strides = [1, 1]} : vector<2x96xf32> to vector<2x32xf32>
    %571 = arith.mulf %569, %528 : vector<2x32xf32>
    %572 = arith.mulf %568, %567 : vector<2x32xf32>
    %573 = arith.addf %571, %572 : vector<2x32xf32>
    %574 = math.tanh %573 : vector<2x32xf32>
    %575 = arith.mulf %570, %574 : vector<2x32xf32>
    %576 = vector.extract_strided_slice %559 {offsets = [0, 0], sizes = [2, 96], strides = [1, 1]} : vector<2x128xf32> to vector<2x96xf32>
    %577 = arith.negf %576 : vector<2x96xf32>
    %578 = math.exp %577 : vector<2x96xf32>
    %cst_129 = arith.constant 1.000000e+00 : f32
    %579 = vector.broadcast %cst_129 : f32 to vector<2x96xf32>
    %580 = arith.addf %579, %578 : vector<2x96xf32>
    %581 = arith.divf %579, %580 : vector<2x96xf32>
    %582 = vector.extract_strided_slice %559 {offsets = [0, 96], sizes = [2, 32], strides = [1, 1]} : vector<2x128xf32> to vector<2x32xf32>
    %583 = math.tanh %582 : vector<2x32xf32>
    %584 = vector.extract_strided_slice %581 {offsets = [0, 0], sizes = [2, 32], strides = [1, 1]} : vector<2x96xf32> to vector<2x32xf32>
    %585 = vector.extract_strided_slice %581 {offsets = [0, 32], sizes = [2, 32], strides = [1, 1]} : vector<2x96xf32> to vector<2x32xf32>
    %586 = vector.extract_strided_slice %581 {offsets = [0, 64], sizes = [2, 32], strides = [1, 1]} : vector<2x96xf32> to vector<2x32xf32>
    %587 = arith.mulf %585, %544 : vector<2x32xf32>
    %588 = arith.mulf %584, %583 : vector<2x32xf32>
    %589 = arith.addf %587, %588 : vector<2x32xf32>
    %590 = math.tanh %589 : vector<2x32xf32>
    %591 = arith.mulf %586, %590 : vector<2x32xf32>
    %c24_130 = arith.constant 24 : index
    %c0_131 = arith.constant 0 : index
    %592 = vector.load %arg4[%c24_130, %c0_131] : memref<32x32xf32, #tpu.memory_space<vmem>>, vector<2x32xf32>
    tpu.vector_store %arg4[%c24_130, %c0_131], %575 {strides = array<i32>} : memref<32x32xf32, #tpu.memory_space<vmem>>, vector<2x32xf32>,
    %c6_132 = arith.constant 6 : index
    %c0_133 = arith.constant 0 : index
    %593 = vector.load %arg5[%c6_132, %c0_133] : memref<32x32xf32, #tpu.memory_space<vmem>>, vector<2x32xf32>
    tpu.vector_store %arg5[%c6_132, %c0_133], %591 {strides = array<i32>} : memref<32x32xf32, #tpu.memory_space<vmem>>, vector<2x32xf32>,
    %594 = tpu.concatenate %575, %591 in 1 : vector<2x32xf32>, vector<2x32xf32> -> vector<2x64xf32>
    %595 = arith.truncf %594 : vector<2x64xf32> to vector<2x64xbf16>
    %cst_134 = arith.constant dense<0.000000e+00> : vector<2x256xf32>
    %596 = tpu.matmul %595, %3, %cst_134 {dimension_numbers = #tpu.dot_dimension_numbers<[1], [0], [0], [1], [0, 0, 1, 1], [], []>} : vector<2x64xbf16>, vector<64x256xbf16>, vector<2x256xf32> -> vector<2x256xf32>
    %c26_135 = arith.constant 26 : index
    %c0_136 = arith.constant 0 : index
    %597 = vector.load %arg1[%c26_135, %c0_136] : memref<32x128xbf16, #tpu.memory_space<vmem>>, vector<2x128xbf16>
    %598 = vector.extract_strided_slice %596 {offsets = [0, 0], sizes = [2, 128], strides = [1, 1]} : vector<2x256xf32> to vector<2x128xf32>
    %599 = arith.extf %597 : vector<2x128xbf16> to vector<2x128xf32>
    %600 = arith.addf %599, %598 : vector<2x128xf32>
    %c4_137 = arith.constant 4 : index
    %c0_138 = arith.constant 0 : index
    %601 = vector.load %arg2[%c4_137, %c0_138] : memref<32x128xbf16, #tpu.memory_space<vmem>>, vector<2x128xbf16>
    %602 = vector.extract_strided_slice %596 {offsets = [0, 128], sizes = [2, 128], strides = [1, 1]} : vector<2x256xf32> to vector<2x128xf32>
    %603 = arith.extf %601 : vector<2x128xbf16> to vector<2x128xf32>
    %604 = arith.addf %603, %602 : vector<2x128xf32>
    %605 = vector.extract_strided_slice %600 {offsets = [0, 0], sizes = [2, 96], strides = [1, 1]} : vector<2x128xf32> to vector<2x96xf32>
    %606 = arith.negf %605 : vector<2x96xf32>
    %607 = math.exp %606 : vector<2x96xf32>
    %cst_139 = arith.constant 1.000000e+00 : f32
    %608 = vector.broadcast %cst_139 : f32 to vector<2x96xf32>
    %609 = arith.addf %608, %607 : vector<2x96xf32>
    %610 = arith.divf %608, %609 : vector<2x96xf32>
    %611 = vector.extract_strided_slice %600 {offsets = [0, 96], sizes = [2, 32], strides = [1, 1]} : vector<2x128xf32> to vector<2x32xf32>
    %612 = math.tanh %611 : vector<2x32xf32>
    %613 = vector.extract_strided_slice %610 {offsets = [0, 0], sizes = [2, 32], strides = [1, 1]} : vector<2x96xf32> to vector<2x32xf32>
    %614 = vector.extract_strided_slice %610 {offsets = [0, 32], sizes = [2, 32], strides = [1, 1]} : vector<2x96xf32> to vector<2x32xf32>
    %615 = vector.extract_strided_slice %610 {offsets = [0, 64], sizes = [2, 32], strides = [1, 1]} : vector<2x96xf32> to vector<2x32xf32>
    %616 = arith.mulf %614, %573 : vector<2x32xf32>
    %617 = arith.mulf %613, %612 : vector<2x32xf32>
    %618 = arith.addf %616, %617 : vector<2x32xf32>
    %619 = math.tanh %618 : vector<2x32xf32>
    %620 = arith.mulf %615, %619 : vector<2x32xf32>
    %621 = vector.extract_strided_slice %604 {offsets = [0, 0], sizes = [2, 96], strides = [1, 1]} : vector<2x128xf32> to vector<2x96xf32>
    %622 = arith.negf %621 : vector<2x96xf32>
    %623 = math.exp %622 : vector<2x96xf32>
    %cst_140 = arith.constant 1.000000e+00 : f32
    %624 = vector.broadcast %cst_140 : f32 to vector<2x96xf32>
    %625 = arith.addf %624, %623 : vector<2x96xf32>
    %626 = arith.divf %624, %625 : vector<2x96xf32>
    %627 = vector.extract_strided_slice %604 {offsets = [0, 96], sizes = [2, 32], strides = [1, 1]} : vector<2x128xf32> to vector<2x32xf32>
    %628 = math.tanh %627 : vector<2x32xf32>
    %629 = vector.extract_strided_slice %626 {offsets = [0, 0], sizes = [2, 32], strides = [1, 1]} : vector<2x96xf32> to vector<2x32xf32>
    %630 = vector.extract_strided_slice %626 {offsets = [0, 32], sizes = [2, 32], strides = [1, 1]} : vector<2x96xf32> to vector<2x32xf32>
    %631 = vector.extract_strided_slice %626 {offsets = [0, 64], sizes = [2, 32], strides = [1, 1]} : vector<2x96xf32> to vector<2x32xf32>
    %632 = arith.mulf %630, %589 : vector<2x32xf32>
    %633 = arith.mulf %629, %628 : vector<2x32xf32>
    %634 = arith.addf %632, %633 : vector<2x32xf32>
    %635 = math.tanh %634 : vector<2x32xf32>
    %636 = arith.mulf %631, %635 : vector<2x32xf32>
    %c26_141 = arith.constant 26 : index
    %c0_142 = arith.constant 0 : index
    %637 = vector.load %arg4[%c26_141, %c0_142] : memref<32x32xf32, #tpu.memory_space<vmem>>, vector<2x32xf32>
    tpu.vector_store %arg4[%c26_141, %c0_142], %620 {strides = array<i32>} : memref<32x32xf32, #tpu.memory_space<vmem>>, vector<2x32xf32>,
    %c4_143 = arith.constant 4 : index
    %c0_144 = arith.constant 0 : index
    %638 = vector.load %arg5[%c4_143, %c0_144] : memref<32x32xf32, #tpu.memory_space<vmem>>, vector<2x32xf32>
    tpu.vector_store %arg5[%c4_143, %c0_144], %636 {strides = array<i32>} : memref<32x32xf32, #tpu.memory_space<vmem>>, vector<2x32xf32>,
    %639 = tpu.concatenate %620, %636 in 1 : vector<2x32xf32>, vector<2x32xf32> -> vector<2x64xf32>
    %640 = arith.truncf %639 : vector<2x64xf32> to vector<2x64xbf16>
    %cst_145 = arith.constant dense<0.000000e+00> : vector<2x256xf32>
    %641 = tpu.matmul %640, %3, %cst_145 {dimension_numbers = #tpu.dot_dimension_numbers<[1], [0], [0], [1], [0, 0, 1, 1], [], []>} : vector<2x64xbf16>, vector<64x256xbf16>, vector<2x256xf32> -> vector<2x256xf32>
    %c28_146 = arith.constant 28 : index
    %c0_147 = arith.constant 0 : index
    %642 = vector.load %arg1[%c28_146, %c0_147] : memref<32x128xbf16, #tpu.memory_space<vmem>>, vector<2x128xbf16>
    %643 = vector.extract_strided_slice %641 {offsets = [0, 0], sizes = [2, 128], strides = [1, 1]} : vector<2x256xf32> to vector<2x128xf32>
    %644 = arith.extf %642 : vector<2x128xbf16> to vector<2x128xf32>
    %645 = arith.addf %644, %643 : vector<2x128xf32>
    %c2_148 = arith.constant 2 : index
    %c0_149 = arith.constant 0 : index
    %646 = vector.load %arg2[%c2_148, %c0_149] : memref<32x128xbf16, #tpu.memory_space<vmem>>, vector<2x128xbf16>
    %647 = vector.extract_strided_slice %641 {offsets = [0, 128], sizes = [2, 128], strides = [1, 1]} : vector<2x256xf32> to vector<2x128xf32>
    %648 = arith.extf %646 : vector<2x128xbf16> to vector<2x128xf32>
    %649 = arith.addf %648, %647 : vector<2x128xf32>
    %650 = vector.extract_strided_slice %645 {offsets = [0, 0], sizes = [2, 96], strides = [1, 1]} : vector<2x128xf32> to vector<2x96xf32>
    %651 = arith.negf %650 : vector<2x96xf32>
    %652 = math.exp %651 : vector<2x96xf32>
    %cst_150 = arith.constant 1.000000e+00 : f32
    %653 = vector.broadcast %cst_150 : f32 to vector<2x96xf32>
    %654 = arith.addf %653, %652 : vector<2x96xf32>
    %655 = arith.divf %653, %654 : vector<2x96xf32>
    %656 = vector.extract_strided_slice %645 {offsets = [0, 96], sizes = [2, 32], strides = [1, 1]} : vector<2x128xf32> to vector<2x32xf32>
    %657 = math.tanh %656 : vector<2x32xf32>
    %658 = vector.extract_strided_slice %655 {offsets = [0, 0], sizes = [2, 32], strides = [1, 1]} : vector<2x96xf32> to vector<2x32xf32>
    %659 = vector.extract_strided_slice %655 {offsets = [0, 32], sizes = [2, 32], strides = [1, 1]} : vector<2x96xf32> to vector<2x32xf32>
    %660 = vector.extract_strided_slice %655 {offsets = [0, 64], sizes = [2, 32], strides = [1, 1]} : vector<2x96xf32> to vector<2x32xf32>
    %661 = arith.mulf %659, %618 : vector<2x32xf32>
    %662 = arith.mulf %658, %657 : vector<2x32xf32>
    %663 = arith.addf %661, %662 : vector<2x32xf32>
    %664 = math.tanh %663 : vector<2x32xf32>
    %665 = arith.mulf %660, %664 : vector<2x32xf32>
    %666 = vector.extract_strided_slice %649 {offsets = [0, 0], sizes = [2, 96], strides = [1, 1]} : vector<2x128xf32> to vector<2x96xf32>
    %667 = arith.negf %666 : vector<2x96xf32>
    %668 = math.exp %667 : vector<2x96xf32>
    %cst_151 = arith.constant 1.000000e+00 : f32
    %669 = vector.broadcast %cst_151 : f32 to vector<2x96xf32>
    %670 = arith.addf %669, %668 : vector<2x96xf32>
    %671 = arith.divf %669, %670 : vector<2x96xf32>
    %672 = vector.extract_strided_slice %649 {offsets = [0, 96], sizes = [2, 32], strides = [1, 1]} : vector<2x128xf32> to vector<2x32xf32>
    %673 = math.tanh %672 : vector<2x32xf32>
    %674 = vector.extract_strided_slice %671 {offsets = [0, 0], sizes = [2, 32], strides = [1, 1]} : vector<2x96xf32> to vector<2x32xf32>
    %675 = vector.extract_strided_slice %671 {offsets = [0, 32], sizes = [2, 32], strides = [1, 1]} : vector<2x96xf32> to vector<2x32xf32>
    %676 = vector.extract_strided_slice %671 {offsets = [0, 64], sizes = [2, 32], strides = [1, 1]} : vector<2x96xf32> to vector<2x32xf32>
    %677 = arith.mulf %675, %634 : vector<2x32xf32>
    %678 = arith.mulf %674, %673 : vector<2x32xf32>
    %679 = arith.addf %677, %678 : vector<2x32xf32>
    %680 = math.tanh %679 : vector<2x32xf32>
    %681 = arith.mulf %676, %680 : vector<2x32xf32>
    %c28_152 = arith.constant 28 : index
    %c0_153 = arith.constant 0 : index
    %682 = vector.load %arg4[%c28_152, %c0_153] : memref<32x32xf32, #tpu.memory_space<vmem>>, vector<2x32xf32>
    tpu.vector_store %arg4[%c28_152, %c0_153], %665 {strides = array<i32>} : memref<32x32xf32, #tpu.memory_space<vmem>>, vector<2x32xf32>,
    %c2_154 = arith.constant 2 : index
    %c0_155 = arith.constant 0 : index
    %683 = vector.load %arg5[%c2_154, %c0_155] : memref<32x32xf32, #tpu.memory_space<vmem>>, vector<2x32xf32>
    tpu.vector_store %arg5[%c2_154, %c0_155], %681 {strides = array<i32>} : memref<32x32xf32, #tpu.memory_space<vmem>>, vector<2x32xf32>,
    %684 = tpu.concatenate %665, %681 in 1 : vector<2x32xf32>, vector<2x32xf32> -> vector<2x64xf32>
    %685 = arith.truncf %684 : vector<2x64xf32> to vector<2x64xbf16>
    %cst_156 = arith.constant dense<0.000000e+00> : vector<2x256xf32>
    %686 = tpu.matmul %685, %3, %cst_156 {dimension_numbers = #tpu.dot_dimension_numbers<[1], [0], [0], [1], [0, 0, 1, 1], [], []>} : vector<2x64xbf16>, vector<64x256xbf16>, vector<2x256xf32> -> vector<2x256xf32>
    %c30_157 = arith.constant 30 : index
    %c0_158 = arith.constant 0 : index
    %687 = vector.load %arg1[%c30_157, %c0_158] : memref<32x128xbf16, #tpu.memory_space<vmem>>, vector<2x128xbf16>
    %688 = vector.extract_strided_slice %686 {offsets = [0, 0], sizes = [2, 128], strides = [1, 1]} : vector<2x256xf32> to vector<2x128xf32>
    %689 = arith.extf %687 : vector<2x128xbf16> to vector<2x128xf32>
    %690 = arith.addf %689, %688 : vector<2x128xf32>
    %c0_159 = arith.constant 0 : index
    %c0_160 = arith.constant 0 : index
    %691 = vector.load %arg2[%c0_159, %c0_160] : memref<32x128xbf16, #tpu.memory_space<vmem>>, vector<2x128xbf16>
    %692 = vector.extract_strided_slice %686 {offsets = [0, 128], sizes = [2, 128], strides = [1, 1]} : vector<2x256xf32> to vector<2x128xf32>
    %693 = arith.extf %691 : vector<2x128xbf16> to vector<2x128xf32>
    %694 = arith.addf %693, %692 : vector<2x128xf32>
    %695 = vector.extract_strided_slice %690 {offsets = [0, 0], sizes = [2, 96], strides = [1, 1]} : vector<2x128xf32> to vector<2x96xf32>
    %696 = arith.negf %695 : vector<2x96xf32>
    %697 = math.exp %696 : vector<2x96xf32>
    %cst_161 = arith.constant 1.000000e+00 : f32
    %698 = vector.broadcast %cst_161 : f32 to vector<2x96xf32>
    %699 = arith.addf %698, %697 : vector<2x96xf32>
    %700 = arith.divf %698, %699 : vector<2x96xf32>
    %701 = vector.extract_strided_slice %690 {offsets = [0, 96], sizes = [2, 32], strides = [1, 1]} : vector<2x128xf32> to vector<2x32xf32>
    %702 = math.tanh %701 : vector<2x32xf32>
    %703 = vector.extract_strided_slice %700 {offsets = [0, 0], sizes = [2, 32], strides = [1, 1]} : vector<2x96xf32> to vector<2x32xf32>
    %704 = vector.extract_strided_slice %700 {offsets = [0, 32], sizes = [2, 32], strides = [1, 1]} : vector<2x96xf32> to vector<2x32xf32>
    %705 = vector.extract_strided_slice %700 {offsets = [0, 64], sizes = [2, 32], strides = [1, 1]} : vector<2x96xf32> to vector<2x32xf32>
    %706 = arith.mulf %704, %663 : vector<2x32xf32>
    %707 = arith.mulf %703, %702 : vector<2x32xf32>
    %708 = arith.addf %706, %707 : vector<2x32xf32>
    %709 = math.tanh %708 : vector<2x32xf32>
    %710 = arith.mulf %705, %709 : vector<2x32xf32>
    %711 = vector.extract_strided_slice %694 {offsets = [0, 0], sizes = [2, 96], strides = [1, 1]} : vector<2x128xf32> to vector<2x96xf32>
    %712 = arith.negf %711 : vector<2x96xf32>
    %713 = math.exp %712 : vector<2x96xf32>
    %cst_162 = arith.constant 1.000000e+00 : f32
    %714 = vector.broadcast %cst_162 : f32 to vector<2x96xf32>
    %715 = arith.addf %714, %713 : vector<2x96xf32>
    %716 = arith.divf %714, %715 : vector<2x96xf32>
    %717 = vector.extract_strided_slice %694 {offsets = [0, 96], sizes = [2, 32], strides = [1, 1]} : vector<2x128xf32> to vector<2x32xf32>
    %718 = math.tanh %717 : vector<2x32xf32>
    %719 = vector.extract_strided_slice %716 {offsets = [0, 0], sizes = [2, 32], strides = [1, 1]} : vector<2x96xf32> to vector<2x32xf32>
    %720 = vector.extract_strided_slice %716 {offsets = [0, 32], sizes = [2, 32], strides = [1, 1]} : vector<2x96xf32> to vector<2x32xf32>
    %721 = vector.extract_strided_slice %716 {offsets = [0, 64], sizes = [2, 32], strides = [1, 1]} : vector<2x96xf32> to vector<2x32xf32>
    %722 = arith.mulf %720, %679 : vector<2x32xf32>
    %723 = arith.mulf %719, %718 : vector<2x32xf32>
    %724 = arith.addf %722, %723 : vector<2x32xf32>
    %725 = math.tanh %724 : vector<2x32xf32>
    %726 = arith.mulf %721, %725 : vector<2x32xf32>
    %c30_163 = arith.constant 30 : index
    %c0_164 = arith.constant 0 : index
    %727 = vector.load %arg4[%c30_163, %c0_164] : memref<32x32xf32, #tpu.memory_space<vmem>>, vector<2x32xf32>
    tpu.vector_store %arg4[%c30_163, %c0_164], %710 {strides = array<i32>} : memref<32x32xf32, #tpu.memory_space<vmem>>, vector<2x32xf32>,
    %c0_165 = arith.constant 0 : index
    %c0_166 = arith.constant 0 : index
    %728 = vector.load %arg5[%c0_165, %c0_166] : memref<32x32xf32, #tpu.memory_space<vmem>>, vector<2x32xf32>
    tpu.vector_store %arg5[%c0_165, %c0_166], %726 {strides = array<i32>} : memref<32x32xf32, #tpu.memory_space<vmem>>, vector<2x32xf32>,
    %729 = tpu.concatenate %710, %726 in 1 : vector<2x32xf32>, vector<2x32xf32> -> vector<2x64xf32>
    %c0_167 = arith.constant 0 : index
    %c0_168 = arith.constant 0 : index
    %c0_169 = arith.constant 0 : index
    %730 = vector.load %arg6[%c0_167, %c0_168, %c0_169] : memref<2x2x64xf32, #tpu.memory_space<vmem>>, vector<1x2x64xf32>
    %731 = vector.shape_cast %730 : vector<1x2x64xf32> to vector<2x64xf32>
    %732 = vector.shape_cast %729 : vector<2x64xf32> to vector<1x2x64xf32>
    tpu.vector_store %arg6[%c0_167, %c0_168, %c0_169], %732 {strides = array<i32>} : memref<2x2x64xf32, #tpu.memory_space<vmem>>, vector<1x2x64xf32>,
    %733 = tpu.concatenate %708, %724 in 1 : vector<2x32xf32>, vector<2x32xf32> -> vector<2x64xf32>
    %c1_170 = arith.constant 1 : index
    %c0_171 = arith.constant 0 : index
    %c0_172 = arith.constant 0 : index
    %734 = vector.load %arg6[%c1_170, %c0_171, %c0_172] : memref<2x2x64xf32, #tpu.memory_space<vmem>>, vector<1x2x64xf32>
    %735 = vector.shape_cast %734 : vector<1x2x64xf32> to vector<2x64xf32>
    %736 = vector.shape_cast %733 : vector<2x64xf32> to vector<1x2x64xf32>
    tpu.vector_store %arg6[%c1_170, %c0_171, %c0_172], %736 {strides = array<i32>} : memref<2x2x64xf32, #tpu.memory_space<vmem>>, vector<1x2x64xf32>,
    return
  }
  func.func @transform_0(%arg0: i32) -> (i32, i32) {
    %c0_i32 = arith.constant 0 : i32
    %c0_i32_0 = arith.constant 0 : i32
    return %arg0, %c0_i32 : i32, i32
  }
  func.func @transform_1(%arg0: i32) -> (i32, i32) {
    %c0_i32 = arith.constant 0 : i32
    %0 = arith.subi %c0_i32, %arg0 : i32
    %c0_i32_0 = arith.constant 0 : i32
    %c0_i32_1 = arith.constant 0 : i32
    return %0, %c0_i32_0 : i32, i32
  }
  func.func @transform_2(%arg0: i32) -> (i32, i32) {
    %c0_i32 = arith.constant 0 : i32
    %c0_i32_0 = arith.constant 0 : i32
    %c0_i32_1 = arith.constant 0 : i32
    return %c0_i32, %c0_i32_0 : i32, i32
  }
  func.func @transform_3(%arg0: i32) -> (i32, i32) {
    %c0_i32 = arith.constant 0 : i32
    %c0_i32_0 = arith.constant 0 : i32
    return %arg0, %c0_i32 : i32, i32
  }
  func.func @transform_4(%arg0: i32) -> (i32, i32) {
    %c0_i32 = arith.constant 0 : i32
    %0 = arith.subi %c0_i32, %arg0 : i32
    %c0_i32_0 = arith.constant 0 : i32
    %c0_i32_1 = arith.constant 0 : i32
    return %0, %c0_i32_0 : i32, i32
  }
}

</mosaic_0001>

<llo_original>
// kernel: nn_lstm_all_forward.3
$region0: #{nn_lstm_all_forward.3}
  #allocation0 [shape = 'u32[]', space=smem, size = 0x4, offset = 0x4, fixed_abs, tag = 'smem constant byte address 0x4 - core index']
  #allocation1 [shape = 'u32[72,128]{1,0:T(1,128)}', space=vmem, size = 0x9000, scoped, tag = 'internal scratch']
  #allocation2 [shape = 'f32[2,2,64]{2,1,0:T(2,128)}', space=vmem, size = 0x800, scoped, tag = 'scratch operand']
  %s0 = inlined_call_operand.vmem [shape: bf16[32,128], index: 0, kind: input, shape index: {}]
  %s1 = inlined_call_operand.vmem [shape: bf16[32,128], index: 1, kind: input, shape index: {}]
  %s2 = inlined_call_operand.vmem [shape: bf16[64,256], index: 2, kind: input, shape index: {}]
  %s3 = inlined_call_operand.vmem [shape: f32[32,32], index: 3, kind: output, shape index: {0}]
  %s4 = inlined_call_operand.vmem [shape: f32[32,32], index: 4, kind: output, shape index: {1}]
  %5 = xla_tuple %s3, %s4
  %s6 = sld [smem:[#allocation0]]
  $region34: #{nn_lstm_all_forward.3} parent=0
    _
  %s8 = ssub.s32 1, %s6
  %s9 = scalar_select 0, %s8, %s6
  // Predicated region
  $region2: #{nn_lstm_all_forward.3} parent=0 // pred_check
    _
  $region3: #{nn_lstm_all_forward.3} parent=0 // pred_check_branch
    %11 = sbr.rel (0) target = $region5
  $region4: #{nn_lstm_all_forward.3} parent=0 // pred_region
    _
  $region5: #{nn_lstm_all_forward.3} parent=0 // pred_fallthru
    _
  // Predicated region
  $region6: #{nn_lstm_all_forward.3} parent=0 // pred_check
    _
  $region7: #{nn_lstm_all_forward.3} parent=0 // pred_check_branch
    %13 = sbr.rel (0) target = $region9
  $region8: #{nn_lstm_all_forward.3} parent=0 // pred_region
    %s14 = ssub.s32 0, 0
    %s15 = smul.u32 4, %s14
    %p16 = scmp.lt.s32.totalorder %s15, 3
    %s17 = scalar_select %p16, %s15, 3
    %s18 = smul.addr %s17, 4
    %s19 = scalar_lea.vmem %s1, %s18
    %s20 = ssub.s32 0, 0
    %s21 = smul.u32 4, %s20
  $region9: #{nn_lstm_all_forward.3} parent=0 // pred_fallthru
    _
  // Predicated region
  $region10: #{nn_lstm_all_forward.3} parent=0 // pred_check
    _
  $region11: #{nn_lstm_all_forward.3} parent=0 // pred_check_branch
    %23 = sbr.rel (0) target = $region13
  $region12: #{nn_lstm_all_forward.3} parent=0 // pred_region
    _
  $region13: #{nn_lstm_all_forward.3} parent=0 // pred_fallthru
    _
  %s24 = ssub.s32 0, 0
  %s25 = smul.u32 4, %s24
  %p26 = scmp.lt.s32.totalorder %s25, 3
  %s27 = scalar_select %p26, %s25, 3
  %s28 = smul.addr %s27, 4
  %s29 = scalar_lea.vmem %s1, %s28
  %s30 = ssub.s32 0, 0
  %s31 = smul.u32 4, %s30
  %p32 = scmp.lt.s32.totalorder %s31, 3
  %s33 = scalar_select %p32, %s31, 3
  %s34 = smul.addr %s33, 8
  %s35 = scalar_lea.vmem %s4, %s34
  %s36 = ssub.s32 0, 0
  %s37 = smul.u32 4, %s36
  %p38 = scmp.lt.s32.totalorder %s37, 3
  %s39 = scalar_select %p38, %s37, 3
  %s40 = smul.addr %s39, 4
  %s41 = scalar_lea.vmem %s1, %s40
  %s42 = ssub.s32 0, 0
  %s43 = smul.u32 4, %s42
  %s44 = ssub.s32 0, 0
  %s45 = smul.u32 4, %s44
  %p46 = scmp.lt.s32.totalorder %s45, 3
  %s47 = scalar_select %p46, %s45, 3
  %s48 = smul.addr %s47, 8
  %s49 = scalar_lea.vmem %s4, %s48
  %s50 = ssub.s32 0, 0
  %s51 = smul.u32 4, %s50
  %p53 = scmp.eq.s32.totalorder 0, 0
  // Predicated region
  $region14: #{nn_lstm_all_forward.3} parent=0 // pred_check
    %p54 = pneg %p53
  $region15: #{nn_lstm_all_forward.3} parent=0 // pred_check_branch
    %56 = sbr.rel (%p54) target = $region17
  $region16: #{nn_lstm_all_forward.3} parent=0 // pred_region
    %vm57 = vcmask 517120
    %58 = vst.msk [vmem:[#allocation2] sm:$0x3] %vm57, 0.0
    %59 = vst.msk [vmem:[#allocation2 + $0x2] sm:$0x3] %vm57, 0.0
  $region17: #{nn_lstm_all_forward.3} parent=0 // pred_fallthru
    _
  %v60 = vld [vmem:[%s2] sm:$0xff]
  %v61 = vld [vmem:[%s2 + $0x8] sm:$0xff]
  %v62 = vld [vmem:[%s2 + $0x10] sm:$0xff]
  %v63 = vld [vmem:[%s2 + $0x18] sm:$0xff]
  %v64 = vld [vmem:[%s2 + $0x20] sm:$0xff]
  %v65 = vld [vmem:[%s2 + $0x28] sm:$0xff]
  %v66 = vld [vmem:[%s2 + $0x30] sm:$0xff]
  %v67 = vld [vmem:[%s2 + $0x38] sm:$0xff]
  %v68 = vld [vmem:[#allocation2] sm:$0x3]
  %s69 = scalar_lea.vmem [#allocation2], 2
  %v70 = vld [vmem:[%s69] sm:$0x3]
  %v71 = vpack.c.bf16 %v68, %v68
  %v80 = vunpack.c.l.b16 %v60
  %v81 = vunpack.c.h.b16 %v60
  %v82 = vunpack.c.l.b16 %v61
  %v83 = vunpack.c.h.b16 %v61
  %v84 = vunpack.c.l.b16 %v62
  %v85 = vunpack.c.h.b16 %v62
  %v86 = vunpack.c.l.b16 %v63
  %v87 = vunpack.c.h.b16 %v63
  %v88 = vunpack.c.l.b16 %v64
  %v89 = vunpack.c.h.b16 %v64
  %v90 = vunpack.c.l.b16 %v65
  %v91 = vunpack.c.h.b16 %v65
  %v92 = vunpack.c.l.b16 %v66
  %v93 = vunpack.c.h.b16 %v66
  %v94 = vunpack.c.l.b16 %v67
  %v95 = vunpack.c.h.b16 %v67
  %v96 = vpack.c.b16 %v82, %v80
  %v97 = vpack.c.b16 %v83, %v81
  %v98 = vpack.c.b16 %v86, %v84
  %v99 = vpack.c.b16 %v87, %v85
  %v100 = vpack.c.b16 %v90, %v88
  %v101 = vpack.c.b16 %v91, %v89
  %v102 = vpack.c.b16 %v94, %v92
  %v103 = vpack.c.b16 %v95, %v93
  %vm112 = vcmask 523264
  %v114 = vsel %vm112, %v71, 0
  %116 = vmatpush.bf16.msra.mxu0 0
  %117 = vmatpush.bf16.msra.mxu0 0
  %118 = vmatpush.bf16.msra.mxu0 0
  %119 = vmatpush.bf16.msra.mxu0 0
  %120 = vmatpush.bf16.msra.mxu0 %v102
  %121 = vmatpush.bf16.msra.mxu0 %v100
  %122 = vmatpush.bf16.msra.mxu0 %v98
  %123 = vmatpush.bf16.msra.mxu0 %v96
  %124 = vmatmul.bf16.gmra.mxu0 %v114
  %v125 = vpop.f32.mrf.mxu0
  %v126 = vadd.f32 0.0, %v125
  %v127 = vpop.f32.mrf.mxu0
  %128 = vdwg.mxu0
  %129 = vmatpush.bf16.msra.mxu0 0
  %130 = vmatpush.bf16.msra.mxu0 0
  %131 = vmatpush.bf16.msra.mxu0 0
  %132 = vmatpush.bf16.msra.mxu0 0
  %133 = vmatpush.bf16.msra.mxu0 %v103
  %134 = vmatpush.bf16.msra.mxu0 %v101
  %135 = vmatpush.bf16.msra.mxu0 %v99
  %136 = vmatpush.bf16.msra.mxu0 %v97
  %137 = vmatmul.bf16.gmra.mxu0 %v114
  %v138 = vpop.f32.mrf.mxu0
  %v139 = vadd.f32 0.0, %v138
  %v140 = vpop.f32.mrf.mxu0
  %141 = vdwg.mxu0
  %v142 = vld [vmem:[%s0] sm:$0x1]
  %v143 = vunpack.c.l.bf16 %v142
  %v144 = vadd.f32 %v143, %v126
  %v145 = vld [vmem:[%s41 + $0xc] sm:$0x8]
  %v146 = vunpack.c.l.bf16 %v145
  %v148 = vrot.slane %v139, 2
  %v150 = vadd.f32 %v146, %v148
  %v151 = vxor.u32 %v144, 2147483648
  %v152 = vmul.f32 %v151, 1.442695
  %v153 = vpow.pop %v152
  %v154 = vadd.f32 %v153, 1.0
  %v155 = vrcp.pop %v154
  %v156 = vmul.f32 %v154, %v155
  %v157 = vsub.f32 1.0, %v156
  %v158 = vmul.f32 %v155, %v157
  %v159 = vadd.f32 %v155, %v158
  %vm160 = vweird.f32 %v154
  %vm161 = vweird.f32 %v155
  %vm162 = vmor %vm160, %vm161
  %v163 = vsel %vm162, %v155, %v159
  %v164 = vand.u32 2147483647, %v154
  %vm165 = vcmp.eq.f32.partialorder %v164, 8.507059e+37
  %v166 = vand.u32 %v154, 2147483648
  %v167 = vor.u32 1.1754944e-38, %v166
  %v168 = vsel %vm165, %v167, %v163
  %v169 = vmul.f32 1.0, %v168
  %v170 = vtanh.pop %v144
  %172 = vrot.lane.b32.xlu0 %v70, 32
  %v173 = vpop.permute.xlu0 %172
  %v175 = vmul.f32 %v169, %v173
  %177 = vrot.lane.b32.xlu0 %v170, 32
  %v178 = vpop.permute.xlu0 %177
  %v180 = vmul.f32 %v169, %v178
  %182 = vrot.lane.b32.xlu0 %v180, 32
  %v183 = vpop.permute.xlu0 %182
  %v185 = vadd.f32 %v175, %v183
  %v186 = vtanh.pop %v185
  %188 = vrot.lane.b32.xlu0 %v186, 32
  %v189 = vpop.permute.xlu0 %188
  %v191 = vmul.f32 %v169, %v189
  %v192 = vxor.u32 %v150, 2147483648
  %v193 = vmul.f32 %v192, 1.442695
  %v194 = vpow.pop %v193
  %v195 = vadd.f32 %v194, 1.0
  %v196 = vrcp.pop %v195
  %v197 = vmul.f32 %v195, %v196
  %v198 = vsub.f32 1.0, %v197
  %v199 = vmul.f32 %v196, %v198
  %v200 = vadd.f32 %v196, %v199
  %vm201 = vweird.f32 %v195
  %vm202 = vweird.f32 %v196
  %vm203 = vmor %vm201, %vm202
  %v204 = vsel %vm203, %v196, %v200
  %v205 = vand.u32 2147483647, %v195
  %vm206 = vcmp.eq.f32.partialorder %v205, 8.507059e+37
  %v207 = vand.u32 %v195, 2147483648
  %v208 = vor.u32 1.1754944e-38, %v207
  %v209 = vsel %vm206, %v208, %v204
  %v210 = vmul.f32 1.0, %v209
  %v211 = vtanh.pop %v150
  %v212 = vrot.slane %v70, 2
  %v214 = vmul.f32 %v210, %v212
  %216 = vrot.lane.b32.xlu0 %v211, 32
  %v217 = vpop.permute.xlu0 %216
  %v219 = vmul.f32 %v210, %v217
  %221 = vrot.lane.b32.xlu0 %v219, 32
  %v222 = vpop.permute.xlu0 %221
  %v224 = vadd.f32 %v214, %v222
  %v225 = vtanh.pop %v224
  %227 = vrot.lane.b32.xlu0 %v225, 32
  %v228 = vpop.permute.xlu0 %227
  %v230 = vmul.f32 %v210, %v228
  %232 = vrot.lane.b32.xlu0 %v191, 64
  %v233 = vpop.permute.xlu0 %232
  %vm235 = vcmask 254976
  %236 = vst.msk [vmem:[%s3] sm:$0x3] %vm235, %v233
  %238 = vrot.lane.b32.xlu0 %v230, 64
  %v239 = vpop.permute.xlu0 %238
  %vm241 = vcmask 261126
  %242 = vst.msk [vmem:[%s49 + $0x18] sm:$0xc0] %vm241, %v239
  %v243 = vrot.slane %v230, 6
  %244 = vrot.lane.b32.xlu0 %v243, 96
  %v245 = vpop.permute.xlu0 %244
  %vm247 = vcmask 261120
  %v248 = vsel %vm247, %v233, %v245
  %v249 = vpack.c.bf16 %v248, %v248
  %v251 = vsel %vm112, %v249, 0
  %253 = vmatpush.bf16.msra.mxu0 0
  %254 = vmatpush.bf16.msra.mxu0 0
  %255 = vmatpush.bf16.msra.mxu0 0
  %256 = vmatpush.bf16.msra.mxu0 0
  %257 = vmatpush.bf16.msra.mxu0 %v102
  %258 = vmatpush.bf16.msra.mxu0 %v100
  %259 = vmatpush.bf16.msra.mxu0 %v98
  %260 = vmatpush.bf16.msra.mxu0 %v96
  %261 = vmatmul.bf16.gmra.mxu0 %v251
  %v262 = vpop.f32.mrf.mxu0
  %v263 = vadd.f32 0.0, %v262
  %v264 = vpop.f32.mrf.mxu0
  %265 = vdwg.mxu0
  %266 = vmatpush.bf16.msra.mxu0 0
  %267 = vmatpush.bf16.msra.mxu0 0
  %268 = vmatpush.bf16.msra.mxu0 0
  %269 = vmatpush.bf16.msra.mxu0 0
  %270 = vmatpush.bf16.msra.mxu0 %v103
  %271 = vmatpush.bf16.msra.mxu0 %v101
  %272 = vmatpush.bf16.msra.mxu0 %v99
  %273 = vmatpush.bf16.msra.mxu0 %v97
  %274 = vmatmul.bf16.gmra.mxu0 %v251
  %v275 = vpop.f32.mrf.mxu0
  %v276 = vadd.f32 0.0, %v275
  %v277 = vpop.f32.mrf.mxu0
  %278 = vdwg.mxu0
  %v279 = vld [vmem:[%s0] sm:$0x2]
  %v280 = vunpack.c.l.bf16 %v279
  %v282 = vrot.slane %v263, 6
  %v284 = vadd.f32 %v280, %v282
  %v285 = vld [vmem:[%s41 + $0xc] sm:$0x4]
  %v286 = vunpack.c.l.bf16 %v285
  %v288 = vrot.slane %v276, 4
  %v290 = vadd.f32 %v286, %v288
  %v291 = vxor.u32 %v284, 2147483648
  %v292 = vmul.f32 %v291, 1.442695
  %v293 = vpow.pop %v292
  %v294 = vadd.f32 %v293, 1.0
  %v295 = vrcp.pop %v294
  %v296 = vmul.f32 %v294, %v295
  %v297 = vsub.f32 1.0, %v296
  %v298 = vmul.f32 %v295, %v297
  %v299 = vadd.f32 %v295, %v298
  %vm300 = vweird.f32 %v294
  %vm301 = vweird.f32 %v295
  %vm302 = vmor %vm300, %vm301
  %v303 = vsel %vm302, %v295, %v299
  %v304 = vand.u32 2147483647, %v294
  %vm305 = vcmp.eq.f32.partialorder %v304, 8.507059e+37
  %v306 = vand.u32 %v294, 2147483648
  %v307 = vor.u32 1.1754944e-38, %v306
  %v308 = vsel %vm305, %v307, %v303
  %v309 = vmul.f32 1.0, %v308
  %v310 = vtanh.pop %v284
  %v312 = vrot.slane %v185, 6
  %v314 = vmul.f32 %v309, %v312
  %316 = vrot.lane.b32.xlu0 %v310, 32
  %v317 = vpop.permute.xlu0 %316
  %v319 = vmul.f32 %v309, %v317
  %321 = vrot.lane.b32.xlu0 %v319, 32
  %v322 = vpop.permute.xlu0 %321
  %v324 = vadd.f32 %v314, %v322
  %v325 = vtanh.pop %v324
  %327 = vrot.lane.b32.xlu0 %v325, 32
  %v328 = vpop.permute.xlu0 %327
  %v330 = vmul.f32 %v309, %v328
  %v331 = vxor.u32 %v290, 2147483648
  %v332 = vmul.f32 %v331, 1.442695
  %v333 = vpow.pop %v332
  %v334 = vadd.f32 %v333, 1.0
  %v335 = vrcp.pop %v334
  %v336 = vmul.f32 %v334, %v335
  %v337 = vsub.f32 1.0, %v336
  %v338 = vmul.f32 %v335, %v337
  %v339 = vadd.f32 %v335, %v338
  %vm340 = vweird.f32 %v334
  %vm341 = vweird.f32 %v335
  %vm342 = vmor %vm340, %vm341
  %v343 = vsel %vm342, %v335, %v339
  %v344 = vand.u32 2147483647, %v334
  %vm345 = vcmp.eq.f32.partialorder %v344, 8.507059e+37
  %v346 = vand.u32 %v334, 2147483648
  %v347 = vor.u32 1.1754944e-38, %v346
  %v348 = vsel %vm345, %v347, %v343
  %v349 = vmul.f32 1.0, %v348
  %v350 = vtanh.pop %v290
  %v352 = vrot.slane %v224, 2
  %v354 = vmul.f32 %v349, %v352
  %356 = vrot.lane.b32.xlu0 %v350, 32
  %v357 = vpop.permute.xlu0 %356
  %v359 = vmul.f32 %v349, %v357
  %361 = vrot.lane.b32.xlu0 %v359, 32
  %v362 = vpop.permute.xlu0 %361
  %v364 = vadd.f32 %v354, %v362
  %v365 = vtanh.pop %v364
  %367 = vrot.lane.b32.xlu0 %v365, 32
  %v368 = vpop.permute.xlu0 %367
  %v370 = vmul.f32 %v349, %v368
  %372 = vrot.lane.b32.xlu0 %v330, 64
  %v373 = vpop.permute.xlu0 %372
  %vm375 = vcmask 257026
  %376 = vst.msk [vmem:[%s3] sm:$0xc] %vm375, %v373
  %378 = vrot.lane.b32.xlu0 %v370, 64
  %v379 = vpop.permute.xlu0 %378
  %vm381 = vcmask 259076
  %382 = vst.msk [vmem:[%s49 + $0x18] sm:$0x30] %vm381, %v379
  %v383 = vrot.slane %v370, 2
  %384 = vrot.lane.b32.xlu0 %v383, 96
  %v385 = vpop.permute.xlu0 %384
  %v387 = vsel %vm247, %v373, %v385
  %v388 = vpack.c.bf16 %v387, %v387
  %v390 = vrot.slane %v388, 1
  %v392 = vsel %vm112, %v390, 0
  %394 = vmatpush.bf16.msra.mxu0 0
  %395 = vmatpush.bf16.msra.mxu0 0
  %396 = vmatpush.bf16.msra.mxu0 0
  %397 = vmatpush.bf16.msra.mxu0 0
  %398 = vmatpush.bf16.msra.mxu0 %v102
  %399 = vmatpush.bf16.msra.mxu0 %v100
  %400 = vmatpush.bf16.msra.mxu0 %v98
  %401 = vmatpush.bf16.msra.mxu0 %v96
  %402 = vmatmul.bf16.gmra.mxu0 %v392
  %v403 = vpop.f32.mrf.mxu0
  %v404 = vadd.f32 0.0, %v403
  %v405 = vpop.f32.mrf.mxu0
  %406 = vdwg.mxu0
  %407 = vmatpush.bf16.msra.mxu0 0
  %408 = vmatpush.bf16.msra.mxu0 0
  %409 = vmatpush.bf16.msra.mxu0 0
  %410 = vmatpush.bf16.msra.mxu0 0
  %411 = vmatpush.bf16.msra.mxu0 %v103
  %412 = vmatpush.bf16.msra.mxu0 %v101
  %413 = vmatpush.bf16.msra.mxu0 %v99
  %414 = vmatpush.bf16.msra.mxu0 %v97
  %415 = vmatmul.bf16.gmra.mxu0 %v392
  %v416 = vpop.f32.mrf.mxu0
  %v417 = vadd.f32 0.0, %v416
  %v418 = vpop.f32.mrf.mxu0
  %419 = vdwg.mxu0
  %v420 = vld [vmem:[%s0] sm:$0x4]
  %v421 = vunpack.c.l.bf16 %v420
  %v423 = vrot.slane %v404, 4
  %v425 = vadd.f32 %v421, %v423
  %v426 = vld [vmem:[%s41 + $0xc] sm:$0x2]
  %v427 = vunpack.c.l.bf16 %v426
  %v429 = vrot.slane %v417, 6
  %v431 = vadd.f32 %v427, %v429
  %v432 = vxor.u32 %v425, 2147483648
  %v433 = vmul.f32 %v432, 1.442695
  %v434 = vpow.pop %v433
  %v435 = vadd.f32 %v434, 1.0
  %v436 = vrcp.pop %v435
  %v437 = vmul.f32 %v435, %v436
  %v438 = vsub.f32 1.0, %v437
  %v439 = vmul.f32 %v436, %v438
  %v440 = vadd.f32 %v436, %v439
  %vm441 = vweird.f32 %v435
  %vm442 = vweird.f32 %v436
  %vm443 = vmor %vm441, %vm442
  %v444 = vsel %vm443, %v436, %v440
  %v445 = vand.u32 2147483647, %v435
  %vm446 = vcmp.eq.f32.partialorder %v445, 8.507059e+37
  %v447 = vand.u32 %v435, 2147483648
  %v448 = vor.u32 1.1754944e-38, %v447
  %v449 = vsel %vm446, %v448, %v444
  %v450 = vmul.f32 1.0, %v449
  %v451 = vtanh.pop %v425
  %v453 = vrot.slane %v324, 6
  %v455 = vmul.f32 %v450, %v453
  %457 = vrot.lane.b32.xlu0 %v451, 32
  %v458 = vpop.permute.xlu0 %457
  %v460 = vmul.f32 %v450, %v458
  %462 = vrot.lane.b32.xlu0 %v460, 32
  %v463 = vpop.permute.xlu0 %462
  %v465 = vadd.f32 %v455, %v463
  %v466 = vtanh.pop %v465
  %468 = vrot.lane.b32.xlu0 %v466, 32
  %v469 = vpop.permute.xlu0 %468
  %v471 = vmul.f32 %v450, %v469
  %v472 = vxor.u32 %v431, 2147483648
  %v473 = vmul.f32 %v472, 1.442695
  %v474 = vpow.pop %v473
  %v475 = vadd.f32 %v474, 1.0
  %v476 = vrcp.pop %v475
  %v477 = vmul.f32 %v475, %v476
  %v478 = vsub.f32 1.0, %v477
  %v479 = vmul.f32 %v476, %v478
  %v480 = vadd.f32 %v476, %v479
  %vm481 = vweird.f32 %v475
  %vm482 = vweird.f32 %v476
  %vm483 = vmor %vm481, %vm482
  %v484 = vsel %vm483, %v476, %v480
  %v485 = vand.u32 2147483647, %v475
  %vm486 = vcmp.eq.f32.partialorder %v485, 8.507059e+37
  %v487 = vand.u32 %v475, 2147483648
  %v488 = vor.u32 1.1754944e-38, %v487
  %v489 = vsel %vm486, %v488, %v484
  %v490 = vmul.f32 1.0, %v489
  %v491 = vtanh.pop %v431
  %v493 = vrot.slane %v364, 2
  %v495 = vmul.f32 %v490, %v493
  %497 = vrot.lane.b32.xlu0 %v491, 32
  %v498 = vpop.permute.xlu0 %497
  %v500 = vmul.f32 %v490, %v498
  %502 = vrot.lane.b32.xlu0 %v500, 32
  %v503 = vpop.permute.xlu0 %502
  %v505 = vadd.f32 %v495, %v503
  %v506 = vtanh.pop %v505
  %508 = vrot.lane.b32.xlu0 %v506, 32
  %v509 = vpop.permute.xlu0 %508
  %v511 = vmul.f32 %v490, %v509
  %513 = vrot.lane.b32.xlu0 %v471, 64
  %v514 = vpop.permute.xlu0 %513
  %516 = vst.msk [vmem:[%s3] sm:$0x30] %vm381, %v514
  %518 = vrot.lane.b32.xlu0 %v511, 64
  %v519 = vpop.permute.xlu0 %518
  %521 = vst.msk [vmem:[%s49 + $0x18] sm:$0xc] %vm375, %v519
  %v522 = vrot.slane %v511, 6
  %523 = vrot.lane.b32.xlu0 %v522, 96
  %v524 = vpop.permute.xlu0 %523
  %v526 = vsel %vm247, %v514, %v524
  %v527 = vpack.c.bf16 %v526, %v526
  %v529 = vrot.slane %v527, 2
  %v531 = vsel %vm112, %v529, 0
  %533 = vmatpush.bf16.msra.mxu0 0
  %534 = vmatpush.bf16.msra.mxu0 0
  %535 = vmatpush.bf16.msra.mxu0 0
  %536 = vmatpush.bf16.msra.mxu0 0
  %537 = vmatpush.bf16.msra.mxu0 %v102
  %538 = vmatpush.bf16.msra.mxu0 %v100
  %539 = vmatpush.bf16.msra.mxu0 %v98
  %540 = vmatpush.bf16.msra.mxu0 %v96
  %541 = vmatmul.bf16.gmra.mxu0 %v531
  %v542 = vpop.f32.mrf.mxu0
  %v543 = vadd.f32 0.0, %v542
  %v544 = vpop.f32.mrf.mxu0
  %545 = vdwg.mxu0
  %546 = vmatpush.bf16.msra.mxu0 0
  %547 = vmatpush.bf16.msra.mxu0 0
  %548 = vmatpush.bf16.msra.mxu0 0
  %549 = vmatpush.bf16.msra.mxu0 0
  %550 = vmatpush.bf16.msra.mxu0 %v103
  %551 = vmatpush.bf16.msra.mxu0 %v101
  %552 = vmatpush.bf16.msra.mxu0 %v99
  %553 = vmatpush.bf16.msra.mxu0 %v97
  %554 = vmatmul.bf16.gmra.mxu0 %v531
  %v555 = vpop.f32.mrf.mxu0
  %v556 = vadd.f32 0.0, %v555
  %v557 = vpop.f32.mrf.mxu0
  %558 = vdwg.mxu0
  %v559 = vld [vmem:[%s0] sm:$0x8]
  %v560 = vunpack.c.l.bf16 %v559
  %v562 = vrot.slane %v543, 2
  %v564 = vadd.f32 %v560, %v562
  %v565 = vld [vmem:[%s41 + $0xc] sm:$0x1]
  %v566 = vunpack.c.l.bf16 %v565
  %v567 = vadd.f32 %v566, %v556
  %v568 = vxor.u32 %v564, 2147483648
  %v569 = vmul.f32 %v568, 1.442695
  %v570 = vpow.pop %v569
  %v571 = vadd.f32 %v570, 1.0
  %v572 = vrcp.pop %v571
  %v573 = vmul.f32 %v571, %v572
  %v574 = vsub.f32 1.0, %v573
  %v575 = vmul.f32 %v572, %v574
  %v576 = vadd.f32 %v572, %v575
  %vm577 = vweird.f32 %v571
  %vm578 = vweird.f32 %v572
  %vm579 = vmor %vm577, %vm578
  %v580 = vsel %vm579, %v572, %v576
  %v581 = vand.u32 2147483647, %v571
  %vm582 = vcmp.eq.f32.partialorder %v581, 8.507059e+37
  %v583 = vand.u32 %v571, 2147483648
  %v584 = vor.u32 1.1754944e-38, %v583
  %v585 = vsel %vm582, %v584, %v580
  %v586 = vmul.f32 1.0, %v585
  %v587 = vtanh.pop %v564
  %v589 = vrot.slane %v465, 6
  %v591 = vmul.f32 %v586, %v589
  %593 = vrot.lane.b32.xlu0 %v587, 32
  %v594 = vpop.permute.xlu0 %593
  %v596 = vmul.f32 %v586, %v594
  %598 = vrot.lane.b32.xlu0 %v596, 32
  %v599 = vpop.permute.xlu0 %598
  %v601 = vadd.f32 %v591, %v599
  %v602 = vtanh.pop %v601
  %604 = vrot.lane.b32.xlu0 %v602, 32
  %v605 = vpop.permute.xlu0 %604
  %v607 = vmul.f32 %v586, %v605
  %v608 = vxor.u32 %v567, 2147483648
  %v609 = vmul.f32 %v608, 1.442695
  %v610 = vpow.pop %v609
  %v611 = vadd.f32 %v610, 1.0
  %v612 = vrcp.pop %v611
  %v613 = vmul.f32 %v611, %v612
  %v614 = vsub.f32 1.0, %v613
  %v615 = vmul.f32 %v612, %v614
  %v616 = vadd.f32 %v612, %v615
  %vm617 = vweird.f32 %v611
  %vm618 = vweird.f32 %v612
  %vm619 = vmor %vm617, %vm618
  %v620 = vsel %vm619, %v612, %v616
  %v621 = vand.u32 2147483647, %v611
  %vm622 = vcmp.eq.f32.partialorder %v621, 8.507059e+37
  %v623 = vand.u32 %v611, 2147483648
  %v624 = vor.u32 1.1754944e-38, %v623
  %v625 = vsel %vm622, %v624, %v620
  %v626 = vmul.f32 1.0, %v625
  %v627 = vtanh.pop %v567
  %v629 = vrot.slane %v505, 2
  %v631 = vmul.f32 %v626, %v629
  %633 = vrot.lane.b32.xlu0 %v627, 32
  %v634 = vpop.permute.xlu0 %633
  %v636 = vmul.f32 %v626, %v634
  %638 = vrot.lane.b32.xlu0 %v636, 32
  %v639 = vpop.permute.xlu0 %638
  %v641 = vadd.f32 %v631, %v639
  %v642 = vtanh.pop %v641
  %644 = vrot.lane.b32.xlu0 %v642, 32
  %v645 = vpop.permute.xlu0 %644
  %v647 = vmul.f32 %v626, %v645
  %649 = vrot.lane.b32.xlu0 %v607, 64
  %v650 = vpop.permute.xlu0 %649
  %652 = vst.msk [vmem:[%s3] sm:$0xc0] %vm241, %v650
  %654 = vrot.lane.b32.xlu0 %v647, 64
  %v655 = vpop.permute.xlu0 %654
  %657 = vst.msk [vmem:[%s49 + $0x18] sm:$0x3] %vm235, %v655
  %v658 = vrot.slane %v647, 2
  %659 = vrot.lane.b32.xlu0 %v658, 96
  %v660 = vpop.permute.xlu0 %659
  %v662 = vsel %vm247, %v650, %v660
  %v663 = vpack.c.bf16 %v662, %v662
  %v665 = vrot.slane %v663, 3
  %v667 = vsel %vm112, %v665, 0
  %669 = vmatpush.bf16.msra.mxu0 0
  %670 = vmatpush.bf16.msra.mxu0 0
  %671 = vmatpush.bf16.msra.mxu0 0
  %672 = vmatpush.bf16.msra.mxu0 0
  %673 = vmatpush.bf16.msra.mxu0 %v102
  %674 = vmatpush.bf16.msra.mxu0 %v100
  %675 = vmatpush.bf16.msra.mxu0 %v98
  %676 = vmatpush.bf16.msra.mxu0 %v96
  %677 = vmatmul.bf16.gmra.mxu0 %v667
  %v678 = vpop.f32.mrf.mxu0
  %v679 = vadd.f32 0.0, %v678
  %v680 = vpop.f32.mrf.mxu0
  %681 = vdwg.mxu0
  %682 = vmatpush.bf16.msra.mxu0 0
  %683 = vmatpush.bf16.msra.mxu0 0
  %684 = vmatpush.bf16.msra.mxu0 0
  %685 = vmatpush.bf16.msra.mxu0 0
  %686 = vmatpush.bf16.msra.mxu0 %v103
  %687 = vmatpush.bf16.msra.mxu0 %v101
  %688 = vmatpush.bf16.msra.mxu0 %v99
  %689 = vmatpush.bf16.msra.mxu0 %v97
  %690 = vmatmul.bf16.gmra.mxu0 %v667
  %v691 = vpop.f32.mrf.mxu0
  %v692 = vadd.f32 0.0, %v691
  %v693 = vpop.f32.mrf.mxu0
  %694 = vdwg.mxu0
  %v695 = vld [vmem:[%s0 + $0x4] sm:$0x1]
  %v696 = vunpack.c.l.bf16 %v695
  %v697 = vadd.f32 %v696, %v679
  %v698 = vld [vmem:[%s41 + $0x8] sm:$0x8]
  %v699 = vunpack.c.l.bf16 %v698
  %v701 = vrot.slane %v692, 2
  %v703 = vadd.f32 %v699, %v701
  %v704 = vxor.u32 %v697, 2147483648
  %v705 = vmul.f32 %v704, 1.442695
  %v706 = vpow.pop %v705
  %v707 = vadd.f32 %v706, 1.0
  %v708 = vrcp.pop %v707
  %v709 = vmul.f32 %v707, %v708
  %v710 = vsub.f32 1.0, %v709
  %v711 = vmul.f32 %v708, %v710
  %v712 = vadd.f32 %v708, %v711
  %vm713 = vweird.f32 %v707
  %vm714 = vweird.f32 %v708
  %vm715 = vmor %vm713, %vm714
  %v716 = vsel %vm715, %v708, %v712
  %v717 = vand.u32 2147483647, %v707
  %vm718 = vcmp.eq.f32.partialorder %v717, 8.507059e+37
  %v719 = vand.u32 %v707, 2147483648
  %v720 = vor.u32 1.1754944e-38, %v719
  %v721 = vsel %vm718, %v720, %v716
  %v722 = vmul.f32 1.0, %v721
  %v723 = vtanh.pop %v697
  %v725 = vrot.slane %v601, 6
  %v727 = vmul.f32 %v722, %v725
  %729 = vrot.lane.b32.xlu0 %v723, 32
  %v730 = vpop.permute.xlu0 %729
  %v732 = vmul.f32 %v722, %v730
  %734 = vrot.lane.b32.xlu0 %v732, 32
  %v735 = vpop.permute.xlu0 %734
  %v737 = vadd.f32 %v727, %v735
  %v738 = vtanh.pop %v737
  %740 = vrot.lane.b32.xlu0 %v738, 32
  %v741 = vpop.permute.xlu0 %740
  %v743 = vmul.f32 %v722, %v741
  %v744 = vxor.u32 %v703, 2147483648
  %v745 = vmul.f32 %v744, 1.442695
  %v746 = vpow.pop %v745
  %v747 = vadd.f32 %v746, 1.0
  %v748 = vrcp.pop %v747
  %v749 = vmul.f32 %v747, %v748
  %v750 = vsub.f32 1.0, %v749
  %v751 = vmul.f32 %v748, %v750
  %v752 = vadd.f32 %v748, %v751
  %vm753 = vweird.f32 %v747
  %vm754 = vweird.f32 %v748
  %vm755 = vmor %vm753, %vm754
  %v756 = vsel %vm755, %v748, %v752
  %v757 = vand.u32 2147483647, %v747
  %vm758 = vcmp.eq.f32.partialorder %v757, 8.507059e+37
  %v759 = vand.u32 %v747, 2147483648
  %v760 = vor.u32 1.1754944e-38, %v759
  %v761 = vsel %vm758, %v760, %v756
  %v762 = vmul.f32 1.0, %v761
  %v763 = vtanh.pop %v703
  %v765 = vrot.slane %v641, 2
  %v767 = vmul.f32 %v762, %v765
  %769 = vrot.lane.b32.xlu0 %v763, 32
  %v770 = vpop.permute.xlu0 %769
  %v772 = vmul.f32 %v762, %v770
  %774 = vrot.lane.b32.xlu0 %v772, 32
  %v775 = vpop.permute.xlu0 %774
  %v777 = vadd.f32 %v767, %v775
  %v778 = vtanh.pop %v777
  %780 = vrot.lane.b32.xlu0 %v778, 32
  %v781 = vpop.permute.xlu0 %780
  %v783 = vmul.f32 %v762, %v781
  %785 = vrot.lane.b32.xlu0 %v743, 64
  %v786 = vpop.permute.xlu0 %785
  %788 = vst.msk [vmem:[%s3 + $0x8] sm:$0x3] %vm235, %v786
  %790 = vrot.lane.b32.xlu0 %v783, 64
  %v791 = vpop.permute.xlu0 %790
  %793 = vst.msk [vmem:[%s49 + $0x10] sm:$0xc0] %vm241, %v791
  %v794 = vrot.slane %v783, 6
  %795 = vrot.lane.b32.xlu0 %v794, 96
  %v796 = vpop.permute.xlu0 %795
  %v798 = vsel %vm247, %v786, %v796
  %v799 = vpack.c.bf16 %v798, %v798
  %v801 = vsel %vm112, %v799, 0
  %803 = vmatpush.bf16.msra.mxu0 0
  %804 = vmatpush.bf16.msra.mxu0 0
  %805 = vmatpush.bf16.msra.mxu0 0
  %806 = vmatpush.bf16.msra.mxu0 0
  %807 = vmatpush.bf16.msra.mxu0 %v102
  %808 = vmatpush.bf16.msra.mxu0 %v100
  %809 = vmatpush.bf16.msra.mxu0 %v98
  %810 = vmatpush.bf16.msra.mxu0 %v96
  %811 = vmatmul.bf16.gmra.mxu0 %v801
  %v812 = vpop.f32.mrf.mxu0
  %v813 = vadd.f32 0.0, %v812
  %v814 = vpop.f32.mrf.mxu0
  %815 = vdwg.mxu0
  %816 = vmatpush.bf16.msra.mxu0 0
  %817 = vmatpush.bf16.msra.mxu0 0
  %818 = vmatpush.bf16.msra.mxu0 0
  %819 = vmatpush.bf16.msra.mxu0 0
  %820 = vmatpush.bf16.msra.mxu0 %v103
  %821 = vmatpush.bf16.msra.mxu0 %v101
  %822 = vmatpush.bf16.msra.mxu0 %v99
  %823 = vmatpush.bf16.msra.mxu0 %v97
  %824 = vmatmul.bf16.gmra.mxu0 %v801
  %v825 = vpop.f32.mrf.mxu0
  %v826 = vadd.f32 0.0, %v825
  %v827 = vpop.f32.mrf.mxu0
  %828 = vdwg.mxu0
  %v829 = vld [vmem:[%s0 + $0x4] sm:$0x2]
  %v830 = vunpack.c.l.bf16 %v829
  %v832 = vrot.slane %v813, 6
  %v834 = vadd.f32 %v830, %v832
  %v835 = vld [vmem:[%s41 + $0x8] sm:$0x4]
  %v836 = vunpack.c.l.bf16 %v835
  %v838 = vrot.slane %v826, 4
  %v840 = vadd.f32 %v836, %v838
  %v841 = vxor.u32 %v834, 2147483648
  %v842 = vmul.f32 %v841, 1.442695
  %v843 = vpow.pop %v842
  %v844 = vadd.f32 %v843, 1.0
  %v845 = vrcp.pop %v844
  %v846 = vmul.f32 %v844, %v845
  %v847 = vsub.f32 1.0, %v846
  %v848 = vmul.f32 %v845, %v847
  %v849 = vadd.f32 %v845, %v848
  %vm850 = vweird.f32 %v844
  %vm851 = vweird.f32 %v845
  %vm852 = vmor %vm850, %vm851
  %v853 = vsel %vm852, %v845, %v849
  %v854 = vand.u32 2147483647, %v844
  %vm855 = vcmp.eq.f32.partialorder %v854, 8.507059e+37
  %v856 = vand.u32 %v844, 2147483648
  %v857 = vor.u32 1.1754944e-38, %v856
  %v858 = vsel %vm855, %v857, %v853
  %v859 = vmul.f32 1.0, %v858
  %v860 = vtanh.pop %v834
  %v862 = vrot.slane %v737, 6
  %v864 = vmul.f32 %v859, %v862
  %866 = vrot.lane.b32.xlu0 %v860, 32
  %v867 = vpop.permute.xlu0 %866
  %v869 = vmul.f32 %v859, %v867
  %871 = vrot.lane.b32.xlu0 %v869, 32
  %v872 = vpop.permute.xlu0 %871
  %v874 = vadd.f32 %v864, %v872
  %v875 = vtanh.pop %v874
  %877 = vrot.lane.b32.xlu0 %v875, 32
  %v878 = vpop.permute.xlu0 %877
  %v880 = vmul.f32 %v859, %v878
  %v881 = vxor.u32 %v840, 2147483648
  %v882 = vmul.f32 %v881, 1.442695
  %v883 = vpow.pop %v882
  %v884 = vadd.f32 %v883, 1.0
  %v885 = vrcp.pop %v884
  %v886 = vmul.f32 %v884, %v885
  %v887 = vsub.f32 1.0, %v886
  %v888 = vmul.f32 %v885, %v887
  %v889 = vadd.f32 %v885, %v888
  %vm890 = vweird.f32 %v884
  %vm891 = vweird.f32 %v885
  %vm892 = vmor %vm890, %vm891
  %v893 = vsel %vm892, %v885, %v889
  %v894 = vand.u32 2147483647, %v884
  %vm895 = vcmp.eq.f32.partialorder %v894, 8.507059e+37
  %v896 = vand.u32 %v884, 2147483648
  %v897 = vor.u32 1.1754944e-38, %v896
  %v898 = vsel %vm895, %v897, %v893
  %v899 = vmul.f32 1.0, %v898
  %v900 = vtanh.pop %v840
  %v902 = vrot.slane %v777, 2
  %v904 = vmul.f32 %v899, %v902
  %906 = vrot.lane.b32.xlu0 %v900, 32
  %v907 = vpop.permute.xlu0 %906
  %v909 = vmul.f32 %v899, %v907
  %911 = vrot.lane.b32.xlu0 %v909, 32
  %v912 = vpop.permute.xlu0 %911
  %v914 = vadd.f32 %v904, %v912
  %v915 = vtanh.pop %v914
  %917 = vrot.lane.b32.xlu0 %v915, 32
  %v918 = vpop.permute.xlu0 %917
  %v920 = vmul.f32 %v899, %v918
  %922 = vrot.lane.b32.xlu0 %v880, 64
  %v923 = vpop.permute.xlu0 %922
  %925 = vst.msk [vmem:[%s3 + $0x8] sm:$0xc] %vm375, %v923
  %927 = vrot.lane.b32.xlu0 %v920, 64
  %v928 = vpop.permute.xlu0 %927
  %930 = vst.msk [vmem:[%s49 + $0x10] sm:$0x30] %vm381, %v928
  %v931 = vrot.slane %v920, 2
  %932 = vrot.lane.b32.xlu0 %v931, 96
  %v933 = vpop.permute.xlu0 %932
  %v935 = vsel %vm247, %v923, %v933
  %v936 = vpack.c.bf16 %v935, %v935
  %v938 = vrot.slane %v936, 1
  %v940 = vsel %vm112, %v938, 0
  %942 = vmatpush.bf16.msra.mxu0 0
  %943 = vmatpush.bf16.msra.mxu0 0
  %944 = vmatpush.bf16.msra.mxu0 0
  %945 = vmatpush.bf16.msra.mxu0 0
  %946 = vmatpush.bf16.msra.mxu0 %v102
  %947 = vmatpush.bf16.msra.mxu0 %v100
  %948 = vmatpush.bf16.msra.mxu0 %v98
  %949 = vmatpush.bf16.msra.mxu0 %v96
  %950 = vmatmul.bf16.gmra.mxu0 %v940
  %v951 = vpop.f32.mrf.mxu0
  %v952 = vadd.f32 0.0, %v951
  %v953 = vpop.f32.mrf.mxu0
  %954 = vdwg.mxu0
  %955 = vmatpush.bf16.msra.mxu0 0
  %956 = vmatpush.bf16.msra.mxu0 0
  %957 = vmatpush.bf16.msra.mxu0 0
  %958 = vmatpush.bf16.msra.mxu0 0
  %959 = vmatpush.bf16.msra.mxu0 %v103
  %960 = vmatpush.bf16.msra.mxu0 %v101
  %961 = vmatpush.bf16.msra.mxu0 %v99
  %962 = vmatpush.bf16.msra.mxu0 %v97
  %963 = vmatmul.bf16.gmra.mxu0 %v940
  %v964 = vpop.f32.mrf.mxu0
  %v965 = vadd.f32 0.0, %v964
  %v966 = vpop.f32.mrf.mxu0
  %967 = vdwg.mxu0
  %v968 = vld [vmem:[%s0 + $0x4] sm:$0x4]
  %v969 = vunpack.c.l.bf16 %v968
  %v971 = vrot.slane %v952, 4
  %v973 = vadd.f32 %v969, %v971
  %v974 = vld [vmem:[%s41 + $0x8] sm:$0x2]
  %v975 = vunpack.c.l.bf16 %v974
  %v977 = vrot.slane %v965, 6
  %v979 = vadd.f32 %v975, %v977
  %v980 = vxor.u32 %v973, 2147483648
  %v981 = vmul.f32 %v980, 1.442695
  %v982 = vpow.pop %v981
  %v983 = vadd.f32 %v982, 1.0
  %v984 = vrcp.pop %v983
  %v985 = vmul.f32 %v983, %v984
  %v986 = vsub.f32 1.0, %v985
  %v987 = vmul.f32 %v984, %v986
  %v988 = vadd.f32 %v984, %v987
  %vm989 = vweird.f32 %v983
  %vm990 = vweird.f32 %v984
  %vm991 = vmor %vm989, %vm990
  %v992 = vsel %vm991, %v984, %v988
  %v993 = vand.u32 2147483647, %v983
  %vm994 = vcmp.eq.f32.partialorder %v993, 8.507059e+37
  %v995 = vand.u32 %v983, 2147483648
  %v996 = vor.u32 1.1754944e-38, %v995
  %v997 = vsel %vm994, %v996, %v992
  %v998 = vmul.f32 1.0, %v997
  %v999 = vtanh.pop %v973
  %v1001 = vrot.slane %v874, 6
  %v1003 = vmul.f32 %v998, %v1001
  %1005 = vrot.lane.b32.xlu0 %v999, 32
  %v1006 = vpop.permute.xlu0 %1005
  %v1008 = vmul.f32 %v998, %v1006
  %1010 = vrot.lane.b32.xlu0 %v1008, 32
  %v1011 = vpop.permute.xlu0 %1010
  %v1013 = vadd.f32 %v1003, %v1011
  %v1014 = vtanh.pop %v1013
  %1016 = vrot.lane.b32.xlu0 %v1014, 32
  %v1017 = vpop.permute.xlu0 %1016
  %v1019 = vmul.f32 %v998, %v1017
  %v1020 = vxor.u32 %v979, 2147483648
  %v1021 = vmul.f32 %v1020, 1.442695
  %v1022 = vpow.pop %v1021
  %v1023 = vadd.f32 %v1022, 1.0
  %v1024 = vrcp.pop %v1023
  %v1025 = vmul.f32 %v1023, %v1024
  %v1026 = vsub.f32 1.0, %v1025
  %v1027 = vmul.f32 %v1024, %v1026
  %v1028 = vadd.f32 %v1024, %v1027
  %vm1029 = vweird.f32 %v1023
  %vm1030 = vweird.f32 %v1024
  %vm1031 = vmor %vm1029, %vm1030
  %v1032 = vsel %vm1031, %v1024, %v1028
  %v1033 = vand.u32 2147483647, %v1023
  %vm1034 = vcmp.eq.f32.partialorder %v1033, 8.507059e+37
  %v1035 = vand.u32 %v1023, 2147483648
  %v1036 = vor.u32 1.1754944e-38, %v1035
  %v1037 = vsel %vm1034, %v1036, %v1032
  %v1038 = vmul.f32 1.0, %v1037
  %v1039 = vtanh.pop %v979
  %v1041 = vrot.slane %v914, 2
  %v1043 = vmul.f32 %v1038, %v1041
  %1045 = vrot.lane.b32.xlu0 %v1039, 32
  %v1046 = vpop.permute.xlu0 %1045
  %v1048 = vmul.f32 %v1038, %v1046
  %1050 = vrot.lane.b32.xlu0 %v1048, 32
  %v1051 = vpop.permute.xlu0 %1050
  %v1053 = vadd.f32 %v1043, %v1051
  %v1054 = vtanh.pop %v1053
  %1056 = vrot.lane.b32.xlu0 %v1054, 32
  %v1057 = vpop.permute.xlu0 %1056
  %v1059 = vmul.f32 %v1038, %v1057
  %1061 = vrot.lane.b32.xlu0 %v1019, 64
  %v1062 = vpop.permute.xlu0 %1061
  %1064 = vst.msk [vmem:[%s3 + $0x8] sm:$0x30] %vm381, %v1062
  %1066 = vrot.lane.b32.xlu0 %v1059, 64
  %v1067 = vpop.permute.xlu0 %1066
  %1069 = vst.msk [vmem:[%s49 + $0x10] sm:$0xc] %vm375, %v1067
  %v1070 = vrot.slane %v1059, 6
  %1071 = vrot.lane.b32.xlu0 %v1070, 96
  %v1072 = vpop.permute.xlu0 %1071
  %v1074 = vsel %vm247, %v1062, %v1072
  %v1075 = vpack.c.bf16 %v1074, %v1074
  %v1077 = vrot.slane %v1075, 2
  %v1079 = vsel %vm112, %v1077, 0
  %1081 = vmatpush.bf16.msra.mxu0 0
  %1082 = vmatpush.bf16.msra.mxu0 0
  %1083 = vmatpush.bf16.msra.mxu0 0
  %1084 = vmatpush.bf16.msra.mxu0 0
  %1085 = vmatpush.bf16.msra.mxu0 %v102
  %1086 = vmatpush.bf16.msra.mxu0 %v100
  %1087 = vmatpush.bf16.msra.mxu0 %v98
  %1088 = vmatpush.bf16.msra.mxu0 %v96
  %1089 = vmatmul.bf16.gmra.mxu0 %v1079
  %v1090 = vpop.f32.mrf.mxu0
  %v1091 = vadd.f32 0.0, %v1090
  %v1092 = vpop.f32.mrf.mxu0
  %1093 = vdwg.mxu0
  %1094 = vmatpush.bf16.msra.mxu0 0
  %1095 = vmatpush.bf16.msra.mxu0 0
  %1096 = vmatpush.bf16.msra.mxu0 0
  %1097 = vmatpush.bf16.msra.mxu0 0
  %1098 = vmatpush.bf16.msra.mxu0 %v103
  %1099 = vmatpush.bf16.msra.mxu0 %v101
  %1100 = vmatpush.bf16.msra.mxu0 %v99
  %1101 = vmatpush.bf16.msra.mxu0 %v97
  %1102 = vmatmul.bf16.gmra.mxu0 %v1079
  %v1103 = vpop.f32.mrf.mxu0
  %v1104 = vadd.f32 0.0, %v1103
  %v1105 = vpop.f32.mrf.mxu0
  %1106 = vdwg.mxu0
  %v1107 = vld [vmem:[%s0 + $0x4] sm:$0x8]
  %v1108 = vunpack.c.l.bf16 %v1107
  %v1110 = vrot.slane %v1091, 2
  %v1112 = vadd.f32 %v1108, %v1110
  %v1113 = vld [vmem:[%s41 + $0x8] sm:$0x1]
  %v1114 = vunpack.c.l.bf16 %v1113
  %v1115 = vadd.f32 %v1114, %v1104
  %v1116 = vxor.u32 %v1112, 2147483648
  %v1117 = vmul.f32 %v1116, 1.442695
  %v1118 = vpow.pop %v1117
  %v1119 = vadd.f32 %v1118, 1.0
  %v1120 = vrcp.pop %v1119
  %v1121 = vmul.f32 %v1119, %v1120
  %v1122 = vsub.f32 1.0, %v1121
  %v1123 = vmul.f32 %v1120, %v1122
  %v1124 = vadd.f32 %v1120, %v1123
  %vm1125 = vweird.f32 %v1119
  %vm1126 = vweird.f32 %v1120
  %vm1127 = vmor %vm1125, %vm1126
  %v1128 = vsel %vm1127, %v1120, %v1124
  %v1129 = vand.u32 2147483647, %v1119
  %vm1130 = vcmp.eq.f32.partialorder %v1129, 8.507059e+37
  %v1131 = vand.u32 %v1119, 2147483648
  %v1132 = vor.u32 1.1754944e-38, %v1131
  %v1133 = vsel %vm1130, %v1132, %v1128
  %v1134 = vmul.f32 1.0, %v1133
  %v1135 = vtanh.pop %v1112
  %v1137 = vrot.slane %v1013, 6
  %v1139 = vmul.f32 %v1134, %v1137
  %1141 = vrot.lane.b32.xlu0 %v1135, 32
  %v1142 = vpop.permute.xlu0 %1141
  %v1144 = vmul.f32 %v1134, %v1142
  %1146 = vrot.lane.b32.xlu0 %v1144, 32
  %v1147 = vpop.permute.xlu0 %1146
  %v1149 = vadd.f32 %v1139, %v1147
  %v1150 = vtanh.pop %v1149
  %1152 = vrot.lane.b32.xlu0 %v1150, 32
  %v1153 = vpop.permute.xlu0 %1152
  %v1155 = vmul.f32 %v1134, %v1153
  %v1156 = vxor.u32 %v1115, 2147483648
  %v1157 = vmul.f32 %v1156, 1.442695
  %v1158 = vpow.pop %v1157
  %v1159 = vadd.f32 %v1158, 1.0
  %v1160 = vrcp.pop %v1159
  %v1161 = vmul.f32 %v1159, %v1160
  %v1162 = vsub.f32 1.0, %v1161
  %v1163 = vmul.f32 %v1160, %v1162
  %v1164 = vadd.f32 %v1160, %v1163
  %vm1165 = vweird.f32 %v1159
  %vm1166 = vweird.f32 %v1160
  %vm1167 = vmor %vm1165, %vm1166
  %v1168 = vsel %vm1167, %v1160, %v1164
  %v1169 = vand.u32 2147483647, %v1159
  %vm1170 = vcmp.eq.f32.partialorder %v1169, 8.507059e+37
  %v1171 = vand.u32 %v1159, 2147483648
  %v1172 = vor.u32 1.1754944e-38, %v1171
  %v1173 = vsel %vm1170, %v1172, %v1168
  %v1174 = vmul.f32 1.0, %v1173
  %v1175 = vtanh.pop %v1115
  %v1177 = vrot.slane %v1053, 2
  %v1179 = vmul.f32 %v1174, %v1177
  %1181 = vrot.lane.b32.xlu0 %v1175, 32
  %v1182 = vpop.permute.xlu0 %1181
  %v1184 = vmul.f32 %v1174, %v1182
  %1186 = vrot.lane.b32.xlu0 %v1184, 32
  %v1187 = vpop.permute.xlu0 %1186
  %v1189 = vadd.f32 %v1179, %v1187
  %v1190 = vtanh.pop %v1189
  %1192 = vrot.lane.b32.xlu0 %v1190, 32
  %v1193 = vpop.permute.xlu0 %1192
  %v1195 = vmul.f32 %v1174, %v1193
  %1197 = vrot.lane.b32.xlu0 %v1155, 64
  %v1198 = vpop.permute.xlu0 %1197
  %1200 = vst.msk [vmem:[%s3 + $0x8] sm:$0xc0] %vm241, %v1198
  %1202 = vrot.lane.b32.xlu0 %v1195, 64
  %v1203 = vpop.permute.xlu0 %1202
  %1205 = vst.msk [vmem:[%s49 + $0x10] sm:$0x3] %vm235, %v1203
  %v1206 = vrot.slane %v1195, 2
  %1207 = vrot.lane.b32.xlu0 %v1206, 96
  %v1208 = vpop.permute.xlu0 %1207
  %v1210 = vsel %vm247, %v1198, %v1208
  %v1211 = vpack.c.bf16 %v1210, %v1210
  %v1213 = vrot.slane %v1211, 3
  %v1215 = vsel %vm112, %v1213, 0
  %1217 = vmatpush.bf16.msra.mxu0 0
  %1218 = vmatpush.bf16.msra.mxu0 0
  %1219 = vmatpush.bf16.msra.mxu0 0
  %1220 = vmatpush.bf16.msra.mxu0 0
  %1221 = vmatpush.bf16.msra.mxu0 %v102
  %1222 = vmatpush.bf16.msra.mxu0 %v100
  %1223 = vmatpush.bf16.msra.mxu0 %v98
  %1224 = vmatpush.bf16.msra.mxu0 %v96
  %1225 = vmatmul.bf16.gmra.mxu0 %v1215
  %v1226 = vpop.f32.mrf.mxu0
  %v1227 = vadd.f32 0.0, %v1226
  %v1228 = vpop.f32.mrf.mxu0
  %1229 = vdwg.mxu0
  %1230 = vmatpush.bf16.msra.mxu0 0
  %1231 = vmatpush.bf16.msra.mxu0 0
  %1232 = vmatpush.bf16.msra.mxu0 0
  %1233 = vmatpush.bf16.msra.mxu0 0
  %1234 = vmatpush.bf16.msra.mxu0 %v103
  %1235 = vmatpush.bf16.msra.mxu0 %v101
  %1236 = vmatpush.bf16.msra.mxu0 %v99
  %1237 = vmatpush.bf16.msra.mxu0 %v97
  %1238 = vmatmul.bf16.gmra.mxu0 %v1215
  %v1239 = vpop.f32.mrf.mxu0
  %v1240 = vadd.f32 0.0, %v1239
  %v1241 = vpop.f32.mrf.mxu0
  %1242 = vdwg.mxu0
  %v1243 = vld [vmem:[%s0 + $0x8] sm:$0x1]
  %v1244 = vunpack.c.l.bf16 %v1243
  %v1245 = vadd.f32 %v1244, %v1227
  %v1246 = vld [vmem:[%s41 + $0x4] sm:$0x8]
  %v1247 = vunpack.c.l.bf16 %v1246
  %v1249 = vrot.slane %v1240, 2
  %v1251 = vadd.f32 %v1247, %v1249
  %v1252 = vxor.u32 %v1245, 2147483648
  %v1253 = vmul.f32 %v1252, 1.442695
  %v1254 = vpow.pop %v1253
  %v1255 = vadd.f32 %v1254, 1.0
  %v1256 = vrcp.pop %v1255
  %v1257 = vmul.f32 %v1255, %v1256
  %v1258 = vsub.f32 1.0, %v1257
  %v1259 = vmul.f32 %v1256, %v1258
  %v1260 = vadd.f32 %v1256, %v1259
  %vm1261 = vweird.f32 %v1255
  %vm1262 = vweird.f32 %v1256
  %vm1263 = vmor %vm1261, %vm1262
  %v1264 = vsel %vm1263, %v1256, %v1260
  %v1265 = vand.u32 2147483647, %v1255
  %vm1266 = vcmp.eq.f32.partialorder %v1265, 8.507059e+37
  %v1267 = vand.u32 %v1255, 2147483648
  %v1268 = vor.u32 1.1754944e-38, %v1267
  %v1269 = vsel %vm1266, %v1268, %v1264
  %v1270 = vmul.f32 1.0, %v1269
  %v1271 = vtanh.pop %v1245
  %v1273 = vrot.slane %v1149, 6
  %v1275 = vmul.f32 %v1270, %v1273
  %1277 = vrot.lane.b32.xlu0 %v1271, 32
  %v1278 = vpop.permute.xlu0 %1277
  %v1280 = vmul.f32 %v1270, %v1278
  %1282 = vrot.lane.b32.xlu0 %v1280, 32
  %v1283 = vpop.permute.xlu0 %1282
  %v1285 = vadd.f32 %v1275, %v1283
  %v1286 = vtanh.pop %v1285
  %1288 = vrot.lane.b32.xlu0 %v1286, 32
  %v1289 = vpop.permute.xlu0 %1288
  %v1291 = vmul.f32 %v1270, %v1289
  %v1292 = vxor.u32 %v1251, 2147483648
  %v1293 = vmul.f32 %v1292, 1.442695
  %v1294 = vpow.pop %v1293
  %v1295 = vadd.f32 %v1294, 1.0
  %v1296 = vrcp.pop %v1295
  %v1297 = vmul.f32 %v1295, %v1296
  %v1298 = vsub.f32 1.0, %v1297
  %v1299 = vmul.f32 %v1296, %v1298
  %v1300 = vadd.f32 %v1296, %v1299
  %vm1301 = vweird.f32 %v1295
  %vm1302 = vweird.f32 %v1296
  %vm1303 = vmor %vm1301, %vm1302
  %v1304 = vsel %vm1303, %v1296, %v1300
  %v1305 = vand.u32 2147483647, %v1295
  %vm1306 = vcmp.eq.f32.partialorder %v1305, 8.507059e+37
  %v1307 = vand.u32 %v1295, 2147483648
  %v1308 = vor.u32 1.1754944e-38, %v1307
  %v1309 = vsel %vm1306, %v1308, %v1304
  %v1310 = vmul.f32 1.0, %v1309
  %v1311 = vtanh.pop %v1251
  %v1313 = vrot.slane %v1189, 2
  %v1315 = vmul.f32 %v1310, %v1313
  %1317 = vrot.lane.b32.xlu0 %v1311, 32
  %v1318 = vpop.permute.xlu0 %1317
  %v1320 = vmul.f32 %v1310, %v1318
  %1322 = vrot.lane.b32.xlu0 %v1320, 32
  %v1323 = vpop.permute.xlu0 %1322
  %v1325 = vadd.f32 %v1315, %v1323
  %v1326 = vtanh.pop %v1325
  %1328 = vrot.lane.b32.xlu0 %v1326, 32
  %v1329 = vpop.permute.xlu0 %1328
  %v1331 = vmul.f32 %v1310, %v1329
  %1333 = vrot.lane.b32.xlu0 %v1291, 64
  %v1334 = vpop.permute.xlu0 %1333
  %1336 = vst.msk [vmem:[%s3 + $0x10] sm:$0x3] %vm235, %v1334
  %1338 = vrot.lane.b32.xlu0 %v1331, 64
  %v1339 = vpop.permute.xlu0 %1338
  %1341 = vst.msk [vmem:[%s49 + $0x8] sm:$0xc0] %vm241, %v1339
  %v1342 = vrot.slane %v1331, 6
  %1343 = vrot.lane.b32.xlu0 %v1342, 96
  %v1344 = vpop.permute.xlu0 %1343
  %v1346 = vsel %vm247, %v1334, %v1344
  %v1347 = vpack.c.bf16 %v1346, %v1346
  %v1349 = vsel %vm112, %v1347, 0
  %1351 = vmatpush.bf16.msra.mxu0 0
  %1352 = vmatpush.bf16.msra.mxu0 0
  %1353 = vmatpush.bf16.msra.mxu0 0
  %1354 = vmatpush.bf16.msra.mxu0 0
  %1355 = vmatpush.bf16.msra.mxu0 %v102
  %1356 = vmatpush.bf16.msra.mxu0 %v100
  %1357 = vmatpush.bf16.msra.mxu0 %v98
  %1358 = vmatpush.bf16.msra.mxu0 %v96
  %1359 = vmatmul.bf16.gmra.mxu0 %v1349
  %v1360 = vpop.f32.mrf.mxu0
  %v1361 = vadd.f32 0.0, %v1360
  %v1362 = vpop.f32.mrf.mxu0
  %1363 = vdwg.mxu0
  %1364 = vmatpush.bf16.msra.mxu0 0
  %1365 = vmatpush.bf16.msra.mxu0 0
  %1366 = vmatpush.bf16.msra.mxu0 0
  %1367 = vmatpush.bf16.msra.mxu0 0
  %1368 = vmatpush.bf16.msra.mxu0 %v103
  %1369 = vmatpush.bf16.msra.mxu0 %v101
  %1370 = vmatpush.bf16.msra.mxu0 %v99
  %1371 = vmatpush.bf16.msra.mxu0 %v97
  %1372 = vmatmul.bf16.gmra.mxu0 %v1349
  %v1373 = vpop.f32.mrf.mxu0
  %v1374 = vadd.f32 0.0, %v1373
  %v1375 = vpop.f32.mrf.mxu0
  %1376 = vdwg.mxu0
  %v1377 = vld [vmem:[%s0 + $0x8] sm:$0x2]
  %v1378 = vunpack.c.l.bf16 %v1377
  %v1380 = vrot.slane %v1361, 6
  %v1382 = vadd.f32 %v1378, %v1380
  %v1383 = vld [vmem:[%s41 + $0x4] sm:$0x4]
  %v1384 = vunpack.c.l.bf16 %v1383
  %v1386 = vrot.slane %v1374, 4
  %v1388 = vadd.f32 %v1384, %v1386
  %v1389 = vxor.u32 %v1382, 2147483648
  %v1390 = vmul.f32 %v1389, 1.442695
  %v1391 = vpow.pop %v1390
  %v1392 = vadd.f32 %v1391, 1.0
  %v1393 = vrcp.pop %v1392
  %v1394 = vmul.f32 %v1392, %v1393
  %v1395 = vsub.f32 1.0, %v1394
  %v1396 = vmul.f32 %v1393, %v1395
  %v1397 = vadd.f32 %v1393, %v1396
  %vm1398 = vweird.f32 %v1392
  %vm1399 = vweird.f32 %v1393
  %vm1400 = vmor %vm1398, %vm1399
  %v1401 = vsel %vm1400, %v1393, %v1397
  %v1402 = vand.u32 2147483647, %v1392
  %vm1403 = vcmp.eq.f32.partialorder %v1402, 8.507059e+37
  %v1404 = vand.u32 %v1392, 2147483648
  %v1405 = vor.u32 1.1754944e-38, %v1404
  %v1406 = vsel %vm1403, %v1405, %v1401
  %v1407 = vmul.f32 1.0, %v1406
  %v1408 = vtanh.pop %v1382
  %v1410 = vrot.slane %v1285, 6
  %v1412 = vmul.f32 %v1407, %v1410
  %1414 = vrot.lane.b32.xlu0 %v1408, 32
  %v1415 = vpop.permute.xlu0 %1414
  %v1417 = vmul.f32 %v1407, %v1415
  %1419 = vrot.lane.b32.xlu0 %v1417, 32
  %v1420 = vpop.permute.xlu0 %1419
  %v1422 = vadd.f32 %v1412, %v1420
  %v1423 = vtanh.pop %v1422
  %1425 = vrot.lane.b32.xlu0 %v1423, 32
  %v1426 = vpop.permute.xlu0 %1425
  %v1428 = vmul.f32 %v1407, %v1426
  %v1429 = vxor.u32 %v1388, 2147483648
  %v1430 = vmul.f32 %v1429, 1.442695
  %v1431 = vpow.pop %v1430
  %v1432 = vadd.f32 %v1431, 1.0
  %v1433 = vrcp.pop %v1432
  %v1434 = vmul.f32 %v1432, %v1433
  %v1435 = vsub.f32 1.0, %v1434
  %v1436 = vmul.f32 %v1433, %v1435
  %v1437 = vadd.f32 %v1433, %v1436
  %vm1438 = vweird.f32 %v1432
  %vm1439 = vweird.f32 %v1433
  %vm1440 = vmor %vm1438, %vm1439
  %v1441 = vsel %vm1440, %v1433, %v1437
  %v1442 = vand.u32 2147483647, %v1432
  %vm1443 = vcmp.eq.f32.partialorder %v1442, 8.507059e+37
  %v1444 = vand.u32 %v1432, 2147483648
  %v1445 = vor.u32 1.1754944e-38, %v1444
  %v1446 = vsel %vm1443, %v1445, %v1441
  %v1447 = vmul.f32 1.0, %v1446
  %v1448 = vtanh.pop %v1388
  %v1450 = vrot.slane %v1325, 2
  %v1452 = vmul.f32 %v1447, %v1450
  %1454 = vrot.lane.b32.xlu0 %v1448, 32
  %v1455 = vpop.permute.xlu0 %1454
  %v1457 = vmul.f32 %v1447, %v1455
  %1459 = vrot.lane.b32.xlu0 %v1457, 32
  %v1460 = vpop.permute.xlu0 %1459
  %v1462 = vadd.f32 %v1452, %v1460
  %v1463 = vtanh.pop %v1462
  %1465 = vrot.lane.b32.xlu0 %v1463, 32
  %v1466 = vpop.permute.xlu0 %1465
  %v1468 = vmul.f32 %v1447, %v1466
  %1470 = vrot.lane.b32.xlu0 %v1428, 64
  %v1471 = vpop.permute.xlu0 %1470
  %1473 = vst.msk [vmem:[%s3 + $0x10] sm:$0xc] %vm375, %v1471
  %1475 = vrot.lane.b32.xlu0 %v1468, 64
  %v1476 = vpop.permute.xlu0 %1475
  %1478 = vst.msk [vmem:[%s49 + $0x8] sm:$0x30] %vm381, %v1476
  %v1479 = vrot.slane %v1468, 2
  %1480 = vrot.lane.b32.xlu0 %v1479, 96
  %v1481 = vpop.permute.xlu0 %1480
  %v1483 = vsel %vm247, %v1471, %v1481
  %v1484 = vpack.c.bf16 %v1483, %v1483
  %v1486 = vrot.slane %v1484, 1
  %v1488 = vsel %vm112, %v1486, 0
  %1490 = vmatpush.bf16.msra.mxu0 0
  %1491 = vmatpush.bf16.msra.mxu0 0
  %1492 = vmatpush.bf16.msra.mxu0 0
  %1493 = vmatpush.bf16.msra.mxu0 0
  %1494 = vmatpush.bf16.msra.mxu0 %v102
  %1495 = vmatpush.bf16.msra.mxu0 %v100
  %1496 = vmatpush.bf16.msra.mxu0 %v98
  %1497 = vmatpush.bf16.msra.mxu0 %v96
  %1498 = vmatmul.bf16.gmra.mxu0 %v1488
  %v1499 = vpop.f32.mrf.mxu0
  %v1500 = vadd.f32 0.0, %v1499
  %v1501 = vpop.f32.mrf.mxu0
  %1502 = vdwg.mxu0
  %1503 = vmatpush.bf16.msra.mxu0 0
  %1504 = vmatpush.bf16.msra.mxu0 0
  %1505 = vmatpush.bf16.msra.mxu0 0
  %1506 = vmatpush.bf16.msra.mxu0 0
  %1507 = vmatpush.bf16.msra.mxu0 %v103
  %1508 = vmatpush.bf16.msra.mxu0 %v101
  %1509 = vmatpush.bf16.msra.mxu0 %v99
  %1510 = vmatpush.bf16.msra.mxu0 %v97
  %1511 = vmatmul.bf16.gmra.mxu0 %v1488
  %v1512 = vpop.f32.mrf.mxu0
  %v1513 = vadd.f32 0.0, %v1512
  %v1514 = vpop.f32.mrf.mxu0
  %1515 = vdwg.mxu0
  %v1516 = vld [vmem:[%s0 + $0x8] sm:$0x4]
  %v1517 = vunpack.c.l.bf16 %v1516
  %v1519 = vrot.slane %v1500, 4
  %v1521 = vadd.f32 %v1517, %v1519
  %v1522 = vld [vmem:[%s41 + $0x4] sm:$0x2]
  %v1523 = vunpack.c.l.bf16 %v1522
  %v1525 = vrot.slane %v1513, 6
  %v1527 = vadd.f32 %v1523, %v1525
  %v1528 = vxor.u32 %v1521, 2147483648
  %v1529 = vmul.f32 %v1528, 1.442695
  %v1530 = vpow.pop %v1529
  %v1531 = vadd.f32 %v1530, 1.0
  %v1532 = vrcp.pop %v1531
  %v1533 = vmul.f32 %v1531, %v1532
  %v1534 = vsub.f32 1.0, %v1533
  %v1535 = vmul.f32 %v1532, %v1534
  %v1536 = vadd.f32 %v1532, %v1535
  %vm1537 = vweird.f32 %v1531
  %vm1538 = vweird.f32 %v1532
  %vm1539 = vmor %vm1537, %vm1538
  %v1540 = vsel %vm1539, %v1532, %v1536
  %v1541 = vand.u32 2147483647, %v1531
  %vm1542 = vcmp.eq.f32.partialorder %v1541, 8.507059e+37
  %v1543 = vand.u32 %v1531, 2147483648
  %v1544 = vor.u32 1.1754944e-38, %v1543
  %v1545 = vsel %vm1542, %v1544, %v1540
  %v1546 = vmul.f32 1.0, %v1545
  %v1547 = vtanh.pop %v1521
  %v1549 = vrot.slane %v1422, 6
  %v1551 = vmul.f32 %v1546, %v1549
  %1553 = vrot.lane.b32.xlu0 %v1547, 32
  %v1554 = vpop.permute.xlu0 %1553
  %v1556 = vmul.f32 %v1546, %v1554
  %1558 = vrot.lane.b32.xlu0 %v1556, 32
  %v1559 = vpop.permute.xlu0 %1558
  %v1561 = vadd.f32 %v1551, %v1559
  %v1562 = vtanh.pop %v1561
  %1564 = vrot.lane.b32.xlu0 %v1562, 32
  %v1565 = vpop.permute.xlu0 %1564
  %v1567 = vmul.f32 %v1546, %v1565
  %v1568 = vxor.u32 %v1527, 2147483648
  %v1569 = vmul.f32 %v1568, 1.442695
  %v1570 = vpow.pop %v1569
  %v1571 = vadd.f32 %v1570, 1.0
  %v1572 = vrcp.pop %v1571
  %v1573 = vmul.f32 %v1571, %v1572
  %v1574 = vsub.f32 1.0, %v1573
  %v1575 = vmul.f32 %v1572, %v1574
  %v1576 = vadd.f32 %v1572, %v1575
  %vm1577 = vweird.f32 %v1571
  %vm1578 = vweird.f32 %v1572
  %vm1579 = vmor %vm1577, %vm1578
  %v1580 = vsel %vm1579, %v1572, %v1576
  %v1581 = vand.u32 2147483647, %v1571
  %vm1582 = vcmp.eq.f32.partialorder %v1581, 8.507059e+37
  %v1583 = vand.u32 %v1571, 2147483648
  %v1584 = vor.u32 1.1754944e-38, %v1583
  %v1585 = vsel %vm1582, %v1584, %v1580
  %v1586 = vmul.f32 1.0, %v1585
  %v1587 = vtanh.pop %v1527
  %v1589 = vrot.slane %v1462, 2
  %v1591 = vmul.f32 %v1586, %v1589
  %1593 = vrot.lane.b32.xlu0 %v1587, 32
  %v1594 = vpop.permute.xlu0 %1593
  %v1596 = vmul.f32 %v1586, %v1594
  %1598 = vrot.lane.b32.xlu0 %v1596, 32
  %v1599 = vpop.permute.xlu0 %1598
  %v1601 = vadd.f32 %v1591, %v1599
  %v1602 = vtanh.pop %v1601
  %1604 = vrot.lane.b32.xlu0 %v1602, 32
  %v1605 = vpop.permute.xlu0 %1604
  %v1607 = vmul.f32 %v1586, %v1605
  %1609 = vrot.lane.b32.xlu0 %v1567, 64
  %v1610 = vpop.permute.xlu0 %1609
  %1612 = vst.msk [vmem:[%s3 + $0x10] sm:$0x30] %vm381, %v1610
  %1614 = vrot.lane.b32.xlu0 %v1607, 64
  %v1615 = vpop.permute.xlu0 %1614
  %1617 = vst.msk [vmem:[%s49 + $0x8] sm:$0xc] %vm375, %v1615
  %v1618 = vrot.slane %v1607, 6
  %1619 = vrot.lane.b32.xlu0 %v1618, 96
  %v1620 = vpop.permute.xlu0 %1619
  %v1622 = vsel %vm247, %v1610, %v1620
  %v1623 = vpack.c.bf16 %v1622, %v1622
  %v1625 = vrot.slane %v1623, 2
  %v1627 = vsel %vm112, %v1625, 0
  %1629 = vmatpush.bf16.msra.mxu0 0
  %1630 = vmatpush.bf16.msra.mxu0 0
  %1631 = vmatpush.bf16.msra.mxu0 0
  %1632 = vmatpush.bf16.msra.mxu0 0
  %1633 = vmatpush.bf16.msra.mxu0 %v102
  %1634 = vmatpush.bf16.msra.mxu0 %v100
  %1635 = vmatpush.bf16.msra.mxu0 %v98
  %1636 = vmatpush.bf16.msra.mxu0 %v96
  %1637 = vmatmul.bf16.gmra.mxu0 %v1627
  %v1638 = vpop.f32.mrf.mxu0
  %v1639 = vadd.f32 0.0, %v1638
  %v1640 = vpop.f32.mrf.mxu0
  %1641 = vdwg.mxu0
  %1642 = vmatpush.bf16.msra.mxu0 0
  %1643 = vmatpush.bf16.msra.mxu0 0
  %1644 = vmatpush.bf16.msra.mxu0 0
  %1645 = vmatpush.bf16.msra.mxu0 0
  %1646 = vmatpush.bf16.msra.mxu0 %v103
  %1647 = vmatpush.bf16.msra.mxu0 %v101
  %1648 = vmatpush.bf16.msra.mxu0 %v99
  %1649 = vmatpush.bf16.msra.mxu0 %v97
  %1650 = vmatmul.bf16.gmra.mxu0 %v1627
  %v1651 = vpop.f32.mrf.mxu0
  %v1652 = vadd.f32 0.0, %v1651
  %v1653 = vpop.f32.mrf.mxu0
  %1654 = vdwg.mxu0
  %v1655 = vld [vmem:[%s0 + $0x8] sm:$0x8]
  %v1656 = vunpack.c.l.bf16 %v1655
  %v1658 = vrot.slane %v1639, 2
  %v1660 = vadd.f32 %v1656, %v1658
  %v1661 = vld [vmem:[%s41 + $0x4] sm:$0x1]
  %v1662 = vunpack.c.l.bf16 %v1661
  %v1663 = vadd.f32 %v1662, %v1652
  %v1664 = vxor.u32 %v1660, 2147483648
  %v1665 = vmul.f32 %v1664, 1.442695
  %v1666 = vpow.pop %v1665
  %v1667 = vadd.f32 %v1666, 1.0
  %v1668 = vrcp.pop %v1667
  %v1669 = vmul.f32 %v1667, %v1668
  %v1670 = vsub.f32 1.0, %v1669
  %v1671 = vmul.f32 %v1668, %v1670
  %v1672 = vadd.f32 %v1668, %v1671
  %vm1673 = vweird.f32 %v1667
  %vm1674 = vweird.f32 %v1668
  %vm1675 = vmor %vm1673, %vm1674
  %v1676 = vsel %vm1675, %v1668, %v1672
  %v1677 = vand.u32 2147483647, %v1667
  %vm1678 = vcmp.eq.f32.partialorder %v1677, 8.507059e+37
  %v1679 = vand.u32 %v1667, 2147483648
  %v1680 = vor.u32 1.1754944e-38, %v1679
  %v1681 = vsel %vm1678, %v1680, %v1676
  %v1682 = vmul.f32 1.0, %v1681
  %v1683 = vtanh.pop %v1660
  %v1685 = vrot.slane %v1561, 6
  %v1687 = vmul.f32 %v1682, %v1685
  %1689 = vrot.lane.b32.xlu0 %v1683, 32
  %v1690 = vpop.permute.xlu0 %1689
  %v1692 = vmul.f32 %v1682, %v1690
  %1694 = vrot.lane.b32.xlu0 %v1692, 32
  %v1695 = vpop.permute.xlu0 %1694
  %v1697 = vadd.f32 %v1687, %v1695
  %v1698 = vtanh.pop %v1697
  %1700 = vrot.lane.b32.xlu0 %v1698, 32
  %v1701 = vpop.permute.xlu0 %1700
  %v1703 = vmul.f32 %v1682, %v1701
  %v1704 = vxor.u32 %v1663, 2147483648
  %v1705 = vmul.f32 %v1704, 1.442695
  %v1706 = vpow.pop %v1705
  %v1707 = vadd.f32 %v1706, 1.0
  %v1708 = vrcp.pop %v1707
  %v1709 = vmul.f32 %v1707, %v1708
  %v1710 = vsub.f32 1.0, %v1709
  %v1711 = vmul.f32 %v1708, %v1710
  %v1712 = vadd.f32 %v1708, %v1711
  %vm1713 = vweird.f32 %v1707
  %vm1714 = vweird.f32 %v1708
  %vm1715 = vmor %vm1713, %vm1714
  %v1716 = vsel %vm1715, %v1708, %v1712
  %v1717 = vand.u32 2147483647, %v1707
  %vm1718 = vcmp.eq.f32.partialorder %v1717, 8.507059e+37
  %v1719 = vand.u32 %v1707, 2147483648
  %v1720 = vor.u32 1.1754944e-38, %v1719
  %v1721 = vsel %vm1718, %v1720, %v1716
  %v1722 = vmul.f32 1.0, %v1721
  %v1723 = vtanh.pop %v1663
  %v1725 = vrot.slane %v1601, 2
  %v1727 = vmul.f32 %v1722, %v1725
  %1729 = vrot.lane.b32.xlu0 %v1723, 32
  %v1730 = vpop.permute.xlu0 %1729
  %v1732 = vmul.f32 %v1722, %v1730
  %1734 = vrot.lane.b32.xlu0 %v1732, 32
  %v1735 = vpop.permute.xlu0 %1734
  %v1737 = vadd.f32 %v1727, %v1735
  %v1738 = vtanh.pop %v1737
  %1740 = vrot.lane.b32.xlu0 %v1738, 32
  %v1741 = vpop.permute.xlu0 %1740
  %v1743 = vmul.f32 %v1722, %v1741
  %1745 = vrot.lane.b32.xlu0 %v1703, 64
  %v1746 = vpop.permute.xlu0 %1745
  %1748 = vst.msk [vmem:[%s3 + $0x10] sm:$0xc0] %vm241, %v1746
  %1750 = vrot.lane.b32.xlu0 %v1743, 64
  %v1751 = vpop.permute.xlu0 %1750
  %1753 = vst.msk [vmem:[%s49 + $0x8] sm:$0x3] %vm235, %v1751
  %v1754 = vrot.slane %v1743, 2
  %1755 = vrot.lane.b32.xlu0 %v1754, 96
  %v1756 = vpop.permute.xlu0 %1755
  %v1758 = vsel %vm247, %v1746, %v1756
  %v1759 = vpack.c.bf16 %v1758, %v1758
  %v1761 = vrot.slane %v1759, 3
  %v1763 = vsel %vm112, %v1761, 0
  %1765 = vmatpush.bf16.msra.mxu0 0
  %1766 = vmatpush.bf16.msra.mxu0 0
  %1767 = vmatpush.bf16.msra.mxu0 0
  %1768 = vmatpush.bf16.msra.mxu0 0
  %1769 = vmatpush.bf16.msra.mxu0 %v102
  %1770 = vmatpush.bf16.msra.mxu0 %v100
  %1771 = vmatpush.bf16.msra.mxu0 %v98
  %1772 = vmatpush.bf16.msra.mxu0 %v96
  %1773 = vmatmul.bf16.gmra.mxu0 %v1763
  %v1774 = vpop.f32.mrf.mxu0
  %v1775 = vadd.f32 0.0, %v1774
  %v1776 = vpop.f32.mrf.mxu0
  %1777 = vdwg.mxu0
  %1778 = vmatpush.bf16.msra.mxu0 0
  %1779 = vmatpush.bf16.msra.mxu0 0
  %1780 = vmatpush.bf16.msra.mxu0 0
  %1781 = vmatpush.bf16.msra.mxu0 0
  %1782 = vmatpush.bf16.msra.mxu0 %v103
  %1783 = vmatpush.bf16.msra.mxu0 %v101
  %1784 = vmatpush.bf16.msra.mxu0 %v99
  %1785 = vmatpush.bf16.msra.mxu0 %v97
  %1786 = vmatmul.bf16.gmra.mxu0 %v1763
  %v1787 = vpop.f32.mrf.mxu0
  %v1788 = vadd.f32 0.0, %v1787
  %v1789 = vpop.f32.mrf.mxu0
  %1790 = vdwg.mxu0
  %v1791 = vld [vmem:[%s0 + $0xc] sm:$0x1]
  %v1792 = vunpack.c.l.bf16 %v1791
  %v1793 = vadd.f32 %v1792, %v1775
  %v1794 = vld [vmem:[%s41] sm:$0x8]
  %v1795 = vunpack.c.l.bf16 %v1794
  %v1797 = vrot.slane %v1788, 2
  %v1799 = vadd.f32 %v1795, %v1797
  %v1800 = vxor.u32 %v1793, 2147483648
  %v1801 = vmul.f32 %v1800, 1.442695
  %v1802 = vpow.pop %v1801
  %v1803 = vadd.f32 %v1802, 1.0
  %v1804 = vrcp.pop %v1803
  %v1805 = vmul.f32 %v1803, %v1804
  %v1806 = vsub.f32 1.0, %v1805
  %v1807 = vmul.f32 %v1804, %v1806
  %v1808 = vadd.f32 %v1804, %v1807
  %vm1809 = vweird.f32 %v1803
  %vm1810 = vweird.f32 %v1804
  %vm1811 = vmor %vm1809, %vm1810
  %v1812 = vsel %vm1811, %v1804, %v1808
  %v1813 = vand.u32 2147483647, %v1803
  %vm1814 = vcmp.eq.f32.partialorder %v1813, 8.507059e+37
  %v1815 = vand.u32 %v1803, 2147483648
  %v1816 = vor.u32 1.1754944e-38, %v1815
  %v1817 = vsel %vm1814, %v1816, %v1812
  %v1818 = vmul.f32 1.0, %v1817
  %v1819 = vtanh.pop %v1793
  %v1821 = vrot.slane %v1697, 6
  %v1823 = vmul.f32 %v1818, %v1821
  %1825 = vrot.lane.b32.xlu0 %v1819, 32
  %v1826 = vpop.permute.xlu0 %1825
  %v1828 = vmul.f32 %v1818, %v1826
  %1830 = vrot.lane.b32.xlu0 %v1828, 32
  %v1831 = vpop.permute.xlu0 %1830
  %v1833 = vadd.f32 %v1823, %v1831
  %v1834 = vtanh.pop %v1833
  %1836 = vrot.lane.b32.xlu0 %v1834, 32
  %v1837 = vpop.permute.xlu0 %1836
  %v1839 = vmul.f32 %v1818, %v1837
  %v1840 = vxor.u32 %v1799, 2147483648
  %v1841 = vmul.f32 %v1840, 1.442695
  %v1842 = vpow.pop %v1841
  %v1843 = vadd.f32 %v1842, 1.0
  %v1844 = vrcp.pop %v1843
  %v1845 = vmul.f32 %v1843, %v1844
  %v1846 = vsub.f32 1.0, %v1845
  %v1847 = vmul.f32 %v1844, %v1846
  %v1848 = vadd.f32 %v1844, %v1847
  %vm1849 = vweird.f32 %v1843
  %vm1850 = vweird.f32 %v1844
  %vm1851 = vmor %vm1849, %vm1850
  %v1852 = vsel %vm1851, %v1844, %v1848
  %v1853 = vand.u32 2147483647, %v1843
  %vm1854 = vcmp.eq.f32.partialorder %v1853, 8.507059e+37
  %v1855 = vand.u32 %v1843, 2147483648
  %v1856 = vor.u32 1.1754944e-38, %v1855
  %v1857 = vsel %vm1854, %v1856, %v1852
  %v1858 = vmul.f32 1.0, %v1857
  %v1859 = vtanh.pop %v1799
  %v1861 = vrot.slane %v1737, 2
  %v1863 = vmul.f32 %v1858, %v1861
  %1865 = vrot.lane.b32.xlu0 %v1859, 32
  %v1866 = vpop.permute.xlu0 %1865
  %v1868 = vmul.f32 %v1858, %v1866
  %1870 = vrot.lane.b32.xlu0 %v1868, 32
  %v1871 = vpop.permute.xlu0 %1870
  %v1873 = vadd.f32 %v1863, %v1871
  %v1874 = vtanh.pop %v1873
  %1876 = vrot.lane.b32.xlu0 %v1874, 32
  %v1877 = vpop.permute.xlu0 %1876
  %v1879 = vmul.f32 %v1858, %v1877
  %1881 = vrot.lane.b32.xlu0 %v1839, 64
  %v1882 = vpop.permute.xlu0 %1881
  %1884 = vst.msk [vmem:[%s3 + $0x18] sm:$0x3] %vm235, %v1882
  %1886 = vrot.lane.b32.xlu0 %v1879, 64
  %v1887 = vpop.permute.xlu0 %1886
  %1889 = vst.msk [vmem:[%s49] sm:$0xc0] %vm241, %v1887
  %v1890 = vrot.slane %v1879, 6
  %1891 = vrot.lane.b32.xlu0 %v1890, 96
  %v1892 = vpop.permute.xlu0 %1891
  %v1894 = vsel %vm247, %v1882, %v1892
  %v1895 = vpack.c.bf16 %v1894, %v1894
  %v1897 = vsel %vm112, %v1895, 0
  %1899 = vmatpush.bf16.msra.mxu0 0
  %1900 = vmatpush.bf16.msra.mxu0 0
  %1901 = vmatpush.bf16.msra.mxu0 0
  %1902 = vmatpush.bf16.msra.mxu0 0
  %1903 = vmatpush.bf16.msra.mxu0 %v102
  %1904 = vmatpush.bf16.msra.mxu0 %v100
  %1905 = vmatpush.bf16.msra.mxu0 %v98
  %1906 = vmatpush.bf16.msra.mxu0 %v96
  %1907 = vmatmul.bf16.gmra.mxu0 %v1897
  %v1908 = vpop.f32.mrf.mxu0
  %v1909 = vadd.f32 0.0, %v1908
  %v1910 = vpop.f32.mrf.mxu0
  %1911 = vdwg.mxu0
  %1912 = vmatpush.bf16.msra.mxu0 0
  %1913 = vmatpush.bf16.msra.mxu0 0
  %1914 = vmatpush.bf16.msra.mxu0 0
  %1915 = vmatpush.bf16.msra.mxu0 0
  %1916 = vmatpush.bf16.msra.mxu0 %v103
  %1917 = vmatpush.bf16.msra.mxu0 %v101
  %1918 = vmatpush.bf16.msra.mxu0 %v99
  %1919 = vmatpush.bf16.msra.mxu0 %v97
  %1920 = vmatmul.bf16.gmra.mxu0 %v1897
  %v1921 = vpop.f32.mrf.mxu0
  %v1922 = vadd.f32 0.0, %v1921
  %v1923 = vpop.f32.mrf.mxu0
  %1924 = vdwg.mxu0
  %v1925 = vld [vmem:[%s0 + $0xc] sm:$0x2]
  %v1926 = vunpack.c.l.bf16 %v1925
  %v1928 = vrot.slane %v1909, 6
  %v1930 = vadd.f32 %v1926, %v1928
  %v1931 = vld [vmem:[%s41] sm:$0x4]
  %v1932 = vunpack.c.l.bf16 %v1931
  %v1934 = vrot.slane %v1922, 4
  %v1936 = vadd.f32 %v1932, %v1934
  %v1937 = vxor.u32 %v1930, 2147483648
  %v1938 = vmul.f32 %v1937, 1.442695
  %v1939 = vpow.pop %v1938
  %v1940 = vadd.f32 %v1939, 1.0
  %v1941 = vrcp.pop %v1940
  %v1942 = vmul.f32 %v1940, %v1941
  %v1943 = vsub.f32 1.0, %v1942
  %v1944 = vmul.f32 %v1941, %v1943
  %v1945 = vadd.f32 %v1941, %v1944
  %vm1946 = vweird.f32 %v1940
  %vm1947 = vweird.f32 %v1941
  %vm1948 = vmor %vm1946, %vm1947
  %v1949 = vsel %vm1948, %v1941, %v1945
  %v1950 = vand.u32 2147483647, %v1940
  %vm1951 = vcmp.eq.f32.partialorder %v1950, 8.507059e+37
  %v1952 = vand.u32 %v1940, 2147483648
  %v1953 = vor.u32 1.1754944e-38, %v1952
  %v1954 = vsel %vm1951, %v1953, %v1949
  %v1955 = vmul.f32 1.0, %v1954
  %v1956 = vtanh.pop %v1930
  %v1958 = vrot.slane %v1833, 6
  %v1960 = vmul.f32 %v1955, %v1958
  %1962 = vrot.lane.b32.xlu0 %v1956, 32
  %v1963 = vpop.permute.xlu0 %1962
  %v1965 = vmul.f32 %v1955, %v1963
  %1967 = vrot.lane.b32.xlu0 %v1965, 32
  %v1968 = vpop.permute.xlu0 %1967
  %v1970 = vadd.f32 %v1960, %v1968
  %v1971 = vtanh.pop %v1970
  %1973 = vrot.lane.b32.xlu0 %v1971, 32
  %v1974 = vpop.permute.xlu0 %1973
  %v1976 = vmul.f32 %v1955, %v1974
  %v1977 = vxor.u32 %v1936, 2147483648
  %v1978 = vmul.f32 %v1977, 1.442695
  %v1979 = vpow.pop %v1978
  %v1980 = vadd.f32 %v1979, 1.0
  %v1981 = vrcp.pop %v1980
  %v1982 = vmul.f32 %v1980, %v1981
  %v1983 = vsub.f32 1.0, %v1982
  %v1984 = vmul.f32 %v1981, %v1983
  %v1985 = vadd.f32 %v1981, %v1984
  %vm1986 = vweird.f32 %v1980
  %vm1987 = vweird.f32 %v1981
  %vm1988 = vmor %vm1986, %vm1987
  %v1989 = vsel %vm1988, %v1981, %v1985
  %v1990 = vand.u32 2147483647, %v1980
  %vm1991 = vcmp.eq.f32.partialorder %v1990, 8.507059e+37
  %v1992 = vand.u32 %v1980, 2147483648
  %v1993 = vor.u32 1.1754944e-38, %v1992
  %v1994 = vsel %vm1991, %v1993, %v1989
  %v1995 = vmul.f32 1.0, %v1994
  %v1996 = vtanh.pop %v1936
  %v1998 = vrot.slane %v1873, 2
  %v2000 = vmul.f32 %v1995, %v1998
  %2002 = vrot.lane.b32.xlu0 %v1996, 32
  %v2003 = vpop.permute.xlu0 %2002
  %v2005 = vmul.f32 %v1995, %v2003
  %2007 = vrot.lane.b32.xlu0 %v2005, 32
  %v2008 = vpop.permute.xlu0 %2007
  %v2010 = vadd.f32 %v2000, %v2008
  %v2011 = vtanh.pop %v2010
  %2013 = vrot.lane.b32.xlu0 %v2011, 32
  %v2014 = vpop.permute.xlu0 %2013
  %v2016 = vmul.f32 %v1995, %v2014
  %2018 = vrot.lane.b32.xlu0 %v1976, 64
  %v2019 = vpop.permute.xlu0 %2018
  %2021 = vst.msk [vmem:[%s3 + $0x18] sm:$0xc] %vm375, %v2019
  %2023 = vrot.lane.b32.xlu0 %v2016, 64
  %v2024 = vpop.permute.xlu0 %2023
  %2026 = vst.msk [vmem:[%s49] sm:$0x30] %vm381, %v2024
  %v2027 = vrot.slane %v2016, 2
  %2028 = vrot.lane.b32.xlu0 %v2027, 96
  %v2029 = vpop.permute.xlu0 %2028
  %v2031 = vsel %vm247, %v2019, %v2029
  %v2032 = vpack.c.bf16 %v2031, %v2031
  %v2034 = vrot.slane %v2032, 1
  %v2036 = vsel %vm112, %v2034, 0
  %2038 = vmatpush.bf16.msra.mxu0 0
  %2039 = vmatpush.bf16.msra.mxu0 0
  %2040 = vmatpush.bf16.msra.mxu0 0
  %2041 = vmatpush.bf16.msra.mxu0 0
  %2042 = vmatpush.bf16.msra.mxu0 %v102
  %2043 = vmatpush.bf16.msra.mxu0 %v100
  %2044 = vmatpush.bf16.msra.mxu0 %v98
  %2045 = vmatpush.bf16.msra.mxu0 %v96
  %2046 = vmatmul.bf16.gmra.mxu0 %v2036
  %v2047 = vpop.f32.mrf.mxu0
  %v2048 = vadd.f32 0.0, %v2047
  %v2049 = vpop.f32.mrf.mxu0
  %2050 = vdwg.mxu0
  %2051 = vmatpush.bf16.msra.mxu0 0
  %2052 = vmatpush.bf16.msra.mxu0 0
  %2053 = vmatpush.bf16.msra.mxu0 0
  %2054 = vmatpush.bf16.msra.mxu0 0
  %2055 = vmatpush.bf16.msra.mxu0 %v103
  %2056 = vmatpush.bf16.msra.mxu0 %v101
  %2057 = vmatpush.bf16.msra.mxu0 %v99
  %2058 = vmatpush.bf16.msra.mxu0 %v97
  %2059 = vmatmul.bf16.gmra.mxu0 %v2036
  %v2060 = vpop.f32.mrf.mxu0
  %v2061 = vadd.f32 0.0, %v2060
  %v2062 = vpop.f32.mrf.mxu0
  %2063 = vdwg.mxu0
  %v2064 = vld [vmem:[%s0 + $0xc] sm:$0x4]
  %v2065 = vunpack.c.l.bf16 %v2064
  %v2067 = vrot.slane %v2048, 4
  %v2069 = vadd.f32 %v2065, %v2067
  %v2070 = vld [vmem:[%s41] sm:$0x2]
  %v2071 = vunpack.c.l.bf16 %v2070
  %v2073 = vrot.slane %v2061, 6
  %v2075 = vadd.f32 %v2071, %v2073
  %v2076 = vxor.u32 %v2069, 2147483648
  %v2077 = vmul.f32 %v2076, 1.442695
  %v2078 = vpow.pop %v2077
  %v2079 = vadd.f32 %v2078, 1.0
  %v2080 = vrcp.pop %v2079
  %v2081 = vmul.f32 %v2079, %v2080
  %v2082 = vsub.f32 1.0, %v2081
  %v2083 = vmul.f32 %v2080, %v2082
  %v2084 = vadd.f32 %v2080, %v2083
  %vm2085 = vweird.f32 %v2079
  %vm2086 = vweird.f32 %v2080
  %vm2087 = vmor %vm2085, %vm2086
  %v2088 = vsel %vm2087, %v2080, %v2084
  %v2089 = vand.u32 2147483647, %v2079
  %vm2090 = vcmp.eq.f32.partialorder %v2089, 8.507059e+37
  %v2091 = vand.u32 %v2079, 2147483648
  %v2092 = vor.u32 1.1754944e-38, %v2091
  %v2093 = vsel %vm2090, %v2092, %v2088
  %v2094 = vmul.f32 1.0, %v2093
  %v2095 = vtanh.pop %v2069
  %v2097 = vrot.slane %v1970, 6
  %v2099 = vmul.f32 %v2094, %v2097
  %2101 = vrot.lane.b32.xlu0 %v2095, 32
  %v2102 = vpop.permute.xlu0 %2101
  %v2104 = vmul.f32 %v2094, %v2102
  %2106 = vrot.lane.b32.xlu0 %v2104, 32
  %v2107 = vpop.permute.xlu0 %2106
  %v2109 = vadd.f32 %v2099, %v2107
  %v2110 = vtanh.pop %v2109
  %2112 = vrot.lane.b32.xlu0 %v2110, 32
  %v2113 = vpop.permute.xlu0 %2112
  %v2115 = vmul.f32 %v2094, %v2113
  %v2116 = vxor.u32 %v2075, 2147483648
  %v2117 = vmul.f32 %v2116, 1.442695
  %v2118 = vpow.pop %v2117
  %v2119 = vadd.f32 %v2118, 1.0
  %v2120 = vrcp.pop %v2119
  %v2121 = vmul.f32 %v2119, %v2120
  %v2122 = vsub.f32 1.0, %v2121
  %v2123 = vmul.f32 %v2120, %v2122
  %v2124 = vadd.f32 %v2120, %v2123
  %vm2125 = vweird.f32 %v2119
  %vm2126 = vweird.f32 %v2120
  %vm2127 = vmor %vm2125, %vm2126
  %v2128 = vsel %vm2127, %v2120, %v2124
  %v2129 = vand.u32 2147483647, %v2119
  %vm2130 = vcmp.eq.f32.partialorder %v2129, 8.507059e+37
  %v2131 = vand.u32 %v2119, 2147483648
  %v2132 = vor.u32 1.1754944e-38, %v2131
  %v2133 = vsel %vm2130, %v2132, %v2128
  %v2134 = vmul.f32 1.0, %v2133
  %v2135 = vtanh.pop %v2075
  %v2137 = vrot.slane %v2010, 2
  %v2139 = vmul.f32 %v2134, %v2137
  %2141 = vrot.lane.b32.xlu0 %v2135, 32
  %v2142 = vpop.permute.xlu0 %2141
  %v2144 = vmul.f32 %v2134, %v2142
  %2146 = vrot.lane.b32.xlu0 %v2144, 32
  %v2147 = vpop.permute.xlu0 %2146
  %v2149 = vadd.f32 %v2139, %v2147
  %v2150 = vtanh.pop %v2149
  %2152 = vrot.lane.b32.xlu0 %v2150, 32
  %v2153 = vpop.permute.xlu0 %2152
  %v2155 = vmul.f32 %v2134, %v2153
  %2157 = vrot.lane.b32.xlu0 %v2115, 64
  %v2158 = vpop.permute.xlu0 %2157
  %2160 = vst.msk [vmem:[%s3 + $0x18] sm:$0x30] %vm381, %v2158
  %2162 = vrot.lane.b32.xlu0 %v2155, 64
  %v2163 = vpop.permute.xlu0 %2162
  %2165 = vst.msk [vmem:[%s49] sm:$0xc] %vm375, %v2163
  %v2166 = vrot.slane %v2155, 6
  %2167 = vrot.lane.b32.xlu0 %v2166, 96
  %v2168 = vpop.permute.xlu0 %2167
  %v2170 = vsel %vm247, %v2158, %v2168
  %v2171 = vpack.c.bf16 %v2170, %v2170
  %v2173 = vrot.slane %v2171, 2
  %v2175 = vsel %vm112, %v2173, 0
  %2177 = vmatpush.bf16.msra.mxu0 0
  %2178 = vmatpush.bf16.msra.mxu0 0
  %2179 = vmatpush.bf16.msra.mxu0 0
  %2180 = vmatpush.bf16.msra.mxu0 0
  %2181 = vmatpush.bf16.msra.mxu0 %v102
  %2182 = vmatpush.bf16.msra.mxu0 %v100
  %2183 = vmatpush.bf16.msra.mxu0 %v98
  %2184 = vmatpush.bf16.msra.mxu0 %v96
  %2185 = vmatmul.bf16.gmra.mxu0 %v2175
  %v2186 = vpop.f32.mrf.mxu0
  %v2187 = vadd.f32 0.0, %v2186
  %v2188 = vpop.f32.mrf.mxu0
  %2189 = vdwg.mxu0
  %2190 = vmatpush.bf16.msra.mxu0 0
  %2191 = vmatpush.bf16.msra.mxu0 0
  %2192 = vmatpush.bf16.msra.mxu0 0
  %2193 = vmatpush.bf16.msra.mxu0 0
  %2194 = vmatpush.bf16.msra.mxu0 %v103
  %2195 = vmatpush.bf16.msra.mxu0 %v101
  %2196 = vmatpush.bf16.msra.mxu0 %v99
  %2197 = vmatpush.bf16.msra.mxu0 %v97
  %2198 = vmatmul.bf16.gmra.mxu0 %v2175
  %v2199 = vpop.f32.mrf.mxu0
  %v2200 = vadd.f32 0.0, %v2199
  %v2201 = vpop.f32.mrf.mxu0
  %2202 = vdwg.mxu0
  %v2203 = vld [vmem:[%s0 + $0xc] sm:$0x8]
  %v2204 = vunpack.c.l.bf16 %v2203
  %v2206 = vrot.slane %v2187, 2
  %v2208 = vadd.f32 %v2204, %v2206
  %v2209 = vld [vmem:[%s41] sm:$0x1]
  %v2210 = vunpack.c.l.bf16 %v2209
  %v2211 = vadd.f32 %v2210, %v2200
  %v2212 = vxor.u32 %v2208, 2147483648
  %v2213 = vmul.f32 %v2212, 1.442695
  %v2214 = vpow.pop %v2213
  %v2215 = vadd.f32 %v2214, 1.0
  %v2216 = vrcp.pop %v2215
  %v2217 = vmul.f32 %v2215, %v2216
  %v2218 = vsub.f32 1.0, %v2217
  %v2219 = vmul.f32 %v2216, %v2218
  %v2220 = vadd.f32 %v2216, %v2219
  %vm2221 = vweird.f32 %v2215
  %vm2222 = vweird.f32 %v2216
  %vm2223 = vmor %vm2221, %vm2222
  %v2224 = vsel %vm2223, %v2216, %v2220
  %v2225 = vand.u32 2147483647, %v2215
  %vm2226 = vcmp.eq.f32.partialorder %v2225, 8.507059e+37
  %v2227 = vand.u32 %v2215, 2147483648
  %v2228 = vor.u32 1.1754944e-38, %v2227
  %v2229 = vsel %vm2226, %v2228, %v2224
  %v2230 = vmul.f32 1.0, %v2229
  %v2231 = vtanh.pop %v2208
  %v2233 = vrot.slane %v2109, 6
  %v2235 = vmul.f32 %v2230, %v2233
  %2237 = vrot.lane.b32.xlu0 %v2231, 32
  %v2238 = vpop.permute.xlu0 %2237
  %v2240 = vmul.f32 %v2230, %v2238
  %2242 = vrot.lane.b32.xlu0 %v2240, 32
  %v2243 = vpop.permute.xlu0 %2242
  %v2245 = vadd.f32 %v2235, %v2243
  %v2246 = vtanh.pop %v2245
  %2248 = vrot.lane.b32.xlu0 %v2246, 32
  %v2249 = vpop.permute.xlu0 %2248
  %v2251 = vmul.f32 %v2230, %v2249
  %v2252 = vxor.u32 %v2211, 2147483648
  %v2253 = vmul.f32 %v2252, 1.442695
  %v2254 = vpow.pop %v2253
  %v2255 = vadd.f32 %v2254, 1.0
  %v2256 = vrcp.pop %v2255
  %v2257 = vmul.f32 %v2255, %v2256
  %v2258 = vsub.f32 1.0, %v2257
  %v2259 = vmul.f32 %v2256, %v2258
  %v2260 = vadd.f32 %v2256, %v2259
  %vm2261 = vweird.f32 %v2255
  %vm2262 = vweird.f32 %v2256
  %vm2263 = vmor %vm2261, %vm2262
  %v2264 = vsel %vm2263, %v2256, %v2260
  %v2265 = vand.u32 2147483647, %v2255
  %vm2266 = vcmp.eq.f32.partialorder %v2265, 8.507059e+37
  %v2267 = vand.u32 %v2255, 2147483648
  %v2268 = vor.u32 1.1754944e-38, %v2267
  %v2269 = vsel %vm2266, %v2268, %v2264
  %v2270 = vmul.f32 1.0, %v2269
  %v2271 = vtanh.pop %v2211
  %v2273 = vrot.slane %v2149, 2
  %v2275 = vmul.f32 %v2270, %v2273
  %2277 = vrot.lane.b32.xlu0 %v2271, 32
  %v2278 = vpop.permute.xlu0 %2277
  %v2280 = vmul.f32 %v2270, %v2278
  %2282 = vrot.lane.b32.xlu0 %v2280, 32
  %v2283 = vpop.permute.xlu0 %2282
  %v2285 = vadd.f32 %v2275, %v2283
  %v2286 = vtanh.pop %v2285
  %2288 = vrot.lane.b32.xlu0 %v2286, 32
  %v2289 = vpop.permute.xlu0 %2288
  %v2291 = vmul.f32 %v2270, %v2289
  %2293 = vrot.lane.b32.xlu0 %v2251, 64
  %v2294 = vpop.permute.xlu0 %2293
  %2296 = vst.msk [vmem:[%s3 + $0x18] sm:$0xc0] %vm241, %v2294
  %2298 = vrot.lane.b32.xlu0 %v2291, 64
  %v2299 = vpop.permute.xlu0 %2298
  %2301 = vst.msk [vmem:[%s49] sm:$0x3] %vm235, %v2299
  %v2302 = vrot.slane %v2291, 2
  %2303 = vrot.lane.b32.xlu0 %v2302, 96
  %v2304 = vpop.permute.xlu0 %2303
  %v2306 = vsel %vm247, %v2294, %v2304
  %vm2307 = vcmask 523270
  %2308 = vst.msk [vmem:[#allocation2 - $0x6] sm:$0xc0] %vm2307, %v2306
  %2310 = vrot.lane.b32.xlu0 %v2245, 96
  %v2311 = vpop.permute.xlu0 %2310
  %v2314 = vrot.slane %v2285, 2
  %v2316 = vsel %vm247, %v2311, %v2314
  %2317 = vst.msk [vmem:[%s69 - $0x6] sm:$0xc0] %vm2307, %v2316
  %s2318 = ssub.s32 0, 0
  %s2319 = smul.u32 4, %s2318
  %p2320 = scmp.lt.s32.totalorder %s2319, 3
  %s2321 = scalar_select %p2320, %s2319, 3
  %s2322 = smul.addr %s2321, 8
  %s2323 = scalar_lea.vmem %s4, %s2322
  // Predicated region
  $region18: #{nn_lstm_all_forward.3} parent=0 // pred_check
    _
  $region19: #{nn_lstm_all_forward.3} parent=0 // pred_check_branch
    %2325 = sbr.rel (0) target = $region21
  $region20: #{nn_lstm_all_forward.3} parent=0 // pred_region
    _
  $region21: #{nn_lstm_all_forward.3} parent=0 // pred_fallthru
    _
  // Predicated region
  $region22: #{nn_lstm_all_forward.3} parent=0 // pred_check
    _
  $region23: #{nn_lstm_all_forward.3} parent=0 // pred_check_branch
    %2327 = sbr.rel (0) target = $region25
  $region24: #{nn_lstm_all_forward.3} parent=0 // pred_region
    %s2328 = ssub.s32 0, 0
    %s2329 = smul.u32 4, %s2328
  $region25: #{nn_lstm_all_forward.3} parent=0 // pred_fallthru
    _
  // Predicated region
  $region26: #{nn_lstm_all_forward.3} parent=0 // pred_check
    _
  $region27: #{nn_lstm_all_forward.3} parent=0 // pred_check_branch
    %2331 = sbr.rel (0) target = $region29
  $region28: #{nn_lstm_all_forward.3} parent=0 // pred_region
    _
  $region29: #{nn_lstm_all_forward.3} parent=0 // pred_fallthru
    _
  // Predicated region
  $region30: #{nn_lstm_all_forward.3} parent=0 // pred_check
    _
  $region31: #{nn_lstm_all_forward.3} parent=0 // pred_check_branch
    %2333 = sbr.rel (0) target = $region33
  $region32: #{nn_lstm_all_forward.3} parent=0 // pred_region
    %s2334 = ssub.s32 0, 0
    %s2335 = smul.u32 4, %s2334
    %p2336 = scmp.lt.s32.totalorder %s2335, 3
    %s2337 = scalar_select %p2336, %s2335, 3
    %s2338 = smul.addr %s2337, 8
    %s2339 = scalar_lea.vmem %s4, %s2338
  $region33: #{nn_lstm_all_forward.3} parent=0 // pred_fallthru
    _

// kernel: nn_lstm_all_forward.2
$region0: #{nn_lstm_all_forward.2}
  #allocation0 [shape = 'u32[]', space=smem, size = 0x4, offset = 0x4, fixed_abs, tag = 'smem constant byte address 0x4 - core index']
  #allocation1 [shape = 'u32[72,128]{1,0:T(1,128)}', space=vmem, size = 0x9000, scoped, tag = 'internal scratch']
  #allocation2 [shape = 'f32[2,2,64]{2,1,0:T(2,128)}', space=vmem, size = 0x800, scoped, tag = 'scratch operand']
  %s0 = inlined_call_operand.vmem [shape: bf16[32,128], index: 0, kind: input, shape index: {}]
  %s1 = inlined_call_operand.vmem [shape: bf16[32,128], index: 1, kind: input, shape index: {}]
  %s2 = inlined_call_operand.vmem [shape: bf16[64,256], index: 2, kind: input, shape index: {}]
  %s3 = inlined_call_operand.vmem [shape: bf16[32,32], index: 3, kind: output, shape index: {0}]
  %s4 = inlined_call_operand.vmem [shape: bf16[32,32], index: 4, kind: output, shape index: {1}]
  %5 = xla_tuple %s3, %s4
  %s6 = sld [smem:[#allocation0]]
  $region34: #{nn_lstm_all_forward.2} parent=0
    _
  %s8 = ssub.s32 1, %s6
  %s9 = scalar_select 0, %s8, %s6
  // Predicated region
  $region2: #{nn_lstm_all_forward.2} parent=0 // pred_check
    _
  $region3: #{nn_lstm_all_forward.2} parent=0 // pred_check_branch
    %11 = sbr.rel (0) target = $region5
  $region4: #{nn_lstm_all_forward.2} parent=0 // pred_region
    _
  $region5: #{nn_lstm_all_forward.2} parent=0 // pred_fallthru
    _
  // Predicated region
  $region6: #{nn_lstm_all_forward.2} parent=0 // pred_check
    _
  $region7: #{nn_lstm_all_forward.2} parent=0 // pred_check_branch
    %13 = sbr.rel (0) target = $region9
  $region8: #{nn_lstm_all_forward.2} parent=0 // pred_region
    %s14 = ssub.s32 0, 0
    %s15 = smul.u32 4, %s14
    %p16 = scmp.lt.s32.totalorder %s15, 3
    %s17 = scalar_select %p16, %s15, 3
    %s18 = smul.addr %s17, 4
    %s19 = scalar_lea.vmem %s1, %s18
    %s20 = ssub.s32 0, 0
    %s21 = smul.u32 4, %s20
  $region9: #{nn_lstm_all_forward.2} parent=0 // pred_fallthru
    _
  // Predicated region
  $region10: #{nn_lstm_all_forward.2} parent=0 // pred_check
    _
  $region11: #{nn_lstm_all_forward.2} parent=0 // pred_check_branch
    %23 = sbr.rel (0) target = $region13
  $region12: #{nn_lstm_all_forward.2} parent=0 // pred_region
    _
  $region13: #{nn_lstm_all_forward.2} parent=0 // pred_fallthru
    _
  %s24 = ssub.s32 0, 0
  %s25 = smul.u32 4, %s24
  %p26 = scmp.lt.s32.totalorder %s25, 3
  %s27 = scalar_select %p26, %s25, 3
  %s28 = smul.addr %s27, 4
  %s29 = scalar_lea.vmem %s1, %s28
  %s30 = ssub.s32 0, 0
  %s31 = smul.u32 4, %s30
  %p32 = scmp.lt.s32.totalorder %s31, 3
  %s33 = scalar_select %p32, %s31, 3
  %s34 = smul.addr %s33, 4
  %s35 = scalar_lea.vmem %s4, %s34
  %s36 = ssub.s32 0, 0
  %s37 = smul.u32 4, %s36
  %p38 = scmp.lt.s32.totalorder %s37, 3
  %s39 = scalar_select %p38, %s37, 3
  %s40 = smul.addr %s39, 4
  %s41 = scalar_lea.vmem %s1, %s40
  %s42 = ssub.s32 0, 0
  %s43 = smul.u32 4, %s42
  %s44 = ssub.s32 0, 0
  %s45 = smul.u32 4, %s44
  %p46 = scmp.lt.s32.totalorder %s45, 3
  %s47 = scalar_select %p46, %s45, 3
  %s48 = smul.addr %s47, 4
  %s49 = scalar_lea.vmem %s4, %s48
  %s50 = ssub.s32 0, 0
  %s51 = smul.u32 4, %s50
  %p53 = scmp.eq.s32.totalorder 0, 0
  // Predicated region
  $region14: #{nn_lstm_all_forward.2} parent=0 // pred_check
    %p54 = pneg %p53
  $region15: #{nn_lstm_all_forward.2} parent=0 // pred_check_branch
    %56 = sbr.rel (%p54) target = $region17
  $region16: #{nn_lstm_all_forward.2} parent=0 // pred_region
    %vm57 = vcmask 517120
    %58 = vst.msk [vmem:[#allocation2] sm:$0x3] %vm57, 0.0
    %59 = vst.msk [vmem:[#allocation2 + $0x2] sm:$0x3] %vm57, 0.0
  $region17: #{nn_lstm_all_forward.2} parent=0 // pred_fallthru
    _
  %v60 = vld [vmem:[%s2] sm:$0xff]
  %v61 = vld [vmem:[%s2 + $0x8] sm:$0xff]
  %v62 = vld [vmem:[%s2 + $0x10] sm:$0xff]
  %v63 = vld [vmem:[%s2 + $0x18] sm:$0xff]
  %v64 = vld [vmem:[%s2 + $0x20] sm:$0xff]
  %v65 = vld [vmem:[%s2 + $0x28] sm:$0xff]
  %v66 = vld [vmem:[%s2 + $0x30] sm:$0xff]
  %v67 = vld [vmem:[%s2 + $0x38] sm:$0xff]
  %v68 = vld [vmem:[#allocation2] sm:$0x3]
  %s69 = scalar_lea.vmem [#allocation2], 2
  %v70 = vld [vmem:[%s69] sm:$0x3]
  %v71 = vpack.c.bf16 %v68, %v68
  %v80 = vunpack.c.l.b16 %v60
  %v81 = vunpack.c.h.b16 %v60
  %v82 = vunpack.c.l.b16 %v61
  %v83 = vunpack.c.h.b16 %v61
  %v84 = vunpack.c.l.b16 %v62
  %v85 = vunpack.c.h.b16 %v62
  %v86 = vunpack.c.l.b16 %v63
  %v87 = vunpack.c.h.b16 %v63
  %v88 = vunpack.c.l.b16 %v64
  %v89 = vunpack.c.h.b16 %v64
  %v90 = vunpack.c.l.b16 %v65
  %v91 = vunpack.c.h.b16 %v65
  %v92 = vunpack.c.l.b16 %v66
  %v93 = vunpack.c.h.b16 %v66
  %v94 = vunpack.c.l.b16 %v67
  %v95 = vunpack.c.h.b16 %v67
  %v96 = vpack.c.b16 %v82, %v80
  %v97 = vpack.c.b16 %v83, %v81
  %v98 = vpack.c.b16 %v86, %v84
  %v99 = vpack.c.b16 %v87, %v85
  %v100 = vpack.c.b16 %v90, %v88
  %v101 = vpack.c.b16 %v91, %v89
  %v102 = vpack.c.b16 %v94, %v92
  %v103 = vpack.c.b16 %v95, %v93
  %vm112 = vcmask 523264
  %v114 = vsel %vm112, %v71, 0
  %116 = vmatpush.bf16.msra.mxu0 0
  %117 = vmatpush.bf16.msra.mxu0 0
  %118 = vmatpush.bf16.msra.mxu0 0
  %119 = vmatpush.bf16.msra.mxu0 0
  %120 = vmatpush.bf16.msra.mxu0 %v102
  %121 = vmatpush.bf16.msra.mxu0 %v100
  %122 = vmatpush.bf16.msra.mxu0 %v98
  %123 = vmatpush.bf16.msra.mxu0 %v96
  %124 = vmatmul.bf16.gmra.mxu0 %v114
  %v125 = vpop.f32.mrf.mxu0
  %v126 = vadd.f32 0.0, %v125
  %v127 = vpop.f32.mrf.mxu0
  %128 = vdwg.mxu0
  %129 = vmatpush.bf16.msra.mxu0 0
  %130 = vmatpush.bf16.msra.mxu0 0
  %131 = vmatpush.bf16.msra.mxu0 0
  %132 = vmatpush.bf16.msra.mxu0 0
  %133 = vmatpush.bf16.msra.mxu0 %v103
  %134 = vmatpush.bf16.msra.mxu0 %v101
  %135 = vmatpush.bf16.msra.mxu0 %v99
  %136 = vmatpush.bf16.msra.mxu0 %v97
  %137 = vmatmul.bf16.gmra.mxu0 %v114
  %v138 = vpop.f32.mrf.mxu0
  %v139 = vadd.f32 0.0, %v138
  %v140 = vpop.f32.mrf.mxu0
  %141 = vdwg.mxu0
  %v142 = vld [vmem:[%s0] sm:$0x1]
  %v143 = vunpack.c.l.bf16 %v142
  %v144 = vadd.f32 %v143, %v126
  %v145 = vld [vmem:[%s41 + $0xc] sm:$0x8]
  %v146 = vunpack.c.l.bf16 %v145
  %v148 = vrot.slane %v139, 2
  %v150 = vadd.f32 %v146, %v148
  %v151 = vxor.u32 %v144, 2147483648
  %v152 = vmul.f32 %v151, 1.442695
  %v153 = vpow.pop %v152
  %v154 = vadd.f32 %v153, 1.0
  %v155 = vrcp.pop %v154
  %v156 = vmul.f32 %v154, %v155
  %v157 = vsub.f32 1.0, %v156
  %v158 = vmul.f32 %v155, %v157
  %v159 = vadd.f32 %v155, %v158
  %vm160 = vweird.f32 %v154
  %vm161 = vweird.f32 %v155
  %vm162 = vmor %vm160, %vm161
  %v163 = vsel %vm162, %v155, %v159
  %v164 = vand.u32 2147483647, %v154
  %vm165 = vcmp.eq.f32.partialorder %v164, 8.507059e+37
  %v166 = vand.u32 %v154, 2147483648
  %v167 = vor.u32 1.1754944e-38, %v166
  %v168 = vsel %vm165, %v167, %v163
  %v169 = vmul.f32 1.0, %v168
  %v170 = vtanh.pop %v144
  %172 = vrot.lane.b32.xlu0 %v70, 32
  %v173 = vpop.permute.xlu0 %172
  %v175 = vmul.f32 %v169, %v173
  %177 = vrot.lane.b32.xlu0 %v170, 32
  %v178 = vpop.permute.xlu0 %177
  %v180 = vmul.f32 %v169, %v178
  %182 = vrot.lane.b32.xlu0 %v180, 32
  %v183 = vpop.permute.xlu0 %182
  %v185 = vadd.f32 %v175, %v183
  %v186 = vtanh.pop %v185
  %188 = vrot.lane.b32.xlu0 %v186, 32
  %v189 = vpop.permute.xlu0 %188
  %v191 = vmul.f32 %v169, %v189
  %v192 = vxor.u32 %v150, 2147483648
  %v193 = vmul.f32 %v192, 1.442695
  %v194 = vpow.pop %v193
  %v195 = vadd.f32 %v194, 1.0
  %v196 = vrcp.pop %v195
  %v197 = vmul.f32 %v195, %v196
  %v198 = vsub.f32 1.0, %v197
  %v199 = vmul.f32 %v196, %v198
  %v200 = vadd.f32 %v196, %v199
  %vm201 = vweird.f32 %v195
  %vm202 = vweird.f32 %v196
  %vm203 = vmor %vm201, %vm202
  %v204 = vsel %vm203, %v196, %v200
  %v205 = vand.u32 2147483647, %v195
  %vm206 = vcmp.eq.f32.partialorder %v205, 8.507059e+37
  %v207 = vand.u32 %v195, 2147483648
  %v208 = vor.u32 1.1754944e-38, %v207
  %v209 = vsel %vm206, %v208, %v204
  %v210 = vmul.f32 1.0, %v209
  %v211 = vtanh.pop %v150
  %v212 = vrot.slane %v70, 2
  %v214 = vmul.f32 %v210, %v212
  %216 = vrot.lane.b32.xlu0 %v211, 32
  %v217 = vpop.permute.xlu0 %216
  %v219 = vmul.f32 %v210, %v217
  %221 = vrot.lane.b32.xlu0 %v219, 32
  %v222 = vpop.permute.xlu0 %221
  %v224 = vadd.f32 %v214, %v222
  %v225 = vtanh.pop %v224
  %227 = vrot.lane.b32.xlu0 %v225, 32
  %v228 = vpop.permute.xlu0 %227
  %v230 = vmul.f32 %v210, %v228
  %v231 = vpack.c.bf16 %v191, %v191
  %233 = vrot.lane.b32.xlu0 %v231, 64
  %v234 = vpop.permute.xlu0 %233
  %vm236 = vcmask 253952
  %237 = vst.msk [vmem:[%s3] sm:$0x1] %vm236, %v234
  %v238 = vpack.c.bf16 %v230, %v230
  %240 = vrot.lane.b32.xlu0 %v238, 64
  %v241 = vpop.permute.xlu0 %240
  %vm243 = vcmask 257027
  %244 = vst.msk [vmem:[%s49 + $0xc] sm:$0x8] %vm243, %v241
  %246 = vrot.lane.b32.xlu0 %v191, 64
  %v247 = vpop.permute.xlu0 %246
  %v250 = vrot.slane %v230, 6
  %251 = vrot.lane.b32.xlu0 %v250, 96
  %v252 = vpop.permute.xlu0 %251
  %vm254 = vcmask 261120
  %v255 = vsel %vm254, %v247, %v252
  %v256 = vpack.c.bf16 %v255, %v255
  %v258 = vsel %vm112, %v256, 0
  %260 = vmatpush.bf16.msra.mxu0 0
  %261 = vmatpush.bf16.msra.mxu0 0
  %262 = vmatpush.bf16.msra.mxu0 0
  %263 = vmatpush.bf16.msra.mxu0 0
  %264 = vmatpush.bf16.msra.mxu0 %v102
  %265 = vmatpush.bf16.msra.mxu0 %v100
  %266 = vmatpush.bf16.msra.mxu0 %v98
  %267 = vmatpush.bf16.msra.mxu0 %v96
  %268 = vmatmul.bf16.gmra.mxu0 %v258
  %v269 = vpop.f32.mrf.mxu0
  %v270 = vadd.f32 0.0, %v269
  %v271 = vpop.f32.mrf.mxu0
  %272 = vdwg.mxu0
  %273 = vmatpush.bf16.msra.mxu0 0
  %274 = vmatpush.bf16.msra.mxu0 0
  %275 = vmatpush.bf16.msra.mxu0 0
  %276 = vmatpush.bf16.msra.mxu0 0
  %277 = vmatpush.bf16.msra.mxu0 %v103
  %278 = vmatpush.bf16.msra.mxu0 %v101
  %279 = vmatpush.bf16.msra.mxu0 %v99
  %280 = vmatpush.bf16.msra.mxu0 %v97
  %281 = vmatmul.bf16.gmra.mxu0 %v258
  %v282 = vpop.f32.mrf.mxu0
  %v283 = vadd.f32 0.0, %v282
  %v284 = vpop.f32.mrf.mxu0
  %285 = vdwg.mxu0
  %v286 = vld [vmem:[%s0] sm:$0x2]
  %v287 = vunpack.c.l.bf16 %v286
  %v289 = vrot.slane %v270, 6
  %v291 = vadd.f32 %v287, %v289
  %v292 = vld [vmem:[%s41 + $0xc] sm:$0x4]
  %v293 = vunpack.c.l.bf16 %v292
  %v295 = vrot.slane %v283, 4
  %v297 = vadd.f32 %v293, %v295
  %v298 = vxor.u32 %v291, 2147483648
  %v299 = vmul.f32 %v298, 1.442695
  %v300 = vpow.pop %v299
  %v301 = vadd.f32 %v300, 1.0
  %v302 = vrcp.pop %v301
  %v303 = vmul.f32 %v301, %v302
  %v304 = vsub.f32 1.0, %v303
  %v305 = vmul.f32 %v302, %v304
  %v306 = vadd.f32 %v302, %v305
  %vm307 = vweird.f32 %v301
  %vm308 = vweird.f32 %v302
  %vm309 = vmor %vm307, %vm308
  %v310 = vsel %vm309, %v302, %v306
  %v311 = vand.u32 2147483647, %v301
  %vm312 = vcmp.eq.f32.partialorder %v311, 8.507059e+37
  %v313 = vand.u32 %v301, 2147483648
  %v314 = vor.u32 1.1754944e-38, %v313
  %v315 = vsel %vm312, %v314, %v310
  %v316 = vmul.f32 1.0, %v315
  %v317 = vtanh.pop %v291
  %v319 = vrot.slane %v185, 6
  %v321 = vmul.f32 %v316, %v319
  %323 = vrot.lane.b32.xlu0 %v317, 32
  %v324 = vpop.permute.xlu0 %323
  %v326 = vmul.f32 %v316, %v324
  %328 = vrot.lane.b32.xlu0 %v326, 32
  %v329 = vpop.permute.xlu0 %328
  %v331 = vadd.f32 %v321, %v329
  %v332 = vtanh.pop %v331
  %334 = vrot.lane.b32.xlu0 %v332, 32
  %v335 = vpop.permute.xlu0 %334
  %v337 = vmul.f32 %v316, %v335
  %v338 = vxor.u32 %v297, 2147483648
  %v339 = vmul.f32 %v338, 1.442695
  %v340 = vpow.pop %v339
  %v341 = vadd.f32 %v340, 1.0
  %v342 = vrcp.pop %v341
  %v343 = vmul.f32 %v341, %v342
  %v344 = vsub.f32 1.0, %v343
  %v345 = vmul.f32 %v342, %v344
  %v346 = vadd.f32 %v342, %v345
  %vm347 = vweird.f32 %v341
  %vm348 = vweird.f32 %v342
  %vm349 = vmor %vm347, %vm348
  %v350 = vsel %vm349, %v342, %v346
  %v351 = vand.u32 2147483647, %v341
  %vm352 = vcmp.eq.f32.partialorder %v351, 8.507059e+37
  %v353 = vand.u32 %v341, 2147483648
  %v354 = vor.u32 1.1754944e-38, %v353
  %v355 = vsel %vm352, %v354, %v350
  %v356 = vmul.f32 1.0, %v355
  %v357 = vtanh.pop %v297
  %v359 = vrot.slane %v224, 2
  %v361 = vmul.f32 %v356, %v359
  %363 = vrot.lane.b32.xlu0 %v357, 32
  %v364 = vpop.permute.xlu0 %363
  %v366 = vmul.f32 %v356, %v364
  %368 = vrot.lane.b32.xlu0 %v366, 32
  %v369 = vpop.permute.xlu0 %368
  %v371 = vadd.f32 %v361, %v369
  %v372 = vtanh.pop %v371
  %374 = vrot.lane.b32.xlu0 %v372, 32
  %v375 = vpop.permute.xlu0 %374
  %v377 = vmul.f32 %v356, %v375
  %v378 = vpack.c.bf16 %v337, %v337
  %380 = vrot.lane.b32.xlu0 %v378, 64
  %v381 = vpop.permute.xlu0 %380
  %vm383 = vcmask 254977
  %384 = vst.msk [vmem:[%s3] sm:$0x2] %vm383, %v381
  %v385 = vpack.c.bf16 %v377, %v377
  %387 = vrot.lane.b32.xlu0 %v385, 64
  %v388 = vpop.permute.xlu0 %387
  %vm390 = vcmask 256002
  %391 = vst.msk [vmem:[%s49 + $0xc] sm:$0x4] %vm390, %v388
  %393 = vrot.lane.b32.xlu0 %v337, 64
  %v394 = vpop.permute.xlu0 %393
  %v397 = vrot.slane %v377, 2
  %398 = vrot.lane.b32.xlu0 %v397, 96
  %v399 = vpop.permute.xlu0 %398
  %v401 = vsel %vm254, %v394, %v399
  %v402 = vpack.c.bf16 %v401, %v401
  %v404 = vrot.slane %v402, 1
  %v406 = vsel %vm112, %v404, 0
  %408 = vmatpush.bf16.msra.mxu0 0
  %409 = vmatpush.bf16.msra.mxu0 0
  %410 = vmatpush.bf16.msra.mxu0 0
  %411 = vmatpush.bf16.msra.mxu0 0
  %412 = vmatpush.bf16.msra.mxu0 %v102
  %413 = vmatpush.bf16.msra.mxu0 %v100
  %414 = vmatpush.bf16.msra.mxu0 %v98
  %415 = vmatpush.bf16.msra.mxu0 %v96
  %416 = vmatmul.bf16.gmra.mxu0 %v406
  %v417 = vpop.f32.mrf.mxu0
  %v418 = vadd.f32 0.0, %v417
  %v419 = vpop.f32.mrf.mxu0
  %420 = vdwg.mxu0
  %421 = vmatpush.bf16.msra.mxu0 0
  %422 = vmatpush.bf16.msra.mxu0 0
  %423 = vmatpush.bf16.msra.mxu0 0
  %424 = vmatpush.bf16.msra.mxu0 0
  %425 = vmatpush.bf16.msra.mxu0 %v103
  %426 = vmatpush.bf16.msra.mxu0 %v101
  %427 = vmatpush.bf16.msra.mxu0 %v99
  %428 = vmatpush.bf16.msra.mxu0 %v97
  %429 = vmatmul.bf16.gmra.mxu0 %v406
  %v430 = vpop.f32.mrf.mxu0
  %v431 = vadd.f32 0.0, %v430
  %v432 = vpop.f32.mrf.mxu0
  %433 = vdwg.mxu0
  %v434 = vld [vmem:[%s0] sm:$0x4]
  %v435 = vunpack.c.l.bf16 %v434
  %v437 = vrot.slane %v418, 4
  %v439 = vadd.f32 %v435, %v437
  %v440 = vld [vmem:[%s41 + $0xc] sm:$0x2]
  %v441 = vunpack.c.l.bf16 %v440
  %v443 = vrot.slane %v431, 6
  %v445 = vadd.f32 %v441, %v443
  %v446 = vxor.u32 %v439, 2147483648
  %v447 = vmul.f32 %v446, 1.442695
  %v448 = vpow.pop %v447
  %v449 = vadd.f32 %v448, 1.0
  %v450 = vrcp.pop %v449
  %v451 = vmul.f32 %v449, %v450
  %v452 = vsub.f32 1.0, %v451
  %v453 = vmul.f32 %v450, %v452
  %v454 = vadd.f32 %v450, %v453
  %vm455 = vweird.f32 %v449
  %vm456 = vweird.f32 %v450
  %vm457 = vmor %vm455, %vm456
  %v458 = vsel %vm457, %v450, %v454
  %v459 = vand.u32 2147483647, %v449
  %vm460 = vcmp.eq.f32.partialorder %v459, 8.507059e+37
  %v461 = vand.u32 %v449, 2147483648
  %v462 = vor.u32 1.1754944e-38, %v461
  %v463 = vsel %vm460, %v462, %v458
  %v464 = vmul.f32 1.0, %v463
  %v465 = vtanh.pop %v439
  %v467 = vrot.slane %v331, 6
  %v469 = vmul.f32 %v464, %v467
  %471 = vrot.lane.b32.xlu0 %v465, 32
  %v472 = vpop.permute.xlu0 %471
  %v474 = vmul.f32 %v464, %v472
  %476 = vrot.lane.b32.xlu0 %v474, 32
  %v477 = vpop.permute.xlu0 %476
  %v479 = vadd.f32 %v469, %v477
  %v480 = vtanh.pop %v479
  %482 = vrot.lane.b32.xlu0 %v480, 32
  %v483 = vpop.permute.xlu0 %482
  %v485 = vmul.f32 %v464, %v483
  %v486 = vxor.u32 %v445, 2147483648
  %v487 = vmul.f32 %v486, 1.442695
  %v488 = vpow.pop %v487
  %v489 = vadd.f32 %v488, 1.0
  %v490 = vrcp.pop %v489
  %v491 = vmul.f32 %v489, %v490
  %v492 = vsub.f32 1.0, %v491
  %v493 = vmul.f32 %v490, %v492
  %v494 = vadd.f32 %v490, %v493
  %vm495 = vweird.f32 %v489
  %vm496 = vweird.f32 %v490
  %vm497 = vmor %vm495, %vm496
  %v498 = vsel %vm497, %v490, %v494
  %v499 = vand.u32 2147483647, %v489
  %vm500 = vcmp.eq.f32.partialorder %v499, 8.507059e+37
  %v501 = vand.u32 %v489, 2147483648
  %v502 = vor.u32 1.1754944e-38, %v501
  %v503 = vsel %vm500, %v502, %v498
  %v504 = vmul.f32 1.0, %v503
  %v505 = vtanh.pop %v445
  %v507 = vrot.slane %v371, 2
  %v509 = vmul.f32 %v504, %v507
  %511 = vrot.lane.b32.xlu0 %v505, 32
  %v512 = vpop.permute.xlu0 %511
  %v514 = vmul.f32 %v504, %v512
  %516 = vrot.lane.b32.xlu0 %v514, 32
  %v517 = vpop.permute.xlu0 %516
  %v519 = vadd.f32 %v509, %v517
  %v520 = vtanh.pop %v519
  %522 = vrot.lane.b32.xlu0 %v520, 32
  %v523 = vpop.permute.xlu0 %522
  %v525 = vmul.f32 %v504, %v523
  %v526 = vpack.c.bf16 %v485, %v485
  %528 = vrot.lane.b32.xlu0 %v526, 64
  %v529 = vpop.permute.xlu0 %528
  %531 = vst.msk [vmem:[%s3] sm:$0x4] %vm390, %v529
  %v532 = vpack.c.bf16 %v525, %v525
  %534 = vrot.lane.b32.xlu0 %v532, 64
  %v535 = vpop.permute.xlu0 %534
  %537 = vst.msk [vmem:[%s49 + $0xc] sm:$0x2] %vm383, %v535
  %539 = vrot.lane.b32.xlu0 %v485, 64
  %v540 = vpop.permute.xlu0 %539
  %v543 = vrot.slane %v525, 6
  %544 = vrot.lane.b32.xlu0 %v543, 96
  %v545 = vpop.permute.xlu0 %544
  %v547 = vsel %vm254, %v540, %v545
  %v548 = vpack.c.bf16 %v547, %v547
  %v550 = vrot.slane %v548, 2
  %v552 = vsel %vm112, %v550, 0
  %554 = vmatpush.bf16.msra.mxu0 0
  %555 = vmatpush.bf16.msra.mxu0 0
  %556 = vmatpush.bf16.msra.mxu0 0
  %557 = vmatpush.bf16.msra.mxu0 0
  %558 = vmatpush.bf16.msra.mxu0 %v102
  %559 = vmatpush.bf16.msra.mxu0 %v100
  %560 = vmatpush.bf16.msra.mxu0 %v98
  %561 = vmatpush.bf16.msra.mxu0 %v96
  %562 = vmatmul.bf16.gmra.mxu0 %v552
  %v563 = vpop.f32.mrf.mxu0
  %v564 = vadd.f32 0.0, %v563
  %v565 = vpop.f32.mrf.mxu0
  %566 = vdwg.mxu0
  %567 = vmatpush.bf16.msra.mxu0 0
  %568 = vmatpush.bf16.msra.mxu0 0
  %569 = vmatpush.bf16.msra.mxu0 0
  %570 = vmatpush.bf16.msra.mxu0 0
  %571 = vmatpush.bf16.msra.mxu0 %v103
  %572 = vmatpush.bf16.msra.mxu0 %v101
  %573 = vmatpush.bf16.msra.mxu0 %v99
  %574 = vmatpush.bf16.msra.mxu0 %v97
  %575 = vmatmul.bf16.gmra.mxu0 %v552
  %v576 = vpop.f32.mrf.mxu0
  %v577 = vadd.f32 0.0, %v576
  %v578 = vpop.f32.mrf.mxu0
  %579 = vdwg.mxu0
  %v580 = vld [vmem:[%s0] sm:$0x8]
  %v581 = vunpack.c.l.bf16 %v580
  %v583 = vrot.slane %v564, 2
  %v585 = vadd.f32 %v581, %v583
  %v586 = vld [vmem:[%s41 + $0xc] sm:$0x1]
  %v587 = vunpack.c.l.bf16 %v586
  %v588 = vadd.f32 %v587, %v577
  %v589 = vxor.u32 %v585, 2147483648
  %v590 = vmul.f32 %v589, 1.442695
  %v591 = vpow.pop %v590
  %v592 = vadd.f32 %v591, 1.0
  %v593 = vrcp.pop %v592
  %v594 = vmul.f32 %v592, %v593
  %v595 = vsub.f32 1.0, %v594
  %v596 = vmul.f32 %v593, %v595
  %v597 = vadd.f32 %v593, %v596
  %vm598 = vweird.f32 %v592
  %vm599 = vweird.f32 %v593
  %vm600 = vmor %vm598, %vm599
  %v601 = vsel %vm600, %v593, %v597
  %v602 = vand.u32 2147483647, %v592
  %vm603 = vcmp.eq.f32.partialorder %v602, 8.507059e+37
  %v604 = vand.u32 %v592, 2147483648
  %v605 = vor.u32 1.1754944e-38, %v604
  %v606 = vsel %vm603, %v605, %v601
  %v607 = vmul.f32 1.0, %v606
  %v608 = vtanh.pop %v585
  %v610 = vrot.slane %v479, 6
  %v612 = vmul.f32 %v607, %v610
  %614 = vrot.lane.b32.xlu0 %v608, 32
  %v615 = vpop.permute.xlu0 %614
  %v617 = vmul.f32 %v607, %v615
  %619 = vrot.lane.b32.xlu0 %v617, 32
  %v620 = vpop.permute.xlu0 %619
  %v622 = vadd.f32 %v612, %v620
  %v623 = vtanh.pop %v622
  %625 = vrot.lane.b32.xlu0 %v623, 32
  %v626 = vpop.permute.xlu0 %625
  %v628 = vmul.f32 %v607, %v626
  %v629 = vxor.u32 %v588, 2147483648
  %v630 = vmul.f32 %v629, 1.442695
  %v631 = vpow.pop %v630
  %v632 = vadd.f32 %v631, 1.0
  %v633 = vrcp.pop %v632
  %v634 = vmul.f32 %v632, %v633
  %v635 = vsub.f32 1.0, %v634
  %v636 = vmul.f32 %v633, %v635
  %v637 = vadd.f32 %v633, %v636
  %vm638 = vweird.f32 %v632
  %vm639 = vweird.f32 %v633
  %vm640 = vmor %vm638, %vm639
  %v641 = vsel %vm640, %v633, %v637
  %v642 = vand.u32 2147483647, %v632
  %vm643 = vcmp.eq.f32.partialorder %v642, 8.507059e+37
  %v644 = vand.u32 %v632, 2147483648
  %v645 = vor.u32 1.1754944e-38, %v644
  %v646 = vsel %vm643, %v645, %v641
  %v647 = vmul.f32 1.0, %v646
  %v648 = vtanh.pop %v588
  %v650 = vrot.slane %v519, 2
  %v652 = vmul.f32 %v647, %v650
  %654 = vrot.lane.b32.xlu0 %v648, 32
  %v655 = vpop.permute.xlu0 %654
  %v657 = vmul.f32 %v647, %v655
  %659 = vrot.lane.b32.xlu0 %v657, 32
  %v660 = vpop.permute.xlu0 %659
  %v662 = vadd.f32 %v652, %v660
  %v663 = vtanh.pop %v662
  %665 = vrot.lane.b32.xlu0 %v663, 32
  %v666 = vpop.permute.xlu0 %665
  %v668 = vmul.f32 %v647, %v666
  %v669 = vpack.c.bf16 %v628, %v628
  %671 = vrot.lane.b32.xlu0 %v669, 64
  %v672 = vpop.permute.xlu0 %671
  %674 = vst.msk [vmem:[%s3] sm:$0x8] %vm243, %v672
  %v675 = vpack.c.bf16 %v668, %v668
  %677 = vrot.lane.b32.xlu0 %v675, 64
  %v678 = vpop.permute.xlu0 %677
  %680 = vst.msk [vmem:[%s49 + $0xc] sm:$0x1] %vm236, %v678
  %682 = vrot.lane.b32.xlu0 %v628, 64
  %v683 = vpop.permute.xlu0 %682
  %v686 = vrot.slane %v668, 2
  %687 = vrot.lane.b32.xlu0 %v686, 96
  %v688 = vpop.permute.xlu0 %687
  %v690 = vsel %vm254, %v683, %v688
  %v691 = vpack.c.bf16 %v690, %v690
  %v693 = vrot.slane %v691, 3
  %v695 = vsel %vm112, %v693, 0
  %697 = vmatpush.bf16.msra.mxu0 0
  %698 = vmatpush.bf16.msra.mxu0 0
  %699 = vmatpush.bf16.msra.mxu0 0
  %700 = vmatpush.bf16.msra.mxu0 0
  %701 = vmatpush.bf16.msra.mxu0 %v102
  %702 = vmatpush.bf16.msra.mxu0 %v100
  %703 = vmatpush.bf16.msra.mxu0 %v98
  %704 = vmatpush.bf16.msra.mxu0 %v96
  %705 = vmatmul.bf16.gmra.mxu0 %v695
  %v706 = vpop.f32.mrf.mxu0
  %v707 = vadd.f32 0.0, %v706
  %v708 = vpop.f32.mrf.mxu0
  %709 = vdwg.mxu0
  %710 = vmatpush.bf16.msra.mxu0 0
  %711 = vmatpush.bf16.msra.mxu0 0
  %712 = vmatpush.bf16.msra.mxu0 0
  %713 = vmatpush.bf16.msra.mxu0 0
  %714 = vmatpush.bf16.msra.mxu0 %v103
  %715 = vmatpush.bf16.msra.mxu0 %v101
  %716 = vmatpush.bf16.msra.mxu0 %v99
  %717 = vmatpush.bf16.msra.mxu0 %v97
  %718 = vmatmul.bf16.gmra.mxu0 %v695
  %v719 = vpop.f32.mrf.mxu0
  %v720 = vadd.f32 0.0, %v719
  %v721 = vpop.f32.mrf.mxu0
  %722 = vdwg.mxu0
  %v723 = vld [vmem:[%s0 + $0x4] sm:$0x1]
  %v724 = vunpack.c.l.bf16 %v723
  %v725 = vadd.f32 %v724, %v707
  %v726 = vld [vmem:[%s41 + $0x8] sm:$0x8]
  %v727 = vunpack.c.l.bf16 %v726
  %v729 = vrot.slane %v720, 2
  %v731 = vadd.f32 %v727, %v729
  %v732 = vxor.u32 %v725, 2147483648
  %v733 = vmul.f32 %v732, 1.442695
  %v734 = vpow.pop %v733
  %v735 = vadd.f32 %v734, 1.0
  %v736 = vrcp.pop %v735
  %v737 = vmul.f32 %v735, %v736
  %v738 = vsub.f32 1.0, %v737
  %v739 = vmul.f32 %v736, %v738
  %v740 = vadd.f32 %v736, %v739
  %vm741 = vweird.f32 %v735
  %vm742 = vweird.f32 %v736
  %vm743 = vmor %vm741, %vm742
  %v744 = vsel %vm743, %v736, %v740
  %v745 = vand.u32 2147483647, %v735
  %vm746 = vcmp.eq.f32.partialorder %v745, 8.507059e+37
  %v747 = vand.u32 %v735, 2147483648
  %v748 = vor.u32 1.1754944e-38, %v747
  %v749 = vsel %vm746, %v748, %v744
  %v750 = vmul.f32 1.0, %v749
  %v751 = vtanh.pop %v725
  %v753 = vrot.slane %v622, 6
  %v755 = vmul.f32 %v750, %v753
  %757 = vrot.lane.b32.xlu0 %v751, 32
  %v758 = vpop.permute.xlu0 %757
  %v760 = vmul.f32 %v750, %v758
  %762 = vrot.lane.b32.xlu0 %v760, 32
  %v763 = vpop.permute.xlu0 %762
  %v765 = vadd.f32 %v755, %v763
  %v766 = vtanh.pop %v765
  %768 = vrot.lane.b32.xlu0 %v766, 32
  %v769 = vpop.permute.xlu0 %768
  %v771 = vmul.f32 %v750, %v769
  %v772 = vxor.u32 %v731, 2147483648
  %v773 = vmul.f32 %v772, 1.442695
  %v774 = vpow.pop %v773
  %v775 = vadd.f32 %v774, 1.0
  %v776 = vrcp.pop %v775
  %v777 = vmul.f32 %v775, %v776
  %v778 = vsub.f32 1.0, %v777
  %v779 = vmul.f32 %v776, %v778
  %v780 = vadd.f32 %v776, %v779
  %vm781 = vweird.f32 %v775
  %vm782 = vweird.f32 %v776
  %vm783 = vmor %vm781, %vm782
  %v784 = vsel %vm783, %v776, %v780
  %v785 = vand.u32 2147483647, %v775
  %vm786 = vcmp.eq.f32.partialorder %v785, 8.507059e+37
  %v787 = vand.u32 %v775, 2147483648
  %v788 = vor.u32 1.1754944e-38, %v787
  %v789 = vsel %vm786, %v788, %v784
  %v790 = vmul.f32 1.0, %v789
  %v791 = vtanh.pop %v731
  %v793 = vrot.slane %v662, 2
  %v795 = vmul.f32 %v790, %v793
  %797 = vrot.lane.b32.xlu0 %v791, 32
  %v798 = vpop.permute.xlu0 %797
  %v800 = vmul.f32 %v790, %v798
  %802 = vrot.lane.b32.xlu0 %v800, 32
  %v803 = vpop.permute.xlu0 %802
  %v805 = vadd.f32 %v795, %v803
  %v806 = vtanh.pop %v805
  %808 = vrot.lane.b32.xlu0 %v806, 32
  %v809 = vpop.permute.xlu0 %808
  %v811 = vmul.f32 %v790, %v809
  %v812 = vpack.c.bf16 %v771, %v771
  %814 = vrot.lane.b32.xlu0 %v812, 64
  %v815 = vpop.permute.xlu0 %814
  %817 = vst.msk [vmem:[%s3 + $0x4] sm:$0x1] %vm236, %v815
  %v818 = vpack.c.bf16 %v811, %v811
  %820 = vrot.lane.b32.xlu0 %v818, 64
  %v821 = vpop.permute.xlu0 %820
  %823 = vst.msk [vmem:[%s49 + $0x8] sm:$0x8] %vm243, %v821
  %825 = vrot.lane.b32.xlu0 %v771, 64
  %v826 = vpop.permute.xlu0 %825
  %v829 = vrot.slane %v811, 6
  %830 = vrot.lane.b32.xlu0 %v829, 96
  %v831 = vpop.permute.xlu0 %830
  %v833 = vsel %vm254, %v826, %v831
  %v834 = vpack.c.bf16 %v833, %v833
  %v836 = vsel %vm112, %v834, 0
  %838 = vmatpush.bf16.msra.mxu0 0
  %839 = vmatpush.bf16.msra.mxu0 0
  %840 = vmatpush.bf16.msra.mxu0 0
  %841 = vmatpush.bf16.msra.mxu0 0
  %842 = vmatpush.bf16.msra.mxu0 %v102
  %843 = vmatpush.bf16.msra.mxu0 %v100
  %844 = vmatpush.bf16.msra.mxu0 %v98
  %845 = vmatpush.bf16.msra.mxu0 %v96
  %846 = vmatmul.bf16.gmra.mxu0 %v836
  %v847 = vpop.f32.mrf.mxu0
  %v848 = vadd.f32 0.0, %v847
  %v849 = vpop.f32.mrf.mxu0
  %850 = vdwg.mxu0
  %851 = vmatpush.bf16.msra.mxu0 0
  %852 = vmatpush.bf16.msra.mxu0 0
  %853 = vmatpush.bf16.msra.mxu0 0
  %854 = vmatpush.bf16.msra.mxu0 0
  %855 = vmatpush.bf16.msra.mxu0 %v103
  %856 = vmatpush.bf16.msra.mxu0 %v101
  %857 = vmatpush.bf16.msra.mxu0 %v99
  %858 = vmatpush.bf16.msra.mxu0 %v97
  %859 = vmatmul.bf16.gmra.mxu0 %v836
  %v860 = vpop.f32.mrf.mxu0
  %v861 = vadd.f32 0.0, %v860
  %v862 = vpop.f32.mrf.mxu0
  %863 = vdwg.mxu0
  %v864 = vld [vmem:[%s0 + $0x4] sm:$0x2]
  %v865 = vunpack.c.l.bf16 %v864
  %v867 = vrot.slane %v848, 6
  %v869 = vadd.f32 %v865, %v867
  %v870 = vld [vmem:[%s41 + $0x8] sm:$0x4]
  %v871 = vunpack.c.l.bf16 %v870
  %v873 = vrot.slane %v861, 4
  %v875 = vadd.f32 %v871, %v873
  %v876 = vxor.u32 %v869, 2147483648
  %v877 = vmul.f32 %v876, 1.442695
  %v878 = vpow.pop %v877
  %v879 = vadd.f32 %v878, 1.0
  %v880 = vrcp.pop %v879
  %v881 = vmul.f32 %v879, %v880
  %v882 = vsub.f32 1.0, %v881
  %v883 = vmul.f32 %v880, %v882
  %v884 = vadd.f32 %v880, %v883
  %vm885 = vweird.f32 %v879
  %vm886 = vweird.f32 %v880
  %vm887 = vmor %vm885, %vm886
  %v888 = vsel %vm887, %v880, %v884
  %v889 = vand.u32 2147483647, %v879
  %vm890 = vcmp.eq.f32.partialorder %v889, 8.507059e+37
  %v891 = vand.u32 %v879, 2147483648
  %v892 = vor.u32 1.1754944e-38, %v891
  %v893 = vsel %vm890, %v892, %v888
  %v894 = vmul.f32 1.0, %v893
  %v895 = vtanh.pop %v869
  %v897 = vrot.slane %v765, 6
  %v899 = vmul.f32 %v894, %v897
  %901 = vrot.lane.b32.xlu0 %v895, 32
  %v902 = vpop.permute.xlu0 %901
  %v904 = vmul.f32 %v894, %v902
  %906 = vrot.lane.b32.xlu0 %v904, 32
  %v907 = vpop.permute.xlu0 %906
  %v909 = vadd.f32 %v899, %v907
  %v910 = vtanh.pop %v909
  %912 = vrot.lane.b32.xlu0 %v910, 32
  %v913 = vpop.permute.xlu0 %912
  %v915 = vmul.f32 %v894, %v913
  %v916 = vxor.u32 %v875, 2147483648
  %v917 = vmul.f32 %v916, 1.442695
  %v918 = vpow.pop %v917
  %v919 = vadd.f32 %v918, 1.0
  %v920 = vrcp.pop %v919
  %v921 = vmul.f32 %v919, %v920
  %v922 = vsub.f32 1.0, %v921
  %v923 = vmul.f32 %v920, %v922
  %v924 = vadd.f32 %v920, %v923
  %vm925 = vweird.f32 %v919
  %vm926 = vweird.f32 %v920
  %vm927 = vmor %vm925, %vm926
  %v928 = vsel %vm927, %v920, %v924
  %v929 = vand.u32 2147483647, %v919
  %vm930 = vcmp.eq.f32.partialorder %v929, 8.507059e+37
  %v931 = vand.u32 %v919, 2147483648
  %v932 = vor.u32 1.1754944e-38, %v931
  %v933 = vsel %vm930, %v932, %v928
  %v934 = vmul.f32 1.0, %v933
  %v935 = vtanh.pop %v875
  %v937 = vrot.slane %v805, 2
  %v939 = vmul.f32 %v934, %v937
  %941 = vrot.lane.b32.xlu0 %v935, 32
  %v942 = vpop.permute.xlu0 %941
  %v944 = vmul.f32 %v934, %v942
  %946 = vrot.lane.b32.xlu0 %v944, 32
  %v947 = vpop.permute.xlu0 %946
  %v949 = vadd.f32 %v939, %v947
  %v950 = vtanh.pop %v949
  %952 = vrot.lane.b32.xlu0 %v950, 32
  %v953 = vpop.permute.xlu0 %952
  %v955 = vmul.f32 %v934, %v953
  %v956 = vpack.c.bf16 %v915, %v915
  %958 = vrot.lane.b32.xlu0 %v956, 64
  %v959 = vpop.permute.xlu0 %958
  %961 = vst.msk [vmem:[%s3 + $0x4] sm:$0x2] %vm383, %v959
  %v962 = vpack.c.bf16 %v955, %v955
  %964 = vrot.lane.b32.xlu0 %v962, 64
  %v965 = vpop.permute.xlu0 %964
  %967 = vst.msk [vmem:[%s49 + $0x8] sm:$0x4] %vm390, %v965
  %969 = vrot.lane.b32.xlu0 %v915, 64
  %v970 = vpop.permute.xlu0 %969
  %v973 = vrot.slane %v955, 2
  %974 = vrot.lane.b32.xlu0 %v973, 96
  %v975 = vpop.permute.xlu0 %974
  %v977 = vsel %vm254, %v970, %v975
  %v978 = vpack.c.bf16 %v977, %v977
  %v980 = vrot.slane %v978, 1
  %v982 = vsel %vm112, %v980, 0
  %984 = vmatpush.bf16.msra.mxu0 0
  %985 = vmatpush.bf16.msra.mxu0 0
  %986 = vmatpush.bf16.msra.mxu0 0
  %987 = vmatpush.bf16.msra.mxu0 0
  %988 = vmatpush.bf16.msra.mxu0 %v102
  %989 = vmatpush.bf16.msra.mxu0 %v100
  %990 = vmatpush.bf16.msra.mxu0 %v98
  %991 = vmatpush.bf16.msra.mxu0 %v96
  %992 = vmatmul.bf16.gmra.mxu0 %v982
  %v993 = vpop.f32.mrf.mxu0
  %v994 = vadd.f32 0.0, %v993
  %v995 = vpop.f32.mrf.mxu0
  %996 = vdwg.mxu0
  %997 = vmatpush.bf16.msra.mxu0 0
  %998 = vmatpush.bf16.msra.mxu0 0
  %999 = vmatpush.bf16.msra.mxu0 0
  %1000 = vmatpush.bf16.msra.mxu0 0
  %1001 = vmatpush.bf16.msra.mxu0 %v103
  %1002 = vmatpush.bf16.msra.mxu0 %v101
  %1003 = vmatpush.bf16.msra.mxu0 %v99
  %1004 = vmatpush.bf16.msra.mxu0 %v97
  %1005 = vmatmul.bf16.gmra.mxu0 %v982
  %v1006 = vpop.f32.mrf.mxu0
  %v1007 = vadd.f32 0.0, %v1006
  %v1008 = vpop.f32.mrf.mxu0
  %1009 = vdwg.mxu0
  %v1010 = vld [vmem:[%s0 + $0x4] sm:$0x4]
  %v1011 = vunpack.c.l.bf16 %v1010
  %v1013 = vrot.slane %v994, 4
  %v1015 = vadd.f32 %v1011, %v1013
  %v1016 = vld [vmem:[%s41 + $0x8] sm:$0x2]
  %v1017 = vunpack.c.l.bf16 %v1016
  %v1019 = vrot.slane %v1007, 6
  %v1021 = vadd.f32 %v1017, %v1019
  %v1022 = vxor.u32 %v1015, 2147483648
  %v1023 = vmul.f32 %v1022, 1.442695
  %v1024 = vpow.pop %v1023
  %v1025 = vadd.f32 %v1024, 1.0
  %v1026 = vrcp.pop %v1025
  %v1027 = vmul.f32 %v1025, %v1026
  %v1028 = vsub.f32 1.0, %v1027
  %v1029 = vmul.f32 %v1026, %v1028
  %v1030 = vadd.f32 %v1026, %v1029
  %vm1031 = vweird.f32 %v1025
  %vm1032 = vweird.f32 %v1026
  %vm1033 = vmor %vm1031, %vm1032
  %v1034 = vsel %vm1033, %v1026, %v1030
  %v1035 = vand.u32 2147483647, %v1025
  %vm1036 = vcmp.eq.f32.partialorder %v1035, 8.507059e+37
  %v1037 = vand.u32 %v1025, 2147483648
  %v1038 = vor.u32 1.1754944e-38, %v1037
  %v1039 = vsel %vm1036, %v1038, %v1034
  %v1040 = vmul.f32 1.0, %v1039
  %v1041 = vtanh.pop %v1015
  %v1043 = vrot.slane %v909, 6
  %v1045 = vmul.f32 %v1040, %v1043
  %1047 = vrot.lane.b32.xlu0 %v1041, 32
  %v1048 = vpop.permute.xlu0 %1047
  %v1050 = vmul.f32 %v1040, %v1048
  %1052 = vrot.lane.b32.xlu0 %v1050, 32
  %v1053 = vpop.permute.xlu0 %1052
  %v1055 = vadd.f32 %v1045, %v1053
  %v1056 = vtanh.pop %v1055
  %1058 = vrot.lane.b32.xlu0 %v1056, 32
  %v1059 = vpop.permute.xlu0 %1058
  %v1061 = vmul.f32 %v1040, %v1059
  %v1062 = vxor.u32 %v1021, 2147483648
  %v1063 = vmul.f32 %v1062, 1.442695
  %v1064 = vpow.pop %v1063
  %v1065 = vadd.f32 %v1064, 1.0
  %v1066 = vrcp.pop %v1065
  %v1067 = vmul.f32 %v1065, %v1066
  %v1068 = vsub.f32 1.0, %v1067
  %v1069 = vmul.f32 %v1066, %v1068
  %v1070 = vadd.f32 %v1066, %v1069
  %vm1071 = vweird.f32 %v1065
  %vm1072 = vweird.f32 %v1066
  %vm1073 = vmor %vm1071, %vm1072
  %v1074 = vsel %vm1073, %v1066, %v1070
  %v1075 = vand.u32 2147483647, %v1065
  %vm1076 = vcmp.eq.f32.partialorder %v1075, 8.507059e+37
  %v1077 = vand.u32 %v1065, 2147483648
  %v1078 = vor.u32 1.1754944e-38, %v1077
  %v1079 = vsel %vm1076, %v1078, %v1074
  %v1080 = vmul.f32 1.0, %v1079
  %v1081 = vtanh.pop %v1021
  %v1083 = vrot.slane %v949, 2
  %v1085 = vmul.f32 %v1080, %v1083
  %1087 = vrot.lane.b32.xlu0 %v1081, 32
  %v1088 = vpop.permute.xlu0 %1087
  %v1090 = vmul.f32 %v1080, %v1088
  %1092 = vrot.lane.b32.xlu0 %v1090, 32
  %v1093 = vpop.permute.xlu0 %1092
  %v1095 = vadd.f32 %v1085, %v1093
  %v1096 = vtanh.pop %v1095
  %1098 = vrot.lane.b32.xlu0 %v1096, 32
  %v1099 = vpop.permute.xlu0 %1098
  %v1101 = vmul.f32 %v1080, %v1099
  %v1102 = vpack.c.bf16 %v1061, %v1061
  %1104 = vrot.lane.b32.xlu0 %v1102, 64
  %v1105 = vpop.permute.xlu0 %1104
  %1107 = vst.msk [vmem:[%s3 + $0x4] sm:$0x4] %vm390, %v1105
  %v1108 = vpack.c.bf16 %v1101, %v1101
  %1110 = vrot.lane.b32.xlu0 %v1108, 64
  %v1111 = vpop.permute.xlu0 %1110
  %1113 = vst.msk [vmem:[%s49 + $0x8] sm:$0x2] %vm383, %v1111
  %1115 = vrot.lane.b32.xlu0 %v1061, 64
  %v1116 = vpop.permute.xlu0 %1115
  %v1119 = vrot.slane %v1101, 6
  %1120 = vrot.lane.b32.xlu0 %v1119, 96
  %v1121 = vpop.permute.xlu0 %1120
  %v1123 = vsel %vm254, %v1116, %v1121
  %v1124 = vpack.c.bf16 %v1123, %v1123
  %v1126 = vrot.slane %v1124, 2
  %v1128 = vsel %vm112, %v1126, 0
  %1130 = vmatpush.bf16.msra.mxu0 0
  %1131 = vmatpush.bf16.msra.mxu0 0
  %1132 = vmatpush.bf16.msra.mxu0 0
  %1133 = vmatpush.bf16.msra.mxu0 0
  %1134 = vmatpush.bf16.msra.mxu0 %v102
  %1135 = vmatpush.bf16.msra.mxu0 %v100
  %1136 = vmatpush.bf16.msra.mxu0 %v98
  %1137 = vmatpush.bf16.msra.mxu0 %v96
  %1138 = vmatmul.bf16.gmra.mxu0 %v1128
  %v1139 = vpop.f32.mrf.mxu0
  %v1140 = vadd.f32 0.0, %v1139
  %v1141 = vpop.f32.mrf.mxu0
  %1142 = vdwg.mxu0
  %1143 = vmatpush.bf16.msra.mxu0 0
  %1144 = vmatpush.bf16.msra.mxu0 0
  %1145 = vmatpush.bf16.msra.mxu0 0
  %1146 = vmatpush.bf16.msra.mxu0 0
  %1147 = vmatpush.bf16.msra.mxu0 %v103
  %1148 = vmatpush.bf16.msra.mxu0 %v101
  %1149 = vmatpush.bf16.msra.mxu0 %v99
  %1150 = vmatpush.bf16.msra.mxu0 %v97
  %1151 = vmatmul.bf16.gmra.mxu0 %v1128
  %v1152 = vpop.f32.mrf.mxu0
  %v1153 = vadd.f32 0.0, %v1152
  %v1154 = vpop.f32.mrf.mxu0
  %1155 = vdwg.mxu0
  %v1156 = vld [vmem:[%s0 + $0x4] sm:$0x8]
  %v1157 = vunpack.c.l.bf16 %v1156
  %v1159 = vrot.slane %v1140, 2
  %v1161 = vadd.f32 %v1157, %v1159
  %v1162 = vld [vmem:[%s41 + $0x8] sm:$0x1]
  %v1163 = vunpack.c.l.bf16 %v1162
  %v1164 = vadd.f32 %v1163, %v1153
  %v1165 = vxor.u32 %v1161, 2147483648
  %v1166 = vmul.f32 %v1165, 1.442695
  %v1167 = vpow.pop %v1166
  %v1168 = vadd.f32 %v1167, 1.0
  %v1169 = vrcp.pop %v1168
  %v1170 = vmul.f32 %v1168, %v1169
  %v1171 = vsub.f32 1.0, %v1170
  %v1172 = vmul.f32 %v1169, %v1171
  %v1173 = vadd.f32 %v1169, %v1172
  %vm1174 = vweird.f32 %v1168
  %vm1175 = vweird.f32 %v1169
  %vm1176 = vmor %vm1174, %vm1175
  %v1177 = vsel %vm1176, %v1169, %v1173
  %v1178 = vand.u32 2147483647, %v1168
  %vm1179 = vcmp.eq.f32.partialorder %v1178, 8.507059e+37
  %v1180 = vand.u32 %v1168, 2147483648
  %v1181 = vor.u32 1.1754944e-38, %v1180
  %v1182 = vsel %vm1179, %v1181, %v1177
  %v1183 = vmul.f32 1.0, %v1182
  %v1184 = vtanh.pop %v1161
  %v1186 = vrot.slane %v1055, 6
  %v1188 = vmul.f32 %v1183, %v1186
  %1190 = vrot.lane.b32.xlu0 %v1184, 32
  %v1191 = vpop.permute.xlu0 %1190
  %v1193 = vmul.f32 %v1183, %v1191
  %1195 = vrot.lane.b32.xlu0 %v1193, 32
  %v1196 = vpop.permute.xlu0 %1195
  %v1198 = vadd.f32 %v1188, %v1196
  %v1199 = vtanh.pop %v1198
  %1201 = vrot.lane.b32.xlu0 %v1199, 32
  %v1202 = vpop.permute.xlu0 %1201
  %v1204 = vmul.f32 %v1183, %v1202
  %v1205 = vxor.u32 %v1164, 2147483648
  %v1206 = vmul.f32 %v1205, 1.442695
  %v1207 = vpow.pop %v1206
  %v1208 = vadd.f32 %v1207, 1.0
  %v1209 = vrcp.pop %v1208
  %v1210 = vmul.f32 %v1208, %v1209
  %v1211 = vsub.f32 1.0, %v1210
  %v1212 = vmul.f32 %v1209, %v1211
  %v1213 = vadd.f32 %v1209, %v1212
  %vm1214 = vweird.f32 %v1208
  %vm1215 = vweird.f32 %v1209
  %vm1216 = vmor %vm1214, %vm1215
  %v1217 = vsel %vm1216, %v1209, %v1213
  %v1218 = vand.u32 2147483647, %v1208
  %vm1219 = vcmp.eq.f32.partialorder %v1218, 8.507059e+37
  %v1220 = vand.u32 %v1208, 2147483648
  %v1221 = vor.u32 1.1754944e-38, %v1220
  %v1222 = vsel %vm1219, %v1221, %v1217
  %v1223 = vmul.f32 1.0, %v1222
  %v1224 = vtanh.pop %v1164
  %v1226 = vrot.slane %v1095, 2
  %v1228 = vmul.f32 %v1223, %v1226
  %1230 = vrot.lane.b32.xlu0 %v1224, 32
  %v1231 = vpop.permute.xlu0 %1230
  %v1233 = vmul.f32 %v1223, %v1231
  %1235 = vrot.lane.b32.xlu0 %v1233, 32
  %v1236 = vpop.permute.xlu0 %1235
  %v1238 = vadd.f32 %v1228, %v1236
  %v1239 = vtanh.pop %v1238
  %1241 = vrot.lane.b32.xlu0 %v1239, 32
  %v1242 = vpop.permute.xlu0 %1241
  %v1244 = vmul.f32 %v1223, %v1242
  %v1245 = vpack.c.bf16 %v1204, %v1204
  %1247 = vrot.lane.b32.xlu0 %v1245, 64
  %v1248 = vpop.permute.xlu0 %1247
  %1250 = vst.msk [vmem:[%s3 + $0x4] sm:$0x8] %vm243, %v1248
  %v1251 = vpack.c.bf16 %v1244, %v1244
  %1253 = vrot.lane.b32.xlu0 %v1251, 64
  %v1254 = vpop.permute.xlu0 %1253
  %1256 = vst.msk [vmem:[%s49 + $0x8] sm:$0x1] %vm236, %v1254
  %1258 = vrot.lane.b32.xlu0 %v1204, 64
  %v1259 = vpop.permute.xlu0 %1258
  %v1262 = vrot.slane %v1244, 2
  %1263 = vrot.lane.b32.xlu0 %v1262, 96
  %v1264 = vpop.permute.xlu0 %1263
  %v1266 = vsel %vm254, %v1259, %v1264
  %v1267 = vpack.c.bf16 %v1266, %v1266
  %v1269 = vrot.slane %v1267, 3
  %v1271 = vsel %vm112, %v1269, 0
  %1273 = vmatpush.bf16.msra.mxu0 0
  %1274 = vmatpush.bf16.msra.mxu0 0
  %1275 = vmatpush.bf16.msra.mxu0 0
  %1276 = vmatpush.bf16.msra.mxu0 0
  %1277 = vmatpush.bf16.msra.mxu0 %v102
  %1278 = vmatpush.bf16.msra.mxu0 %v100
  %1279 = vmatpush.bf16.msra.mxu0 %v98
  %1280 = vmatpush.bf16.msra.mxu0 %v96
  %1281 = vmatmul.bf16.gmra.mxu0 %v1271
  %v1282 = vpop.f32.mrf.mxu0
  %v1283 = vadd.f32 0.0, %v1282
  %v1284 = vpop.f32.mrf.mxu0
  %1285 = vdwg.mxu0
  %1286 = vmatpush.bf16.msra.mxu0 0
  %1287 = vmatpush.bf16.msra.mxu0 0
  %1288 = vmatpush.bf16.msra.mxu0 0
  %1289 = vmatpush.bf16.msra.mxu0 0
  %1290 = vmatpush.bf16.msra.mxu0 %v103
  %1291 = vmatpush.bf16.msra.mxu0 %v101
  %1292 = vmatpush.bf16.msra.mxu0 %v99
  %1293 = vmatpush.bf16.msra.mxu0 %v97
  %1294 = vmatmul.bf16.gmra.mxu0 %v1271
  %v1295 = vpop.f32.mrf.mxu0
  %v1296 = vadd.f32 0.0, %v1295
  %v1297 = vpop.f32.mrf.mxu0
  %1298 = vdwg.mxu0
  %v1299 = vld [vmem:[%s0 + $0x8] sm:$0x1]
  %v1300 = vunpack.c.l.bf16 %v1299
  %v1301 = vadd.f32 %v1300, %v1283
  %v1302 = vld [vmem:[%s41 + $0x4] sm:$0x8]
  %v1303 = vunpack.c.l.bf16 %v1302
  %v1305 = vrot.slane %v1296, 2
  %v1307 = vadd.f32 %v1303, %v1305
  %v1308 = vxor.u32 %v1301, 2147483648
  %v1309 = vmul.f32 %v1308, 1.442695
  %v1310 = vpow.pop %v1309
  %v1311 = vadd.f32 %v1310, 1.0
  %v1312 = vrcp.pop %v1311
  %v1313 = vmul.f32 %v1311, %v1312
  %v1314 = vsub.f32 1.0, %v1313
  %v1315 = vmul.f32 %v1312, %v1314
  %v1316 = vadd.f32 %v1312, %v1315
  %vm1317 = vweird.f32 %v1311
  %vm1318 = vweird.f32 %v1312
  %vm1319 = vmor %vm1317, %vm1318
  %v1320 = vsel %vm1319, %v1312, %v1316
  %v1321 = vand.u32 2147483647, %v1311
  %vm1322 = vcmp.eq.f32.partialorder %v1321, 8.507059e+37
  %v1323 = vand.u32 %v1311, 2147483648
  %v1324 = vor.u32 1.1754944e-38, %v1323
  %v1325 = vsel %vm1322, %v1324, %v1320
  %v1326 = vmul.f32 1.0, %v1325
  %v1327 = vtanh.pop %v1301
  %v1329 = vrot.slane %v1198, 6
  %v1331 = vmul.f32 %v1326, %v1329
  %1333 = vrot.lane.b32.xlu0 %v1327, 32
  %v1334 = vpop.permute.xlu0 %1333
  %v1336 = vmul.f32 %v1326, %v1334
  %1338 = vrot.lane.b32.xlu0 %v1336, 32
  %v1339 = vpop.permute.xlu0 %1338
  %v1341 = vadd.f32 %v1331, %v1339
  %v1342 = vtanh.pop %v1341
  %1344 = vrot.lane.b32.xlu0 %v1342, 32
  %v1345 = vpop.permute.xlu0 %1344
  %v1347 = vmul.f32 %v1326, %v1345
  %v1348 = vxor.u32 %v1307, 2147483648
  %v1349 = vmul.f32 %v1348, 1.442695
  %v1350 = vpow.pop %v1349
  %v1351 = vadd.f32 %v1350, 1.0
  %v1352 = vrcp.pop %v1351
  %v1353 = vmul.f32 %v1351, %v1352
  %v1354 = vsub.f32 1.0, %v1353
  %v1355 = vmul.f32 %v1352, %v1354
  %v1356 = vadd.f32 %v1352, %v1355
  %vm1357 = vweird.f32 %v1351
  %vm1358 = vweird.f32 %v1352
  %vm1359 = vmor %vm1357, %vm1358
  %v1360 = vsel %vm1359, %v1352, %v1356
  %v1361 = vand.u32 2147483647, %v1351
  %vm1362 = vcmp.eq.f32.partialorder %v1361, 8.507059e+37
  %v1363 = vand.u32 %v1351, 2147483648
  %v1364 = vor.u32 1.1754944e-38, %v1363
  %v1365 = vsel %vm1362, %v1364, %v1360
  %v1366 = vmul.f32 1.0, %v1365
  %v1367 = vtanh.pop %v1307
  %v1369 = vrot.slane %v1238, 2
  %v1371 = vmul.f32 %v1366, %v1369
  %1373 = vrot.lane.b32.xlu0 %v1367, 32
  %v1374 = vpop.permute.xlu0 %1373
  %v1376 = vmul.f32 %v1366, %v1374
  %1378 = vrot.lane.b32.xlu0 %v1376, 32
  %v1379 = vpop.permute.xlu0 %1378
  %v1381 = vadd.f32 %v1371, %v1379
  %v1382 = vtanh.pop %v1381
  %1384 = vrot.lane.b32.xlu0 %v1382, 32
  %v1385 = vpop.permute.xlu0 %1384
  %v1387 = vmul.f32 %v1366, %v1385
  %v1388 = vpack.c.bf16 %v1347, %v1347
  %1390 = vrot.lane.b32.xlu0 %v1388, 64
  %v1391 = vpop.permute.xlu0 %1390
  %1393 = vst.msk [vmem:[%s3 + $0x8] sm:$0x1] %vm236, %v1391
  %v1394 = vpack.c.bf16 %v1387, %v1387
  %1396 = vrot.lane.b32.xlu0 %v1394, 64
  %v1397 = vpop.permute.xlu0 %1396
  %1399 = vst.msk [vmem:[%s49 + $0x4] sm:$0x8] %vm243, %v1397
  %1401 = vrot.lane.b32.xlu0 %v1347, 64
  %v1402 = vpop.permute.xlu0 %1401
  %v1405 = vrot.slane %v1387, 6
  %1406 = vrot.lane.b32.xlu0 %v1405, 96
  %v1407 = vpop.permute.xlu0 %1406
  %v1409 = vsel %vm254, %v1402, %v1407
  %v1410 = vpack.c.bf16 %v1409, %v1409
  %v1412 = vsel %vm112, %v1410, 0
  %1414 = vmatpush.bf16.msra.mxu0 0
  %1415 = vmatpush.bf16.msra.mxu0 0
  %1416 = vmatpush.bf16.msra.mxu0 0
  %1417 = vmatpush.bf16.msra.mxu0 0
  %1418 = vmatpush.bf16.msra.mxu0 %v102
  %1419 = vmatpush.bf16.msra.mxu0 %v100
  %1420 = vmatpush.bf16.msra.mxu0 %v98
  %1421 = vmatpush.bf16.msra.mxu0 %v96
  %1422 = vmatmul.bf16.gmra.mxu0 %v1412
  %v1423 = vpop.f32.mrf.mxu0
  %v1424 = vadd.f32 0.0, %v1423
  %v1425 = vpop.f32.mrf.mxu0
  %1426 = vdwg.mxu0
  %1427 = vmatpush.bf16.msra.mxu0 0
  %1428 = vmatpush.bf16.msra.mxu0 0
  %1429 = vmatpush.bf16.msra.mxu0 0
  %1430 = vmatpush.bf16.msra.mxu0 0
  %1431 = vmatpush.bf16.msra.mxu0 %v103
  %1432 = vmatpush.bf16.msra.mxu0 %v101
  %1433 = vmatpush.bf16.msra.mxu0 %v99
  %1434 = vmatpush.bf16.msra.mxu0 %v97
  %1435 = vmatmul.bf16.gmra.mxu0 %v1412
  %v1436 = vpop.f32.mrf.mxu0
  %v1437 = vadd.f32 0.0, %v1436
  %v1438 = vpop.f32.mrf.mxu0
  %1439 = vdwg.mxu0
  %v1440 = vld [vmem:[%s0 + $0x8] sm:$0x2]
  %v1441 = vunpack.c.l.bf16 %v1440
  %v1443 = vrot.slane %v1424, 6
  %v1445 = vadd.f32 %v1441, %v1443
  %v1446 = vld [vmem:[%s41 + $0x4] sm:$0x4]
  %v1447 = vunpack.c.l.bf16 %v1446
  %v1449 = vrot.slane %v1437, 4
  %v1451 = vadd.f32 %v1447, %v1449
  %v1452 = vxor.u32 %v1445, 2147483648
  %v1453 = vmul.f32 %v1452, 1.442695
  %v1454 = vpow.pop %v1453
  %v1455 = vadd.f32 %v1454, 1.0
  %v1456 = vrcp.pop %v1455
  %v1457 = vmul.f32 %v1455, %v1456
  %v1458 = vsub.f32 1.0, %v1457
  %v1459 = vmul.f32 %v1456, %v1458
  %v1460 = vadd.f32 %v1456, %v1459
  %vm1461 = vweird.f32 %v1455
  %vm1462 = vweird.f32 %v1456
  %vm1463 = vmor %vm1461, %vm1462
  %v1464 = vsel %vm1463, %v1456, %v1460
  %v1465 = vand.u32 2147483647, %v1455
  %vm1466 = vcmp.eq.f32.partialorder %v1465, 8.507059e+37
  %v1467 = vand.u32 %v1455, 2147483648
  %v1468 = vor.u32 1.1754944e-38, %v1467
  %v1469 = vsel %vm1466, %v1468, %v1464
  %v1470 = vmul.f32 1.0, %v1469
  %v1471 = vtanh.pop %v1445
  %v1473 = vrot.slane %v1341, 6
  %v1475 = vmul.f32 %v1470, %v1473
  %1477 = vrot.lane.b32.xlu0 %v1471, 32
  %v1478 = vpop.permute.xlu0 %1477
  %v1480 = vmul.f32 %v1470, %v1478
  %1482 = vrot.lane.b32.xlu0 %v1480, 32
  %v1483 = vpop.permute.xlu0 %1482
  %v1485 = vadd.f32 %v1475, %v1483
  %v1486 = vtanh.pop %v1485
  %1488 = vrot.lane.b32.xlu0 %v1486, 32
  %v1489 = vpop.permute.xlu0 %1488
  %v1491 = vmul.f32 %v1470, %v1489
  %v1492 = vxor.u32 %v1451, 2147483648
  %v1493 = vmul.f32 %v1492, 1.442695
  %v1494 = vpow.pop %v1493
  %v1495 = vadd.f32 %v1494, 1.0
  %v1496 = vrcp.pop %v1495
  %v1497 = vmul.f32 %v1495, %v1496
  %v1498 = vsub.f32 1.0, %v1497
  %v1499 = vmul.f32 %v1496, %v1498
  %v1500 = vadd.f32 %v1496, %v1499
  %vm1501 = vweird.f32 %v1495
  %vm1502 = vweird.f32 %v1496
  %vm1503 = vmor %vm1501, %vm1502
  %v1504 = vsel %vm1503, %v1496, %v1500
  %v1505 = vand.u32 2147483647, %v1495
  %vm1506 = vcmp.eq.f32.partialorder %v1505, 8.507059e+37
  %v1507 = vand.u32 %v1495, 2147483648
  %v1508 = vor.u32 1.1754944e-38, %v1507
  %v1509 = vsel %vm1506, %v1508, %v1504
  %v1510 = vmul.f32 1.0, %v1509
  %v1511 = vtanh.pop %v1451
  %v1513 = vrot.slane %v1381, 2
  %v1515 = vmul.f32 %v1510, %v1513
  %1517 = vrot.lane.b32.xlu0 %v1511, 32
  %v1518 = vpop.permute.xlu0 %1517
  %v1520 = vmul.f32 %v1510, %v1518
  %1522 = vrot.lane.b32.xlu0 %v1520, 32
  %v1523 = vpop.permute.xlu0 %1522
  %v1525 = vadd.f32 %v1515, %v1523
  %v1526 = vtanh.pop %v1525
  %1528 = vrot.lane.b32.xlu0 %v1526, 32
  %v1529 = vpop.permute.xlu0 %1528
  %v1531 = vmul.f32 %v1510, %v1529
  %v1532 = vpack.c.bf16 %v1491, %v1491
  %1534 = vrot.lane.b32.xlu0 %v1532, 64
  %v1535 = vpop.permute.xlu0 %1534
  %1537 = vst.msk [vmem:[%s3 + $0x8] sm:$0x2] %vm383, %v1535
  %v1538 = vpack.c.bf16 %v1531, %v1531
  %1540 = vrot.lane.b32.xlu0 %v1538, 64
  %v1541 = vpop.permute.xlu0 %1540
  %1543 = vst.msk [vmem:[%s49 + $0x4] sm:$0x4] %vm390, %v1541
  %1545 = vrot.lane.b32.xlu0 %v1491, 64
  %v1546 = vpop.permute.xlu0 %1545
  %v1549 = vrot.slane %v1531, 2
  %1550 = vrot.lane.b32.xlu0 %v1549, 96
  %v1551 = vpop.permute.xlu0 %1550
  %v1553 = vsel %vm254, %v1546, %v1551
  %v1554 = vpack.c.bf16 %v1553, %v1553
  %v1556 = vrot.slane %v1554, 1
  %v1558 = vsel %vm112, %v1556, 0
  %1560 = vmatpush.bf16.msra.mxu0 0
  %1561 = vmatpush.bf16.msra.mxu0 0
  %1562 = vmatpush.bf16.msra.mxu0 0
  %1563 = vmatpush.bf16.msra.mxu0 0
  %1564 = vmatpush.bf16.msra.mxu0 %v102
  %1565 = vmatpush.bf16.msra.mxu0 %v100
  %1566 = vmatpush.bf16.msra.mxu0 %v98
  %1567 = vmatpush.bf16.msra.mxu0 %v96
  %1568 = vmatmul.bf16.gmra.mxu0 %v1558
  %v1569 = vpop.f32.mrf.mxu0
  %v1570 = vadd.f32 0.0, %v1569
  %v1571 = vpop.f32.mrf.mxu0
  %1572 = vdwg.mxu0
  %1573 = vmatpush.bf16.msra.mxu0 0
  %1574 = vmatpush.bf16.msra.mxu0 0
  %1575 = vmatpush.bf16.msra.mxu0 0
  %1576 = vmatpush.bf16.msra.mxu0 0
  %1577 = vmatpush.bf16.msra.mxu0 %v103
  %1578 = vmatpush.bf16.msra.mxu0 %v101
  %1579 = vmatpush.bf16.msra.mxu0 %v99
  %1580 = vmatpush.bf16.msra.mxu0 %v97
  %1581 = vmatmul.bf16.gmra.mxu0 %v1558
  %v1582 = vpop.f32.mrf.mxu0
  %v1583 = vadd.f32 0.0, %v1582
  %v1584 = vpop.f32.mrf.mxu0
  %1585 = vdwg.mxu0
  %v1586 = vld [vmem:[%s0 + $0x8] sm:$0x4]
  %v1587 = vunpack.c.l.bf16 %v1586
  %v1589 = vrot.slane %v1570, 4
  %v1591 = vadd.f32 %v1587, %v1589
  %v1592 = vld [vmem:[%s41 + $0x4] sm:$0x2]
  %v1593 = vunpack.c.l.bf16 %v1592
  %v1595 = vrot.slane %v1583, 6
  %v1597 = vadd.f32 %v1593, %v1595
  %v1598 = vxor.u32 %v1591, 2147483648
  %v1599 = vmul.f32 %v1598, 1.442695
  %v1600 = vpow.pop %v1599
  %v1601 = vadd.f32 %v1600, 1.0
  %v1602 = vrcp.pop %v1601
  %v1603 = vmul.f32 %v1601, %v1602
  %v1604 = vsub.f32 1.0, %v1603
  %v1605 = vmul.f32 %v1602, %v1604
  %v1606 = vadd.f32 %v1602, %v1605
  %vm1607 = vweird.f32 %v1601
  %vm1608 = vweird.f32 %v1602
  %vm1609 = vmor %vm1607, %vm1608
  %v1610 = vsel %vm1609, %v1602, %v1606
  %v1611 = vand.u32 2147483647, %v1601
  %vm1612 = vcmp.eq.f32.partialorder %v1611, 8.507059e+37
  %v1613 = vand.u32 %v1601, 2147483648
  %v1614 = vor.u32 1.1754944e-38, %v1613
  %v1615 = vsel %vm1612, %v1614, %v1610
  %v1616 = vmul.f32 1.0, %v1615
  %v1617 = vtanh.pop %v1591
  %v1619 = vrot.slane %v1485, 6
  %v1621 = vmul.f32 %v1616, %v1619
  %1623 = vrot.lane.b32.xlu0 %v1617, 32
  %v1624 = vpop.permute.xlu0 %1623
  %v1626 = vmul.f32 %v1616, %v1624
  %1628 = vrot.lane.b32.xlu0 %v1626, 32
  %v1629 = vpop.permute.xlu0 %1628
  %v1631 = vadd.f32 %v1621, %v1629
  %v1632 = vtanh.pop %v1631
  %1634 = vrot.lane.b32.xlu0 %v1632, 32
  %v1635 = vpop.permute.xlu0 %1634
  %v1637 = vmul.f32 %v1616, %v1635
  %v1638 = vxor.u32 %v1597, 2147483648
  %v1639 = vmul.f32 %v1638, 1.442695
  %v1640 = vpow.pop %v1639
  %v1641 = vadd.f32 %v1640, 1.0
  %v1642 = vrcp.pop %v1641
  %v1643 = vmul.f32 %v1641, %v1642
  %v1644 = vsub.f32 1.0, %v1643
  %v1645 = vmul.f32 %v1642, %v1644
  %v1646 = vadd.f32 %v1642, %v1645
  %vm1647 = vweird.f32 %v1641
  %vm1648 = vweird.f32 %v1642
  %vm1649 = vmor %vm1647, %vm1648
  %v1650 = vsel %vm1649, %v1642, %v1646
  %v1651 = vand.u32 2147483647, %v1641
  %vm1652 = vcmp.eq.f32.partialorder %v1651, 8.507059e+37
  %v1653 = vand.u32 %v1641, 2147483648
  %v1654 = vor.u32 1.1754944e-38, %v1653
  %v1655 = vsel %vm1652, %v1654, %v1650
  %v1656 = vmul.f32 1.0, %v1655
  %v1657 = vtanh.pop %v1597
  %v1659 = vrot.slane %v1525, 2
  %v1661 = vmul.f32 %v1656, %v1659
  %1663 = vrot.lane.b32.xlu0 %v1657, 32
  %v1664 = vpop.permute.xlu0 %1663
  %v1666 = vmul.f32 %v1656, %v1664
  %1668 = vrot.lane.b32.xlu0 %v1666, 32
  %v1669 = vpop.permute.xlu0 %1668
  %v1671 = vadd.f32 %v1661, %v1669
  %v1672 = vtanh.pop %v1671
  %1674 = vrot.lane.b32.xlu0 %v1672, 32
  %v1675 = vpop.permute.xlu0 %1674
  %v1677 = vmul.f32 %v1656, %v1675
  %v1678 = vpack.c.bf16 %v1637, %v1637
  %1680 = vrot.lane.b32.xlu0 %v1678, 64
  %v1681 = vpop.permute.xlu0 %1680
  %1683 = vst.msk [vmem:[%s3 + $0x8] sm:$0x4] %vm390, %v1681
  %v1684 = vpack.c.bf16 %v1677, %v1677
  %1686 = vrot.lane.b32.xlu0 %v1684, 64
  %v1687 = vpop.permute.xlu0 %1686
  %1689 = vst.msk [vmem:[%s49 + $0x4] sm:$0x2] %vm383, %v1687
  %1691 = vrot.lane.b32.xlu0 %v1637, 64
  %v1692 = vpop.permute.xlu0 %1691
  %v1695 = vrot.slane %v1677, 6
  %1696 = vrot.lane.b32.xlu0 %v1695, 96
  %v1697 = vpop.permute.xlu0 %1696
  %v1699 = vsel %vm254, %v1692, %v1697
  %v1700 = vpack.c.bf16 %v1699, %v1699
  %v1702 = vrot.slane %v1700, 2
  %v1704 = vsel %vm112, %v1702, 0
  %1706 = vmatpush.bf16.msra.mxu0 0
  %1707 = vmatpush.bf16.msra.mxu0 0
  %1708 = vmatpush.bf16.msra.mxu0 0
  %1709 = vmatpush.bf16.msra.mxu0 0
  %1710 = vmatpush.bf16.msra.mxu0 %v102
  %1711 = vmatpush.bf16.msra.mxu0 %v100
  %1712 = vmatpush.bf16.msra.mxu0 %v98
  %1713 = vmatpush.bf16.msra.mxu0 %v96
  %1714 = vmatmul.bf16.gmra.mxu0 %v1704
  %v1715 = vpop.f32.mrf.mxu0
  %v1716 = vadd.f32 0.0, %v1715
  %v1717 = vpop.f32.mrf.mxu0
  %1718 = vdwg.mxu0
  %1719 = vmatpush.bf16.msra.mxu0 0
  %1720 = vmatpush.bf16.msra.mxu0 0
  %1721 = vmatpush.bf16.msra.mxu0 0
  %1722 = vmatpush.bf16.msra.mxu0 0
  %1723 = vmatpush.bf16.msra.mxu0 %v103
  %1724 = vmatpush.bf16.msra.mxu0 %v101
  %1725 = vmatpush.bf16.msra.mxu0 %v99
  %1726 = vmatpush.bf16.msra.mxu0 %v97
  %1727 = vmatmul.bf16.gmra.mxu0 %v1704
  %v1728 = vpop.f32.mrf.mxu0
  %v1729 = vadd.f32 0.0, %v1728
  %v1730 = vpop.f32.mrf.mxu0
  %1731 = vdwg.mxu0
  %v1732 = vld [vmem:[%s0 + $0x8] sm:$0x8]
  %v1733 = vunpack.c.l.bf16 %v1732
  %v1735 = vrot.slane %v1716, 2
  %v1737 = vadd.f32 %v1733, %v1735
  %v1738 = vld [vmem:[%s41 + $0x4] sm:$0x1]
  %v1739 = vunpack.c.l.bf16 %v1738
  %v1740 = vadd.f32 %v1739, %v1729
  %v1741 = vxor.u32 %v1737, 2147483648
  %v1742 = vmul.f32 %v1741, 1.442695
  %v1743 = vpow.pop %v1742
  %v1744 = vadd.f32 %v1743, 1.0
  %v1745 = vrcp.pop %v1744
  %v1746 = vmul.f32 %v1744, %v1745
  %v1747 = vsub.f32 1.0, %v1746
  %v1748 = vmul.f32 %v1745, %v1747
  %v1749 = vadd.f32 %v1745, %v1748
  %vm1750 = vweird.f32 %v1744
  %vm1751 = vweird.f32 %v1745
  %vm1752 = vmor %vm1750, %vm1751
  %v1753 = vsel %vm1752, %v1745, %v1749
  %v1754 = vand.u32 2147483647, %v1744
  %vm1755 = vcmp.eq.f32.partialorder %v1754, 8.507059e+37
  %v1756 = vand.u32 %v1744, 2147483648
  %v1757 = vor.u32 1.1754944e-38, %v1756
  %v1758 = vsel %vm1755, %v1757, %v1753
  %v1759 = vmul.f32 1.0, %v1758
  %v1760 = vtanh.pop %v1737
  %v1762 = vrot.slane %v1631, 6
  %v1764 = vmul.f32 %v1759, %v1762
  %1766 = vrot.lane.b32.xlu0 %v1760, 32
  %v1767 = vpop.permute.xlu0 %1766
  %v1769 = vmul.f32 %v1759, %v1767
  %1771 = vrot.lane.b32.xlu0 %v1769, 32
  %v1772 = vpop.permute.xlu0 %1771
  %v1774 = vadd.f32 %v1764, %v1772
  %v1775 = vtanh.pop %v1774
  %1777 = vrot.lane.b32.xlu0 %v1775, 32
  %v1778 = vpop.permute.xlu0 %1777
  %v1780 = vmul.f32 %v1759, %v1778
  %v1781 = vxor.u32 %v1740, 2147483648
  %v1782 = vmul.f32 %v1781, 1.442695
  %v1783 = vpow.pop %v1782
  %v1784 = vadd.f32 %v1783, 1.0
  %v1785 = vrcp.pop %v1784
  %v1786 = vmul.f32 %v1784, %v1785
  %v1787 = vsub.f32 1.0, %v1786
  %v1788 = vmul.f32 %v1785, %v1787
  %v1789 = vadd.f32 %v1785, %v1788
  %vm1790 = vweird.f32 %v1784
  %vm1791 = vweird.f32 %v1785
  %vm1792 = vmor %vm1790, %vm1791
  %v1793 = vsel %vm1792, %v1785, %v1789
  %v1794 = vand.u32 2147483647, %v1784
  %vm1795 = vcmp.eq.f32.partialorder %v1794, 8.507059e+37
  %v1796 = vand.u32 %v1784, 2147483648
  %v1797 = vor.u32 1.1754944e-38, %v1796
  %v1798 = vsel %vm1795, %v1797, %v1793
  %v1799 = vmul.f32 1.0, %v1798
  %v1800 = vtanh.pop %v1740
  %v1802 = vrot.slane %v1671, 2
  %v1804 = vmul.f32 %v1799, %v1802
  %1806 = vrot.lane.b32.xlu0 %v1800, 32
  %v1807 = vpop.permute.xlu0 %1806
  %v1809 = vmul.f32 %v1799, %v1807
  %1811 = vrot.lane.b32.xlu0 %v1809, 32
  %v1812 = vpop.permute.xlu0 %1811
  %v1814 = vadd.f32 %v1804, %v1812
  %v1815 = vtanh.pop %v1814
  %1817 = vrot.lane.b32.xlu0 %v1815, 32
  %v1818 = vpop.permute.xlu0 %1817
  %v1820 = vmul.f32 %v1799, %v1818
  %v1821 = vpack.c.bf16 %v1780, %v1780
  %1823 = vrot.lane.b32.xlu0 %v1821, 64
  %v1824 = vpop.permute.xlu0 %1823
  %1826 = vst.msk [vmem:[%s3 + $0x8] sm:$0x8] %vm243, %v1824
  %v1827 = vpack.c.bf16 %v1820, %v1820
  %1829 = vrot.lane.b32.xlu0 %v1827, 64
  %v1830 = vpop.permute.xlu0 %1829
  %1832 = vst.msk [vmem:[%s49 + $0x4] sm:$0x1] %vm236, %v1830
  %1834 = vrot.lane.b32.xlu0 %v1780, 64
  %v1835 = vpop.permute.xlu0 %1834
  %v1838 = vrot.slane %v1820, 2
  %1839 = vrot.lane.b32.xlu0 %v1838, 96
  %v1840 = vpop.permute.xlu0 %1839
  %v1842 = vsel %vm254, %v1835, %v1840
  %v1843 = vpack.c.bf16 %v1842, %v1842
  %v1845 = vrot.slane %v1843, 3
  %v1847 = vsel %vm112, %v1845, 0
  %1849 = vmatpush.bf16.msra.mxu0 0
  %1850 = vmatpush.bf16.msra.mxu0 0
  %1851 = vmatpush.bf16.msra.mxu0 0
  %1852 = vmatpush.bf16.msra.mxu0 0
  %1853 = vmatpush.bf16.msra.mxu0 %v102
  %1854 = vmatpush.bf16.msra.mxu0 %v100
  %1855 = vmatpush.bf16.msra.mxu0 %v98
  %1856 = vmatpush.bf16.msra.mxu0 %v96
  %1857 = vmatmul.bf16.gmra.mxu0 %v1847
  %v1858 = vpop.f32.mrf.mxu0
  %v1859 = vadd.f32 0.0, %v1858
  %v1860 = vpop.f32.mrf.mxu0
  %1861 = vdwg.mxu0
  %1862 = vmatpush.bf16.msra.mxu0 0
  %1863 = vmatpush.bf16.msra.mxu0 0
  %1864 = vmatpush.bf16.msra.mxu0 0
  %1865 = vmatpush.bf16.msra.mxu0 0
  %1866 = vmatpush.bf16.msra.mxu0 %v103
  %1867 = vmatpush.bf16.msra.mxu0 %v101
  %1868 = vmatpush.bf16.msra.mxu0 %v99
  %1869 = vmatpush.bf16.msra.mxu0 %v97
  %1870 = vmatmul.bf16.gmra.mxu0 %v1847
  %v1871 = vpop.f32.mrf.mxu0
  %v1872 = vadd.f32 0.0, %v1871
  %v1873 = vpop.f32.mrf.mxu0
  %1874 = vdwg.mxu0
  %v1875 = vld [vmem:[%s0 + $0xc] sm:$0x1]
  %v1876 = vunpack.c.l.bf16 %v1875
  %v1877 = vadd.f32 %v1876, %v1859
  %v1878 = vld [vmem:[%s41] sm:$0x8]
  %v1879 = vunpack.c.l.bf16 %v1878
  %v1881 = vrot.slane %v1872, 2
  %v1883 = vadd.f32 %v1879, %v1881
  %v1884 = vxor.u32 %v1877, 2147483648
  %v1885 = vmul.f32 %v1884, 1.442695
  %v1886 = vpow.pop %v1885
  %v1887 = vadd.f32 %v1886, 1.0
  %v1888 = vrcp.pop %v1887
  %v1889 = vmul.f32 %v1887, %v1888
  %v1890 = vsub.f32 1.0, %v1889
  %v1891 = vmul.f32 %v1888, %v1890
  %v1892 = vadd.f32 %v1888, %v1891
  %vm1893 = vweird.f32 %v1887
  %vm1894 = vweird.f32 %v1888
  %vm1895 = vmor %vm1893, %vm1894
  %v1896 = vsel %vm1895, %v1888, %v1892
  %v1897 = vand.u32 2147483647, %v1887
  %vm1898 = vcmp.eq.f32.partialorder %v1897, 8.507059e+37
  %v1899 = vand.u32 %v1887, 2147483648
  %v1900 = vor.u32 1.1754944e-38, %v1899
  %v1901 = vsel %vm1898, %v1900, %v1896
  %v1902 = vmul.f32 1.0, %v1901
  %v1903 = vtanh.pop %v1877
  %v1905 = vrot.slane %v1774, 6
  %v1907 = vmul.f32 %v1902, %v1905
  %1909 = vrot.lane.b32.xlu0 %v1903, 32
  %v1910 = vpop.permute.xlu0 %1909
  %v1912 = vmul.f32 %v1902, %v1910
  %1914 = vrot.lane.b32.xlu0 %v1912, 32
  %v1915 = vpop.permute.xlu0 %1914
  %v1917 = vadd.f32 %v1907, %v1915
  %v1918 = vtanh.pop %v1917
  %1920 = vrot.lane.b32.xlu0 %v1918, 32
  %v1921 = vpop.permute.xlu0 %1920
  %v1923 = vmul.f32 %v1902, %v1921
  %v1924 = vxor.u32 %v1883, 2147483648
  %v1925 = vmul.f32 %v1924, 1.442695
  %v1926 = vpow.pop %v1925
  %v1927 = vadd.f32 %v1926, 1.0
  %v1928 = vrcp.pop %v1927
  %v1929 = vmul.f32 %v1927, %v1928
  %v1930 = vsub.f32 1.0, %v1929
  %v1931 = vmul.f32 %v1928, %v1930
  %v1932 = vadd.f32 %v1928, %v1931
  %vm1933 = vweird.f32 %v1927
  %vm1934 = vweird.f32 %v1928
  %vm1935 = vmor %vm1933, %vm1934
  %v1936 = vsel %vm1935, %v1928, %v1932
  %v1937 = vand.u32 2147483647, %v1927
  %vm1938 = vcmp.eq.f32.partialorder %v1937, 8.507059e+37
  %v1939 = vand.u32 %v1927, 2147483648
  %v1940 = vor.u32 1.1754944e-38, %v1939
  %v1941 = vsel %vm1938, %v1940, %v1936
  %v1942 = vmul.f32 1.0, %v1941
  %v1943 = vtanh.pop %v1883
  %v1945 = vrot.slane %v1814, 2
  %v1947 = vmul.f32 %v1942, %v1945
  %1949 = vrot.lane.b32.xlu0 %v1943, 32
  %v1950 = vpop.permute.xlu0 %1949
  %v1952 = vmul.f32 %v1942, %v1950
  %1954 = vrot.lane.b32.xlu0 %v1952, 32
  %v1955 = vpop.permute.xlu0 %1954
  %v1957 = vadd.f32 %v1947, %v1955
  %v1958 = vtanh.pop %v1957
  %1960 = vrot.lane.b32.xlu0 %v1958, 32
  %v1961 = vpop.permute.xlu0 %1960
  %v1963 = vmul.f32 %v1942, %v1961
  %v1964 = vpack.c.bf16 %v1923, %v1923
  %1966 = vrot.lane.b32.xlu0 %v1964, 64
  %v1967 = vpop.permute.xlu0 %1966
  %1969 = vst.msk [vmem:[%s3 + $0xc] sm:$0x1] %vm236, %v1967
  %v1970 = vpack.c.bf16 %v1963, %v1963
  %1972 = vrot.lane.b32.xlu0 %v1970, 64
  %v1973 = vpop.permute.xlu0 %1972
  %1975 = vst.msk [vmem:[%s49] sm:$0x8] %vm243, %v1973
  %1977 = vrot.lane.b32.xlu0 %v1923, 64
  %v1978 = vpop.permute.xlu0 %1977
  %v1981 = vrot.slane %v1963, 6
  %1982 = vrot.lane.b32.xlu0 %v1981, 96
  %v1983 = vpop.permute.xlu0 %1982
  %v1985 = vsel %vm254, %v1978, %v1983
  %v1986 = vpack.c.bf16 %v1985, %v1985
  %v1988 = vsel %vm112, %v1986, 0
  %1990 = vmatpush.bf16.msra.mxu0 0
  %1991 = vmatpush.bf16.msra.mxu0 0
  %1992 = vmatpush.bf16.msra.mxu0 0
  %1993 = vmatpush.bf16.msra.mxu0 0
  %1994 = vmatpush.bf16.msra.mxu0 %v102
  %1995 = vmatpush.bf16.msra.mxu0 %v100
  %1996 = vmatpush.bf16.msra.mxu0 %v98
  %1997 = vmatpush.bf16.msra.mxu0 %v96
  %1998 = vmatmul.bf16.gmra.mxu0 %v1988
  %v1999 = vpop.f32.mrf.mxu0
  %v2000 = vadd.f32 0.0, %v1999
  %v2001 = vpop.f32.mrf.mxu0
  %2002 = vdwg.mxu0
  %2003 = vmatpush.bf16.msra.mxu0 0
  %2004 = vmatpush.bf16.msra.mxu0 0
  %2005 = vmatpush.bf16.msra.mxu0 0
  %2006 = vmatpush.bf16.msra.mxu0 0
  %2007 = vmatpush.bf16.msra.mxu0 %v103
  %2008 = vmatpush.bf16.msra.mxu0 %v101
  %2009 = vmatpush.bf16.msra.mxu0 %v99
  %2010 = vmatpush.bf16.msra.mxu0 %v97
  %2011 = vmatmul.bf16.gmra.mxu0 %v1988
  %v2012 = vpop.f32.mrf.mxu0
  %v2013 = vadd.f32 0.0, %v2012
  %v2014 = vpop.f32.mrf.mxu0
  %2015 = vdwg.mxu0
  %v2016 = vld [vmem:[%s0 + $0xc] sm:$0x2]
  %v2017 = vunpack.c.l.bf16 %v2016
  %v2019 = vrot.slane %v2000, 6
  %v2021 = vadd.f32 %v2017, %v2019
  %v2022 = vld [vmem:[%s41] sm:$0x4]
  %v2023 = vunpack.c.l.bf16 %v2022
  %v2025 = vrot.slane %v2013, 4
  %v2027 = vadd.f32 %v2023, %v2025
  %v2028 = vxor.u32 %v2021, 2147483648
  %v2029 = vmul.f32 %v2028, 1.442695
  %v2030 = vpow.pop %v2029
  %v2031 = vadd.f32 %v2030, 1.0
  %v2032 = vrcp.pop %v2031
  %v2033 = vmul.f32 %v2031, %v2032
  %v2034 = vsub.f32 1.0, %v2033
  %v2035 = vmul.f32 %v2032, %v2034
  %v2036 = vadd.f32 %v2032, %v2035
  %vm2037 = vweird.f32 %v2031
  %vm2038 = vweird.f32 %v2032
  %vm2039 = vmor %vm2037, %vm2038
  %v2040 = vsel %vm2039, %v2032, %v2036
  %v2041 = vand.u32 2147483647, %v2031
  %vm2042 = vcmp.eq.f32.partialorder %v2041, 8.507059e+37
  %v2043 = vand.u32 %v2031, 2147483648
  %v2044 = vor.u32 1.1754944e-38, %v2043
  %v2045 = vsel %vm2042, %v2044, %v2040
  %v2046 = vmul.f32 1.0, %v2045
  %v2047 = vtanh.pop %v2021
  %v2049 = vrot.slane %v1917, 6
  %v2051 = vmul.f32 %v2046, %v2049
  %2053 = vrot.lane.b32.xlu0 %v2047, 32
  %v2054 = vpop.permute.xlu0 %2053
  %v2056 = vmul.f32 %v2046, %v2054
  %2058 = vrot.lane.b32.xlu0 %v2056, 32
  %v2059 = vpop.permute.xlu0 %2058
  %v2061 = vadd.f32 %v2051, %v2059
  %v2062 = vtanh.pop %v2061
  %2064 = vrot.lane.b32.xlu0 %v2062, 32
  %v2065 = vpop.permute.xlu0 %2064
  %v2067 = vmul.f32 %v2046, %v2065
  %v2068 = vxor.u32 %v2027, 2147483648
  %v2069 = vmul.f32 %v2068, 1.442695
  %v2070 = vpow.pop %v2069
  %v2071 = vadd.f32 %v2070, 1.0
  %v2072 = vrcp.pop %v2071
  %v2073 = vmul.f32 %v2071, %v2072
  %v2074 = vsub.f32 1.0, %v2073
  %v2075 = vmul.f32 %v2072, %v2074
  %v2076 = vadd.f32 %v2072, %v2075
  %vm2077 = vweird.f32 %v2071
  %vm2078 = vweird.f32 %v2072
  %vm2079 = vmor %vm2077, %vm2078
  %v2080 = vsel %vm2079, %v2072, %v2076
  %v2081 = vand.u32 2147483647, %v2071
  %vm2082 = vcmp.eq.f32.partialorder %v2081, 8.507059e+37
  %v2083 = vand.u32 %v2071, 2147483648
  %v2084 = vor.u32 1.1754944e-38, %v2083
  %v2085 = vsel %vm2082, %v2084, %v2080
  %v2086 = vmul.f32 1.0, %v2085
  %v2087 = vtanh.pop %v2027
  %v2089 = vrot.slane %v1957, 2
  %v2091 = vmul.f32 %v2086, %v2089
  %2093 = vrot.lane.b32.xlu0 %v2087, 32
  %v2094 = vpop.permute.xlu0 %2093
  %v2096 = vmul.f32 %v2086, %v2094
  %2098 = vrot.lane.b32.xlu0 %v2096, 32
  %v2099 = vpop.permute.xlu0 %2098
  %v2101 = vadd.f32 %v2091, %v2099
  %v2102 = vtanh.pop %v2101
  %2104 = vrot.lane.b32.xlu0 %v2102, 32
  %v2105 = vpop.permute.xlu0 %2104
  %v2107 = vmul.f32 %v2086, %v2105
  %v2108 = vpack.c.bf16 %v2067, %v2067
  %2110 = vrot.lane.b32.xlu0 %v2108, 64
  %v2111 = vpop.permute.xlu0 %2110
  %2113 = vst.msk [vmem:[%s3 + $0xc] sm:$0x2] %vm383, %v2111
  %v2114 = vpack.c.bf16 %v2107, %v2107
  %2116 = vrot.lane.b32.xlu0 %v2114, 64
  %v2117 = vpop.permute.xlu0 %2116
  %2119 = vst.msk [vmem:[%s49] sm:$0x4] %vm390, %v2117
  %2121 = vrot.lane.b32.xlu0 %v2067, 64
  %v2122 = vpop.permute.xlu0 %2121
  %v2125 = vrot.slane %v2107, 2
  %2126 = vrot.lane.b32.xlu0 %v2125, 96
  %v2127 = vpop.permute.xlu0 %2126
  %v2129 = vsel %vm254, %v2122, %v2127
  %v2130 = vpack.c.bf16 %v2129, %v2129
  %v2132 = vrot.slane %v2130, 1
  %v2134 = vsel %vm112, %v2132, 0
  %2136 = vmatpush.bf16.msra.mxu0 0
  %2137 = vmatpush.bf16.msra.mxu0 0
  %2138 = vmatpush.bf16.msra.mxu0 0
  %2139 = vmatpush.bf16.msra.mxu0 0
  %2140 = vmatpush.bf16.msra.mxu0 %v102
  %2141 = vmatpush.bf16.msra.mxu0 %v100
  %2142 = vmatpush.bf16.msra.mxu0 %v98
  %2143 = vmatpush.bf16.msra.mxu0 %v96
  %2144 = vmatmul.bf16.gmra.mxu0 %v2134
  %v2145 = vpop.f32.mrf.mxu0
  %v2146 = vadd.f32 0.0, %v2145
  %v2147 = vpop.f32.mrf.mxu0
  %2148 = vdwg.mxu0
  %2149 = vmatpush.bf16.msra.mxu0 0
  %2150 = vmatpush.bf16.msra.mxu0 0
  %2151 = vmatpush.bf16.msra.mxu0 0
  %2152 = vmatpush.bf16.msra.mxu0 0
  %2153 = vmatpush.bf16.msra.mxu0 %v103
  %2154 = vmatpush.bf16.msra.mxu0 %v101
  %2155 = vmatpush.bf16.msra.mxu0 %v99
  %2156 = vmatpush.bf16.msra.mxu0 %v97
  %2157 = vmatmul.bf16.gmra.mxu0 %v2134
  %v2158 = vpop.f32.mrf.mxu0
  %v2159 = vadd.f32 0.0, %v2158
  %v2160 = vpop.f32.mrf.mxu0
  %2161 = vdwg.mxu0
  %v2162 = vld [vmem:[%s0 + $0xc] sm:$0x4]
  %v2163 = vunpack.c.l.bf16 %v2162
  %v2165 = vrot.slane %v2146, 4
  %v2167 = vadd.f32 %v2163, %v2165
  %v2168 = vld [vmem:[%s41] sm:$0x2]
  %v2169 = vunpack.c.l.bf16 %v2168
  %v2171 = vrot.slane %v2159, 6
  %v2173 = vadd.f32 %v2169, %v2171
  %v2174 = vxor.u32 %v2167, 2147483648
  %v2175 = vmul.f32 %v2174, 1.442695
  %v2176 = vpow.pop %v2175
  %v2177 = vadd.f32 %v2176, 1.0
  %v2178 = vrcp.pop %v2177
  %v2179 = vmul.f32 %v2177, %v2178
  %v2180 = vsub.f32 1.0, %v2179
  %v2181 = vmul.f32 %v2178, %v2180
  %v2182 = vadd.f32 %v2178, %v2181
  %vm2183 = vweird.f32 %v2177
  %vm2184 = vweird.f32 %v2178
  %vm2185 = vmor %vm2183, %vm2184
  %v2186 = vsel %vm2185, %v2178, %v2182
  %v2187 = vand.u32 2147483647, %v2177
  %vm2188 = vcmp.eq.f32.partialorder %v2187, 8.507059e+37
  %v2189 = vand.u32 %v2177, 2147483648
  %v2190 = vor.u32 1.1754944e-38, %v2189
  %v2191 = vsel %vm2188, %v2190, %v2186
  %v2192 = vmul.f32 1.0, %v2191
  %v2193 = vtanh.pop %v2167
  %v2195 = vrot.slane %v2061, 6
  %v2197 = vmul.f32 %v2192, %v2195
  %2199 = vrot.lane.b32.xlu0 %v2193, 32
  %v2200 = vpop.permute.xlu0 %2199
  %v2202 = vmul.f32 %v2192, %v2200
  %2204 = vrot.lane.b32.xlu0 %v2202, 32
  %v2205 = vpop.permute.xlu0 %2204
  %v2207 = vadd.f32 %v2197, %v2205
  %v2208 = vtanh.pop %v2207
  %2210 = vrot.lane.b32.xlu0 %v2208, 32
  %v2211 = vpop.permute.xlu0 %2210
  %v2213 = vmul.f32 %v2192, %v2211
  %v2214 = vxor.u32 %v2173, 2147483648
  %v2215 = vmul.f32 %v2214, 1.442695
  %v2216 = vpow.pop %v2215
  %v2217 = vadd.f32 %v2216, 1.0
  %v2218 = vrcp.pop %v2217
  %v2219 = vmul.f32 %v2217, %v2218
  %v2220 = vsub.f32 1.0, %v2219
  %v2221 = vmul.f32 %v2218, %v2220
  %v2222 = vadd.f32 %v2218, %v2221
  %vm2223 = vweird.f32 %v2217
  %vm2224 = vweird.f32 %v2218
  %vm2225 = vmor %vm2223, %vm2224
  %v2226 = vsel %vm2225, %v2218, %v2222
  %v2227 = vand.u32 2147483647, %v2217
  %vm2228 = vcmp.eq.f32.partialorder %v2227, 8.507059e+37
  %v2229 = vand.u32 %v2217, 2147483648
  %v2230 = vor.u32 1.1754944e-38, %v2229
  %v2231 = vsel %vm2228, %v2230, %v2226
  %v2232 = vmul.f32 1.0, %v2231
  %v2233 = vtanh.pop %v2173
  %v2235 = vrot.slane %v2101, 2
  %v2237 = vmul.f32 %v2232, %v2235
  %2239 = vrot.lane.b32.xlu0 %v2233, 32
  %v2240 = vpop.permute.xlu0 %2239
  %v2242 = vmul.f32 %v2232, %v2240
  %2244 = vrot.lane.b32.xlu0 %v2242, 32
  %v2245 = vpop.permute.xlu0 %2244
  %v2247 = vadd.f32 %v2237, %v2245
  %v2248 = vtanh.pop %v2247
  %2250 = vrot.lane.b32.xlu0 %v2248, 32
  %v2251 = vpop.permute.xlu0 %2250
  %v2253 = vmul.f32 %v2232, %v2251
  %v2254 = vpack.c.bf16 %v2213, %v2213
  %2256 = vrot.lane.b32.xlu0 %v2254, 64
  %v2257 = vpop.permute.xlu0 %2256
  %2259 = vst.msk [vmem:[%s3 + $0xc] sm:$0x4] %vm390, %v2257
  %v2260 = vpack.c.bf16 %v2253, %v2253
  %2262 = vrot.lane.b32.xlu0 %v2260, 64
  %v2263 = vpop.permute.xlu0 %2262
  %2265 = vst.msk [vmem:[%s49] sm:$0x2] %vm383, %v2263
  %2267 = vrot.lane.b32.xlu0 %v2213, 64
  %v2268 = vpop.permute.xlu0 %2267
  %v2271 = vrot.slane %v2253, 6
  %2272 = vrot.lane.b32.xlu0 %v2271, 96
  %v2273 = vpop.permute.xlu0 %2272
  %v2275 = vsel %vm254, %v2268, %v2273
  %v2276 = vpack.c.bf16 %v2275, %v2275
  %v2278 = vrot.slane %v2276, 2
  %v2280 = vsel %vm112, %v2278, 0
  %2282 = vmatpush.bf16.msra.mxu0 0
  %2283 = vmatpush.bf16.msra.mxu0 0
  %2284 = vmatpush.bf16.msra.mxu0 0
  %2285 = vmatpush.bf16.msra.mxu0 0
  %2286 = vmatpush.bf16.msra.mxu0 %v102
  %2287 = vmatpush.bf16.msra.mxu0 %v100
  %2288 = vmatpush.bf16.msra.mxu0 %v98
  %2289 = vmatpush.bf16.msra.mxu0 %v96
  %2290 = vmatmul.bf16.gmra.mxu0 %v2280
  %v2291 = vpop.f32.mrf.mxu0
  %v2292 = vadd.f32 0.0, %v2291
  %v2293 = vpop.f32.mrf.mxu0
  %2294 = vdwg.mxu0
  %2295 = vmatpush.bf16.msra.mxu0 0
  %2296 = vmatpush.bf16.msra.mxu0 0
  %2297 = vmatpush.bf16.msra.mxu0 0
  %2298 = vmatpush.bf16.msra.mxu0 0
  %2299 = vmatpush.bf16.msra.mxu0 %v103
  %2300 = vmatpush.bf16.msra.mxu0 %v101
  %2301 = vmatpush.bf16.msra.mxu0 %v99
  %2302 = vmatpush.bf16.msra.mxu0 %v97
  %2303 = vmatmul.bf16.gmra.mxu0 %v2280
  %v2304 = vpop.f32.mrf.mxu0
  %v2305 = vadd.f32 0.0, %v2304
  %v2306 = vpop.f32.mrf.mxu0
  %2307 = vdwg.mxu0
  %v2308 = vld [vmem:[%s0 + $0xc] sm:$0x8]
  %v2309 = vunpack.c.l.bf16 %v2308
  %v2311 = vrot.slane %v2292, 2
  %v2313 = vadd.f32 %v2309, %v2311
  %v2314 = vld [vmem:[%s41] sm:$0x1]
  %v2315 = vunpack.c.l.bf16 %v2314
  %v2316 = vadd.f32 %v2315, %v2305
  %v2317 = vxor.u32 %v2313, 2147483648
  %v2318 = vmul.f32 %v2317, 1.442695
  %v2319 = vpow.pop %v2318
  %v2320 = vadd.f32 %v2319, 1.0
  %v2321 = vrcp.pop %v2320
  %v2322 = vmul.f32 %v2320, %v2321
  %v2323 = vsub.f32 1.0, %v2322
  %v2324 = vmul.f32 %v2321, %v2323
  %v2325 = vadd.f32 %v2321, %v2324
  %vm2326 = vweird.f32 %v2320
  %vm2327 = vweird.f32 %v2321
  %vm2328 = vmor %vm2326, %vm2327
  %v2329 = vsel %vm2328, %v2321, %v2325
  %v2330 = vand.u32 2147483647, %v2320
  %vm2331 = vcmp.eq.f32.partialorder %v2330, 8.507059e+37
  %v2332 = vand.u32 %v2320, 2147483648
  %v2333 = vor.u32 1.1754944e-38, %v2332
  %v2334 = vsel %vm2331, %v2333, %v2329
  %v2335 = vmul.f32 1.0, %v2334
  %v2336 = vtanh.pop %v2313
  %v2338 = vrot.slane %v2207, 6
  %v2340 = vmul.f32 %v2335, %v2338
  %2342 = vrot.lane.b32.xlu0 %v2336, 32
  %v2343 = vpop.permute.xlu0 %2342
  %v2345 = vmul.f32 %v2335, %v2343
  %2347 = vrot.lane.b32.xlu0 %v2345, 32
  %v2348 = vpop.permute.xlu0 %2347
  %v2350 = vadd.f32 %v2340, %v2348
  %v2351 = vtanh.pop %v2350
  %2353 = vrot.lane.b32.xlu0 %v2351, 32
  %v2354 = vpop.permute.xlu0 %2353
  %v2356 = vmul.f32 %v2335, %v2354
  %v2357 = vxor.u32 %v2316, 2147483648
  %v2358 = vmul.f32 %v2357, 1.442695
  %v2359 = vpow.pop %v2358
  %v2360 = vadd.f32 %v2359, 1.0
  %v2361 = vrcp.pop %v2360
  %v2362 = vmul.f32 %v2360, %v2361
  %v2363 = vsub.f32 1.0, %v2362
  %v2364 = vmul.f32 %v2361, %v2363
  %v2365 = vadd.f32 %v2361, %v2364
  %vm2366 = vweird.f32 %v2360
  %vm2367 = vweird.f32 %v2361
  %vm2368 = vmor %vm2366, %vm2367
  %v2369 = vsel %vm2368, %v2361, %v2365
  %v2370 = vand.u32 2147483647, %v2360
  %vm2371 = vcmp.eq.f32.partialorder %v2370, 8.507059e+37
  %v2372 = vand.u32 %v2360, 2147483648
  %v2373 = vor.u32 1.1754944e-38, %v2372
  %v2374 = vsel %vm2371, %v2373, %v2369
  %v2375 = vmul.f32 1.0, %v2374
  %v2376 = vtanh.pop %v2316
  %v2378 = vrot.slane %v2247, 2
  %v2380 = vmul.f32 %v2375, %v2378
  %2382 = vrot.lane.b32.xlu0 %v2376, 32
  %v2383 = vpop.permute.xlu0 %2382
  %v2385 = vmul.f32 %v2375, %v2383
  %2387 = vrot.lane.b32.xlu0 %v2385, 32
  %v2388 = vpop.permute.xlu0 %2387
  %v2390 = vadd.f32 %v2380, %v2388
  %v2391 = vtanh.pop %v2390
  %2393 = vrot.lane.b32.xlu0 %v2391, 32
  %v2394 = vpop.permute.xlu0 %2393
  %v2396 = vmul.f32 %v2375, %v2394
  %v2397 = vpack.c.bf16 %v2356, %v2356
  %2399 = vrot.lane.b32.xlu0 %v2397, 64
  %v2400 = vpop.permute.xlu0 %2399
  %2402 = vst.msk [vmem:[%s3 + $0xc] sm:$0x8] %vm243, %v2400
  %v2403 = vpack.c.bf16 %v2396, %v2396
  %2405 = vrot.lane.b32.xlu0 %v2403, 64
  %v2406 = vpop.permute.xlu0 %2405
  %2408 = vst.msk [vmem:[%s49] sm:$0x1] %vm236, %v2406
  %2410 = vrot.lane.b32.xlu0 %v2356, 64
  %v2411 = vpop.permute.xlu0 %2410
  %v2414 = vrot.slane %v2396, 2
  %2415 = vrot.lane.b32.xlu0 %v2414, 96
  %v2416 = vpop.permute.xlu0 %2415
  %v2418 = vsel %vm254, %v2411, %v2416
  %vm2419 = vcmask 523270
  %2420 = vst.msk [vmem:[#allocation2 - $0x6] sm:$0xc0] %vm2419, %v2418
  %2422 = vrot.lane.b32.xlu0 %v2350, 96
  %v2423 = vpop.permute.xlu0 %2422
  %v2426 = vrot.slane %v2390, 2
  %v2428 = vsel %vm254, %v2423, %v2426
  %2429 = vst.msk [vmem:[%s69 - $0x6] sm:$0xc0] %vm2419, %v2428
  %s2430 = ssub.s32 0, 0
  %s2431 = smul.u32 4, %s2430
  %p2432 = scmp.lt.s32.totalorder %s2431, 3
  %s2433 = scalar_select %p2432, %s2431, 3
  %s2434 = smul.addr %s2433, 4
  %s2435 = scalar_lea.vmem %s4, %s2434
  // Predicated region
  $region18: #{nn_lstm_all_forward.2} parent=0 // pred_check
    _
  $region19: #{nn_lstm_all_forward.2} parent=0 // pred_check_branch
    %2437 = sbr.rel (0) target = $region21
  $region20: #{nn_lstm_all_forward.2} parent=0 // pred_region
    _
  $region21: #{nn_lstm_all_forward.2} parent=0 // pred_fallthru
    _
  // Predicated region
  $region22: #{nn_lstm_all_forward.2} parent=0 // pred_check
    _
  $region23: #{nn_lstm_all_forward.2} parent=0 // pred_check_branch
    %2439 = sbr.rel (0) target = $region25
  $region24: #{nn_lstm_all_forward.2} parent=0 // pred_region
    %s2440 = ssub.s32 0, 0
    %s2441 = smul.u32 4, %s2440
  $region25: #{nn_lstm_all_forward.2} parent=0 // pred_fallthru
    _
  // Predicated region
  $region26: #{nn_lstm_all_forward.2} parent=0 // pred_check
    _
  $region27: #{nn_lstm_all_forward.2} parent=0 // pred_check_branch
    %2443 = sbr.rel (0) target = $region29
  $region28: #{nn_lstm_all_forward.2} parent=0 // pred_region
    _
  $region29: #{nn_lstm_all_forward.2} parent=0 // pred_fallthru
    _
  // Predicated region
  $region30: #{nn_lstm_all_forward.2} parent=0 // pred_check
    _
  $region31: #{nn_lstm_all_forward.2} parent=0 // pred_check_branch
    %2445 = sbr.rel (0) target = $region33
  $region32: #{nn_lstm_all_forward.2} parent=0 // pred_region
    %s2446 = ssub.s32 0, 0
    %s2447 = smul.u32 4, %s2446
    %p2448 = scmp.lt.s32.totalorder %s2447, 3
    %s2449 = scalar_select %p2448, %s2447, 3
    %s2450 = smul.addr %s2449, 4
    %s2451 = scalar_lea.vmem %s4, %s2450
  $region33: #{nn_lstm_all_forward.2} parent=0 // pred_fallthru
    _

</llo_original>
